<compile_context>
chip_gen: v7x
topology: tpu7x:2x2x1
jax: 0.10.0
libtpu: 0.0.40
codegen_flags: <defaults>
</compile_context>

<pallas_src>
import functools

import jax
import jax.numpy as jnp
import numpy as np
from jax.experimental import pallas as pl
from jax.experimental.pallas import tpu as pltpu


# ----------------------------- Pallas kernel -----------------------------

def _conv_gemm_kernel(*refs, relu, has_identity, pool_taps):
    """One batch element: im2col-GEMM + BN affine (+bias) (+residual) (+ReLU)
    (+fused 3x3/s2 H/W max-pool) epilogue.

    refs (in order) = patches  (M, K)        bf16
                      weights  (K, Cout)     bf16  (VMEM-resident)
                      scale    (1, Cout)     f32   folded BN scale
                      shift    (1, Cout)     f32   folded BN shift (+ conv bias)
                      [identity (M, Cout)    bf16] residual branch
                      [pool_sel (T, Mo, M)   bf16] one-hot pool-tap selectors
                      out      (Mo, Cout)    bf16 / f32
    """
    it = iter(refs)
    p_ref = next(it)
    w_ref = next(it)
    scale_ref = next(it)
    shift_ref = next(it)
    id_ref = next(it) if has_identity else None
    sel_ref = next(it) if pool_taps else None
    o_ref = next(it)

    # Single fat MXU matmul: all kD*kH*kW*Cin taps in one contraction.
    y = jnp.dot(p_ref[...], w_ref[...], preferred_element_type=jnp.float32)
    if has_identity:
        # PyTorch block applies bn2 AFTER (conv2 + bias + identity).
        y = y + id_ref[...].astype(jnp.float32)
    y = y * scale_ref[...] + shift_ref[...]            # BN affine (+ bias)
    if relu:
        y = jnp.maximum(y, 0.0)
    if pool_taps:
        # Fused MaxPool3d([1,3,3], stride [1,2,2], pad [0,1,1]).  Each tap is
        # a one-hot selection matmul (MXU) + elementwise max; zero rows for
        # padded taps are exact because y >= 0 post-ReLU.
        yb = y.astype(jnp.bfloat16)
        pooled = None
        for t in range(pool_taps):
            z = jnp.dot(sel_ref[t], yb, preferred_element_type=jnp.float32)
            pooled = z if pooled is None else jnp.maximum(pooled, z)
        y = pooled
    o_ref[...] = y.astype(o_ref.dtype)


# ----------------------------- wrapper helpers -----------------------------

def _im2col(x, kernel, stride, padding):
    """x: [N, D, H, W, C] -> (patches [N, Do*Ho*Wo, kD*kH*kW*C], (Do, Ho, Wo)).

    Built from kD*kH*kW strided slices of the padded activation; K ordering is
    (kd, kh, kw, cin), matching _prep_conv_w."""
    kd, kh, kw = kernel
    sd, sh, sw = stride
    pd, ph, pw = padding
    n, d, h, w, c = x.shape
    do = (d + 2 * pd - kd) // sd + 1
    ho = (h + 2 * ph - kh) // sh + 1
    wo = (w + 2 * pw - kw) // sw + 1
    xp = jnp.pad(x, ((0, 0), (pd, pd), (ph, ph), (pw, pw), (0, 0)))
    taps = []
    for a in range(kd):
        for b in range(kh):
            for cc in range(kw):
                taps.append(xp[:,
                               a:a + (do - 1) * sd + 1:sd,
                               b:b + (ho - 1) * sh + 1:sh,
                               cc:cc + (wo - 1) * sw + 1:sw,
                               :])
    pat = jnp.stack(taps, axis=4)                      # [N, Do, Ho, Wo, T, C]
    return pat.reshape(n, do * ho * wo, kd * kh * kw * c), (do, ho, wo)


def _pool_taps_selection(do, ho, wo, *, kh=3, kw=3, sh=2, sw=2, ph=1, pw=1):
    """One-hot selection matrices for a kernel-depth-1 H/W max pool.

    Returns (sel [kh*kw, Do*Hp*Wp, Do*Ho*Wo] bf16, Hp, Wp).  Out-of-range taps
    get all-zero rows (exact for a post-ReLU input)."""
    hp = (ho + 2 * ph - kh) // sh + 1
    wp = (wo + 2 * pw - kw) // sw + 1
    m_in, m_out = do * ho * wo, do * hp * wp
    sel = np.zeros((kh * kw, m_out, m_in), np.float32)
    for b in range(kh):
        for c in range(kw):
            t = b * kw + c
            for d in range(do):
                for oh in range(hp):
                    ih = oh * sh + b - ph
                    if not 0 <= ih < ho:
                        continue
                    for ow in range(wp):
                        iw = ow * sw + c - pw
                        if not 0 <= iw < wo:
                            continue
                        sel[t, (d * hp + oh) * wp + ow,
                            (d * ho + ih) * wo + iw] = 1.0
    return jnp.asarray(sel, jnp.bfloat16), hp, wp


# ----------------------------- fused conv wrapper -----------------------------

def conv3d_bn_act(x, w2d, scale, shift, *, kernel, stride, padding, relu=True,
                  identity=None, fuse_pool=False, out_dtype=jnp.bfloat16):
    """Conv3d (PyTorch semantics) fused with BN affine (+bias) (+residual)
    (+ReLU) (+conv1's MaxPool) — one pallas_call, grid=(N,).

    x           : [N, D, H, W, Cin] activation (cast to bf16 for the MXU)
    w2d         : [kD*kH*kW*Cin, Cout] bf16 prepared weights
    scale/shift : [Cout] f32 folded epilogue affine
    identity    : optional [N, Do, Ho, Wo, Cout] residual branch (kept in its
                  producing dtype, upcast in-kernel)
    returns     : [N, Do, Ho, Wo, Cout] (pooled spatial dims if fuse_pool)
    """
    assert identity is None or not fuse_pool
    n = x.shape[0]
    cout = w2d.shape[1]
    patches, (do, ho, wo) = _im2col(x.astype(jnp.bfloat16), kernel, stride,
                                    padding)
    m, k = patches.shape[1], patches.shape[2]
    scale2 = scale.reshape(1, cout).astype(jnp.float32)
    shift2 = shift.reshape(1, cout).astype(jnp.float32)

    in_arrays = [patches, w2d, scale2, shift2]
    in_specs = [
        pl.BlockSpec((None, m, k), lambda i: (i, 0, 0)),
        # constant index_maps -> weights / affine / selectors stay resident
        pl.BlockSpec((k, cout), lambda i: (0, 0)),
        pl.BlockSpec((1, cout), lambda i: (0, 0)),
        pl.BlockSpec((1, cout), lambda i: (0, 0)),
    ]
    if identity is not None:
        in_arrays.append(identity.reshape(n, m, cout))     # bf16, no f32 cast
        in_specs.append(pl.BlockSpec((None, m, cout), lambda i: (i, 0, 0)))

    pool_taps = 0
    if fuse_pool:
        sel, hp, wp = _pool_taps_selection(do, ho, wo)
        pool_taps = sel.shape[0]
        in_arrays.append(sel)
        in_specs.append(pl.BlockSpec(sel.shape, lambda i: (0, 0, 0)))
        m_out, out_sp = do * hp * wp, (do, hp, wp)
    else:
        m_out, out_sp = m, (do, ho, wo)

    out = pl.pallas_call(
        functools.partial(_conv_gemm_kernel, relu=relu,
                          has_identity=identity is not None,
                          pool_taps=pool_taps),
        out_shape=jax.ShapeDtypeStruct((n, m_out, cout), out_dtype),
        grid_spec=pltpu.PrefetchScalarGridSpec(
            num_scalar_prefetch=0,
            grid=(n,),                                # 2 fat steps, N-parallel
            in_specs=in_specs,
            out_specs=pl.BlockSpec((None, m_out, cout), lambda i: (i, 0, 0)),
        ),
        compiler_params=pltpu.CompilerParams(
            dimension_semantics=("parallel",),
            vmem_limit_bytes=32 * 1024 * 1024),       # footprint < 2 MiB/step
    )(*in_arrays)
    return out.reshape(n, *out_sp, cout)


# ----------------------------- model -----------------------------

def _fold_bn(bn, eps=1e-5):
    scale = bn["g"] / jnp.sqrt(bn["v"] + eps)
    shift = bn["b"] - bn["m"] * scale
    return scale, shift


def _prep_conv_w(w):
    # PyTorch [Cout, Cin, kD, kH, kW] -> [kD*kH*kW*Cin, Cout] bf16 (im2col K).
    cout, cin, kd, kh, kw = w.shape
    return (jnp.transpose(w, (2, 3, 4, 1, 0))
            .reshape(kd * kh * kw * cin, cout).astype(jnp.bfloat16))


def _prep_res(p):
    s1, t1 = _fold_bn(p["bn1"])
    s2, t2 = _fold_bn(p["bn2"])
    return dict(
        w1=_prep_conv_w(p["w1"]), scale1=s1, shift1=t1,
        w2=_prep_conv_w(p["w2"]), scale2=s2,
        # bn2((conv2 + b2) + identity) == (conv2 + identity)*s2 + (b2*s2 + t2)
        shift2=p["b2"] * s2 + t2,
    )


def prepare_params(params):
    """One-time weight layout / BN folding (done outside the jitted forward)."""
    s, t = _fold_bn(params["bn"])
    return dict(
        conv1_w=_prep_conv_w(params["w_conv1"]),
        conv1_scale=s, conv1_shift=t,
        res1=_prep_res(params["res1"]),
        res2=_prep_res(params["res2"]),
    )


def residual_block_fwd(x, p, stride, out_dtype=jnp.bfloat16):
    # conv1 + bn1 + relu (one fused pallas_call)
    out = conv3d_bn_act(x, p["w1"], p["scale1"], p["shift1"], kernel=(3, 3, 3),
                        stride=stride, padding=(1, 1, 1), relu=True)
    if stride == (1, 1, 1):
        identity = x                       # MaxPool3d(kernel=1, stride=1) == id
    else:
        # MaxPool3d(kernel=[1,1,1], stride) == strided subsample
        identity = x[:, ::stride[0], ::stride[1], ::stride[2], :]
    # conv2 + bias + residual add + bn2 + relu (one fused pallas_call)
    return conv3d_bn_act(out, p["w2"], p["scale2"], p["shift2"],
                         kernel=(3, 3, 3), stride=(1, 1, 1), padding=(1, 1, 1),
                         relu=True, identity=identity, out_dtype=out_dtype)


def videonet_forward(x_ncdhw, pp):
    x = jnp.transpose(x_ncdhw, (0, 2, 3, 4, 1))       # NCDHW -> NDHWC (once)
    # conv1 + bn + relu + MaxPool3d([1,3,3],[1,2,2],(0,1,1)): ONE pallas_call
    x = conv3d_bn_act(x, pp["conv1_w"], pp["conv1_scale"], pp["conv1_shift"],
                      kernel=(5, 7, 7), stride=(2, 2, 2), padding=(2, 3, 3),
                      relu=True, fuse_pool=True)
    x = residual_block_fwd(x, pp["res1"], (1, 1, 1))
    x = residual_block_fwd(x, pp["res2"], (2, 2, 2), out_dtype=jnp.float32)
    return jnp.transpose(x, (0, 4, 1, 2, 3))          # NDHWC -> NCDHW (once)


# ----------------------------- deterministic init -----------------------------

def _init_bn(key, c):
    k1, k2, k3, k4 = jax.random.split(key, 4)
    return dict(
        g=1.0 + 0.1 * jax.random.normal(k1, (c,), jnp.float32),
        b=0.1 * jax.random.normal(k2, (c,), jnp.float32),
        m=0.1 * jax.random.normal(k3, (c,), jnp.float32),
        v=jax.random.uniform(k4, (c,), jnp.float32, minval=0.5, maxval=1.5),
    )


def _init_res(key, cin, cout):
    ks = jax.random.split(key, 5)
    return dict(
        w1=0.05 * jax.random.normal(ks[0], (cout, cin, 3, 3, 3), jnp.float32),
        w2=0.05 * jax.random.normal(ks[1], (cout, cout, 3, 3, 3), jnp.float32),
        b2=0.05 * jax.random.normal(ks[2], (cout,), jnp.float32),
        bn1=_init_bn(ks[3], cout),
        bn2=_init_bn(ks[4], cout),
    )


def init_params(key):
    ks = jax.random.split(key, 4)
    return dict(
        w_conv1=0.05 * jax.random.normal(ks[0], (64, 3, 5, 7, 7), jnp.float32),
        bn=_init_bn(ks[1], 64),
        res1=_init_res(ks[2], 64, 64),
        res2=_init_res(ks[3], 64, 64),
    )


if __name__ == "__main__":
    key = jax.random.PRNGKey(0)
    kp, kx = jax.random.split(key)
    params = init_params(kp)
    pp = prepare_params(params)      # one-time weight / BN prep (not per-call)
    # x: [N, C, D, H, W] = [2, 3, 8, 16, 16]
    x = jax.random.normal(kx, (2, 3, 8, 16, 16), jnp.float32)

    fwd = jax.jit(videonet_forward)
    out = fwd(x, pp)
    jax.block_until_ready(out)
    # conv1+pool -> (2,64,4,4,4); res1 -> same; res2 -> (2,64,2,2,2)
    assert out.shape == (2, 64, 2, 2, 2), out.shape
    assert bool(jnp.all(jnp.isfinite(out)))
    print("KERNEL_OK")
</pallas_src>

<mosaic_0001>
module attributes {stable_mosaic.version = 11 : i64} {
  func.func @_conv_gemm_kernel(%arg0: i32, %arg1: memref<1x256x735xbf16, #tpu.memory_space<vmem>>, %arg2: memref<735x64xbf16, #tpu.memory_space<vmem>>, %arg3: memref<1x64xf32, #tpu.memory_space<vmem>>, %arg4: memref<1x64xf32, #tpu.memory_space<vmem>>, %arg5: memref<9x64x256xbf16, #tpu.memory_space<vmem>>, %arg6: memref<1x64x64xbf16, #tpu.memory_space<vmem>>) attributes {dimension_semantics = [#tpu.dimension_semantics<parallel>], iteration_bounds = array<i64: 2>, scalar_prefetch = 0 : i64, scratch_operands = 0 : i64, tpu.core_type = #tpu.core_type<tc>, window_params = [{transform_indices = @transform_0, window_bounds = array<i64: 1, 256, 735>}, {pipeline_mode = #tpu.pipeline_mode<synchronous>, transform_indices = @transform_1, window_bounds = array<i64: 735, 64>}, {pipeline_mode = #tpu.pipeline_mode<synchronous>, transform_indices = @transform_2, window_bounds = array<i64: 1, 64>}, {pipeline_mode = #tpu.pipeline_mode<synchronous>, transform_indices = @transform_3, window_bounds = array<i64: 1, 64>}, {pipeline_mode = #tpu.pipeline_mode<synchronous>, transform_indices = @transform_4, window_bounds = array<i64: 9, 64, 256>}, {transform_indices = @transform_5, window_bounds = array<i64: 1, 64, 64>}]} {
    %c0 = arith.constant 0 : index
    %c0_0 = arith.constant 0 : index
    %c0_1 = arith.constant 0 : index
    %0 = vector.load %arg1[%c0, %c0_0, %c0_1] : memref<1x256x735xbf16, #tpu.memory_space<vmem>>, vector<1x256x735xbf16>
    %1 = vector.shape_cast %0 : vector<1x256x735xbf16> to vector<256x735xbf16>
    %c0_2 = arith.constant 0 : index
    %c0_3 = arith.constant 0 : index
    %2 = vector.load %arg2[%c0_2, %c0_3] : memref<735x64xbf16, #tpu.memory_space<vmem>>, vector<735x64xbf16>
    %cst = arith.constant dense<0.000000e+00> : vector<256x64xf32>
    %3 = tpu.matmul %1, %2, %cst {dimension_numbers = #tpu.dot_dimension_numbers<[1], [0], [0], [1], [0, 0, 1, 1], [], []>} : vector<256x735xbf16>, vector<735x64xbf16>, vector<256x64xf32> -> vector<256x64xf32>
    %c0_4 = arith.constant 0 : index
    %c0_5 = arith.constant 0 : index
    %4 = vector.load %arg3[%c0_4, %c0_5] : memref<1x64xf32, #tpu.memory_space<vmem>>, vector<1x64xf32>
    %5 = vector.broadcast %4 : vector<1x64xf32> to vector<256x64xf32>
    %6 = arith.mulf %3, %5 : vector<256x64xf32>
    %c0_6 = arith.constant 0 : index
    %c0_7 = arith.constant 0 : index
    %7 = vector.load %arg4[%c0_6, %c0_7] : memref<1x64xf32, #tpu.memory_space<vmem>>, vector<1x64xf32>
    %8 = vector.broadcast %7 : vector<1x64xf32> to vector<256x64xf32>
    %9 = arith.addf %6, %8 : vector<256x64xf32>
    %cst_8 = arith.constant 0.000000e+00 : f32
    %10 = vector.broadcast %cst_8 : f32 to vector<256x64xf32>
    %11 = arith.maximumf %9, %10 : vector<256x64xf32>
    %12 = arith.truncf %11 : vector<256x64xf32> to vector<256x64xbf16>
    %c0_9 = arith.constant 0 : index
    %c0_10 = arith.constant 0 : index
    %c0_11 = arith.constant 0 : index
    %13 = vector.load %arg5[%c0_9, %c0_10, %c0_11] : memref<9x64x256xbf16, #tpu.memory_space<vmem>>, vector<1x64x256xbf16>
    %14 = vector.shape_cast %13 : vector<1x64x256xbf16> to vector<64x256xbf16>
    %cst_12 = arith.constant dense<0.000000e+00> : vector<64x64xf32>
    %15 = tpu.matmul %14, %12, %cst_12 {dimension_numbers = #tpu.dot_dimension_numbers<[1], [0], [0], [1], [0, 0, 1, 1], [], []>} : vector<64x256xbf16>, vector<256x64xbf16>, vector<64x64xf32> -> vector<64x64xf32>
    %c1 = arith.constant 1 : index
    %c0_13 = arith.constant 0 : index
    %c0_14 = arith.constant 0 : index
    %16 = vector.load %arg5[%c1, %c0_13, %c0_14] : memref<9x64x256xbf16, #tpu.memory_space<vmem>>, vector<1x64x256xbf16>
    %17 = vector.shape_cast %16 : vector<1x64x256xbf16> to vector<64x256xbf16>
    %cst_15 = arith.constant dense<0.000000e+00> : vector<64x64xf32>
    %18 = tpu.matmul %17, %12, %cst_15 {dimension_numbers = #tpu.dot_dimension_numbers<[1], [0], [0], [1], [0, 0, 1, 1], [], []>} : vector<64x256xbf16>, vector<256x64xbf16>, vector<64x64xf32> -> vector<64x64xf32>
    %19 = arith.maximumf %15, %18 : vector<64x64xf32>
    %c2 = arith.constant 2 : index
    %c0_16 = arith.constant 0 : index
    %c0_17 = arith.constant 0 : index
    %20 = vector.load %arg5[%c2, %c0_16, %c0_17] : memref<9x64x256xbf16, #tpu.memory_space<vmem>>, vector<1x64x256xbf16>
    %21 = vector.shape_cast %20 : vector<1x64x256xbf16> to vector<64x256xbf16>
    %cst_18 = arith.constant dense<0.000000e+00> : vector<64x64xf32>
    %22 = tpu.matmul %21, %12, %cst_18 {dimension_numbers = #tpu.dot_dimension_numbers<[1], [0], [0], [1], [0, 0, 1, 1], [], []>} : vector<64x256xbf16>, vector<256x64xbf16>, vector<64x64xf32> -> vector<64x64xf32>
    %23 = arith.maximumf %19, %22 : vector<64x64xf32>
    %c3 = arith.constant 3 : index
    %c0_19 = arith.constant 0 : index
    %c0_20 = arith.constant 0 : index
    %24 = vector.load %arg5[%c3, %c0_19, %c0_20] : memref<9x64x256xbf16, #tpu.memory_space<vmem>>, vector<1x64x256xbf16>
    %25 = vector.shape_cast %24 : vector<1x64x256xbf16> to vector<64x256xbf16>
    %cst_21 = arith.constant dense<0.000000e+00> : vector<64x64xf32>
    %26 = tpu.matmul %25, %12, %cst_21 {dimension_numbers = #tpu.dot_dimension_numbers<[1], [0], [0], [1], [0, 0, 1, 1], [], []>} : vector<64x256xbf16>, vector<256x64xbf16>, vector<64x64xf32> -> vector<64x64xf32>
    %27 = arith.maximumf %23, %26 : vector<64x64xf32>
    %c4 = arith.constant 4 : index
    %c0_22 = arith.constant 0 : index
    %c0_23 = arith.constant 0 : index
    %28 = vector.load %arg5[%c4, %c0_22, %c0_23] : memref<9x64x256xbf16, #tpu.memory_space<vmem>>, vector<1x64x256xbf16>
    %29 = vector.shape_cast %28 : vector<1x64x256xbf16> to vector<64x256xbf16>
    %cst_24 = arith.constant dense<0.000000e+00> : vector<64x64xf32>
    %30 = tpu.matmul %29, %12, %cst_24 {dimension_numbers = #tpu.dot_dimension_numbers<[1], [0], [0], [1], [0, 0, 1, 1], [], []>} : vector<64x256xbf16>, vector<256x64xbf16>, vector<64x64xf32> -> vector<64x64xf32>
    %31 = arith.maximumf %27, %30 : vector<64x64xf32>
    %c5 = arith.constant 5 : index
    %c0_25 = arith.constant 0 : index
    %c0_26 = arith.constant 0 : index
    %32 = vector.load %arg5[%c5, %c0_25, %c0_26] : memref<9x64x256xbf16, #tpu.memory_space<vmem>>, vector<1x64x256xbf16>
    %33 = vector.shape_cast %32 : vector<1x64x256xbf16> to vector<64x256xbf16>
    %cst_27 = arith.constant dense<0.000000e+00> : vector<64x64xf32>
    %34 = tpu.matmul %33, %12, %cst_27 {dimension_numbers = #tpu.dot_dimension_numbers<[1], [0], [0], [1], [0, 0, 1, 1], [], []>} : vector<64x256xbf16>, vector<256x64xbf16>, vector<64x64xf32> -> vector<64x64xf32>
    %35 = arith.maximumf %31, %34 : vector<64x64xf32>
    %c6 = arith.constant 6 : index
    %c0_28 = arith.constant 0 : index
    %c0_29 = arith.constant 0 : index
    %36 = vector.load %arg5[%c6, %c0_28, %c0_29] : memref<9x64x256xbf16, #tpu.memory_space<vmem>>, vector<1x64x256xbf16>
    %37 = vector.shape_cast %36 : vector<1x64x256xbf16> to vector<64x256xbf16>
    %cst_30 = arith.constant dense<0.000000e+00> : vector<64x64xf32>
    %38 = tpu.matmul %37, %12, %cst_30 {dimension_numbers = #tpu.dot_dimension_numbers<[1], [0], [0], [1], [0, 0, 1, 1], [], []>} : vector<64x256xbf16>, vector<256x64xbf16>, vector<64x64xf32> -> vector<64x64xf32>
    %39 = arith.maximumf %35, %38 : vector<64x64xf32>
    %c7 = arith.constant 7 : index
    %c0_31 = arith.constant 0 : index
    %c0_32 = arith.constant 0 : index
    %40 = vector.load %arg5[%c7, %c0_31, %c0_32] : memref<9x64x256xbf16, #tpu.memory_space<vmem>>, vector<1x64x256xbf16>
    %41 = vector.shape_cast %40 : vector<1x64x256xbf16> to vector<64x256xbf16>
    %cst_33 = arith.constant dense<0.000000e+00> : vector<64x64xf32>
    %42 = tpu.matmul %41, %12, %cst_33 {dimension_numbers = #tpu.dot_dimension_numbers<[1], [0], [0], [1], [0, 0, 1, 1], [], []>} : vector<64x256xbf16>, vector<256x64xbf16>, vector<64x64xf32> -> vector<64x64xf32>
    %43 = arith.maximumf %39, %42 : vector<64x64xf32>
    %c8 = arith.constant 8 : index
    %c0_34 = arith.constant 0 : index
    %c0_35 = arith.constant 0 : index
    %44 = vector.load %arg5[%c8, %c0_34, %c0_35] : memref<9x64x256xbf16, #tpu.memory_space<vmem>>, vector<1x64x256xbf16>
    %45 = vector.shape_cast %44 : vector<1x64x256xbf16> to vector<64x256xbf16>
    %cst_36 = arith.constant dense<0.000000e+00> : vector<64x64xf32>
    %46 = tpu.matmul %45, %12, %cst_36 {dimension_numbers = #tpu.dot_dimension_numbers<[1], [0], [0], [1], [0, 0, 1, 1], [], []>} : vector<64x256xbf16>, vector<256x64xbf16>, vector<64x64xf32> -> vector<64x64xf32>
    %47 = arith.maximumf %43, %46 : vector<64x64xf32>
    %48 = arith.truncf %47 : vector<64x64xf32> to vector<64x64xbf16>
    %c0_37 = arith.constant 0 : index
    %c0_38 = arith.constant 0 : index
    %c0_39 = arith.constant 0 : index
    %49 = vector.load %arg6[%c0_37, %c0_38, %c0_39] : memref<1x64x64xbf16, #tpu.memory_space<vmem>>, vector<1x64x64xbf16>
    %50 = vector.shape_cast %49 : vector<1x64x64xbf16> to vector<64x64xbf16>
    %51 = vector.shape_cast %48 : vector<64x64xbf16> to vector<1x64x64xbf16>
    tpu.vector_store %arg6[%c0_37, %c0_38, %c0_39], %51 {strides = array<i32>} : memref<1x64x64xbf16, #tpu.memory_space<vmem>>, vector<1x64x64xbf16>,
    return
  }
  func.func @transform_0(%arg0: i32) -> (i32, i32, i32) {
    %c0_i32 = arith.constant 0 : i32
    %c0_i32_0 = arith.constant 0 : i32
    %c0_i32_1 = arith.constant 0 : i32
    return %arg0, %c0_i32, %c0_i32_0 : i32, i32, i32
  }
  func.func @transform_1(%arg0: i32) -> (i32, i32) {
    %c0_i32 = arith.constant 0 : i32
    %c0_i32_0 = arith.constant 0 : i32
    %c0_i32_1 = arith.constant 0 : i32
    return %c0_i32, %c0_i32_0 : i32, i32
  }
  func.func @transform_2(%arg0: i32) -> (i32, i32) {
    %c0_i32 = arith.constant 0 : i32
    %c0_i32_0 = arith.constant 0 : i32
    %c0_i32_1 = arith.constant 0 : i32
    return %c0_i32, %c0_i32_0 : i32, i32
  }
  func.func @transform_3(%arg0: i32) -> (i32, i32) {
    %c0_i32 = arith.constant 0 : i32
    %c0_i32_0 = arith.constant 0 : i32
    %c0_i32_1 = arith.constant 0 : i32
    return %c0_i32, %c0_i32_0 : i32, i32
  }
  func.func @transform_4(%arg0: i32) -> (i32, i32, i32) {
    %c0_i32 = arith.constant 0 : i32
    %c0_i32_0 = arith.constant 0 : i32
    %c0_i32_1 = arith.constant 0 : i32
    %c0_i32_2 = arith.constant 0 : i32
    return %c0_i32, %c0_i32_0, %c0_i32_1 : i32, i32, i32
  }
  func.func @transform_5(%arg0: i32) -> (i32, i32, i32) {
    %c0_i32 = arith.constant 0 : i32
    %c0_i32_0 = arith.constant 0 : i32
    %c0_i32_1 = arith.constant 0 : i32
    return %arg0, %c0_i32, %c0_i32_0 : i32, i32, i32
  }
}

module attributes {stable_mosaic.version = 11 : i64} {
  func.func @_conv_gemm_kernel(%arg0: i32, %arg1: memref<1x64x1728xbf16, #tpu.memory_space<vmem>>, %arg2: memref<1728x64xbf16, #tpu.memory_space<vmem>>, %arg3: memref<1x64xf32, #tpu.memory_space<vmem>>, %arg4: memref<1x64xf32, #tpu.memory_space<vmem>>, %arg5: memref<1x64x64xbf16, #tpu.memory_space<vmem>>) attributes {dimension_semantics = [#tpu.dimension_semantics<parallel>], iteration_bounds = array<i64: 2>, scalar_prefetch = 0 : i64, scratch_operands = 0 : i64, tpu.core_type = #tpu.core_type<tc>, window_params = [{transform_indices = @transform_0, window_bounds = array<i64: 1, 64, 1728>}, {pipeline_mode = #tpu.pipeline_mode<synchronous>, transform_indices = @transform_1, window_bounds = array<i64: 1728, 64>}, {pipeline_mode = #tpu.pipeline_mode<synchronous>, transform_indices = @transform_2, window_bounds = array<i64: 1, 64>}, {pipeline_mode = #tpu.pipeline_mode<synchronous>, transform_indices = @transform_3, window_bounds = array<i64: 1, 64>}, {transform_indices = @transform_4, window_bounds = array<i64: 1, 64, 64>}]} {
    %c0 = arith.constant 0 : index
    %c0_0 = arith.constant 0 : index
    %c0_1 = arith.constant 0 : index
    %0 = vector.load %arg1[%c0, %c0_0, %c0_1] : memref<1x64x1728xbf16, #tpu.memory_space<vmem>>, vector<1x64x1728xbf16>
    %1 = vector.shape_cast %0 : vector<1x64x1728xbf16> to vector<64x1728xbf16>
    %c0_2 = arith.constant 0 : index
    %c0_3 = arith.constant 0 : index
    %2 = vector.load %arg2[%c0_2, %c0_3] : memref<1728x64xbf16, #tpu.memory_space<vmem>>, vector<1728x64xbf16>
    %cst = arith.constant dense<0.000000e+00> : vector<64x64xf32>
    %3 = tpu.matmul %1, %2, %cst {dimension_numbers = #tpu.dot_dimension_numbers<[1], [0], [0], [1], [0, 0, 1, 1], [], []>} : vector<64x1728xbf16>, vector<1728x64xbf16>, vector<64x64xf32> -> vector<64x64xf32>
    %c0_4 = arith.constant 0 : index
    %c0_5 = arith.constant 0 : index
    %4 = vector.load %arg3[%c0_4, %c0_5] : memref<1x64xf32, #tpu.memory_space<vmem>>, vector<1x64xf32>
    %5 = vector.broadcast %4 : vector<1x64xf32> to vector<64x64xf32>
    %6 = arith.mulf %3, %5 : vector<64x64xf32>
    %c0_6 = arith.constant 0 : index
    %c0_7 = arith.constant 0 : index
    %7 = vector.load %arg4[%c0_6, %c0_7] : memref<1x64xf32, #tpu.memory_space<vmem>>, vector<1x64xf32>
    %8 = vector.broadcast %7 : vector<1x64xf32> to vector<64x64xf32>
    %9 = arith.addf %6, %8 : vector<64x64xf32>
    %cst_8 = arith.constant 0.000000e+00 : f32
    %10 = vector.broadcast %cst_8 : f32 to vector<64x64xf32>
    %11 = arith.maximumf %9, %10 : vector<64x64xf32>
    %12 = arith.truncf %11 : vector<64x64xf32> to vector<64x64xbf16>
    %c0_9 = arith.constant 0 : index
    %c0_10 = arith.constant 0 : index
    %c0_11 = arith.constant 0 : index
    %13 = vector.load %arg5[%c0_9, %c0_10, %c0_11] : memref<1x64x64xbf16, #tpu.memory_space<vmem>>, vector<1x64x64xbf16>
    %14 = vector.shape_cast %13 : vector<1x64x64xbf16> to vector<64x64xbf16>
    %15 = vector.shape_cast %12 : vector<64x64xbf16> to vector<1x64x64xbf16>
    tpu.vector_store %arg5[%c0_9, %c0_10, %c0_11], %15 {strides = array<i32>} : memref<1x64x64xbf16, #tpu.memory_space<vmem>>, vector<1x64x64xbf16>,
    return
  }
  func.func @transform_0(%arg0: i32) -> (i32, i32, i32) {
    %c0_i32 = arith.constant 0 : i32
    %c0_i32_0 = arith.constant 0 : i32
    %c0_i32_1 = arith.constant 0 : i32
    return %arg0, %c0_i32, %c0_i32_0 : i32, i32, i32
  }
  func.func @transform_1(%arg0: i32) -> (i32, i32) {
    %c0_i32 = arith.constant 0 : i32
    %c0_i32_0 = arith.constant 0 : i32
    %c0_i32_1 = arith.constant 0 : i32
    return %c0_i32, %c0_i32_0 : i32, i32
  }
  func.func @transform_2(%arg0: i32) -> (i32, i32) {
    %c0_i32 = arith.constant 0 : i32
    %c0_i32_0 = arith.constant 0 : i32
    %c0_i32_1 = arith.constant 0 : i32
    return %c0_i32, %c0_i32_0 : i32, i32
  }
  func.func @transform_3(%arg0: i32) -> (i32, i32) {
    %c0_i32 = arith.constant 0 : i32
    %c0_i32_0 = arith.constant 0 : i32
    %c0_i32_1 = arith.constant 0 : i32
    return %c0_i32, %c0_i32_0 : i32, i32
  }
  func.func @transform_4(%arg0: i32) -> (i32, i32, i32) {
    %c0_i32 = arith.constant 0 : i32
    %c0_i32_0 = arith.constant 0 : i32
    %c0_i32_1 = arith.constant 0 : i32
    return %arg0, %c0_i32, %c0_i32_0 : i32, i32, i32
  }
}

module attributes {stable_mosaic.version = 11 : i64} {
  func.func @_conv_gemm_kernel(%arg0: i32, %arg1: memref<1x64x1728xbf16, #tpu.memory_space<vmem>>, %arg2: memref<1728x64xbf16, #tpu.memory_space<vmem>>, %arg3: memref<1x64xf32, #tpu.memory_space<vmem>>, %arg4: memref<1x64xf32, #tpu.memory_space<vmem>>, %arg5: memref<1x64x64xbf16, #tpu.memory_space<vmem>>, %arg6: memref<1x64x64xbf16, #tpu.memory_space<vmem>>) attributes {dimension_semantics = [#tpu.dimension_semantics<parallel>], iteration_bounds = array<i64: 2>, scalar_prefetch = 0 : i64, scratch_operands = 0 : i64, tpu.core_type = #tpu.core_type<tc>, window_params = [{transform_indices = @transform_0, window_bounds = array<i64: 1, 64, 1728>}, {pipeline_mode = #tpu.pipeline_mode<synchronous>, transform_indices = @transform_1, window_bounds = array<i64: 1728, 64>}, {pipeline_mode = #tpu.pipeline_mode<synchronous>, transform_indices = @transform_2, window_bounds = array<i64: 1, 64>}, {pipeline_mode = #tpu.pipeline_mode<synchronous>, transform_indices = @transform_3, window_bounds = array<i64: 1, 64>}, {transform_indices = @transform_4, window_bounds = array<i64: 1, 64, 64>}, {transform_indices = @transform_5, window_bounds = array<i64: 1, 64, 64>}]} {
    %c0 = arith.constant 0 : index
    %c0_0 = arith.constant 0 : index
    %c0_1 = arith.constant 0 : index
    %0 = vector.load %arg1[%c0, %c0_0, %c0_1] : memref<1x64x1728xbf16, #tpu.memory_space<vmem>>, vector<1x64x1728xbf16>
    %1 = vector.shape_cast %0 : vector<1x64x1728xbf16> to vector<64x1728xbf16>
    %c0_2 = arith.constant 0 : index
    %c0_3 = arith.constant 0 : index
    %2 = vector.load %arg2[%c0_2, %c0_3] : memref<1728x64xbf16, #tpu.memory_space<vmem>>, vector<1728x64xbf16>
    %cst = arith.constant dense<0.000000e+00> : vector<64x64xf32>
    %3 = tpu.matmul %1, %2, %cst {dimension_numbers = #tpu.dot_dimension_numbers<[1], [0], [0], [1], [0, 0, 1, 1], [], []>} : vector<64x1728xbf16>, vector<1728x64xbf16>, vector<64x64xf32> -> vector<64x64xf32>
    %c0_4 = arith.constant 0 : index
    %c0_5 = arith.constant 0 : index
    %c0_6 = arith.constant 0 : index
    %4 = vector.load %arg5[%c0_4, %c0_5, %c0_6] : memref<1x64x64xbf16, #tpu.memory_space<vmem>>, vector<1x64x64xbf16>
    %5 = vector.shape_cast %4 : vector<1x64x64xbf16> to vector<64x64xbf16>
    %6 = arith.extf %5 : vector<64x64xbf16> to vector<64x64xf32>
    %7 = arith.addf %3, %6 : vector<64x64xf32>
    %c0_7 = arith.constant 0 : index
    %c0_8 = arith.constant 0 : index
    %8 = vector.load %arg3[%c0_7, %c0_8] : memref<1x64xf32, #tpu.memory_space<vmem>>, vector<1x64xf32>
    %9 = vector.broadcast %8 : vector<1x64xf32> to vector<64x64xf32>
    %10 = arith.mulf %7, %9 : vector<64x64xf32>
    %c0_9 = arith.constant 0 : index
    %c0_10 = arith.constant 0 : index
    %11 = vector.load %arg4[%c0_9, %c0_10] : memref<1x64xf32, #tpu.memory_space<vmem>>, vector<1x64xf32>
    %12 = vector.broadcast %11 : vector<1x64xf32> to vector<64x64xf32>
    %13 = arith.addf %10, %12 : vector<64x64xf32>
    %cst_11 = arith.constant 0.000000e+00 : f32
    %14 = vector.broadcast %cst_11 : f32 to vector<64x64xf32>
    %15 = arith.maximumf %13, %14 : vector<64x64xf32>
    %16 = arith.truncf %15 : vector<64x64xf32> to vector<64x64xbf16>
    %c0_12 = arith.constant 0 : index
    %c0_13 = arith.constant 0 : index
    %c0_14 = arith.constant 0 : index
    %17 = vector.load %arg6[%c0_12, %c0_13, %c0_14] : memref<1x64x64xbf16, #tpu.memory_space<vmem>>, vector<1x64x64xbf16>
    %18 = vector.shape_cast %17 : vector<1x64x64xbf16> to vector<64x64xbf16>
    %19 = vector.shape_cast %16 : vector<64x64xbf16> to vector<1x64x64xbf16>
    tpu.vector_store %arg6[%c0_12, %c0_13, %c0_14], %19 {strides = array<i32>} : memref<1x64x64xbf16, #tpu.memory_space<vmem>>, vector<1x64x64xbf16>,
    return
  }
  func.func @transform_0(%arg0: i32) -> (i32, i32, i32) {
    %c0_i32 = arith.constant 0 : i32
    %c0_i32_0 = arith.constant 0 : i32
    %c0_i32_1 = arith.constant 0 : i32
    return %arg0, %c0_i32, %c0_i32_0 : i32, i32, i32
  }
  func.func @transform_1(%arg0: i32) -> (i32, i32) {
    %c0_i32 = arith.constant 0 : i32
    %c0_i32_0 = arith.constant 0 : i32
    %c0_i32_1 = arith.constant 0 : i32
    return %c0_i32, %c0_i32_0 : i32, i32
  }
  func.func @transform_2(%arg0: i32) -> (i32, i32) {
    %c0_i32 = arith.constant 0 : i32
    %c0_i32_0 = arith.constant 0 : i32
    %c0_i32_1 = arith.constant 0 : i32
    return %c0_i32, %c0_i32_0 : i32, i32
  }
  func.func @transform_3(%arg0: i32) -> (i32, i32) {
    %c0_i32 = arith.constant 0 : i32
    %c0_i32_0 = arith.constant 0 : i32
    %c0_i32_1 = arith.constant 0 : i32
    return %c0_i32, %c0_i32_0 : i32, i32
  }
  func.func @transform_4(%arg0: i32) -> (i32, i32, i32) {
    %c0_i32 = arith.constant 0 : i32
    %c0_i32_0 = arith.constant 0 : i32
    %c0_i32_1 = arith.constant 0 : i32
    return %arg0, %c0_i32, %c0_i32_0 : i32, i32, i32
  }
  func.func @transform_5(%arg0: i32) -> (i32, i32, i32) {
    %c0_i32 = arith.constant 0 : i32
    %c0_i32_0 = arith.constant 0 : i32
    %c0_i32_1 = arith.constant 0 : i32
    return %arg0, %c0_i32, %c0_i32_0 : i32, i32, i32
  }
}

module attributes {stable_mosaic.version = 11 : i64} {
  func.func @_conv_gemm_kernel(%arg0: i32, %arg1: memref<1x8x1728xbf16, #tpu.memory_space<vmem>>, %arg2: memref<1728x64xbf16, #tpu.memory_space<vmem>>, %arg3: memref<1x64xf32, #tpu.memory_space<vmem>>, %arg4: memref<1x64xf32, #tpu.memory_space<vmem>>, %arg5: memref<1x8x64xbf16, #tpu.memory_space<vmem>>) attributes {dimension_semantics = [#tpu.dimension_semantics<parallel>], iteration_bounds = array<i64: 2>, scalar_prefetch = 0 : i64, scratch_operands = 0 : i64, tpu.core_type = #tpu.core_type<tc>, window_params = [{transform_indices = @transform_0, window_bounds = array<i64: 1, 8, 1728>}, {pipeline_mode = #tpu.pipeline_mode<synchronous>, transform_indices = @transform_1, window_bounds = array<i64: 1728, 64>}, {pipeline_mode = #tpu.pipeline_mode<synchronous>, transform_indices = @transform_2, window_bounds = array<i64: 1, 64>}, {pipeline_mode = #tpu.pipeline_mode<synchronous>, transform_indices = @transform_3, window_bounds = array<i64: 1, 64>}, {transform_indices = @transform_4, window_bounds = array<i64: 1, 8, 64>}]} {
    %c0 = arith.constant 0 : index
    %c0_0 = arith.constant 0 : index
    %c0_1 = arith.constant 0 : index
    %0 = vector.load %arg1[%c0, %c0_0, %c0_1] : memref<1x8x1728xbf16, #tpu.memory_space<vmem>>, vector<1x8x1728xbf16>
    %1 = vector.shape_cast %0 : vector<1x8x1728xbf16> to vector<8x1728xbf16>
    %c0_2 = arith.constant 0 : index
    %c0_3 = arith.constant 0 : index
    %2 = vector.load %arg2[%c0_2, %c0_3] : memref<1728x64xbf16, #tpu.memory_space<vmem>>, vector<1728x64xbf16>
    %cst = arith.constant dense<0.000000e+00> : vector<8x64xf32>
    %3 = tpu.matmul %1, %2, %cst {dimension_numbers = #tpu.dot_dimension_numbers<[1], [0], [0], [1], [0, 0, 1, 1], [], []>} : vector<8x1728xbf16>, vector<1728x64xbf16>, vector<8x64xf32> -> vector<8x64xf32>
    %c0_4 = arith.constant 0 : index
    %c0_5 = arith.constant 0 : index
    %4 = vector.load %arg3[%c0_4, %c0_5] : memref<1x64xf32, #tpu.memory_space<vmem>>, vector<1x64xf32>
    %5 = vector.broadcast %4 : vector<1x64xf32> to vector<8x64xf32>
    %6 = arith.mulf %3, %5 : vector<8x64xf32>
    %c0_6 = arith.constant 0 : index
    %c0_7 = arith.constant 0 : index
    %7 = vector.load %arg4[%c0_6, %c0_7] : memref<1x64xf32, #tpu.memory_space<vmem>>, vector<1x64xf32>
    %8 = vector.broadcast %7 : vector<1x64xf32> to vector<8x64xf32>
    %9 = arith.addf %6, %8 : vector<8x64xf32>
    %cst_8 = arith.constant 0.000000e+00 : f32
    %10 = vector.broadcast %cst_8 : f32 to vector<8x64xf32>
    %11 = arith.maximumf %9, %10 : vector<8x64xf32>
    %12 = arith.truncf %11 : vector<8x64xf32> to vector<8x64xbf16>
    %c0_9 = arith.constant 0 : index
    %c0_10 = arith.constant 0 : index
    %c0_11 = arith.constant 0 : index
    %13 = vector.load %arg5[%c0_9, %c0_10, %c0_11] : memref<1x8x64xbf16, #tpu.memory_space<vmem>>, vector<1x8x64xbf16>
    %14 = vector.shape_cast %13 : vector<1x8x64xbf16> to vector<8x64xbf16>
    %15 = vector.shape_cast %12 : vector<8x64xbf16> to vector<1x8x64xbf16>
    tpu.vector_store %arg5[%c0_9, %c0_10, %c0_11], %15 {strides = array<i32>} : memref<1x8x64xbf16, #tpu.memory_space<vmem>>, vector<1x8x64xbf16>,
    return
  }
  func.func @transform_0(%arg0: i32) -> (i32, i32, i32) {
    %c0_i32 = arith.constant 0 : i32
    %c0_i32_0 = arith.constant 0 : i32
    %c0_i32_1 = arith.constant 0 : i32
    return %arg0, %c0_i32, %c0_i32_0 : i32, i32, i32
  }
  func.func @transform_1(%arg0: i32) -> (i32, i32) {
    %c0_i32 = arith.constant 0 : i32
    %c0_i32_0 = arith.constant 0 : i32
    %c0_i32_1 = arith.constant 0 : i32
    return %c0_i32, %c0_i32_0 : i32, i32
  }
  func.func @transform_2(%arg0: i32) -> (i32, i32) {
    %c0_i32 = arith.constant 0 : i32
    %c0_i32_0 = arith.constant 0 : i32
    %c0_i32_1 = arith.constant 0 : i32
    return %c0_i32, %c0_i32_0 : i32, i32
  }
  func.func @transform_3(%arg0: i32) -> (i32, i32) {
    %c0_i32 = arith.constant 0 : i32
    %c0_i32_0 = arith.constant 0 : i32
    %c0_i32_1 = arith.constant 0 : i32
    return %c0_i32, %c0_i32_0 : i32, i32
  }
  func.func @transform_4(%arg0: i32) -> (i32, i32, i32) {
    %c0_i32 = arith.constant 0 : i32
    %c0_i32_0 = arith.constant 0 : i32
    %c0_i32_1 = arith.constant 0 : i32
    return %arg0, %c0_i32, %c0_i32_0 : i32, i32, i32
  }
}

module attributes {stable_mosaic.version = 11 : i64} {
  func.func @_conv_gemm_kernel(%arg0: i32, %arg1: memref<1x8x1728xbf16, #tpu.memory_space<vmem>>, %arg2: memref<1728x64xbf16, #tpu.memory_space<vmem>>, %arg3: memref<1x64xf32, #tpu.memory_space<vmem>>, %arg4: memref<1x64xf32, #tpu.memory_space<vmem>>, %arg5: memref<1x8x64xbf16, #tpu.memory_space<vmem>>, %arg6: memref<1x8x64xf32, #tpu.memory_space<vmem>>) attributes {dimension_semantics = [#tpu.dimension_semantics<parallel>], iteration_bounds = array<i64: 2>, scalar_prefetch = 0 : i64, scratch_operands = 0 : i64, tpu.core_type = #tpu.core_type<tc>, window_params = [{transform_indices = @transform_0, window_bounds = array<i64: 1, 8, 1728>}, {pipeline_mode = #tpu.pipeline_mode<synchronous>, transform_indices = @transform_1, window_bounds = array<i64: 1728, 64>}, {pipeline_mode = #tpu.pipeline_mode<synchronous>, transform_indices = @transform_2, window_bounds = array<i64: 1, 64>}, {pipeline_mode = #tpu.pipeline_mode<synchronous>, transform_indices = @transform_3, window_bounds = array<i64: 1, 64>}, {transform_indices = @transform_4, window_bounds = array<i64: 1, 8, 64>}, {transform_indices = @transform_5, window_bounds = array<i64: 1, 8, 64>}]} {
    %c0 = arith.constant 0 : index
    %c0_0 = arith.constant 0 : index
    %c0_1 = arith.constant 0 : index
    %0 = vector.load %arg1[%c0, %c0_0, %c0_1] : memref<1x8x1728xbf16, #tpu.memory_space<vmem>>, vector<1x8x1728xbf16>
    %1 = vector.shape_cast %0 : vector<1x8x1728xbf16> to vector<8x1728xbf16>
    %c0_2 = arith.constant 0 : index
    %c0_3 = arith.constant 0 : index
    %2 = vector.load %arg2[%c0_2, %c0_3] : memref<1728x64xbf16, #tpu.memory_space<vmem>>, vector<1728x64xbf16>
    %cst = arith.constant dense<0.000000e+00> : vector<8x64xf32>
    %3 = tpu.matmul %1, %2, %cst {dimension_numbers = #tpu.dot_dimension_numbers<[1], [0], [0], [1], [0, 0, 1, 1], [], []>} : vector<8x1728xbf16>, vector<1728x64xbf16>, vector<8x64xf32> -> vector<8x64xf32>
    %c0_4 = arith.constant 0 : index
    %c0_5 = arith.constant 0 : index
    %c0_6 = arith.constant 0 : index
    %4 = vector.load %arg5[%c0_4, %c0_5, %c0_6] : memref<1x8x64xbf16, #tpu.memory_space<vmem>>, vector<1x8x64xbf16>
    %5 = vector.shape_cast %4 : vector<1x8x64xbf16> to vector<8x64xbf16>
    %6 = arith.extf %5 : vector<8x64xbf16> to vector<8x64xf32>
    %7 = arith.addf %3, %6 : vector<8x64xf32>
    %c0_7 = arith.constant 0 : index
    %c0_8 = arith.constant 0 : index
    %8 = vector.load %arg3[%c0_7, %c0_8] : memref<1x64xf32, #tpu.memory_space<vmem>>, vector<1x64xf32>
    %9 = vector.broadcast %8 : vector<1x64xf32> to vector<8x64xf32>
    %10 = arith.mulf %7, %9 : vector<8x64xf32>
    %c0_9 = arith.constant 0 : index
    %c0_10 = arith.constant 0 : index
    %11 = vector.load %arg4[%c0_9, %c0_10] : memref<1x64xf32, #tpu.memory_space<vmem>>, vector<1x64xf32>
    %12 = vector.broadcast %11 : vector<1x64xf32> to vector<8x64xf32>
    %13 = arith.addf %10, %12 : vector<8x64xf32>
    %cst_11 = arith.constant 0.000000e+00 : f32
    %14 = vector.broadcast %cst_11 : f32 to vector<8x64xf32>
    %15 = arith.maximumf %13, %14 : vector<8x64xf32>
    %c0_12 = arith.constant 0 : index
    %c0_13 = arith.constant 0 : index
    %c0_14 = arith.constant 0 : index
    %16 = vector.load %arg6[%c0_12, %c0_13, %c0_14] : memref<1x8x64xf32, #tpu.memory_space<vmem>>, vector<1x8x64xf32>
    %17 = vector.shape_cast %16 : vector<1x8x64xf32> to vector<8x64xf32>
    %18 = vector.shape_cast %15 : vector<8x64xf32> to vector<1x8x64xf32>
    tpu.vector_store %arg6[%c0_12, %c0_13, %c0_14], %18 {strides = array<i32>} : memref<1x8x64xf32, #tpu.memory_space<vmem>>, vector<1x8x64xf32>,
    return
  }
  func.func @transform_0(%arg0: i32) -> (i32, i32, i32) {
    %c0_i32 = arith.constant 0 : i32
    %c0_i32_0 = arith.constant 0 : i32
    %c0_i32_1 = arith.constant 0 : i32
    return %arg0, %c0_i32, %c0_i32_0 : i32, i32, i32
  }
  func.func @transform_1(%arg0: i32) -> (i32, i32) {
    %c0_i32 = arith.constant 0 : i32
    %c0_i32_0 = arith.constant 0 : i32
    %c0_i32_1 = arith.constant 0 : i32
    return %c0_i32, %c0_i32_0 : i32, i32
  }
  func.func @transform_2(%arg0: i32) -> (i32, i32) {
    %c0_i32 = arith.constant 0 : i32
    %c0_i32_0 = arith.constant 0 : i32
    %c0_i32_1 = arith.constant 0 : i32
    return %c0_i32, %c0_i32_0 : i32, i32
  }
  func.func @transform_3(%arg0: i32) -> (i32, i32) {
    %c0_i32 = arith.constant 0 : i32
    %c0_i32_0 = arith.constant 0 : i32
    %c0_i32_1 = arith.constant 0 : i32
    return %c0_i32, %c0_i32_0 : i32, i32
  }
  func.func @transform_4(%arg0: i32) -> (i32, i32, i32) {
    %c0_i32 = arith.constant 0 : i32
    %c0_i32_0 = arith.constant 0 : i32
    %c0_i32_1 = arith.constant 0 : i32
    return %arg0, %c0_i32, %c0_i32_0 : i32, i32, i32
  }
  func.func @transform_5(%arg0: i32) -> (i32, i32, i32) {
    %c0_i32 = arith.constant 0 : i32
    %c0_i32_0 = arith.constant 0 : i32
    %c0_i32_1 = arith.constant 0 : i32
    return %arg0, %c0_i32, %c0_i32_0 : i32, i32, i32
  }
}

</mosaic_0001>

<llo_original>
// kernel: videonet_forward.5
$region0: #{videonet_forward.5}
  #allocation0 [shape = 'u32[]', space=smem, size = 0x4, offset = 0x4, fixed_abs, tag = 'smem constant byte address 0x4 - core index']
  #allocation1 [shape = 'u32[144,128]{1,0:T(1,128)}', space=vmem, size = 0x12000, scoped, tag = 'internal scratch']
  %s0 = inlined_call_operand.vmem [shape: bf16[2,256,735], index: 0, kind: input, shape index: {}]
  %s1 = inlined_call_operand.vmem [shape: bf16[735,64], index: 1, kind: input, shape index: {}]
  %s2 = inlined_call_operand.vmem [shape: f32[1,64], index: 2, kind: input, shape index: {}]
  %s3 = inlined_call_operand.vmem [shape: f32[1,64], index: 3, kind: input, shape index: {}]
  %s4 = inlined_call_operand.vmem [shape: bf16[9,64,256], index: 4, kind: input, shape index: {}]
  %s5 = inlined_call_operand.vmem [shape: bf16[2,64,64], index: 5, kind: output, shape index: {}]
  %s6 = sld [smem:[#allocation0]]
  $region53: #{videonet_forward.5} parent=0
    _
  %s8 = ssub.s32 1, %s6
  %s9 = scalar_select 0, %s8, %s6
  loop: start=0, step=1, limit=4
  $region2: #{videonet_forward.5} parent=0 // loop_pre_header
    _
  $region3: #{videonet_forward.5} parent=0 // loop_header
    %s11 = sphi 0, %s15
    %p12 = scmp.ge.s32.totalorder %s11, 4
    %s21 = sphi 0, %s23
    %s24 = sphi 0, %s21
    %s25 = sphi 0, %s24
    %s41 = sphi 0, %s25
    %s45 = sphi 0, %s45
    %s47 = sphi 0, %s45
    %s48 = sphi 0, %s47
    %s62 = sphi 0, %s48
    %s66 = sphi 0, %s66
    %s68 = sphi 0, %s66
    %s69 = sphi 0, %s68
    %s83 = sphi 0, %s69
    %s87 = sphi 0, %s87
    %s89 = sphi 0, %s87
    %s90 = sphi 0, %s89
    %s104 = sphi 0, %s90
    %s108 = sphi 0, %s108
    %s110 = sphi 0, %s108
    %s111 = sphi 0, %s110
    %s125 = sphi 0, %s111
    %s131 = sphi 0, %s133
    %s134 = sphi 0, %s131
    %s135 = sphi 0, %s134
    %s151 = sphi 0, %s135
  $region4: #{videonet_forward.5} parent=0 // loop_header_branch
    %14 = sbr.rel (%p12) target = $region8
  $region5: #{videonet_forward.5} parent=0 // loop_body
    %s16 = ssub.s32 %s11, 1
    %s17 = ssub.s32 %s11, 2
    %s18 = sadd.s32 %s11, 1
    %s19 = ssub.s32 %s11, %s18
    %p20 = scmp.eq.s32.totalorder %s19, 0
    %s22 = sadd.s32 %s21, 1
    %s23 = scalar_select %p20, %s21, %s22
    %p26 = pneg %p20
    %p27 = scmp.eq.s32.totalorder %s11, 1
    %p28 = por %p26, %p27
    %p29 = scmp.ne.s32.totalorder %s21, %s24
    %p30 = scmp.eq.s32.totalorder %s11, 0
    %p31 = por %p29, %p30
    %p32 = scmp.ne.s32.totalorder %s21, %s24
    %p33 = scmp.eq.s32.totalorder %s16, 1
    %p34 = por %p32, %p33
    %p35 = scmp.ne.s32.totalorder %s24, %s25
    %p36 = scmp.eq.s32.totalorder %s16, 0
    %p37 = por %p35, %p36
    %p38 = scmp.ne.s32.totalorder %s24, %s25
    %p39 = scmp.eq.s32.totalorder %s17, 1
    %p40 = por %p38, %p39
    %p42 = scmp.ne.s32.totalorder %s25, %s41
    %p43 = scmp.eq.s32.totalorder %s17, 0
    %p44 = por %p42, %p43
    %s46 = sadd.s32 %s45, 1
    %p49 = scmp.eq.s32.totalorder %s11, 1
    %p50 = scmp.ne.s32.totalorder %s45, %s47
    %p51 = scmp.eq.s32.totalorder %s11, 0
    %p52 = por %p50, %p51
    %p53 = scmp.ne.s32.totalorder %s45, %s47
    %p54 = scmp.eq.s32.totalorder %s16, 1
    %p55 = por %p53, %p54
    %p56 = scmp.ne.s32.totalorder %s47, %s48
    %p57 = scmp.eq.s32.totalorder %s16, 0
    %p58 = por %p56, %p57
    %p59 = scmp.ne.s32.totalorder %s47, %s48
    %p60 = scmp.eq.s32.totalorder %s17, 1
    %p61 = por %p59, %p60
    %p63 = scmp.ne.s32.totalorder %s48, %s62
    %p64 = scmp.eq.s32.totalorder %s17, 0
    %p65 = por %p63, %p64
    %s67 = sadd.s32 %s66, 1
    %p70 = scmp.eq.s32.totalorder %s11, 1
    %p71 = scmp.ne.s32.totalorder %s66, %s68
    %p72 = scmp.eq.s32.totalorder %s11, 0
    %p73 = por %p71, %p72
    %p74 = scmp.ne.s32.totalorder %s66, %s68
    %p75 = scmp.eq.s32.totalorder %s16, 1
    %p76 = por %p74, %p75
    %p77 = scmp.ne.s32.totalorder %s68, %s69
    %p78 = scmp.eq.s32.totalorder %s16, 0
    %p79 = por %p77, %p78
    %p80 = scmp.ne.s32.totalorder %s68, %s69
    %p81 = scmp.eq.s32.totalorder %s17, 1
    %p82 = por %p80, %p81
    %p84 = scmp.ne.s32.totalorder %s69, %s83
    %p85 = scmp.eq.s32.totalorder %s17, 0
    %p86 = por %p84, %p85
    %s88 = sadd.s32 %s87, 1
    %p91 = scmp.eq.s32.totalorder %s11, 1
    %p92 = scmp.ne.s32.totalorder %s87, %s89
    %p93 = scmp.eq.s32.totalorder %s11, 0
    %p94 = por %p92, %p93
    %p95 = scmp.ne.s32.totalorder %s87, %s89
    %p96 = scmp.eq.s32.totalorder %s16, 1
    %p97 = por %p95, %p96
    %p98 = scmp.ne.s32.totalorder %s89, %s90
    %p99 = scmp.eq.s32.totalorder %s16, 0
    %p100 = por %p98, %p99
    %p101 = scmp.ne.s32.totalorder %s89, %s90
    %p102 = scmp.eq.s32.totalorder %s17, 1
    %p103 = por %p101, %p102
    %p105 = scmp.ne.s32.totalorder %s90, %s104
    %p106 = scmp.eq.s32.totalorder %s17, 0
    %p107 = por %p105, %p106
    %s109 = sadd.s32 %s108, 1
    %p112 = scmp.eq.s32.totalorder %s11, 1
    %p113 = scmp.ne.s32.totalorder %s108, %s110
    %p114 = scmp.eq.s32.totalorder %s11, 0
    %p115 = por %p113, %p114
    %p116 = scmp.ne.s32.totalorder %s108, %s110
    %p117 = scmp.eq.s32.totalorder %s16, 1
    %p118 = por %p116, %p117
    %p119 = scmp.ne.s32.totalorder %s110, %s111
    %p120 = scmp.eq.s32.totalorder %s16, 0
    %p121 = por %p119, %p120
    %p122 = scmp.ne.s32.totalorder %s110, %s111
    %p123 = scmp.eq.s32.totalorder %s17, 1
    %p124 = por %p122, %p123
    %p126 = scmp.ne.s32.totalorder %s111, %s125
    %p127 = scmp.eq.s32.totalorder %s17, 0
    %p128 = por %p126, %p127
    %s129 = ssub.s32 %s11, %s18
    %p130 = scmp.eq.s32.totalorder %s129, 0
    %s132 = sadd.s32 %s131, 1
    %s133 = scalar_select %p130, %s131, %s132
    %p136 = pneg %p130
    %p137 = scmp.eq.s32.totalorder %s11, 1
    %p138 = por %p136, %p137
    %p139 = scmp.ne.s32.totalorder %s131, %s134
    %p140 = scmp.eq.s32.totalorder %s11, 0
    %p141 = por %p139, %p140
    %p142 = scmp.ne.s32.totalorder %s131, %s134
    %p143 = scmp.eq.s32.totalorder %s16, 1
    %p144 = por %p142, %p143
    %p145 = scmp.ne.s32.totalorder %s134, %s135
    %p146 = scmp.eq.s32.totalorder %s16, 0
    %p147 = por %p145, %p146
    %p148 = scmp.ne.s32.totalorder %s134, %s135
    %p149 = scmp.eq.s32.totalorder %s17, 1
    %p150 = por %p148, %p149
    %p152 = scmp.ne.s32.totalorder %s135, %s151
    %p153 = scmp.eq.s32.totalorder %s17, 0
    %p154 = por %p152, %p153
    %p155 = scmp.le.s32.totalorder 1, %s11
    %p156 = scmp.lt.s32.totalorder %s11, 3
    %p157 = pnand %p155, %p156
    %p158 = pneg %p157
    // Predicated region
    $region9: #{videonet_forward.5} parent=5 // pred_check
      _
    $region10: #{videonet_forward.5} parent=5 // pred_check_branch
      %160 = sbr.rel (%p157) target = $region12
    $region11: #{videonet_forward.5} parent=5 // pred_region
      %s161 = ssub.s32 %s11, 1
      // Predicated region
      $region13: #{videonet_forward.5} parent=11 // pred_check
        %p162 = pneg %p58
      $region14: #{videonet_forward.5} parent=11 // pred_check_branch
        %164 = sbr.rel (%p162) target = $region16
      $region15: #{videonet_forward.5} parent=11 // pred_region
        _
      $region16: #{videonet_forward.5} parent=11 // pred_fallthru
        _
      // Predicated region
      $region17: #{videonet_forward.5} parent=11 // pred_check
        %p165 = pneg %p79
      $region18: #{videonet_forward.5} parent=11 // pred_check_branch
        %167 = sbr.rel (%p165) target = $region20
      $region19: #{videonet_forward.5} parent=11 // pred_region
        _
      $region20: #{videonet_forward.5} parent=11 // pred_fallthru
        _
      // Predicated region
      $region21: #{videonet_forward.5} parent=11 // pred_check
        %p168 = pneg %p100
      $region22: #{videonet_forward.5} parent=11 // pred_check_branch
        %170 = sbr.rel (%p168) target = $region24
      $region23: #{videonet_forward.5} parent=11 // pred_region
        _
      $region24: #{videonet_forward.5} parent=11 // pred_fallthru
        _
      // Predicated region
      $region25: #{videonet_forward.5} parent=11 // pred_check
        %p171 = pneg %p121
      $region26: #{videonet_forward.5} parent=11 // pred_check_branch
        %173 = sbr.rel (%p171) target = $region28
      $region27: #{videonet_forward.5} parent=11 // pred_region
        _
      $region28: #{videonet_forward.5} parent=11 // pred_fallthru
        _
    $region12: #{videonet_forward.5} parent=5 // pred_fallthru
      _
    %p174 = scmp.lt.s32.totalorder %s11, 2
    // Predicated region
    $region29: #{videonet_forward.5} parent=5 // pred_check
      %p175 = pneg %p174
    $region30: #{videonet_forward.5} parent=5 // pred_check_branch
      %177 = sbr.rel (%p175) target = $region32
    $region31: #{videonet_forward.5} parent=5 // pred_region
      // Predicated region
      $region33: #{videonet_forward.5} parent=31 // pred_check
        %p178 = pneg %p31
      $region34: #{videonet_forward.5} parent=31 // pred_check_branch
        %180 = sbr.rel (%p178) target = $region36
      $region35: #{videonet_forward.5} parent=31 // pred_region
        %p181 = scmp.lt.s32.totalorder %s11, 1
        %s182 = scalar_select %p181, %s11, 1
        %s183 = smul.addr %s182, 192
        %s184 = smul.addr %s183, 4
        %s185 = scalar_lea.vmem %s0, %s184
      $region36: #{videonet_forward.5} parent=31 // pred_fallthru
        _
    $region32: #{videonet_forward.5} parent=5 // pred_fallthru
      _
    %p186 = scmp.le.s32.totalorder 1, %s11
    %p187 = scmp.lt.s32.totalorder %s11, 3
    %p188 = pnand %p186, %p187
    %p189 = pneg %p188
    // Predicated region
    $region37: #{videonet_forward.5} parent=5 // pred_check
      _
    $region38: #{videonet_forward.5} parent=5 // pred_check_branch
      %191 = sbr.rel (%p188) target = $region40
    $region39: #{videonet_forward.5} parent=5 // pred_region
      %s192 = ssub.s32 %s11, 1
      %p193 = scmp.lt.s32.totalorder %s16, 1
      %s194 = scalar_select %p193, %s16, 1
      %s195 = smul.addr %s194, 192
      %s196 = smul.addr %s195, 4
      %s197 = scalar_lea.vmem %s0, %s196
      %p198 = pneg %p37
      %p199 = pneg %p34
      %p200 = pneg %p58
      %p201 = pneg %p55
      %p202 = pneg %p79
      %p203 = pneg %p76
      %p204 = pneg %p100
      %p205 = pneg %p97
      %p206 = pneg %p121
      %p207 = pneg %p118
      %p208 = pneg %p147
      %p209 = pneg %p144
      %p210 = scmp.lt.s32.totalorder %s16, 1
      %s211 = scalar_select %p210, %s16, 1
      %s212 = smul.addr %s211, 8
      %s213 = smul.addr %s212, 4
      %s214 = scalar_lea.vmem %s5, %s213
      %p215 = scmp.lt.s32.totalorder %s16, 1
      %s216 = scalar_select %p215, %s16, 1
      %s217 = smul.addr %s216, 192
      %s218 = smul.addr %s217, 4
      %s219 = scalar_lea.vmem %s0, %s218
      %p220 = scmp.lt.s32.totalorder %s16, 1
      %s221 = scalar_select %p220, %s16, 1
      %s222 = smul.addr %s221, 8
      %s223 = smul.addr %s222, 4
      %s224 = scalar_lea.vmem %s5, %s223
      %v226 = vld [vmem:[%s219] sm:$0xff]
      %v227 = vld [vmem:[%s219 + $0x8] sm:$0xff]
      %v228 = vld [vmem:[%s219 + $0x10] sm:$0xff]
      %v229 = vld [vmem:[%s219 + $0x18] sm:$0xff]
      %v230 = vld [vmem:[%s219 + $0x20] sm:$0xff]
      %v231 = vld [vmem:[%s219 + $0x28] sm:$0xff]
      %v232 = vld [vmem:[%s219 + $0x30] sm:$0xff]
      %v233 = vld [vmem:[%s219 + $0x38] sm:$0xff]
      %v234 = vld [vmem:[%s219 + $0x40] sm:$0xff]
      %v235 = vld [vmem:[%s219 + $0x48] sm:$0xff]
      %v236 = vld [vmem:[%s219 + $0x50] sm:$0xff]
      %v237 = vld [vmem:[%s219 + $0x58] sm:$0xff]
      %v238 = vld [vmem:[%s219 + $0x60] sm:$0xff]
      %v239 = vld [vmem:[%s219 + $0x68] sm:$0xff]
      %v240 = vld [vmem:[%s219 + $0x70] sm:$0xff]
      %v241 = vld [vmem:[%s219 + $0x78] sm:$0xff]
      %v242 = vld [vmem:[%s219 + $0x80] sm:$0xff]
      %v243 = vld [vmem:[%s219 + $0x88] sm:$0xff]
      %v244 = vld [vmem:[%s219 + $0x90] sm:$0xff]
      %v245 = vld [vmem:[%s219 + $0x98] sm:$0xff]
      %v246 = vld [vmem:[%s219 + $0xa0] sm:$0xff]
      %v247 = vld [vmem:[%s219 + $0xa8] sm:$0xff]
      %v248 = vld [vmem:[%s219 + $0xb0] sm:$0xff]
      %v249 = vld [vmem:[%s219 + $0xb8] sm:$0xff]
      %v250 = vld [vmem:[%s219 + $0xc0] sm:$0xff]
      %v251 = vld [vmem:[%s219 + $0xc8] sm:$0xff]
      %v252 = vld [vmem:[%s219 + $0xd0] sm:$0xff]
      %v253 = vld [vmem:[%s219 + $0xd8] sm:$0xff]
      %v254 = vld [vmem:[%s219 + $0xe0] sm:$0xff]
      %v255 = vld [vmem:[%s219 + $0xe8] sm:$0xff]
      %v256 = vld [vmem:[%s219 + $0xf0] sm:$0xff]
      %v257 = vld [vmem:[%s219 + $0xf8] sm:$0xff]
      %v258 = vld [vmem:[%s219 + $0x100] sm:$0xff]
      %v259 = vld [vmem:[%s219 + $0x108] sm:$0xff]
      %v260 = vld [vmem:[%s219 + $0x110] sm:$0xff]
      %v261 = vld [vmem:[%s219 + $0x118] sm:$0xff]
      %v262 = vld [vmem:[%s219 + $0x120] sm:$0xff]
      %v263 = vld [vmem:[%s219 + $0x128] sm:$0xff]
      %v264 = vld [vmem:[%s219 + $0x130] sm:$0xff]
      %v265 = vld [vmem:[%s219 + $0x138] sm:$0xff]
      %v266 = vld [vmem:[%s219 + $0x140] sm:$0xff]
      %v267 = vld [vmem:[%s219 + $0x148] sm:$0xff]
      %v268 = vld [vmem:[%s219 + $0x150] sm:$0xff]
      %v269 = vld [vmem:[%s219 + $0x158] sm:$0xff]
      %v270 = vld [vmem:[%s219 + $0x160] sm:$0xff]
      %v271 = vld [vmem:[%s219 + $0x168] sm:$0xff]
      %v272 = vld [vmem:[%s219 + $0x170] sm:$0xff]
      %v273 = vld [vmem:[%s219 + $0x178] sm:$0xff]
      %v274 = vld [vmem:[%s219 + $0x180] sm:$0xff]
      %v275 = vld [vmem:[%s219 + $0x188] sm:$0xff]
      %v276 = vld [vmem:[%s219 + $0x190] sm:$0xff]
      %v277 = vld [vmem:[%s219 + $0x198] sm:$0xff]
      %v278 = vld [vmem:[%s219 + $0x1a0] sm:$0xff]
      %v279 = vld [vmem:[%s219 + $0x1a8] sm:$0xff]
      %v280 = vld [vmem:[%s219 + $0x1b0] sm:$0xff]
      %v281 = vld [vmem:[%s219 + $0x1b8] sm:$0xff]
      %v282 = vld [vmem:[%s219 + $0x1c0] sm:$0xff]
      %v283 = vld [vmem:[%s219 + $0x1c8] sm:$0xff]
      %v284 = vld [vmem:[%s219 + $0x1d0] sm:$0xff]
      %v285 = vld [vmem:[%s219 + $0x1d8] sm:$0xff]
      %v286 = vld [vmem:[%s219 + $0x1e0] sm:$0xff]
      %v287 = vld [vmem:[%s219 + $0x1e8] sm:$0xff]
      %v288 = vld [vmem:[%s219 + $0x1f0] sm:$0xff]
      %v289 = vld [vmem:[%s219 + $0x1f8] sm:$0xff]
      %v290 = vld [vmem:[%s219 + $0x200] sm:$0xff]
      %v291 = vld [vmem:[%s219 + $0x208] sm:$0xff]
      %v292 = vld [vmem:[%s219 + $0x210] sm:$0xff]
      %v293 = vld [vmem:[%s219 + $0x218] sm:$0xff]
      %v294 = vld [vmem:[%s219 + $0x220] sm:$0xff]
      %v295 = vld [vmem:[%s219 + $0x228] sm:$0xff]
      %v296 = vld [vmem:[%s219 + $0x230] sm:$0xff]
      %v297 = vld [vmem:[%s219 + $0x238] sm:$0xff]
      %v298 = vld [vmem:[%s219 + $0x240] sm:$0xff]
      %v299 = vld [vmem:[%s219 + $0x248] sm:$0xff]
      %v300 = vld [vmem:[%s219 + $0x250] sm:$0xff]
      %v301 = vld [vmem:[%s219 + $0x258] sm:$0xff]
      %v302 = vld [vmem:[%s219 + $0x260] sm:$0xff]
      %v303 = vld [vmem:[%s219 + $0x268] sm:$0xff]
      %v304 = vld [vmem:[%s219 + $0x270] sm:$0xff]
      %v305 = vld [vmem:[%s219 + $0x278] sm:$0xff]
      %v306 = vld [vmem:[%s219 + $0x280] sm:$0xff]
      %v307 = vld [vmem:[%s219 + $0x288] sm:$0xff]
      %v308 = vld [vmem:[%s219 + $0x290] sm:$0xff]
      %v309 = vld [vmem:[%s219 + $0x298] sm:$0xff]
      %v310 = vld [vmem:[%s219 + $0x2a0] sm:$0xff]
      %v311 = vld [vmem:[%s219 + $0x2a8] sm:$0xff]
      %v312 = vld [vmem:[%s219 + $0x2b0] sm:$0xff]
      %v313 = vld [vmem:[%s219 + $0x2b8] sm:$0xff]
      %v314 = vld [vmem:[%s219 + $0x2c0] sm:$0xff]
      %v315 = vld [vmem:[%s219 + $0x2c8] sm:$0xff]
      %v316 = vld [vmem:[%s219 + $0x2d0] sm:$0xff]
      %v317 = vld [vmem:[%s219 + $0x2d8] sm:$0xff]
      %v318 = vld [vmem:[%s219 + $0x2e0] sm:$0xff]
      %v319 = vld [vmem:[%s219 + $0x2e8] sm:$0xff]
      %v320 = vld [vmem:[%s219 + $0x2f0] sm:$0xff]
      %v321 = vld [vmem:[%s219 + $0x2f8] sm:$0xff]
      %v322 = vld [vmem:[%s1] sm:$0xf]
      %v323 = vld [vmem:[%s1 + $0x4] sm:$0xf]
      %v324 = vld [vmem:[%s1 + $0x8] sm:$0xf]
      %v325 = vld [vmem:[%s1 + $0xc] sm:$0xf]
      %v326 = vld [vmem:[%s1 + $0x10] sm:$0xf]
      %v327 = vld [vmem:[%s1 + $0x14] sm:$0xf]
      %v328 = vld [vmem:[%s1 + $0x18] sm:$0xf]
      %v329 = vld [vmem:[%s1 + $0x1c] sm:$0xf]
      %v330 = vld [vmem:[%s1 + $0x20] sm:$0xf]
      %v331 = vld [vmem:[%s1 + $0x24] sm:$0xf]
      %v332 = vld [vmem:[%s1 + $0x28] sm:$0xf]
      %v333 = vld [vmem:[%s1 + $0x2c] sm:$0xf]
      %v334 = vld [vmem:[%s1 + $0x30] sm:$0xf]
      %v335 = vld [vmem:[%s1 + $0x34] sm:$0xf]
      %v336 = vld [vmem:[%s1 + $0x38] sm:$0xf]
      %v337 = vld [vmem:[%s1 + $0x3c] sm:$0xf]
      %v338 = vld [vmem:[%s1 + $0x40] sm:$0xf]
      %v339 = vld [vmem:[%s1 + $0x44] sm:$0xf]
      %v340 = vld [vmem:[%s1 + $0x48] sm:$0xf]
      %v341 = vld [vmem:[%s1 + $0x4c] sm:$0xf]
      %v342 = vld [vmem:[%s1 + $0x50] sm:$0xf]
      %v343 = vld [vmem:[%s1 + $0x54] sm:$0xf]
      %v344 = vld [vmem:[%s1 + $0x58] sm:$0xf]
      %v345 = vld [vmem:[%s1 + $0x5c] sm:$0xf]
      %v346 = vld [vmem:[%s1 + $0x60] sm:$0xf]
      %v347 = vld [vmem:[%s1 + $0x64] sm:$0xf]
      %v348 = vld [vmem:[%s1 + $0x68] sm:$0xf]
      %v349 = vld [vmem:[%s1 + $0x6c] sm:$0xf]
      %v350 = vld [vmem:[%s1 + $0x70] sm:$0xf]
      %v351 = vld [vmem:[%s1 + $0x74] sm:$0xf]
      %v352 = vld [vmem:[%s1 + $0x78] sm:$0xf]
      %v353 = vld [vmem:[%s1 + $0x7c] sm:$0xf]
      %v354 = vld [vmem:[%s1 + $0x80] sm:$0xf]
      %v355 = vld [vmem:[%s1 + $0x84] sm:$0xf]
      %v356 = vld [vmem:[%s1 + $0x88] sm:$0xf]
      %v357 = vld [vmem:[%s1 + $0x8c] sm:$0xf]
      %v358 = vld [vmem:[%s1 + $0x90] sm:$0xf]
      %v359 = vld [vmem:[%s1 + $0x94] sm:$0xf]
      %v360 = vld [vmem:[%s1 + $0x98] sm:$0xf]
      %v361 = vld [vmem:[%s1 + $0x9c] sm:$0xf]
      %v362 = vld [vmem:[%s1 + $0xa0] sm:$0xf]
      %v363 = vld [vmem:[%s1 + $0xa4] sm:$0xf]
      %v364 = vld [vmem:[%s1 + $0xa8] sm:$0xf]
      %v365 = vld [vmem:[%s1 + $0xac] sm:$0xf]
      %v366 = vld [vmem:[%s1 + $0xb0] sm:$0xf]
      %v367 = vld [vmem:[%s1 + $0xb4] sm:$0xf]
      %v368 = vld [vmem:[%s1 + $0xb8] sm:$0xf]
      %v369 = vld [vmem:[%s1 + $0xbc] sm:$0xf]
      %v370 = vld [vmem:[%s1 + $0xc0] sm:$0xf]
      %v371 = vld [vmem:[%s1 + $0xc4] sm:$0xf]
      %v372 = vld [vmem:[%s1 + $0xc8] sm:$0xf]
      %v373 = vld [vmem:[%s1 + $0xcc] sm:$0xf]
      %v374 = vld [vmem:[%s1 + $0xd0] sm:$0xf]
      %v375 = vld [vmem:[%s1 + $0xd4] sm:$0xf]
      %v376 = vld [vmem:[%s1 + $0xd8] sm:$0xf]
      %v377 = vld [vmem:[%s1 + $0xdc] sm:$0xf]
      %v378 = vld [vmem:[%s1 + $0xe0] sm:$0xf]
      %v379 = vld [vmem:[%s1 + $0xe4] sm:$0xf]
      %v380 = vld [vmem:[%s1 + $0xe8] sm:$0xf]
      %v381 = vld [vmem:[%s1 + $0xec] sm:$0xf]
      %v382 = vld [vmem:[%s1 + $0xf0] sm:$0xf]
      %v383 = vld [vmem:[%s1 + $0xf4] sm:$0xf]
      %v384 = vld [vmem:[%s1 + $0xf8] sm:$0xf]
      %v385 = vld [vmem:[%s1 + $0xfc] sm:$0xf]
      %v386 = vld [vmem:[%s1 + $0x100] sm:$0xf]
      %v387 = vld [vmem:[%s1 + $0x104] sm:$0xf]
      %v388 = vld [vmem:[%s1 + $0x108] sm:$0xf]
      %v389 = vld [vmem:[%s1 + $0x10c] sm:$0xf]
      %v390 = vld [vmem:[%s1 + $0x110] sm:$0xf]
      %v391 = vld [vmem:[%s1 + $0x114] sm:$0xf]
      %v392 = vld [vmem:[%s1 + $0x118] sm:$0xf]
      %v393 = vld [vmem:[%s1 + $0x11c] sm:$0xf]
      %v394 = vld [vmem:[%s1 + $0x120] sm:$0xf]
      %v395 = vld [vmem:[%s1 + $0x124] sm:$0xf]
      %v396 = vld [vmem:[%s1 + $0x128] sm:$0xf]
      %v397 = vld [vmem:[%s1 + $0x12c] sm:$0xf]
      %v398 = vld [vmem:[%s1 + $0x130] sm:$0xf]
      %v399 = vld [vmem:[%s1 + $0x134] sm:$0xf]
      %v400 = vld [vmem:[%s1 + $0x138] sm:$0xf]
      %v401 = vld [vmem:[%s1 + $0x13c] sm:$0xf]
      %v402 = vld [vmem:[%s1 + $0x140] sm:$0xf]
      %v403 = vld [vmem:[%s1 + $0x144] sm:$0xf]
      %v404 = vld [vmem:[%s1 + $0x148] sm:$0xf]
      %v405 = vld [vmem:[%s1 + $0x14c] sm:$0xf]
      %v406 = vld [vmem:[%s1 + $0x150] sm:$0xf]
      %v407 = vld [vmem:[%s1 + $0x154] sm:$0xf]
      %v408 = vld [vmem:[%s1 + $0x158] sm:$0xf]
      %v409 = vld [vmem:[%s1 + $0x15c] sm:$0xf]
      %v410 = vld [vmem:[%s1 + $0x160] sm:$0xf]
      %v411 = vld [vmem:[%s1 + $0x164] sm:$0xf]
      %v412 = vld [vmem:[%s1 + $0x168] sm:$0xf]
      %v413 = vld [vmem:[%s1 + $0x16c] sm:$0xf]
      %v510 = vunpack.c.l.b16 %v226
      %v511 = vunpack.c.h.b16 %v226
      %v512 = vunpack.c.l.b16 %v227
      %v513 = vunpack.c.h.b16 %v227
      %v514 = vunpack.c.l.b16 %v228
      %v515 = vunpack.c.h.b16 %v228
      %v516 = vunpack.c.l.b16 %v229
      %v517 = vunpack.c.h.b16 %v229
      %v518 = vunpack.c.l.b16 %v230
      %v519 = vunpack.c.h.b16 %v230
      %v520 = vunpack.c.l.b16 %v231
      %v521 = vunpack.c.h.b16 %v231
      %v522 = vunpack.c.l.b16 %v232
      %v523 = vunpack.c.h.b16 %v232
      %v524 = vunpack.c.l.b16 %v233
      %v525 = vunpack.c.h.b16 %v233
      %v526 = vunpack.c.l.b16 %v234
      %v527 = vunpack.c.h.b16 %v234
      %v528 = vunpack.c.l.b16 %v235
      %v529 = vunpack.c.h.b16 %v235
      %v530 = vunpack.c.l.b16 %v236
      %v531 = vunpack.c.h.b16 %v236
      %v532 = vunpack.c.l.b16 %v237
      %v533 = vunpack.c.h.b16 %v237
      %v534 = vunpack.c.l.b16 %v238
      %v535 = vunpack.c.h.b16 %v238
      %v536 = vunpack.c.l.b16 %v239
      %v537 = vunpack.c.h.b16 %v239
      %v538 = vunpack.c.l.b16 %v240
      %v539 = vunpack.c.h.b16 %v240
      %v540 = vunpack.c.l.b16 %v241
      %v541 = vunpack.c.h.b16 %v241
      %v542 = vunpack.c.l.b16 %v242
      %v543 = vunpack.c.h.b16 %v242
      %v544 = vunpack.c.l.b16 %v243
      %v545 = vunpack.c.h.b16 %v243
      %v546 = vunpack.c.l.b16 %v244
      %v547 = vunpack.c.h.b16 %v244
      %v548 = vunpack.c.l.b16 %v245
      %v549 = vunpack.c.h.b16 %v245
      %v550 = vunpack.c.l.b16 %v246
      %v551 = vunpack.c.h.b16 %v246
      %v552 = vunpack.c.l.b16 %v247
      %v553 = vunpack.c.h.b16 %v247
      %v554 = vunpack.c.l.b16 %v248
      %v555 = vunpack.c.h.b16 %v248
      %v556 = vunpack.c.l.b16 %v249
      %v557 = vunpack.c.h.b16 %v249
      %v558 = vunpack.c.l.b16 %v250
      %v559 = vunpack.c.h.b16 %v250
      %v560 = vunpack.c.l.b16 %v251
      %v561 = vunpack.c.h.b16 %v251
      %v562 = vunpack.c.l.b16 %v252
      %v563 = vunpack.c.h.b16 %v252
      %v564 = vunpack.c.l.b16 %v253
      %v565 = vunpack.c.h.b16 %v253
      %v566 = vunpack.c.l.b16 %v254
      %v567 = vunpack.c.h.b16 %v254
      %v568 = vunpack.c.l.b16 %v255
      %v569 = vunpack.c.h.b16 %v255
      %v570 = vunpack.c.l.b16 %v256
      %v571 = vunpack.c.h.b16 %v256
      %v572 = vunpack.c.l.b16 %v257
      %v573 = vunpack.c.h.b16 %v257
      %v574 = vunpack.c.l.b16 %v258
      %v575 = vunpack.c.h.b16 %v258
      %v576 = vunpack.c.l.b16 %v259
      %v577 = vunpack.c.h.b16 %v259
      %v578 = vunpack.c.l.b16 %v260
      %v579 = vunpack.c.h.b16 %v260
      %v580 = vunpack.c.l.b16 %v261
      %v581 = vunpack.c.h.b16 %v261
      %v582 = vunpack.c.l.b16 %v262
      %v583 = vunpack.c.h.b16 %v262
      %v584 = vunpack.c.l.b16 %v263
      %v585 = vunpack.c.h.b16 %v263
      %v586 = vunpack.c.l.b16 %v264
      %v587 = vunpack.c.h.b16 %v264
      %v588 = vunpack.c.l.b16 %v265
      %v589 = vunpack.c.h.b16 %v265
      %v590 = vunpack.c.l.b16 %v266
      %v591 = vunpack.c.h.b16 %v266
      %v592 = vunpack.c.l.b16 %v267
      %v593 = vunpack.c.h.b16 %v267
      %v594 = vunpack.c.l.b16 %v268
      %v595 = vunpack.c.h.b16 %v268
      %v596 = vunpack.c.l.b16 %v269
      %v597 = vunpack.c.h.b16 %v269
      %v598 = vunpack.c.l.b16 %v270
      %v599 = vunpack.c.h.b16 %v270
      %v600 = vunpack.c.l.b16 %v271
      %v601 = vunpack.c.h.b16 %v271
      %v602 = vunpack.c.l.b16 %v272
      %v603 = vunpack.c.h.b16 %v272
      %v604 = vunpack.c.l.b16 %v273
      %v605 = vunpack.c.h.b16 %v273
      %v606 = vunpack.c.l.b16 %v274
      %v607 = vunpack.c.h.b16 %v274
      %v608 = vunpack.c.l.b16 %v275
      %v609 = vunpack.c.h.b16 %v275
      %v610 = vunpack.c.l.b16 %v276
      %v611 = vunpack.c.h.b16 %v276
      %v612 = vunpack.c.l.b16 %v277
      %v613 = vunpack.c.h.b16 %v277
      %v614 = vunpack.c.l.b16 %v278
      %v615 = vunpack.c.h.b16 %v278
      %v616 = vunpack.c.l.b16 %v279
      %v617 = vunpack.c.h.b16 %v279
      %v618 = vunpack.c.l.b16 %v280
      %v619 = vunpack.c.h.b16 %v280
      %v620 = vunpack.c.l.b16 %v281
      %v621 = vunpack.c.h.b16 %v281
      %v622 = vunpack.c.l.b16 %v282
      %v623 = vunpack.c.h.b16 %v282
      %v624 = vunpack.c.l.b16 %v283
      %v625 = vunpack.c.h.b16 %v283
      %v626 = vunpack.c.l.b16 %v284
      %v627 = vunpack.c.h.b16 %v284
      %v628 = vunpack.c.l.b16 %v285
      %v629 = vunpack.c.h.b16 %v285
      %v630 = vunpack.c.l.b16 %v286
      %v631 = vunpack.c.h.b16 %v286
      %v632 = vunpack.c.l.b16 %v287
      %v633 = vunpack.c.h.b16 %v287
      %v634 = vunpack.c.l.b16 %v288
      %v635 = vunpack.c.h.b16 %v288
      %v636 = vunpack.c.l.b16 %v289
      %v637 = vunpack.c.h.b16 %v289
      %v638 = vunpack.c.l.b16 %v290
      %v639 = vunpack.c.h.b16 %v290
      %v640 = vunpack.c.l.b16 %v291
      %v641 = vunpack.c.h.b16 %v291
      %v642 = vunpack.c.l.b16 %v292
      %v643 = vunpack.c.h.b16 %v292
      %v644 = vunpack.c.l.b16 %v293
      %v645 = vunpack.c.h.b16 %v293
      %v646 = vunpack.c.l.b16 %v294
      %v647 = vunpack.c.h.b16 %v294
      %v648 = vunpack.c.l.b16 %v295
      %v649 = vunpack.c.h.b16 %v295
      %v650 = vunpack.c.l.b16 %v296
      %v651 = vunpack.c.h.b16 %v296
      %v652 = vunpack.c.l.b16 %v297
      %v653 = vunpack.c.h.b16 %v297
      %v654 = vunpack.c.l.b16 %v298
      %v655 = vunpack.c.h.b16 %v298
      %v656 = vunpack.c.l.b16 %v299
      %v657 = vunpack.c.h.b16 %v299
      %v658 = vunpack.c.l.b16 %v300
      %v659 = vunpack.c.h.b16 %v300
      %v660 = vunpack.c.l.b16 %v301
      %v661 = vunpack.c.h.b16 %v301
      %v662 = vunpack.c.l.b16 %v302
      %v663 = vunpack.c.h.b16 %v302
      %v664 = vunpack.c.l.b16 %v303
      %v665 = vunpack.c.h.b16 %v303
      %v666 = vunpack.c.l.b16 %v304
      %v667 = vunpack.c.h.b16 %v304
      %v668 = vunpack.c.l.b16 %v305
      %v669 = vunpack.c.h.b16 %v305
      %v670 = vunpack.c.l.b16 %v306
      %v671 = vunpack.c.h.b16 %v306
      %v672 = vunpack.c.l.b16 %v307
      %v673 = vunpack.c.h.b16 %v307
      %v674 = vunpack.c.l.b16 %v308
      %v675 = vunpack.c.h.b16 %v308
      %v676 = vunpack.c.l.b16 %v309
      %v677 = vunpack.c.h.b16 %v309
      %v678 = vunpack.c.l.b16 %v310
      %v679 = vunpack.c.h.b16 %v310
      %v680 = vunpack.c.l.b16 %v311
      %v681 = vunpack.c.h.b16 %v311
      %v682 = vunpack.c.l.b16 %v312
      %v683 = vunpack.c.h.b16 %v312
      %v684 = vunpack.c.l.b16 %v313
      %v685 = vunpack.c.h.b16 %v313
      %v686 = vunpack.c.l.b16 %v314
      %v687 = vunpack.c.h.b16 %v314
      %v688 = vunpack.c.l.b16 %v315
      %v689 = vunpack.c.h.b16 %v315
      %v690 = vunpack.c.l.b16 %v316
      %v691 = vunpack.c.h.b16 %v316
      %v692 = vunpack.c.l.b16 %v317
      %v693 = vunpack.c.h.b16 %v317
      %v694 = vunpack.c.l.b16 %v318
      %v695 = vunpack.c.h.b16 %v318
      %v696 = vunpack.c.l.b16 %v319
      %v697 = vunpack.c.h.b16 %v319
      %v698 = vunpack.c.l.b16 %v320
      %v699 = vunpack.c.h.b16 %v320
      %v700 = vunpack.c.l.b16 %v321
      %v701 = vunpack.c.h.b16 %v321
      %v702 = vpack.c.b16 %v516, %v510
      %v703 = vpack.c.b16 %v517, %v511
      %v704 = vpack.c.b16 %v518, %v512
      %v705 = vpack.c.b16 %v519, %v513
      %v706 = vpack.c.b16 %v520, %v514
      %v707 = vpack.c.b16 %v521, %v515
      %v708 = vpack.c.b16 %v528, %v522
      %v709 = vpack.c.b16 %v529, %v523
      %v710 = vpack.c.b16 %v530, %v524
      %v711 = vpack.c.b16 %v531, %v525
      %v712 = vpack.c.b16 %v532, %v526
      %v713 = vpack.c.b16 %v533, %v527
      %v714 = vpack.c.b16 %v540, %v534
      %v715 = vpack.c.b16 %v541, %v535
      %v716 = vpack.c.b16 %v542, %v536
      %v717 = vpack.c.b16 %v543, %v537
      %v718 = vpack.c.b16 %v544, %v538
      %v719 = vpack.c.b16 %v545, %v539
      %v720 = vpack.c.b16 %v552, %v546
      %v721 = vpack.c.b16 %v553, %v547
      %v722 = vpack.c.b16 %v554, %v548
      %v723 = vpack.c.b16 %v555, %v549
      %v724 = vpack.c.b16 %v556, %v550
      %v725 = vpack.c.b16 %v557, %v551
      %v726 = vpack.c.b16 %v564, %v558
      %v727 = vpack.c.b16 %v565, %v559
      %v728 = vpack.c.b16 %v566, %v560
      %v729 = vpack.c.b16 %v567, %v561
      %v730 = vpack.c.b16 %v568, %v562
      %v731 = vpack.c.b16 %v569, %v563
      %v732 = vpack.c.b16 %v576, %v570
      %v733 = vpack.c.b16 %v577, %v571
      %v734 = vpack.c.b16 %v578, %v572
      %v735 = vpack.c.b16 %v579, %v573
      %v736 = vpack.c.b16 %v580, %v574
      %v737 = vpack.c.b16 %v581, %v575
      %v738 = vpack.c.b16 %v588, %v582
      %v739 = vpack.c.b16 %v589, %v583
      %v740 = vpack.c.b16 %v590, %v584
      %v741 = vpack.c.b16 %v591, %v585
      %v742 = vpack.c.b16 %v592, %v586
      %v743 = vpack.c.b16 %v593, %v587
      %v744 = vpack.c.b16 %v600, %v594
      %v745 = vpack.c.b16 %v601, %v595
      %v746 = vpack.c.b16 %v602, %v596
      %v747 = vpack.c.b16 %v603, %v597
      %v748 = vpack.c.b16 %v604, %v598
      %v749 = vpack.c.b16 %v605, %v599
      %v750 = vpack.c.b16 %v612, %v606
      %v751 = vpack.c.b16 %v613, %v607
      %v752 = vpack.c.b16 %v614, %v608
      %v753 = vpack.c.b16 %v615, %v609
      %v754 = vpack.c.b16 %v616, %v610
      %v755 = vpack.c.b16 %v617, %v611
      %v756 = vpack.c.b16 %v624, %v618
      %v757 = vpack.c.b16 %v625, %v619
      %v758 = vpack.c.b16 %v626, %v620
      %v759 = vpack.c.b16 %v627, %v621
      %v760 = vpack.c.b16 %v628, %v622
      %v761 = vpack.c.b16 %v629, %v623
      %v762 = vpack.c.b16 %v636, %v630
      %v763 = vpack.c.b16 %v637, %v631
      %v764 = vpack.c.b16 %v638, %v632
      %v765 = vpack.c.b16 %v639, %v633
      %v766 = vpack.c.b16 %v640, %v634
      %v767 = vpack.c.b16 %v641, %v635
      %v768 = vpack.c.b16 %v648, %v642
      %v769 = vpack.c.b16 %v649, %v643
      %v770 = vpack.c.b16 %v650, %v644
      %v771 = vpack.c.b16 %v651, %v645
      %v772 = vpack.c.b16 %v652, %v646
      %v773 = vpack.c.b16 %v653, %v647
      %v774 = vpack.c.b16 %v660, %v654
      %v775 = vpack.c.b16 %v661, %v655
      %v776 = vpack.c.b16 %v662, %v656
      %v777 = vpack.c.b16 %v663, %v657
      %v778 = vpack.c.b16 %v664, %v658
      %v779 = vpack.c.b16 %v665, %v659
      %v780 = vpack.c.b16 %v672, %v666
      %v781 = vpack.c.b16 %v673, %v667
      %v782 = vpack.c.b16 %v674, %v668
      %v783 = vpack.c.b16 %v675, %v669
      %v784 = vpack.c.b16 %v676, %v670
      %v785 = vpack.c.b16 %v677, %v671
      %v786 = vpack.c.b16 %v684, %v678
      %v787 = vpack.c.b16 %v685, %v679
      %v788 = vpack.c.b16 %v686, %v680
      %v789 = vpack.c.b16 %v687, %v681
      %v790 = vpack.c.b16 %v688, %v682
      %v791 = vpack.c.b16 %v689, %v683
      %v792 = vpack.c.b16 %v696, %v690
      %v793 = vpack.c.b16 %v697, %v691
      %v794 = vpack.c.b16 %v698, %v692
      %v795 = vpack.c.b16 %v699, %v693
      %v796 = vpack.c.b16 %v700, %v694
      %v797 = vpack.c.b16 %v701, %v695
      %v970 = vunpack.c.l.b16 %v322
      %v971 = vunpack.c.l.b16 %v323
      %v972 = vunpack.c.l.b16 %v324
      %v973 = vunpack.c.l.b16 %v325
      %v974 = vunpack.c.l.b16 %v326
      %v975 = vunpack.c.l.b16 %v327
      %v976 = vunpack.c.l.b16 %v328
      %v977 = vunpack.c.l.b16 %v329
      %v978 = vunpack.c.l.b16 %v330
      %v979 = vunpack.c.l.b16 %v331
      %v980 = vunpack.c.l.b16 %v332
      %v981 = vunpack.c.l.b16 %v333
      %v982 = vunpack.c.l.b16 %v334
      %v983 = vunpack.c.l.b16 %v335
      %v984 = vunpack.c.l.b16 %v336
      %v985 = vunpack.c.l.b16 %v337
      %v986 = vunpack.c.l.b16 %v338
      %v987 = vunpack.c.l.b16 %v339
      %v988 = vunpack.c.l.b16 %v340
      %v989 = vunpack.c.l.b16 %v341
      %v990 = vunpack.c.l.b16 %v342
      %v991 = vunpack.c.l.b16 %v343
      %v992 = vunpack.c.l.b16 %v344
      %v993 = vunpack.c.l.b16 %v345
      %v994 = vunpack.c.l.b16 %v346
      %v995 = vunpack.c.l.b16 %v347
      %v996 = vunpack.c.l.b16 %v348
      %v997 = vunpack.c.l.b16 %v349
      %v998 = vunpack.c.l.b16 %v350
      %v999 = vunpack.c.l.b16 %v351
      %v1000 = vunpack.c.l.b16 %v352
      %v1001 = vunpack.c.l.b16 %v353
      %v1002 = vunpack.c.l.b16 %v354
      %v1003 = vunpack.c.l.b16 %v355
      %v1004 = vunpack.c.l.b16 %v356
      %v1005 = vunpack.c.l.b16 %v357
      %v1006 = vunpack.c.l.b16 %v358
      %v1007 = vunpack.c.l.b16 %v359
      %v1008 = vunpack.c.l.b16 %v360
      %v1009 = vunpack.c.l.b16 %v361
      %v1010 = vunpack.c.l.b16 %v362
      %v1011 = vunpack.c.l.b16 %v363
      %v1012 = vunpack.c.l.b16 %v364
      %v1013 = vunpack.c.l.b16 %v365
      %v1014 = vunpack.c.l.b16 %v366
      %v1015 = vunpack.c.l.b16 %v367
      %v1016 = vunpack.c.l.b16 %v368
      %v1017 = vunpack.c.l.b16 %v369
      %v1018 = vunpack.c.l.b16 %v370
      %v1019 = vunpack.c.l.b16 %v371
      %v1020 = vunpack.c.l.b16 %v372
      %v1021 = vunpack.c.l.b16 %v373
      %v1022 = vunpack.c.l.b16 %v374
      %v1023 = vunpack.c.l.b16 %v375
      %v1024 = vunpack.c.l.b16 %v376
      %v1025 = vunpack.c.l.b16 %v377
      %v1026 = vunpack.c.l.b16 %v378
      %v1027 = vunpack.c.l.b16 %v379
      %v1028 = vunpack.c.l.b16 %v380
      %v1029 = vunpack.c.l.b16 %v381
      %v1030 = vunpack.c.l.b16 %v382
      %v1031 = vunpack.c.l.b16 %v383
      %v1032 = vunpack.c.l.b16 %v384
      %v1033 = vunpack.c.l.b16 %v385
      %v1034 = vunpack.c.l.b16 %v386
      %v1035 = vunpack.c.l.b16 %v387
      %v1036 = vunpack.c.l.b16 %v388
      %v1037 = vunpack.c.l.b16 %v389
      %v1038 = vunpack.c.l.b16 %v390
      %v1039 = vunpack.c.l.b16 %v391
      %v1040 = vunpack.c.l.b16 %v392
      %v1041 = vunpack.c.l.b16 %v393
      %v1042 = vunpack.c.l.b16 %v394
      %v1043 = vunpack.c.l.b16 %v395
      %v1044 = vunpack.c.l.b16 %v396
      %v1045 = vunpack.c.l.b16 %v397
      %v1046 = vunpack.c.l.b16 %v398
      %v1047 = vunpack.c.l.b16 %v399
      %v1048 = vunpack.c.l.b16 %v400
      %v1049 = vunpack.c.l.b16 %v401
      %v1050 = vunpack.c.l.b16 %v402
      %v1051 = vunpack.c.l.b16 %v403
      %v1052 = vunpack.c.l.b16 %v404
      %v1053 = vunpack.c.l.b16 %v405
      %v1054 = vunpack.c.l.b16 %v406
      %v1055 = vunpack.c.l.b16 %v407
      %v1056 = vunpack.c.l.b16 %v408
      %v1057 = vunpack.c.l.b16 %v409
      %v1058 = vunpack.c.l.b16 %v410
      %v1059 = vunpack.c.l.b16 %v411
      %v1060 = vunpack.c.l.b16 %v412
      %v1061 = vunpack.c.l.b16 %v413
      %v1062 = vpack.c.b16 %v971, %v970
      %v1063 = vpack.c.b16 %v973, %v972
      %v1064 = vpack.c.b16 %v975, %v974
      %v1065 = vpack.c.b16 %v977, %v976
      %v1066 = vpack.c.b16 %v979, %v978
      %v1067 = vpack.c.b16 %v981, %v980
      %v1068 = vpack.c.b16 %v983, %v982
      %v1069 = vpack.c.b16 %v985, %v984
      %v1070 = vpack.c.b16 %v987, %v986
      %v1071 = vpack.c.b16 %v989, %v988
      %v1072 = vpack.c.b16 %v991, %v990
      %v1073 = vpack.c.b16 %v993, %v992
      %v1074 = vpack.c.b16 %v995, %v994
      %v1075 = vpack.c.b16 %v997, %v996
      %v1076 = vpack.c.b16 %v999, %v998
      %v1077 = vpack.c.b16 %v1001, %v1000
      %v1078 = vpack.c.b16 %v1003, %v1002
      %v1079 = vpack.c.b16 %v1005, %v1004
      %v1080 = vpack.c.b16 %v1007, %v1006
      %v1081 = vpack.c.b16 %v1009, %v1008
      %v1082 = vpack.c.b16 %v1011, %v1010
      %v1083 = vpack.c.b16 %v1013, %v1012
      %v1084 = vpack.c.b16 %v1015, %v1014
      %v1085 = vpack.c.b16 %v1017, %v1016
      %v1086 = vpack.c.b16 %v1019, %v1018
      %v1087 = vpack.c.b16 %v1021, %v1020
      %v1088 = vpack.c.b16 %v1023, %v1022
      %v1089 = vpack.c.b16 %v1025, %v1024
      %v1090 = vpack.c.b16 %v1027, %v1026
      %v1091 = vpack.c.b16 %v1029, %v1028
      %v1092 = vpack.c.b16 %v1031, %v1030
      %v1093 = vpack.c.b16 %v1033, %v1032
      %v1094 = vpack.c.b16 %v1035, %v1034
      %v1095 = vpack.c.b16 %v1037, %v1036
      %v1096 = vpack.c.b16 %v1039, %v1038
      %v1097 = vpack.c.b16 %v1041, %v1040
      %v1098 = vpack.c.b16 %v1043, %v1042
      %v1099 = vpack.c.b16 %v1045, %v1044
      %v1100 = vpack.c.b16 %v1047, %v1046
      %v1101 = vpack.c.b16 %v1049, %v1048
      %v1102 = vpack.c.b16 %v1051, %v1050
      %v1103 = vpack.c.b16 %v1053, %v1052
      %v1104 = vpack.c.b16 %v1055, %v1054
      %v1105 = vpack.c.b16 %v1057, %v1056
      %v1106 = vpack.c.b16 %v1059, %v1058
      %v1107 = vpack.c.b16 %v1061, %v1060
      %vm1153 = vcmask 777216
      %v1155 = vsel %vm1153, %v707, 0
      %v1158 = vsel %vm1153, %v713, 0
      %v1161 = vsel %vm1153, %v719, 0
      %v1164 = vsel %vm1153, %v725, 0
      %v1167 = vsel %vm1153, %v731, 0
      %v1170 = vsel %vm1153, %v737, 0
      %v1173 = vsel %vm1153, %v743, 0
      %v1176 = vsel %vm1153, %v749, 0
      %v1179 = vsel %vm1153, %v755, 0
      %v1182 = vsel %vm1153, %v761, 0
      %v1185 = vsel %vm1153, %v767, 0
      %v1188 = vsel %vm1153, %v773, 0
      %v1191 = vsel %vm1153, %v779, 0
      %v1194 = vsel %vm1153, %v785, 0
      %v1197 = vsel %vm1153, %v791, 0
      %v1200 = vsel %vm1153, %v797, 0
      %vm1202 = vcmask 1046528
      %vm1203 = vcmask 1047552
      %v1204 = vsel %vm1202, 4294967295, 65535
      %v1205 = vsel %vm1203, %v1204, 0
      %v1207 = vand.u32 %v1107, %v1205
      %1209 = vmatprep.subr.bf16.mxu0 0
      %1210 = vmatpush1.bf16.msra.mxu0 %v1062
      %1211 = vmatprep.subr.bf16.mxu0 0
      %1212 = vmatpush1.bf16.msra.mxu0 %v1063
      %1213 = vmatprep.subr.bf16.mxu0 0
      %1214 = vmatpush1.bf16.msra.mxu0 %v1064
      %1215 = vmatprep.subr.bf16.mxu0 0
      %1216 = vmatpush1.bf16.msra.mxu0 %v1065
      %1217 = vmatprep.subr.bf16.mxu0 0
      %1218 = vmatpush1.bf16.msra.mxu0 %v1066
      %1219 = vmatprep.subr.bf16.mxu0 0
      %1220 = vmatpush1.bf16.msra.mxu0 %v1067
      %1221 = vmatprep.subr.bf16.mxu0 0
      %1222 = vmatpush1.bf16.msra.mxu0 %v1068
      %1223 = vmatprep.subr.bf16.mxu0 0
      %1224 = vmatpush1.bf16.msra.mxu0 %v1069
      %1225 = vmatprep.subr.bf16.mxu0 0
      %1226 = vmatpush1.bf16.msra.mxu0 %v1070
      %1227 = vmatprep.subr.bf16.mxu0 0
      %1228 = vmatpush1.bf16.msra.mxu0 %v1071
      %1229 = vmatprep.subr.bf16.mxu0 0
      %1230 = vmatpush1.bf16.msra.mxu0 %v1072
      %1231 = vmatprep.subr.bf16.mxu0 0
      %1232 = vmatpush1.bf16.msra.mxu0 %v1073
      %1233 = vmatprep.subr.bf16.mxu0 0
      %1234 = vmatpush1.bf16.msra.mxu0 %v1074
      %1235 = vmatprep.subr.bf16.mxu0 0
      %1236 = vmatpush1.bf16.msra.mxu0 %v1075
      %1237 = vmatprep.subr.bf16.mxu0 0
      %1238 = vmatpush1.bf16.msra.mxu0 %v1076
      %1239 = vmatprep.subr.bf16.mxu0 0
      %1240 = vmatpush1.bf16.msra.mxu0 %v1077
      %1241 = vmatprep.mubr.bf16.mxu0 %v703
      %1242 = vmatmul.mubr.bf16.gmra.mrb[0].mxu0 %v702
      %v1243 = vpop.f32.mrb[0].mxu0
      %v1244 = vadd.f32 0.0, %v1243
      %v1245 = vpop.f32.mrb[0].mxu0
      %v1246 = vpop.f32.mrb[0].mxu0
      %v1247 = vadd.f32 0.0, %v1246
      %v1248 = vpop.f32.mrb[0].mxu0
      %1249 = vmatprep.mubr.bf16.mxu0 %v709
      %1250 = vmatmul.mubr.bf16.gmra.mrb[0].mxu0 %v708
      %v1251 = vpop.f32.mrb[0].mxu0
      %v1252 = vadd.f32 0.0, %v1251
      %v1253 = vpop.f32.mrb[0].mxu0
      %v1254 = vpop.f32.mrb[0].mxu0
      %v1255 = vadd.f32 0.0, %v1254
      %v1256 = vpop.f32.mrb[0].mxu0
      %1257 = vmatprep.mubr.bf16.mxu0 %v715
      %1258 = vmatmul.mubr.bf16.gmra.mrb[0].mxu0 %v714
      %v1259 = vpop.f32.mrb[0].mxu0
      %v1260 = vadd.f32 0.0, %v1259
      %v1261 = vpop.f32.mrb[0].mxu0
      %v1262 = vpop.f32.mrb[0].mxu0
      %v1263 = vadd.f32 0.0, %v1262
      %v1264 = vpop.f32.mrb[0].mxu0
      %1265 = vmatprep.mubr.bf16.mxu0 %v721
      %1266 = vmatmul.mubr.bf16.gmra.mrb[0].mxu0 %v720
      %v1267 = vpop.f32.mrb[0].mxu0
      %v1268 = vadd.f32 0.0, %v1267
      %v1269 = vpop.f32.mrb[0].mxu0
      %v1270 = vpop.f32.mrb[0].mxu0
      %v1271 = vadd.f32 0.0, %v1270
      %v1272 = vpop.f32.mrb[0].mxu0
      %1273 = vmatprep.mubr.bf16.mxu0 %v727
      %1274 = vmatmul.mubr.bf16.gmra.mrb[0].mxu0 %v726
      %v1275 = vpop.f32.mrb[0].mxu0
      %v1276 = vadd.f32 0.0, %v1275
      %v1277 = vpop.f32.mrb[0].mxu0
      %v1278 = vpop.f32.mrb[0].mxu0
      %v1279 = vadd.f32 0.0, %v1278
      %v1280 = vpop.f32.mrb[0].mxu0
      %1281 = vmatprep.mubr.bf16.mxu0 %v733
      %1282 = vmatmul.mubr.bf16.gmra.mrb[0].mxu0 %v732
      %v1283 = vpop.f32.mrb[0].mxu0
      %v1284 = vadd.f32 0.0, %v1283
      %v1285 = vpop.f32.mrb[0].mxu0
      %v1286 = vpop.f32.mrb[0].mxu0
      %v1287 = vadd.f32 0.0, %v1286
      %v1288 = vpop.f32.mrb[0].mxu0
      %1289 = vmatprep.mubr.bf16.mxu0 %v739
      %1290 = vmatmul.mubr.bf16.gmra.mrb[0].mxu0 %v738
      %v1291 = vpop.f32.mrb[0].mxu0
      %v1292 = vadd.f32 0.0, %v1291
      %v1293 = vpop.f32.mrb[0].mxu0
      %v1294 = vpop.f32.mrb[0].mxu0
      %v1295 = vadd.f32 0.0, %v1294
      %v1296 = vpop.f32.mrb[0].mxu0
      %1297 = vmatprep.mubr.bf16.mxu0 %v745
      %1298 = vmatmul.mubr.bf16.gmra.mrb[0].mxu0 %v744
      %v1299 = vpop.f32.mrb[0].mxu0
      %v1300 = vadd.f32 0.0, %v1299
      %v1301 = vpop.f32.mrb[0].mxu0
      %v1302 = vpop.f32.mrb[0].mxu0
      %v1303 = vadd.f32 0.0, %v1302
      %v1304 = vpop.f32.mrb[0].mxu0
      %1305 = vmatprep.mubr.bf16.mxu0 %v751
      %1306 = vmatmul.mubr.bf16.gmra.mrb[0].mxu0 %v750
      %v1307 = vpop.f32.mrb[0].mxu0
      %v1308 = vadd.f32 0.0, %v1307
      %v1309 = vpop.f32.mrb[0].mxu0
      %v1310 = vpop.f32.mrb[0].mxu0
      %v1311 = vadd.f32 0.0, %v1310
      %v1312 = vpop.f32.mrb[0].mxu0
      %1313 = vmatprep.mubr.bf16.mxu0 %v757
      %1314 = vmatmul.mubr.bf16.gmra.mrb[0].mxu0 %v756
      %v1315 = vpop.f32.mrb[0].mxu0
      %v1316 = vadd.f32 0.0, %v1315
      %v1317 = vpop.f32.mrb[0].mxu0
      %v1318 = vpop.f32.mrb[0].mxu0
      %v1319 = vadd.f32 0.0, %v1318
      %v1320 = vpop.f32.mrb[0].mxu0
      %1321 = vmatprep.mubr.bf16.mxu0 %v763
      %1322 = vmatmul.mubr.bf16.gmra.mrb[0].mxu0 %v762
      %v1323 = vpop.f32.mrb[0].mxu0
      %v1324 = vadd.f32 0.0, %v1323
      %v1325 = vpop.f32.mrb[0].mxu0
      %v1326 = vpop.f32.mrb[0].mxu0
      %v1327 = vadd.f32 0.0, %v1326
      %v1328 = vpop.f32.mrb[0].mxu0
      %1329 = vmatprep.mubr.bf16.mxu0 %v769
      %1330 = vmatmul.mubr.bf16.gmra.mrb[0].mxu0 %v768
      %v1331 = vpop.f32.mrb[0].mxu0
      %v1332 = vadd.f32 0.0, %v1331
      %v1333 = vpop.f32.mrb[0].mxu0
      %v1334 = vpop.f32.mrb[0].mxu0
      %v1335 = vadd.f32 0.0, %v1334
      %v1336 = vpop.f32.mrb[0].mxu0
      %1337 = vmatprep.mubr.bf16.mxu0 %v775
      %1338 = vmatmul.mubr.bf16.gmra.mrb[0].mxu0 %v774
      %v1339 = vpop.f32.mrb[0].mxu0
      %v1340 = vadd.f32 0.0, %v1339
      %v1341 = vpop.f32.mrb[0].mxu0
      %v1342 = vpop.f32.mrb[0].mxu0
      %v1343 = vadd.f32 0.0, %v1342
      %v1344 = vpop.f32.mrb[0].mxu0
      %1345 = vmatprep.mubr.bf16.mxu0 %v781
      %1346 = vmatmul.mubr.bf16.gmra.mrb[0].mxu0 %v780
      %v1347 = vpop.f32.mrb[0].mxu0
      %v1348 = vadd.f32 0.0, %v1347
      %v1349 = vpop.f32.mrb[0].mxu0
      %v1350 = vpop.f32.mrb[0].mxu0
      %v1351 = vadd.f32 0.0, %v1350
      %v1352 = vpop.f32.mrb[0].mxu0
      %1353 = vmatprep.mubr.bf16.mxu0 %v787
      %1354 = vmatmul.mubr.bf16.gmra.mrb[0].mxu0 %v786
      %v1355 = vpop.f32.mrb[0].mxu0
      %v1356 = vadd.f32 0.0, %v1355
      %v1357 = vpop.f32.mrb[0].mxu0
      %v1358 = vpop.f32.mrb[0].mxu0
      %v1359 = vadd.f32 0.0, %v1358
      %v1360 = vpop.f32.mrb[0].mxu0
      %1361 = vmatprep.mubr.bf16.mxu0 %v793
      %1362 = vmatmul.mubr.bf16.gmra.mrb[0].mxu0 %v792
      %v1363 = vpop.f32.mrb[0].mxu0
      %v1364 = vadd.f32 0.0, %v1363
      %v1365 = vpop.f32.mrb[0].mxu0
      %v1366 = vpop.f32.mrb[0].mxu0
      %v1367 = vadd.f32 0.0, %v1366
      %v1368 = vpop.f32.mrb[0].mxu0
      %1369 = vdwg.mxu0
      %1370 = vmatprep.subr.bf16.mxu0 0
      %1371 = vmatpush1.bf16.msra.mxu0 %v1078
      %1372 = vmatprep.subr.bf16.mxu0 0
      %1373 = vmatpush1.bf16.msra.mxu0 %v1079
      %1374 = vmatprep.subr.bf16.mxu0 0
      %1375 = vmatpush1.bf16.msra.mxu0 %v1080
      %1376 = vmatprep.subr.bf16.mxu0 0
      %1377 = vmatpush1.bf16.msra.mxu0 %v1081
      %1378 = vmatprep.subr.bf16.mxu0 0
      %1379 = vmatpush1.bf16.msra.mxu0 %v1082
      %1380 = vmatprep.subr.bf16.mxu0 0
      %1381 = vmatpush1.bf16.msra.mxu0 %v1083
      %1382 = vmatprep.subr.bf16.mxu0 0
      %1383 = vmatpush1.bf16.msra.mxu0 %v1084
      %1384 = vmatprep.subr.bf16.mxu0 0
      %1385 = vmatpush1.bf16.msra.mxu0 %v1085
      %1386 = vmatprep.subr.bf16.mxu0 0
      %1387 = vmatpush1.bf16.msra.mxu0 %v1086
      %1388 = vmatprep.subr.bf16.mxu0 0
      %1389 = vmatpush1.bf16.msra.mxu0 %v1087
      %1390 = vmatprep.subr.bf16.mxu0 0
      %1391 = vmatpush1.bf16.msra.mxu0 %v1088
      %1392 = vmatprep.subr.bf16.mxu0 0
      %1393 = vmatpush1.bf16.msra.mxu0 %v1089
      %1394 = vmatprep.subr.bf16.mxu0 0
      %1395 = vmatpush1.bf16.msra.mxu0 %v1090
      %1396 = vmatprep.subr.bf16.mxu0 0
      %1397 = vmatpush1.bf16.msra.mxu0 %v1091
      %1398 = vmatprep.subr.bf16.mxu0 0
      %1399 = vmatpush1.bf16.msra.mxu0 %v1092
      %1400 = vmatprep.subr.bf16.mxu0 0
      %1401 = vmatpush1.bf16.msra.mxu0 %v1093
      %1402 = vmatprep.mubr.bf16.mxu0 %v705
      %1403 = vmatmul.mubr.bf16.gmra.mrb[0].mxu0 %v704
      %v1404 = vpop.f32.mrb[0].mxu0
      %v1405 = vadd.f32 %v1244, %v1404
      %v1406 = vpop.f32.mrb[0].mxu0
      %v1407 = vpop.f32.mrb[0].mxu0
      %v1408 = vadd.f32 %v1247, %v1407
      %v1409 = vpop.f32.mrb[0].mxu0
      %1410 = vmatprep.mubr.bf16.mxu0 %v711
      %1411 = vmatmul.mubr.bf16.gmra.mrb[0].mxu0 %v710
      %v1412 = vpop.f32.mrb[0].mxu0
      %v1413 = vadd.f32 %v1252, %v1412
      %v1414 = vpop.f32.mrb[0].mxu0
      %v1415 = vpop.f32.mrb[0].mxu0
      %v1416 = vadd.f32 %v1255, %v1415
      %v1417 = vpop.f32.mrb[0].mxu0
      %1418 = vmatprep.mubr.bf16.mxu0 %v717
      %1419 = vmatmul.mubr.bf16.gmra.mrb[0].mxu0 %v716
      %v1420 = vpop.f32.mrb[0].mxu0
      %v1421 = vadd.f32 %v1260, %v1420
      %v1422 = vpop.f32.mrb[0].mxu0
      %v1423 = vpop.f32.mrb[0].mxu0
      %v1424 = vadd.f32 %v1263, %v1423
      %v1425 = vpop.f32.mrb[0].mxu0
      %1426 = vmatprep.mubr.bf16.mxu0 %v723
      %1427 = vmatmul.mubr.bf16.gmra.mrb[0].mxu0 %v722
      %v1428 = vpop.f32.mrb[0].mxu0
      %v1429 = vadd.f32 %v1268, %v1428
      %v1430 = vpop.f32.mrb[0].mxu0
      %v1431 = vpop.f32.mrb[0].mxu0
      %v1432 = vadd.f32 %v1271, %v1431
      %v1433 = vpop.f32.mrb[0].mxu0
      %1434 = vmatprep.mubr.bf16.mxu0 %v729
      %1435 = vmatmul.mubr.bf16.gmra.mrb[0].mxu0 %v728
      %v1436 = vpop.f32.mrb[0].mxu0
      %v1437 = vadd.f32 %v1276, %v1436
      %v1438 = vpop.f32.mrb[0].mxu0
      %v1439 = vpop.f32.mrb[0].mxu0
      %v1440 = vadd.f32 %v1279, %v1439
      %v1441 = vpop.f32.mrb[0].mxu0
      %1442 = vmatprep.mubr.bf16.mxu0 %v735
      %1443 = vmatmul.mubr.bf16.gmra.mrb[0].mxu0 %v734
      %v1444 = vpop.f32.mrb[0].mxu0
      %v1445 = vadd.f32 %v1284, %v1444
      %v1446 = vpop.f32.mrb[0].mxu0
      %v1447 = vpop.f32.mrb[0].mxu0
      %v1448 = vadd.f32 %v1287, %v1447
      %v1449 = vpop.f32.mrb[0].mxu0
      %1450 = vmatprep.mubr.bf16.mxu0 %v741
      %1451 = vmatmul.mubr.bf16.gmra.mrb[0].mxu0 %v740
      %v1452 = vpop.f32.mrb[0].mxu0
      %v1453 = vadd.f32 %v1292, %v1452
      %v1454 = vpop.f32.mrb[0].mxu0
      %v1455 = vpop.f32.mrb[0].mxu0
      %v1456 = vadd.f32 %v1295, %v1455
      %v1457 = vpop.f32.mrb[0].mxu0
      %1458 = vmatprep.mubr.bf16.mxu0 %v747
      %1459 = vmatmul.mubr.bf16.gmra.mrb[0].mxu0 %v746
      %v1460 = vpop.f32.mrb[0].mxu0
      %v1461 = vadd.f32 %v1300, %v1460
      %v1462 = vpop.f32.mrb[0].mxu0
      %v1463 = vpop.f32.mrb[0].mxu0
      %v1464 = vadd.f32 %v1303, %v1463
      %v1465 = vpop.f32.mrb[0].mxu0
      %1466 = vmatprep.mubr.bf16.mxu0 %v753
      %1467 = vmatmul.mubr.bf16.gmra.mrb[0].mxu0 %v752
      %v1468 = vpop.f32.mrb[0].mxu0
      %v1469 = vadd.f32 %v1308, %v1468
      %v1470 = vpop.f32.mrb[0].mxu0
      %v1471 = vpop.f32.mrb[0].mxu0
      %v1472 = vadd.f32 %v1311, %v1471
      %v1473 = vpop.f32.mrb[0].mxu0
      %1474 = vmatprep.mubr.bf16.mxu0 %v759
      %1475 = vmatmul.mubr.bf16.gmra.mrb[0].mxu0 %v758
      %v1476 = vpop.f32.mrb[0].mxu0
      %v1477 = vadd.f32 %v1316, %v1476
      %v1478 = vpop.f32.mrb[0].mxu0
      %v1479 = vpop.f32.mrb[0].mxu0
      %v1480 = vadd.f32 %v1319, %v1479
      %v1481 = vpop.f32.mrb[0].mxu0
      %1482 = vmatprep.mubr.bf16.mxu0 %v765
      %1483 = vmatmul.mubr.bf16.gmra.mrb[0].mxu0 %v764
      %v1484 = vpop.f32.mrb[0].mxu0
      %v1485 = vadd.f32 %v1324, %v1484
      %v1486 = vpop.f32.mrb[0].mxu0
      %v1487 = vpop.f32.mrb[0].mxu0
      %v1488 = vadd.f32 %v1327, %v1487
      %v1489 = vpop.f32.mrb[0].mxu0
      %1490 = vmatprep.mubr.bf16.mxu0 %v771
      %1491 = vmatmul.mubr.bf16.gmra.mrb[0].mxu0 %v770
      %v1492 = vpop.f32.mrb[0].mxu0
      %v1493 = vadd.f32 %v1332, %v1492
      %v1494 = vpop.f32.mrb[0].mxu0
      %v1495 = vpop.f32.mrb[0].mxu0
      %v1496 = vadd.f32 %v1335, %v1495
      %v1497 = vpop.f32.mrb[0].mxu0
      %1498 = vmatprep.mubr.bf16.mxu0 %v777
      %1499 = vmatmul.mubr.bf16.gmra.mrb[0].mxu0 %v776
      %v1500 = vpop.f32.mrb[0].mxu0
      %v1501 = vadd.f32 %v1340, %v1500
      %v1502 = vpop.f32.mrb[0].mxu0
      %v1503 = vpop.f32.mrb[0].mxu0
      %v1504 = vadd.f32 %v1343, %v1503
      %v1505 = vpop.f32.mrb[0].mxu0
      %1506 = vmatprep.mubr.bf16.mxu0 %v783
      %1507 = vmatmul.mubr.bf16.gmra.mrb[0].mxu0 %v782
      %v1508 = vpop.f32.mrb[0].mxu0
      %v1509 = vadd.f32 %v1348, %v1508
      %v1510 = vpop.f32.mrb[0].mxu0
      %v1511 = vpop.f32.mrb[0].mxu0
      %v1512 = vadd.f32 %v1351, %v1511
      %v1513 = vpop.f32.mrb[0].mxu0
      %1514 = vmatprep.mubr.bf16.mxu0 %v789
      %1515 = vmatmul.mubr.bf16.gmra.mrb[0].mxu0 %v788
      %v1516 = vpop.f32.mrb[0].mxu0
      %v1517 = vadd.f32 %v1356, %v1516
      %v1518 = vpop.f32.mrb[0].mxu0
      %v1519 = vpop.f32.mrb[0].mxu0
      %v1520 = vadd.f32 %v1359, %v1519
      %v1521 = vpop.f32.mrb[0].mxu0
      %1522 = vmatprep.mubr.bf16.mxu0 %v795
      %1523 = vmatmul.mubr.bf16.gmra.mrb[0].mxu0 %v794
      %v1524 = vpop.f32.mrb[0].mxu0
      %v1525 = vadd.f32 %v1364, %v1524
      %v1526 = vpop.f32.mrb[0].mxu0
      %v1527 = vpop.f32.mrb[0].mxu0
      %v1528 = vadd.f32 %v1367, %v1527
      %v1529 = vpop.f32.mrb[0].mxu0
      %1530 = vdwg.mxu0
      %1531 = vmatprep.subr.bf16.mxu0 0
      %1532 = vmatpush1.bf16.msra.mxu0 %v1094
      %1533 = vmatprep.subr.bf16.mxu0 0
      %1534 = vmatpush1.bf16.msra.mxu0 %v1095
      %1535 = vmatprep.subr.bf16.mxu0 0
      %1536 = vmatpush1.bf16.msra.mxu0 %v1096
      %1537 = vmatprep.subr.bf16.mxu0 0
      %1538 = vmatpush1.bf16.msra.mxu0 %v1097
      %1539 = vmatprep.subr.bf16.mxu0 0
      %1540 = vmatpush1.bf16.msra.mxu0 %v1098
      %1541 = vmatprep.subr.bf16.mxu0 0
      %1542 = vmatpush1.bf16.msra.mxu0 %v1099
      %1543 = vmatprep.subr.bf16.mxu0 0
      %1544 = vmatpush1.bf16.msra.mxu0 %v1100
      %1545 = vmatprep.subr.bf16.mxu0 0
      %1546 = vmatpush1.bf16.msra.mxu0 %v1101
      %1547 = vmatprep.subr.bf16.mxu0 0
      %1548 = vmatpush1.bf16.msra.mxu0 %v1102
      %1549 = vmatprep.subr.bf16.mxu0 0
      %1550 = vmatpush1.bf16.msra.mxu0 %v1103
      %1551 = vmatprep.subr.bf16.mxu0 0
      %1552 = vmatpush1.bf16.msra.mxu0 %v1104
      %1553 = vmatprep.subr.bf16.mxu0 0
      %1554 = vmatpush1.bf16.msra.mxu0 %v1105
      %1555 = vmatprep.subr.bf16.mxu0 0
      %1556 = vmatpush1.bf16.msra.mxu0 %v1106
      %1557 = vmatprep.subr.bf16.mxu0 0
      %1558 = vmatpush1.bf16.msra.mxu0 %v1207
      %1559 = vmatprep.subr.bf16.mxu0 0
      %1560 = vmatpush1.bf16.msra.mxu0 0
      %1561 = vmatprep.subr.bf16.mxu0 0
      %1562 = vmatpush1.bf16.msra.mxu0 0
      %1563 = vmatprep.mubr.bf16.mxu0 %v1155
      %1564 = vmatmul.mubr.bf16.gmra.mrb[0].mxu0 %v706
      %v1565 = vpop.f32.mrb[0].mxu0
      %v1566 = vadd.f32 %v1405, %v1565
      %v1567 = vpop.f32.mrb[0].mxu0
      %v1568 = vpop.f32.mrb[0].mxu0
      %v1569 = vadd.f32 %v1408, %v1568
      %v1570 = vpop.f32.mrb[0].mxu0
      %1571 = vmatprep.mubr.bf16.mxu0 %v1158
      %1572 = vmatmul.mubr.bf16.gmra.mrb[0].mxu0 %v712
      %v1573 = vpop.f32.mrb[0].mxu0
      %v1574 = vadd.f32 %v1413, %v1573
      %v1575 = vpop.f32.mrb[0].mxu0
      %v1576 = vpop.f32.mrb[0].mxu0
      %v1577 = vadd.f32 %v1416, %v1576
      %v1578 = vpop.f32.mrb[0].mxu0
      %1579 = vmatprep.mubr.bf16.mxu0 %v1161
      %1580 = vmatmul.mubr.bf16.gmra.mrb[0].mxu0 %v718
      %v1581 = vpop.f32.mrb[0].mxu0
      %v1582 = vadd.f32 %v1421, %v1581
      %v1583 = vpop.f32.mrb[0].mxu0
      %v1584 = vpop.f32.mrb[0].mxu0
      %v1585 = vadd.f32 %v1424, %v1584
      %v1586 = vpop.f32.mrb[0].mxu0
      %1587 = vmatprep.mubr.bf16.mxu0 %v1164
      %1588 = vmatmul.mubr.bf16.gmra.mrb[0].mxu0 %v724
      %v1589 = vpop.f32.mrb[0].mxu0
      %v1590 = vadd.f32 %v1429, %v1589
      %v1591 = vpop.f32.mrb[0].mxu0
      %v1592 = vpop.f32.mrb[0].mxu0
      %v1593 = vadd.f32 %v1432, %v1592
      %v1594 = vpop.f32.mrb[0].mxu0
      %1595 = vmatprep.mubr.bf16.mxu0 %v1167
      %1596 = vmatmul.mubr.bf16.gmra.mrb[0].mxu0 %v730
      %v1597 = vpop.f32.mrb[0].mxu0
      %v1598 = vadd.f32 %v1437, %v1597
      %v1599 = vpop.f32.mrb[0].mxu0
      %v1600 = vpop.f32.mrb[0].mxu0
      %v1601 = vadd.f32 %v1440, %v1600
      %v1602 = vpop.f32.mrb[0].mxu0
      %1603 = vmatprep.mubr.bf16.mxu0 %v1170
      %1604 = vmatmul.mubr.bf16.gmra.mrb[0].mxu0 %v736
      %v1605 = vpop.f32.mrb[0].mxu0
      %v1606 = vadd.f32 %v1445, %v1605
      %v1607 = vpop.f32.mrb[0].mxu0
      %v1608 = vpop.f32.mrb[0].mxu0
      %v1609 = vadd.f32 %v1448, %v1608
      %v1610 = vpop.f32.mrb[0].mxu0
      %1611 = vmatprep.mubr.bf16.mxu0 %v1173
      %1612 = vmatmul.mubr.bf16.gmra.mrb[0].mxu0 %v742
      %v1613 = vpop.f32.mrb[0].mxu0
      %v1614 = vadd.f32 %v1453, %v1613
      %v1615 = vpop.f32.mrb[0].mxu0
      %v1616 = vpop.f32.mrb[0].mxu0
      %v1617 = vadd.f32 %v1456, %v1616
      %v1618 = vpop.f32.mrb[0].mxu0
      %1619 = vmatprep.mubr.bf16.mxu0 %v1176
      %1620 = vmatmul.mubr.bf16.gmra.mrb[0].mxu0 %v748
      %v1621 = vpop.f32.mrb[0].mxu0
      %v1622 = vadd.f32 %v1461, %v1621
      %v1623 = vpop.f32.mrb[0].mxu0
      %v1624 = vpop.f32.mrb[0].mxu0
      %v1625 = vadd.f32 %v1464, %v1624
      %v1626 = vpop.f32.mrb[0].mxu0
      %1627 = vmatprep.mubr.bf16.mxu0 %v1179
      %1628 = vmatmul.mubr.bf16.gmra.mrb[0].mxu0 %v754
      %v1629 = vpop.f32.mrb[0].mxu0
      %v1630 = vadd.f32 %v1469, %v1629
      %v1631 = vpop.f32.mrb[0].mxu0
      %v1632 = vpop.f32.mrb[0].mxu0
      %v1633 = vadd.f32 %v1472, %v1632
      %v1634 = vpop.f32.mrb[0].mxu0
      %1635 = vmatprep.mubr.bf16.mxu0 %v1182
      %1636 = vmatmul.mubr.bf16.gmra.mrb[0].mxu0 %v760
      %v1637 = vpop.f32.mrb[0].mxu0
      %v1638 = vadd.f32 %v1477, %v1637
      %v1639 = vpop.f32.mrb[0].mxu0
      %v1640 = vpop.f32.mrb[0].mxu0
      %v1641 = vadd.f32 %v1480, %v1640
      %v1642 = vpop.f32.mrb[0].mxu0
      %1643 = vmatprep.mubr.bf16.mxu0 %v1185
      %1644 = vmatmul.mubr.bf16.gmra.mrb[0].mxu0 %v766
      %v1645 = vpop.f32.mrb[0].mxu0
      %v1646 = vadd.f32 %v1485, %v1645
      %v1647 = vpop.f32.mrb[0].mxu0
      %v1648 = vpop.f32.mrb[0].mxu0
      %v1649 = vadd.f32 %v1488, %v1648
      %v1650 = vpop.f32.mrb[0].mxu0
      %1651 = vmatprep.mubr.bf16.mxu0 %v1188
      %1652 = vmatmul.mubr.bf16.gmra.mrb[0].mxu0 %v772
      %v1653 = vpop.f32.mrb[0].mxu0
      %v1654 = vadd.f32 %v1493, %v1653
      %v1655 = vpop.f32.mrb[0].mxu0
      %v1656 = vpop.f32.mrb[0].mxu0
      %v1657 = vadd.f32 %v1496, %v1656
      %v1658 = vpop.f32.mrb[0].mxu0
      %1659 = vmatprep.mubr.bf16.mxu0 %v1191
      %1660 = vmatmul.mubr.bf16.gmra.mrb[0].mxu0 %v778
      %v1661 = vpop.f32.mrb[0].mxu0
      %v1662 = vadd.f32 %v1501, %v1661
      %v1663 = vpop.f32.mrb[0].mxu0
      %v1664 = vpop.f32.mrb[0].mxu0
      %v1665 = vadd.f32 %v1504, %v1664
      %v1666 = vpop.f32.mrb[0].mxu0
      %1667 = vmatprep.mubr.bf16.mxu0 %v1194
      %1668 = vmatmul.mubr.bf16.gmra.mrb[0].mxu0 %v784
      %v1669 = vpop.f32.mrb[0].mxu0
      %v1670 = vadd.f32 %v1509, %v1669
      %v1671 = vpop.f32.mrb[0].mxu0
      %v1672 = vpop.f32.mrb[0].mxu0
      %v1673 = vadd.f32 %v1512, %v1672
      %v1674 = vpop.f32.mrb[0].mxu0
      %1675 = vmatprep.mubr.bf16.mxu0 %v1197
      %1676 = vmatmul.mubr.bf16.gmra.mrb[0].mxu0 %v790
      %v1677 = vpop.f32.mrb[0].mxu0
      %v1678 = vadd.f32 %v1517, %v1677
      %v1679 = vpop.f32.mrb[0].mxu0
      %v1680 = vpop.f32.mrb[0].mxu0
      %v1681 = vadd.f32 %v1520, %v1680
      %v1682 = vpop.f32.mrb[0].mxu0
      %1683 = vmatprep.mubr.bf16.mxu0 %v1200
      %1684 = vmatmul.mubr.bf16.gmra.mrb[0].mxu0 %v796
      %v1685 = vpop.f32.mrb[0].mxu0
      %v1686 = vadd.f32 %v1525, %v1685
      %v1687 = vpop.f32.mrb[0].mxu0
      %v1688 = vpop.f32.mrb[0].mxu0
      %v1689 = vadd.f32 %v1528, %v1688
      %v1690 = vpop.f32.mrb[0].mxu0
      %1691 = vdwg.mxu0
      %v1692 = vld [vmem:[%s2] sm:$0x1]
      %v1694 = vlaneseq
      %v1695 = vshrl.u32 %v1694, 7
      %v1696 = vsub.s32 0, %v1695
      %v1697 = vrot.slane %v1692, %v1696
      %v1699 = vmul.f32 %v1566, %v1697
      %v1700 = vmul.f32 %v1569, %v1697
      %v1701 = vmul.f32 %v1574, %v1697
      %v1702 = vmul.f32 %v1577, %v1697
      %v1703 = vmul.f32 %v1582, %v1697
      %v1704 = vmul.f32 %v1585, %v1697
      %v1705 = vmul.f32 %v1590, %v1697
      %v1706 = vmul.f32 %v1593, %v1697
      %v1707 = vmul.f32 %v1598, %v1697
      %v1708 = vmul.f32 %v1601, %v1697
      %v1709 = vmul.f32 %v1606, %v1697
      %v1710 = vmul.f32 %v1609, %v1697
      %v1711 = vmul.f32 %v1614, %v1697
      %v1712 = vmul.f32 %v1617, %v1697
      %v1713 = vmul.f32 %v1622, %v1697
      %v1714 = vmul.f32 %v1625, %v1697
      %v1715 = vmul.f32 %v1630, %v1697
      %v1716 = vmul.f32 %v1633, %v1697
      %v1717 = vmul.f32 %v1638, %v1697
      %v1718 = vmul.f32 %v1641, %v1697
      %v1719 = vmul.f32 %v1646, %v1697
      %v1720 = vmul.f32 %v1649, %v1697
      %v1721 = vmul.f32 %v1654, %v1697
      %v1722 = vmul.f32 %v1657, %v1697
      %v1723 = vmul.f32 %v1662, %v1697
      %v1724 = vmul.f32 %v1665, %v1697
      %v1725 = vmul.f32 %v1670, %v1697
      %v1726 = vmul.f32 %v1673, %v1697
      %v1727 = vmul.f32 %v1678, %v1697
      %v1728 = vmul.f32 %v1681, %v1697
      %v1729 = vmul.f32 %v1686, %v1697
      %v1730 = vmul.f32 %v1689, %v1697
      %v1731 = vld [vmem:[%s3] sm:$0x1]
      %v1733 = vlaneseq
      %v1734 = vshrl.u32 %v1733, 7
      %v1735 = vsub.s32 0, %v1734
      %v1736 = vrot.slane %v1731, %v1735
      %v1738 = vadd.f32 %v1699, %v1736
      %v1739 = vadd.f32 %v1700, %v1736
      %v1740 = vadd.f32 %v1701, %v1736
      %v1741 = vadd.f32 %v1702, %v1736
      %v1742 = vadd.f32 %v1703, %v1736
      %v1743 = vadd.f32 %v1704, %v1736
      %v1744 = vadd.f32 %v1705, %v1736
      %v1745 = vadd.f32 %v1706, %v1736
      %v1746 = vadd.f32 %v1707, %v1736
      %v1747 = vadd.f32 %v1708, %v1736
      %v1748 = vadd.f32 %v1709, %v1736
      %v1749 = vadd.f32 %v1710, %v1736
      %v1750 = vadd.f32 %v1711, %v1736
      %v1751 = vadd.f32 %v1712, %v1736
      %v1752 = vadd.f32 %v1713, %v1736
      %v1753 = vadd.f32 %v1714, %v1736
      %v1754 = vadd.f32 %v1715, %v1736
      %v1755 = vadd.f32 %v1716, %v1736
      %v1756 = vadd.f32 %v1717, %v1736
      %v1757 = vadd.f32 %v1718, %v1736
      %v1758 = vadd.f32 %v1719, %v1736
      %v1759 = vadd.f32 %v1720, %v1736
      %v1760 = vadd.f32 %v1721, %v1736
      %v1761 = vadd.f32 %v1722, %v1736
      %v1762 = vadd.f32 %v1723, %v1736
      %v1763 = vadd.f32 %v1724, %v1736
      %v1764 = vadd.f32 %v1725, %v1736
      %v1765 = vadd.f32 %v1726, %v1736
      %v1766 = vadd.f32 %v1727, %v1736
      %v1767 = vadd.f32 %v1728, %v1736
      %v1768 = vadd.f32 %v1729, %v1736
      %v1769 = vadd.f32 %v1730, %v1736
      %v1770 = vmax.f32 %v1738, 0.0
      %v1771 = vmax.f32 %v1739, 0.0
      %v1772 = vmax.f32 %v1740, 0.0
      %v1773 = vmax.f32 %v1741, 0.0
      %v1774 = vmax.f32 %v1742, 0.0
      %v1775 = vmax.f32 %v1743, 0.0
      %v1776 = vmax.f32 %v1744, 0.0
      %v1777 = vmax.f32 %v1745, 0.0
      %v1778 = vmax.f32 %v1746, 0.0
      %v1779 = vmax.f32 %v1747, 0.0
      %v1780 = vmax.f32 %v1748, 0.0
      %v1781 = vmax.f32 %v1749, 0.0
      %v1782 = vmax.f32 %v1750, 0.0
      %v1783 = vmax.f32 %v1751, 0.0
      %v1784 = vmax.f32 %v1752, 0.0
      %v1785 = vmax.f32 %v1753, 0.0
      %v1786 = vmax.f32 %v1754, 0.0
      %v1787 = vmax.f32 %v1755, 0.0
      %v1788 = vmax.f32 %v1756, 0.0
      %v1789 = vmax.f32 %v1757, 0.0
      %v1790 = vmax.f32 %v1758, 0.0
      %v1791 = vmax.f32 %v1759, 0.0
      %v1792 = vmax.f32 %v1760, 0.0
      %v1793 = vmax.f32 %v1761, 0.0
      %v1794 = vmax.f32 %v1762, 0.0
      %v1795 = vmax.f32 %v1763, 0.0
      %v1796 = vmax.f32 %v1764, 0.0
      %v1797 = vmax.f32 %v1765, 0.0
      %v1798 = vmax.f32 %v1766, 0.0
      %v1799 = vmax.f32 %v1767, 0.0
      %v1800 = vmax.f32 %v1768, 0.0
      %v1801 = vmax.f32 %v1769, 0.0
      %v1802 = vpack.c.bf16 %v1771, %v1770
      %v1803 = vpack.c.bf16 %v1773, %v1772
      %v1804 = vpack.c.bf16 %v1775, %v1774
      %v1805 = vpack.c.bf16 %v1777, %v1776
      %v1806 = vpack.c.bf16 %v1779, %v1778
      %v1807 = vpack.c.bf16 %v1781, %v1780
      %v1808 = vpack.c.bf16 %v1783, %v1782
      %v1809 = vpack.c.bf16 %v1785, %v1784
      %v1810 = vpack.c.bf16 %v1787, %v1786
      %v1811 = vpack.c.bf16 %v1789, %v1788
      %v1812 = vpack.c.bf16 %v1791, %v1790
      %v1813 = vpack.c.bf16 %v1793, %v1792
      %v1814 = vpack.c.bf16 %v1795, %v1794
      %v1815 = vpack.c.bf16 %v1797, %v1796
      %v1816 = vpack.c.bf16 %v1799, %v1798
      %v1817 = vpack.c.bf16 %v1801, %v1800
      %v1818 = vld [vmem:[%s4] sm:$0xff]
      %v1819 = vld [vmem:[%s4 + $0x8] sm:$0xff]
      %v1820 = vld [vmem:[%s4 + $0x10] sm:$0xff]
      %v1821 = vld [vmem:[%s4 + $0x18] sm:$0xff]
      %v1822 = vld [vmem:[%s4 + $0x20] sm:$0xff]
      %v1823 = vld [vmem:[%s4 + $0x28] sm:$0xff]
      %v1824 = vld [vmem:[%s4 + $0x30] sm:$0xff]
      %v1825 = vld [vmem:[%s4 + $0x38] sm:$0xff]
      %v1834 = vunpack.c.l.b16 %v1818
      %v1835 = vunpack.c.h.b16 %v1818
      %v1836 = vunpack.c.l.b16 %v1819
      %v1837 = vunpack.c.h.b16 %v1819
      %v1838 = vunpack.c.l.b16 %v1820
      %v1839 = vunpack.c.h.b16 %v1820
      %v1840 = vunpack.c.l.b16 %v1821
      %v1841 = vunpack.c.h.b16 %v1821
      %v1842 = vunpack.c.l.b16 %v1822
      %v1843 = vunpack.c.h.b16 %v1822
      %v1844 = vunpack.c.l.b16 %v1823
      %v1845 = vunpack.c.h.b16 %v1823
      %v1846 = vunpack.c.l.b16 %v1824
      %v1847 = vunpack.c.h.b16 %v1824
      %v1848 = vunpack.c.l.b16 %v1825
      %v1849 = vunpack.c.h.b16 %v1825
      %v1850 = vpack.c.b16 %v1836, %v1834
      %v1851 = vpack.c.b16 %v1837, %v1835
      %v1852 = vpack.c.b16 %v1840, %v1838
      %v1853 = vpack.c.b16 %v1841, %v1839
      %v1854 = vpack.c.b16 %v1844, %v1842
      %v1855 = vpack.c.b16 %v1845, %v1843
      %v1856 = vpack.c.b16 %v1848, %v1846
      %v1857 = vpack.c.b16 %v1849, %v1847
      %1866 = vmatprep.subr.bf16.mxu0 0
      %1867 = vmatpush1.bf16.msra.mxu0 %v1802
      %1868 = vmatprep.subr.bf16.mxu0 0
      %1869 = vmatpush1.bf16.msra.mxu0 %v1803
      %1870 = vmatprep.subr.bf16.mxu0 0
      %1871 = vmatpush1.bf16.msra.mxu0 %v1804
      %1872 = vmatprep.subr.bf16.mxu0 0
      %1873 = vmatpush1.bf16.msra.mxu0 %v1805
      %1874 = vmatprep.subr.bf16.mxu0 0
      %1875 = vmatpush1.bf16.msra.mxu0 %v1806
      %1876 = vmatprep.subr.bf16.mxu0 0
      %1877 = vmatpush1.bf16.msra.mxu0 %v1807
      %1878 = vmatprep.subr.bf16.mxu0 0
      %1879 = vmatpush1.bf16.msra.mxu0 %v1808
      %1880 = vmatprep.subr.bf16.mxu0 0
      %1881 = vmatpush1.bf16.msra.mxu0 %v1809
      %1882 = vmatprep.subr.bf16.mxu0 0
      %1883 = vmatpush1.bf16.msra.mxu0 %v1810
      %1884 = vmatprep.subr.bf16.mxu0 0
      %1885 = vmatpush1.bf16.msra.mxu0 %v1811
      %1886 = vmatprep.subr.bf16.mxu0 0
      %1887 = vmatpush1.bf16.msra.mxu0 %v1812
      %1888 = vmatprep.subr.bf16.mxu0 0
      %1889 = vmatpush1.bf16.msra.mxu0 %v1813
      %1890 = vmatprep.subr.bf16.mxu0 0
      %1891 = vmatpush1.bf16.msra.mxu0 %v1814
      %1892 = vmatprep.subr.bf16.mxu0 0
      %1893 = vmatpush1.bf16.msra.mxu0 %v1815
      %1894 = vmatprep.subr.bf16.mxu0 0
      %1895 = vmatpush1.bf16.msra.mxu0 %v1816
      %1896 = vmatprep.subr.bf16.mxu0 0
      %1897 = vmatpush1.bf16.msra.mxu0 %v1817
      %1898 = vmatprep.mubr.bf16.mxu0 %v1851
      %1899 = vmatmul.mubr.bf16.gmra.mrb[0].mxu0 %v1850
      %v1900 = vpop.f32.mrb[0].mxu0
      %v1901 = vadd.f32 0.0, %v1900
      %v1902 = vpop.f32.mrb[0].mxu0
      %v1903 = vpop.f32.mrb[0].mxu0
      %v1904 = vadd.f32 0.0, %v1903
      %v1905 = vpop.f32.mrb[0].mxu0
      %1906 = vmatprep.mubr.bf16.mxu0 %v1853
      %1907 = vmatmul.mubr.bf16.gmra.mrb[0].mxu0 %v1852
      %v1908 = vpop.f32.mrb[0].mxu0
      %v1909 = vadd.f32 0.0, %v1908
      %v1910 = vpop.f32.mrb[0].mxu0
      %v1911 = vpop.f32.mrb[0].mxu0
      %v1912 = vadd.f32 0.0, %v1911
      %v1913 = vpop.f32.mrb[0].mxu0
      %1914 = vmatprep.mubr.bf16.mxu0 %v1855
      %1915 = vmatmul.mubr.bf16.gmra.mrb[0].mxu0 %v1854
      %v1916 = vpop.f32.mrb[0].mxu0
      %v1917 = vadd.f32 0.0, %v1916
      %v1918 = vpop.f32.mrb[0].mxu0
      %v1919 = vpop.f32.mrb[0].mxu0
      %v1920 = vadd.f32 0.0, %v1919
      %v1921 = vpop.f32.mrb[0].mxu0
      %1922 = vmatprep.mubr.bf16.mxu0 %v1857
      %1923 = vmatmul.mubr.bf16.gmra.mrb[0].mxu0 %v1856
      %v1924 = vpop.f32.mrb[0].mxu0
      %v1925 = vadd.f32 0.0, %v1924
      %v1926 = vpop.f32.mrb[0].mxu0
      %v1927 = vpop.f32.mrb[0].mxu0
      %v1928 = vadd.f32 0.0, %v1927
      %v1929 = vpop.f32.mrb[0].mxu0
      %1930 = vdwg.mxu0
      %s1931 = scalar_lea.vmem %s4, 64
      %v1932 = vld [vmem:[%s1931] sm:$0xff]
      %v1933 = vld [vmem:[%s1931 + $0x8] sm:$0xff]
      %v1934 = vld [vmem:[%s1931 + $0x10] sm:$0xff]
      %v1935 = vld [vmem:[%s1931 + $0x18] sm:$0xff]
      %v1936 = vld [vmem:[%s1931 + $0x20] sm:$0xff]
      %v1937 = vld [vmem:[%s1931 + $0x28] sm:$0xff]
      %v1938 = vld [vmem:[%s1931 + $0x30] sm:$0xff]
      %v1939 = vld [vmem:[%s1931 + $0x38] sm:$0xff]
      %v1948 = vunpack.c.l.b16 %v1932
      %v1949 = vunpack.c.h.b16 %v1932
      %v1950 = vunpack.c.l.b16 %v1933
      %v1951 = vunpack.c.h.b16 %v1933
      %v1952 = vunpack.c.l.b16 %v1934
      %v1953 = vunpack.c.h.b16 %v1934
      %v1954 = vunpack.c.l.b16 %v1935
      %v1955 = vunpack.c.h.b16 %v1935
      %v1956 = vunpack.c.l.b16 %v1936
      %v1957 = vunpack.c.h.b16 %v1936
      %v1958 = vunpack.c.l.b16 %v1937
      %v1959 = vunpack.c.h.b16 %v1937
      %v1960 = vunpack.c.l.b16 %v1938
      %v1961 = vunpack.c.h.b16 %v1938
      %v1962 = vunpack.c.l.b16 %v1939
      %v1963 = vunpack.c.h.b16 %v1939
      %v1964 = vpack.c.b16 %v1950, %v1948
      %v1965 = vpack.c.b16 %v1951, %v1949
      %v1966 = vpack.c.b16 %v1954, %v1952
      %v1967 = vpack.c.b16 %v1955, %v1953
      %v1968 = vpack.c.b16 %v1958, %v1956
      %v1969 = vpack.c.b16 %v1959, %v1957
      %v1970 = vpack.c.b16 %v1962, %v1960
      %v1971 = vpack.c.b16 %v1963, %v1961
      %1980 = vmatprep.subr.bf16.mxu0 0
      %1981 = vmatpush1.bf16.msra.mxu0 %v1802
      %1982 = vmatprep.subr.bf16.mxu0 0
      %1983 = vmatpush1.bf16.msra.mxu0 %v1803
      %1984 = vmatprep.subr.bf16.mxu0 0
      %1985 = vmatpush1.bf16.msra.mxu0 %v1804
      %1986 = vmatprep.subr.bf16.mxu0 0
      %1987 = vmatpush1.bf16.msra.mxu0 %v1805
      %1988 = vmatprep.subr.bf16.mxu0 0
      %1989 = vmatpush1.bf16.msra.mxu0 %v1806
      %1990 = vmatprep.subr.bf16.mxu0 0
      %1991 = vmatpush1.bf16.msra.mxu0 %v1807
      %1992 = vmatprep.subr.bf16.mxu0 0
      %1993 = vmatpush1.bf16.msra.mxu0 %v1808
      %1994 = vmatprep.subr.bf16.mxu0 0
      %1995 = vmatpush1.bf16.msra.mxu0 %v1809
      %1996 = vmatprep.subr.bf16.mxu0 0
      %1997 = vmatpush1.bf16.msra.mxu0 %v1810
      %1998 = vmatprep.subr.bf16.mxu0 0
      %1999 = vmatpush1.bf16.msra.mxu0 %v1811
      %2000 = vmatprep.subr.bf16.mxu0 0
      %2001 = vmatpush1.bf16.msra.mxu0 %v1812
      %2002 = vmatprep.subr.bf16.mxu0 0
      %2003 = vmatpush1.bf16.msra.mxu0 %v1813
      %2004 = vmatprep.subr.bf16.mxu0 0
      %2005 = vmatpush1.bf16.msra.mxu0 %v1814
      %2006 = vmatprep.subr.bf16.mxu0 0
      %2007 = vmatpush1.bf16.msra.mxu0 %v1815
      %2008 = vmatprep.subr.bf16.mxu0 0
      %2009 = vmatpush1.bf16.msra.mxu0 %v1816
      %2010 = vmatprep.subr.bf16.mxu0 0
      %2011 = vmatpush1.bf16.msra.mxu0 %v1817
      %2012 = vmatprep.mubr.bf16.mxu0 %v1965
      %2013 = vmatmul.mubr.bf16.gmra.mrb[0].mxu0 %v1964
      %v2014 = vpop.f32.mrb[0].mxu0
      %v2015 = vadd.f32 0.0, %v2014
      %v2016 = vpop.f32.mrb[0].mxu0
      %v2017 = vpop.f32.mrb[0].mxu0
      %v2018 = vadd.f32 0.0, %v2017
      %v2019 = vpop.f32.mrb[0].mxu0
      %2020 = vmatprep.mubr.bf16.mxu0 %v1967
      %2021 = vmatmul.mubr.bf16.gmra.mrb[0].mxu0 %v1966
      %v2022 = vpop.f32.mrb[0].mxu0
      %v2023 = vadd.f32 0.0, %v2022
      %v2024 = vpop.f32.mrb[0].mxu0
      %v2025 = vpop.f32.mrb[0].mxu0
      %v2026 = vadd.f32 0.0, %v2025
      %v2027 = vpop.f32.mrb[0].mxu0
      %2028 = vmatprep.mubr.bf16.mxu0 %v1969
      %2029 = vmatmul.mubr.bf16.gmra.mrb[0].mxu0 %v1968
      %v2030 = vpop.f32.mrb[0].mxu0
      %v2031 = vadd.f32 0.0, %v2030
      %v2032 = vpop.f32.mrb[0].mxu0
      %v2033 = vpop.f32.mrb[0].mxu0
      %v2034 = vadd.f32 0.0, %v2033
      %v2035 = vpop.f32.mrb[0].mxu0
      %2036 = vmatprep.mubr.bf16.mxu0 %v1971
      %2037 = vmatmul.mubr.bf16.gmra.mrb[0].mxu0 %v1970
      %v2038 = vpop.f32.mrb[0].mxu0
      %v2039 = vadd.f32 0.0, %v2038
      %v2040 = vpop.f32.mrb[0].mxu0
      %v2041 = vpop.f32.mrb[0].mxu0
      %v2042 = vadd.f32 0.0, %v2041
      %v2043 = vpop.f32.mrb[0].mxu0
      %2044 = vdwg.mxu0
      %v2045 = vmax.f32 %v1901, %v2015
      %v2046 = vmax.f32 %v1904, %v2018
      %v2047 = vmax.f32 %v1909, %v2023
      %v2048 = vmax.f32 %v1912, %v2026
      %v2049 = vmax.f32 %v1917, %v2031
      %v2050 = vmax.f32 %v1920, %v2034
      %v2051 = vmax.f32 %v1925, %v2039
      %v2052 = vmax.f32 %v1928, %v2042
      %s2053 = scalar_lea.vmem %s4, 128
      %v2054 = vld [vmem:[%s2053] sm:$0xff]
      %v2055 = vld [vmem:[%s2053 + $0x8] sm:$0xff]
      %v2056 = vld [vmem:[%s2053 + $0x10] sm:$0xff]
      %v2057 = vld [vmem:[%s2053 + $0x18] sm:$0xff]
      %v2058 = vld [vmem:[%s2053 + $0x20] sm:$0xff]
      %v2059 = vld [vmem:[%s2053 + $0x28] sm:$0xff]
      %v2060 = vld [vmem:[%s2053 + $0x30] sm:$0xff]
      %v2061 = vld [vmem:[%s2053 + $0x38] sm:$0xff]
      %v2070 = vunpack.c.l.b16 %v2054
      %v2071 = vunpack.c.h.b16 %v2054
      %v2072 = vunpack.c.l.b16 %v2055
      %v2073 = vunpack.c.h.b16 %v2055
      %v2074 = vunpack.c.l.b16 %v2056
      %v2075 = vunpack.c.h.b16 %v2056
      %v2076 = vunpack.c.l.b16 %v2057
      %v2077 = vunpack.c.h.b16 %v2057
      %v2078 = vunpack.c.l.b16 %v2058
      %v2079 = vunpack.c.h.b16 %v2058
      %v2080 = vunpack.c.l.b16 %v2059
      %v2081 = vunpack.c.h.b16 %v2059
      %v2082 = vunpack.c.l.b16 %v2060
      %v2083 = vunpack.c.h.b16 %v2060
      %v2084 = vunpack.c.l.b16 %v2061
      %v2085 = vunpack.c.h.b16 %v2061
      %v2086 = vpack.c.b16 %v2072, %v2070
      %v2087 = vpack.c.b16 %v2073, %v2071
      %v2088 = vpack.c.b16 %v2076, %v2074
      %v2089 = vpack.c.b16 %v2077, %v2075
      %v2090 = vpack.c.b16 %v2080, %v2078
      %v2091 = vpack.c.b16 %v2081, %v2079
      %v2092 = vpack.c.b16 %v2084, %v2082
      %v2093 = vpack.c.b16 %v2085, %v2083
      %2102 = vmatprep.subr.bf16.mxu0 0
      %2103 = vmatpush1.bf16.msra.mxu0 %v1802
      %2104 = vmatprep.subr.bf16.mxu0 0
      %2105 = vmatpush1.bf16.msra.mxu0 %v1803
      %2106 = vmatprep.subr.bf16.mxu0 0
      %2107 = vmatpush1.bf16.msra.mxu0 %v1804
      %2108 = vmatprep.subr.bf16.mxu0 0
      %2109 = vmatpush1.bf16.msra.mxu0 %v1805
      %2110 = vmatprep.subr.bf16.mxu0 0
      %2111 = vmatpush1.bf16.msra.mxu0 %v1806
      %2112 = vmatprep.subr.bf16.mxu0 0
      %2113 = vmatpush1.bf16.msra.mxu0 %v1807
      %2114 = vmatprep.subr.bf16.mxu0 0
      %2115 = vmatpush1.bf16.msra.mxu0 %v1808
      %2116 = vmatprep.subr.bf16.mxu0 0
      %2117 = vmatpush1.bf16.msra.mxu0 %v1809
      %2118 = vmatprep.subr.bf16.mxu0 0
      %2119 = vmatpush1.bf16.msra.mxu0 %v1810
      %2120 = vmatprep.subr.bf16.mxu0 0
      %2121 = vmatpush1.bf16.msra.mxu0 %v1811
      %2122 = vmatprep.subr.bf16.mxu0 0
      %2123 = vmatpush1.bf16.msra.mxu0 %v1812
      %2124 = vmatprep.subr.bf16.mxu0 0
      %2125 = vmatpush1.bf16.msra.mxu0 %v1813
      %2126 = vmatprep.subr.bf16.mxu0 0
      %2127 = vmatpush1.bf16.msra.mxu0 %v1814
      %2128 = vmatprep.subr.bf16.mxu0 0
      %2129 = vmatpush1.bf16.msra.mxu0 %v1815
      %2130 = vmatprep.subr.bf16.mxu0 0
      %2131 = vmatpush1.bf16.msra.mxu0 %v1816
      %2132 = vmatprep.subr.bf16.mxu0 0
      %2133 = vmatpush1.bf16.msra.mxu0 %v1817
      %2134 = vmatprep.mubr.bf16.mxu0 %v2087
      %2135 = vmatmul.mubr.bf16.gmra.mrb[0].mxu0 %v2086
      %v2136 = vpop.f32.mrb[0].mxu0
      %v2137 = vadd.f32 0.0, %v2136
      %v2138 = vpop.f32.mrb[0].mxu0
      %v2139 = vpop.f32.mrb[0].mxu0
      %v2140 = vadd.f32 0.0, %v2139
      %v2141 = vpop.f32.mrb[0].mxu0
      %2142 = vmatprep.mubr.bf16.mxu0 %v2089
      %2143 = vmatmul.mubr.bf16.gmra.mrb[0].mxu0 %v2088
      %v2144 = vpop.f32.mrb[0].mxu0
      %v2145 = vadd.f32 0.0, %v2144
      %v2146 = vpop.f32.mrb[0].mxu0
      %v2147 = vpop.f32.mrb[0].mxu0
      %v2148 = vadd.f32 0.0, %v2147
      %v2149 = vpop.f32.mrb[0].mxu0
      %2150 = vmatprep.mubr.bf16.mxu0 %v2091
      %2151 = vmatmul.mubr.bf16.gmra.mrb[0].mxu0 %v2090
      %v2152 = vpop.f32.mrb[0].mxu0
      %v2153 = vadd.f32 0.0, %v2152
      %v2154 = vpop.f32.mrb[0].mxu0
      %v2155 = vpop.f32.mrb[0].mxu0
      %v2156 = vadd.f32 0.0, %v2155
      %v2157 = vpop.f32.mrb[0].mxu0
      %2158 = vmatprep.mubr.bf16.mxu0 %v2093
      %2159 = vmatmul.mubr.bf16.gmra.mrb[0].mxu0 %v2092
      %v2160 = vpop.f32.mrb[0].mxu0
      %v2161 = vadd.f32 0.0, %v2160
      %v2162 = vpop.f32.mrb[0].mxu0
      %v2163 = vpop.f32.mrb[0].mxu0
      %v2164 = vadd.f32 0.0, %v2163
      %v2165 = vpop.f32.mrb[0].mxu0
      %2166 = vdwg.mxu0
      %v2167 = vmax.f32 %v2045, %v2137
      %v2168 = vmax.f32 %v2046, %v2140
      %v2169 = vmax.f32 %v2047, %v2145
      %v2170 = vmax.f32 %v2048, %v2148
      %v2171 = vmax.f32 %v2049, %v2153
      %v2172 = vmax.f32 %v2050, %v2156
      %v2173 = vmax.f32 %v2051, %v2161
      %v2174 = vmax.f32 %v2052, %v2164
      %s2175 = scalar_lea.vmem %s4, 192
      %v2176 = vld [vmem:[%s2175] sm:$0xff]
      %v2177 = vld [vmem:[%s2175 + $0x8] sm:$0xff]
      %v2178 = vld [vmem:[%s2175 + $0x10] sm:$0xff]
      %v2179 = vld [vmem:[%s2175 + $0x18] sm:$0xff]
      %v2180 = vld [vmem:[%s2175 + $0x20] sm:$0xff]
      %v2181 = vld [vmem:[%s2175 + $0x28] sm:$0xff]
      %v2182 = vld [vmem:[%s2175 + $0x30] sm:$0xff]
      %v2183 = vld [vmem:[%s2175 + $0x38] sm:$0xff]
      %v2192 = vunpack.c.l.b16 %v2176
      %v2193 = vunpack.c.h.b16 %v2176
      %v2194 = vunpack.c.l.b16 %v2177
      %v2195 = vunpack.c.h.b16 %v2177
      %v2196 = vunpack.c.l.b16 %v2178
      %v2197 = vunpack.c.h.b16 %v2178
      %v2198 = vunpack.c.l.b16 %v2179
      %v2199 = vunpack.c.h.b16 %v2179
      %v2200 = vunpack.c.l.b16 %v2180
      %v2201 = vunpack.c.h.b16 %v2180
      %v2202 = vunpack.c.l.b16 %v2181
      %v2203 = vunpack.c.h.b16 %v2181
      %v2204 = vunpack.c.l.b16 %v2182
      %v2205 = vunpack.c.h.b16 %v2182
      %v2206 = vunpack.c.l.b16 %v2183
      %v2207 = vunpack.c.h.b16 %v2183
      %v2208 = vpack.c.b16 %v2194, %v2192
      %v2209 = vpack.c.b16 %v2195, %v2193
      %v2210 = vpack.c.b16 %v2198, %v2196
      %v2211 = vpack.c.b16 %v2199, %v2197
      %v2212 = vpack.c.b16 %v2202, %v2200
      %v2213 = vpack.c.b16 %v2203, %v2201
      %v2214 = vpack.c.b16 %v2206, %v2204
      %v2215 = vpack.c.b16 %v2207, %v2205
      %2224 = vmatprep.subr.bf16.mxu0 0
      %2225 = vmatpush1.bf16.msra.mxu0 %v1802
      %2226 = vmatprep.subr.bf16.mxu0 0
      %2227 = vmatpush1.bf16.msra.mxu0 %v1803
      %2228 = vmatprep.subr.bf16.mxu0 0
      %2229 = vmatpush1.bf16.msra.mxu0 %v1804
      %2230 = vmatprep.subr.bf16.mxu0 0
      %2231 = vmatpush1.bf16.msra.mxu0 %v1805
      %2232 = vmatprep.subr.bf16.mxu0 0
      %2233 = vmatpush1.bf16.msra.mxu0 %v1806
      %2234 = vmatprep.subr.bf16.mxu0 0
      %2235 = vmatpush1.bf16.msra.mxu0 %v1807
      %2236 = vmatprep.subr.bf16.mxu0 0
      %2237 = vmatpush1.bf16.msra.mxu0 %v1808
      %2238 = vmatprep.subr.bf16.mxu0 0
      %2239 = vmatpush1.bf16.msra.mxu0 %v1809
      %2240 = vmatprep.subr.bf16.mxu0 0
      %2241 = vmatpush1.bf16.msra.mxu0 %v1810
      %2242 = vmatprep.subr.bf16.mxu0 0
      %2243 = vmatpush1.bf16.msra.mxu0 %v1811
      %2244 = vmatprep.subr.bf16.mxu0 0
      %2245 = vmatpush1.bf16.msra.mxu0 %v1812
      %2246 = vmatprep.subr.bf16.mxu0 0
      %2247 = vmatpush1.bf16.msra.mxu0 %v1813
      %2248 = vmatprep.subr.bf16.mxu0 0
      %2249 = vmatpush1.bf16.msra.mxu0 %v1814
      %2250 = vmatprep.subr.bf16.mxu0 0
      %2251 = vmatpush1.bf16.msra.mxu0 %v1815
      %2252 = vmatprep.subr.bf16.mxu0 0
      %2253 = vmatpush1.bf16.msra.mxu0 %v1816
      %2254 = vmatprep.subr.bf16.mxu0 0
      %2255 = vmatpush1.bf16.msra.mxu0 %v1817
      %2256 = vmatprep.mubr.bf16.mxu0 %v2209
      %2257 = vmatmul.mubr.bf16.gmra.mrb[0].mxu0 %v2208
      %v2258 = vpop.f32.mrb[0].mxu0
      %v2259 = vadd.f32 0.0, %v2258
      %v2260 = vpop.f32.mrb[0].mxu0
      %v2261 = vpop.f32.mrb[0].mxu0
      %v2262 = vadd.f32 0.0, %v2261
      %v2263 = vpop.f32.mrb[0].mxu0
      %2264 = vmatprep.mubr.bf16.mxu0 %v2211
      %2265 = vmatmul.mubr.bf16.gmra.mrb[0].mxu0 %v2210
      %v2266 = vpop.f32.mrb[0].mxu0
      %v2267 = vadd.f32 0.0, %v2266
      %v2268 = vpop.f32.mrb[0].mxu0
      %v2269 = vpop.f32.mrb[0].mxu0
      %v2270 = vadd.f32 0.0, %v2269
      %v2271 = vpop.f32.mrb[0].mxu0
      %2272 = vmatprep.mubr.bf16.mxu0 %v2213
      %2273 = vmatmul.mubr.bf16.gmra.mrb[0].mxu0 %v2212
      %v2274 = vpop.f32.mrb[0].mxu0
      %v2275 = vadd.f32 0.0, %v2274
      %v2276 = vpop.f32.mrb[0].mxu0
      %v2277 = vpop.f32.mrb[0].mxu0
      %v2278 = vadd.f32 0.0, %v2277
      %v2279 = vpop.f32.mrb[0].mxu0
      %2280 = vmatprep.mubr.bf16.mxu0 %v2215
      %2281 = vmatmul.mubr.bf16.gmra.mrb[0].mxu0 %v2214
      %v2282 = vpop.f32.mrb[0].mxu0
      %v2283 = vadd.f32 0.0, %v2282
      %v2284 = vpop.f32.mrb[0].mxu0
      %v2285 = vpop.f32.mrb[0].mxu0
      %v2286 = vadd.f32 0.0, %v2285
      %v2287 = vpop.f32.mrb[0].mxu0
      %2288 = vdwg.mxu0
      %v2289 = vmax.f32 %v2167, %v2259
      %v2290 = vmax.f32 %v2168, %v2262
      %v2291 = vmax.f32 %v2169, %v2267
      %v2292 = vmax.f32 %v2170, %v2270
      %v2293 = vmax.f32 %v2171, %v2275
      %v2294 = vmax.f32 %v2172, %v2278
      %v2295 = vmax.f32 %v2173, %v2283
      %v2296 = vmax.f32 %v2174, %v2286
      %s2297 = scalar_lea.vmem %s4, 256
      %v2298 = vld [vmem:[%s2297] sm:$0xff]
      %v2299 = vld [vmem:[%s2297 + $0x8] sm:$0xff]
      %v2300 = vld [vmem:[%s2297 + $0x10] sm:$0xff]
      %v2301 = vld [vmem:[%s2297 + $0x18] sm:$0xff]
      %v2302 = vld [vmem:[%s2297 + $0x20] sm:$0xff]
      %v2303 = vld [vmem:[%s2297 + $0x28] sm:$0xff]
      %v2304 = vld [vmem:[%s2297 + $0x30] sm:$0xff]
      %v2305 = vld [vmem:[%s2297 + $0x38] sm:$0xff]
      %v2314 = vunpack.c.l.b16 %v2298
      %v2315 = vunpack.c.h.b16 %v2298
      %v2316 = vunpack.c.l.b16 %v2299
      %v2317 = vunpack.c.h.b16 %v2299
      %v2318 = vunpack.c.l.b16 %v2300
      %v2319 = vunpack.c.h.b16 %v2300
      %v2320 = vunpack.c.l.b16 %v2301
      %v2321 = vunpack.c.h.b16 %v2301
      %v2322 = vunpack.c.l.b16 %v2302
      %v2323 = vunpack.c.h.b16 %v2302
      %v2324 = vunpack.c.l.b16 %v2303
      %v2325 = vunpack.c.h.b16 %v2303
      %v2326 = vunpack.c.l.b16 %v2304
      %v2327 = vunpack.c.h.b16 %v2304
      %v2328 = vunpack.c.l.b16 %v2305
      %v2329 = vunpack.c.h.b16 %v2305
      %v2330 = vpack.c.b16 %v2316, %v2314
      %v2331 = vpack.c.b16 %v2317, %v2315
      %v2332 = vpack.c.b16 %v2320, %v2318
      %v2333 = vpack.c.b16 %v2321, %v2319
      %v2334 = vpack.c.b16 %v2324, %v2322
      %v2335 = vpack.c.b16 %v2325, %v2323
      %v2336 = vpack.c.b16 %v2328, %v2326
      %v2337 = vpack.c.b16 %v2329, %v2327
      %2346 = vmatprep.subr.bf16.mxu0 0
      %2347 = vmatpush1.bf16.msra.mxu0 %v1802
      %2348 = vmatprep.subr.bf16.mxu0 0
      %2349 = vmatpush1.bf16.msra.mxu0 %v1803
      %2350 = vmatprep.subr.bf16.mxu0 0
      %2351 = vmatpush1.bf16.msra.mxu0 %v1804
      %2352 = vmatprep.subr.bf16.mxu0 0
      %2353 = vmatpush1.bf16.msra.mxu0 %v1805
      %2354 = vmatprep.subr.bf16.mxu0 0
      %2355 = vmatpush1.bf16.msra.mxu0 %v1806
      %2356 = vmatprep.subr.bf16.mxu0 0
      %2357 = vmatpush1.bf16.msra.mxu0 %v1807
      %2358 = vmatprep.subr.bf16.mxu0 0
      %2359 = vmatpush1.bf16.msra.mxu0 %v1808
      %2360 = vmatprep.subr.bf16.mxu0 0
      %2361 = vmatpush1.bf16.msra.mxu0 %v1809
      %2362 = vmatprep.subr.bf16.mxu0 0
      %2363 = vmatpush1.bf16.msra.mxu0 %v1810
      %2364 = vmatprep.subr.bf16.mxu0 0
      %2365 = vmatpush1.bf16.msra.mxu0 %v1811
      %2366 = vmatprep.subr.bf16.mxu0 0
      %2367 = vmatpush1.bf16.msra.mxu0 %v1812
      %2368 = vmatprep.subr.bf16.mxu0 0
      %2369 = vmatpush1.bf16.msra.mxu0 %v1813
      %2370 = vmatprep.subr.bf16.mxu0 0
      %2371 = vmatpush1.bf16.msra.mxu0 %v1814
      %2372 = vmatprep.subr.bf16.mxu0 0
      %2373 = vmatpush1.bf16.msra.mxu0 %v1815
      %2374 = vmatprep.subr.bf16.mxu0 0
      %2375 = vmatpush1.bf16.msra.mxu0 %v1816
      %2376 = vmatprep.subr.bf16.mxu0 0
      %2377 = vmatpush1.bf16.msra.mxu0 %v1817
      %2378 = vmatprep.mubr.bf16.mxu0 %v2331
      %2379 = vmatmul.mubr.bf16.gmra.mrb[0].mxu0 %v2330
      %v2380 = vpop.f32.mrb[0].mxu0
      %v2381 = vadd.f32 0.0, %v2380
      %v2382 = vpop.f32.mrb[0].mxu0
      %v2383 = vpop.f32.mrb[0].mxu0
      %v2384 = vadd.f32 0.0, %v2383
      %v2385 = vpop.f32.mrb[0].mxu0
      %2386 = vmatprep.mubr.bf16.mxu0 %v2333
      %2387 = vmatmul.mubr.bf16.gmra.mrb[0].mxu0 %v2332
      %v2388 = vpop.f32.mrb[0].mxu0
      %v2389 = vadd.f32 0.0, %v2388
      %v2390 = vpop.f32.mrb[0].mxu0
      %v2391 = vpop.f32.mrb[0].mxu0
      %v2392 = vadd.f32 0.0, %v2391
      %v2393 = vpop.f32.mrb[0].mxu0
      %2394 = vmatprep.mubr.bf16.mxu0 %v2335
      %2395 = vmatmul.mubr.bf16.gmra.mrb[0].mxu0 %v2334
      %v2396 = vpop.f32.mrb[0].mxu0
      %v2397 = vadd.f32 0.0, %v2396
      %v2398 = vpop.f32.mrb[0].mxu0
      %v2399 = vpop.f32.mrb[0].mxu0
      %v2400 = vadd.f32 0.0, %v2399
      %v2401 = vpop.f32.mrb[0].mxu0
      %2402 = vmatprep.mubr.bf16.mxu0 %v2337
      %2403 = vmatmul.mubr.bf16.gmra.mrb[0].mxu0 %v2336
      %v2404 = vpop.f32.mrb[0].mxu0
      %v2405 = vadd.f32 0.0, %v2404
      %v2406 = vpop.f32.mrb[0].mxu0
      %v2407 = vpop.f32.mrb[0].mxu0
      %v2408 = vadd.f32 0.0, %v2407
      %v2409 = vpop.f32.mrb[0].mxu0
      %2410 = vdwg.mxu0
      %v2411 = vmax.f32 %v2289, %v2381
      %v2412 = vmax.f32 %v2290, %v2384
      %v2413 = vmax.f32 %v2291, %v2389
      %v2414 = vmax.f32 %v2292, %v2392
      %v2415 = vmax.f32 %v2293, %v2397
      %v2416 = vmax.f32 %v2294, %v2400
      %v2417 = vmax.f32 %v2295, %v2405
      %v2418 = vmax.f32 %v2296, %v2408
      %s2419 = scalar_lea.vmem %s4, 320
      %v2420 = vld [vmem:[%s2419] sm:$0xff]
      %v2421 = vld [vmem:[%s2419 + $0x8] sm:$0xff]
      %v2422 = vld [vmem:[%s2419 + $0x10] sm:$0xff]
      %v2423 = vld [vmem:[%s2419 + $0x18] sm:$0xff]
      %v2424 = vld [vmem:[%s2419 + $0x20] sm:$0xff]
      %v2425 = vld [vmem:[%s2419 + $0x28] sm:$0xff]
      %v2426 = vld [vmem:[%s2419 + $0x30] sm:$0xff]
      %v2427 = vld [vmem:[%s2419 + $0x38] sm:$0xff]
      %v2436 = vunpack.c.l.b16 %v2420
      %v2437 = vunpack.c.h.b16 %v2420
      %v2438 = vunpack.c.l.b16 %v2421
      %v2439 = vunpack.c.h.b16 %v2421
      %v2440 = vunpack.c.l.b16 %v2422
      %v2441 = vunpack.c.h.b16 %v2422
      %v2442 = vunpack.c.l.b16 %v2423
      %v2443 = vunpack.c.h.b16 %v2423
      %v2444 = vunpack.c.l.b16 %v2424
      %v2445 = vunpack.c.h.b16 %v2424
      %v2446 = vunpack.c.l.b16 %v2425
      %v2447 = vunpack.c.h.b16 %v2425
      %v2448 = vunpack.c.l.b16 %v2426
      %v2449 = vunpack.c.h.b16 %v2426
      %v2450 = vunpack.c.l.b16 %v2427
      %v2451 = vunpack.c.h.b16 %v2427
      %v2452 = vpack.c.b16 %v2438, %v2436
      %v2453 = vpack.c.b16 %v2439, %v2437
      %v2454 = vpack.c.b16 %v2442, %v2440
      %v2455 = vpack.c.b16 %v2443, %v2441
      %v2456 = vpack.c.b16 %v2446, %v2444
      %v2457 = vpack.c.b16 %v2447, %v2445
      %v2458 = vpack.c.b16 %v2450, %v2448
      %v2459 = vpack.c.b16 %v2451, %v2449
      %2468 = vmatprep.subr.bf16.mxu0 0
      %2469 = vmatpush1.bf16.msra.mxu0 %v1802
      %2470 = vmatprep.subr.bf16.mxu0 0
      %2471 = vmatpush1.bf16.msra.mxu0 %v1803
      %2472 = vmatprep.subr.bf16.mxu0 0
      %2473 = vmatpush1.bf16.msra.mxu0 %v1804
      %2474 = vmatprep.subr.bf16.mxu0 0
      %2475 = vmatpush1.bf16.msra.mxu0 %v1805
      %2476 = vmatprep.subr.bf16.mxu0 0
      %2477 = vmatpush1.bf16.msra.mxu0 %v1806
      %2478 = vmatprep.subr.bf16.mxu0 0
      %2479 = vmatpush1.bf16.msra.mxu0 %v1807
      %2480 = vmatprep.subr.bf16.mxu0 0
      %2481 = vmatpush1.bf16.msra.mxu0 %v1808
      %2482 = vmatprep.subr.bf16.mxu0 0
      %2483 = vmatpush1.bf16.msra.mxu0 %v1809
      %2484 = vmatprep.subr.bf16.mxu0 0
      %2485 = vmatpush1.bf16.msra.mxu0 %v1810
      %2486 = vmatprep.subr.bf16.mxu0 0
      %2487 = vmatpush1.bf16.msra.mxu0 %v1811
      %2488 = vmatprep.subr.bf16.mxu0 0
      %2489 = vmatpush1.bf16.msra.mxu0 %v1812
      %2490 = vmatprep.subr.bf16.mxu0 0
      %2491 = vmatpush1.bf16.msra.mxu0 %v1813
      %2492 = vmatprep.subr.bf16.mxu0 0
      %2493 = vmatpush1.bf16.msra.mxu0 %v1814
      %2494 = vmatprep.subr.bf16.mxu0 0
      %2495 = vmatpush1.bf16.msra.mxu0 %v1815
      %2496 = vmatprep.subr.bf16.mxu0 0
      %2497 = vmatpush1.bf16.msra.mxu0 %v1816
      %2498 = vmatprep.subr.bf16.mxu0 0
      %2499 = vmatpush1.bf16.msra.mxu0 %v1817
      %2500 = vmatprep.mubr.bf16.mxu0 %v2453
      %2501 = vmatmul.mubr.bf16.gmra.mrb[0].mxu0 %v2452
      %v2502 = vpop.f32.mrb[0].mxu0
      %v2503 = vadd.f32 0.0, %v2502
      %v2504 = vpop.f32.mrb[0].mxu0
      %v2505 = vpop.f32.mrb[0].mxu0
      %v2506 = vadd.f32 0.0, %v2505
      %v2507 = vpop.f32.mrb[0].mxu0
      %2508 = vmatprep.mubr.bf16.mxu0 %v2455
      %2509 = vmatmul.mubr.bf16.gmra.mrb[0].mxu0 %v2454
      %v2510 = vpop.f32.mrb[0].mxu0
      %v2511 = vadd.f32 0.0, %v2510
      %v2512 = vpop.f32.mrb[0].mxu0
      %v2513 = vpop.f32.mrb[0].mxu0
      %v2514 = vadd.f32 0.0, %v2513
      %v2515 = vpop.f32.mrb[0].mxu0
      %2516 = vmatprep.mubr.bf16.mxu0 %v2457
      %2517 = vmatmul.mubr.bf16.gmra.mrb[0].mxu0 %v2456
      %v2518 = vpop.f32.mrb[0].mxu0
      %v2519 = vadd.f32 0.0, %v2518
      %v2520 = vpop.f32.mrb[0].mxu0
      %v2521 = vpop.f32.mrb[0].mxu0
      %v2522 = vadd.f32 0.0, %v2521
      %v2523 = vpop.f32.mrb[0].mxu0
      %2524 = vmatprep.mubr.bf16.mxu0 %v2459
      %2525 = vmatmul.mubr.bf16.gmra.mrb[0].mxu0 %v2458
      %v2526 = vpop.f32.mrb[0].mxu0
      %v2527 = vadd.f32 0.0, %v2526
      %v2528 = vpop.f32.mrb[0].mxu0
      %v2529 = vpop.f32.mrb[0].mxu0
      %v2530 = vadd.f32 0.0, %v2529
      %v2531 = vpop.f32.mrb[0].mxu0
      %2532 = vdwg.mxu0
      %v2533 = vmax.f32 %v2411, %v2503
      %v2534 = vmax.f32 %v2412, %v2506
      %v2535 = vmax.f32 %v2413, %v2511
      %v2536 = vmax.f32 %v2414, %v2514
      %v2537 = vmax.f32 %v2415, %v2519
      %v2538 = vmax.f32 %v2416, %v2522
      %v2539 = vmax.f32 %v2417, %v2527
      %v2540 = vmax.f32 %v2418, %v2530
      %s2541 = scalar_lea.vmem %s4, 384
      %v2542 = vld [vmem:[%s2541] sm:$0xff]
      %v2543 = vld [vmem:[%s2541 + $0x8] sm:$0xff]
      %v2544 = vld [vmem:[%s2541 + $0x10] sm:$0xff]
      %v2545 = vld [vmem:[%s2541 + $0x18] sm:$0xff]
      %v2546 = vld [vmem:[%s2541 + $0x20] sm:$0xff]
      %v2547 = vld [vmem:[%s2541 + $0x28] sm:$0xff]
      %v2548 = vld [vmem:[%s2541 + $0x30] sm:$0xff]
      %v2549 = vld [vmem:[%s2541 + $0x38] sm:$0xff]
      %v2558 = vunpack.c.l.b16 %v2542
      %v2559 = vunpack.c.h.b16 %v2542
      %v2560 = vunpack.c.l.b16 %v2543
      %v2561 = vunpack.c.h.b16 %v2543
      %v2562 = vunpack.c.l.b16 %v2544
      %v2563 = vunpack.c.h.b16 %v2544
      %v2564 = vunpack.c.l.b16 %v2545
      %v2565 = vunpack.c.h.b16 %v2545
      %v2566 = vunpack.c.l.b16 %v2546
      %v2567 = vunpack.c.h.b16 %v2546
      %v2568 = vunpack.c.l.b16 %v2547
      %v2569 = vunpack.c.h.b16 %v2547
      %v2570 = vunpack.c.l.b16 %v2548
      %v2571 = vunpack.c.h.b16 %v2548
      %v2572 = vunpack.c.l.b16 %v2549
      %v2573 = vunpack.c.h.b16 %v2549
      %v2574 = vpack.c.b16 %v2560, %v2558
      %v2575 = vpack.c.b16 %v2561, %v2559
      %v2576 = vpack.c.b16 %v2564, %v2562
      %v2577 = vpack.c.b16 %v2565, %v2563
      %v2578 = vpack.c.b16 %v2568, %v2566
      %v2579 = vpack.c.b16 %v2569, %v2567
      %v2580 = vpack.c.b16 %v2572, %v2570
      %v2581 = vpack.c.b16 %v2573, %v2571
      %2590 = vmatprep.subr.bf16.mxu0 0
      %2591 = vmatpush1.bf16.msra.mxu0 %v1802
      %2592 = vmatprep.subr.bf16.mxu0 0
      %2593 = vmatpush1.bf16.msra.mxu0 %v1803
      %2594 = vmatprep.subr.bf16.mxu0 0
      %2595 = vmatpush1.bf16.msra.mxu0 %v1804
      %2596 = vmatprep.subr.bf16.mxu0 0
      %2597 = vmatpush1.bf16.msra.mxu0 %v1805
      %2598 = vmatprep.subr.bf16.mxu0 0
      %2599 = vmatpush1.bf16.msra.mxu0 %v1806
      %2600 = vmatprep.subr.bf16.mxu0 0
      %2601 = vmatpush1.bf16.msra.mxu0 %v1807
      %2602 = vmatprep.subr.bf16.mxu0 0
      %2603 = vmatpush1.bf16.msra.mxu0 %v1808
      %2604 = vmatprep.subr.bf16.mxu0 0
      %2605 = vmatpush1.bf16.msra.mxu0 %v1809
      %2606 = vmatprep.subr.bf16.mxu0 0
      %2607 = vmatpush1.bf16.msra.mxu0 %v1810
      %2608 = vmatprep.subr.bf16.mxu0 0
      %2609 = vmatpush1.bf16.msra.mxu0 %v1811
      %2610 = vmatprep.subr.bf16.mxu0 0
      %2611 = vmatpush1.bf16.msra.mxu0 %v1812
      %2612 = vmatprep.subr.bf16.mxu0 0
      %2613 = vmatpush1.bf16.msra.mxu0 %v1813
      %2614 = vmatprep.subr.bf16.mxu0 0
      %2615 = vmatpush1.bf16.msra.mxu0 %v1814
      %2616 = vmatprep.subr.bf16.mxu0 0
      %2617 = vmatpush1.bf16.msra.mxu0 %v1815
      %2618 = vmatprep.subr.bf16.mxu0 0
      %2619 = vmatpush1.bf16.msra.mxu0 %v1816
      %2620 = vmatprep.subr.bf16.mxu0 0
      %2621 = vmatpush1.bf16.msra.mxu0 %v1817
      %2622 = vmatprep.mubr.bf16.mxu0 %v2575
      %2623 = vmatmul.mubr.bf16.gmra.mrb[0].mxu0 %v2574
      %v2624 = vpop.f32.mrb[0].mxu0
      %v2625 = vadd.f32 0.0, %v2624
      %v2626 = vpop.f32.mrb[0].mxu0
      %v2627 = vpop.f32.mrb[0].mxu0
      %v2628 = vadd.f32 0.0, %v2627
      %v2629 = vpop.f32.mrb[0].mxu0
      %2630 = vmatprep.mubr.bf16.mxu0 %v2577
      %2631 = vmatmul.mubr.bf16.gmra.mrb[0].mxu0 %v2576
      %v2632 = vpop.f32.mrb[0].mxu0
      %v2633 = vadd.f32 0.0, %v2632
      %v2634 = vpop.f32.mrb[0].mxu0
      %v2635 = vpop.f32.mrb[0].mxu0
      %v2636 = vadd.f32 0.0, %v2635
      %v2637 = vpop.f32.mrb[0].mxu0
      %2638 = vmatprep.mubr.bf16.mxu0 %v2579
      %2639 = vmatmul.mubr.bf16.gmra.mrb[0].mxu0 %v2578
      %v2640 = vpop.f32.mrb[0].mxu0
      %v2641 = vadd.f32 0.0, %v2640
      %v2642 = vpop.f32.mrb[0].mxu0
      %v2643 = vpop.f32.mrb[0].mxu0
      %v2644 = vadd.f32 0.0, %v2643
      %v2645 = vpop.f32.mrb[0].mxu0
      %2646 = vmatprep.mubr.bf16.mxu0 %v2581
      %2647 = vmatmul.mubr.bf16.gmra.mrb[0].mxu0 %v2580
      %v2648 = vpop.f32.mrb[0].mxu0
      %v2649 = vadd.f32 0.0, %v2648
      %v2650 = vpop.f32.mrb[0].mxu0
      %v2651 = vpop.f32.mrb[0].mxu0
      %v2652 = vadd.f32 0.0, %v2651
      %v2653 = vpop.f32.mrb[0].mxu0
      %2654 = vdwg.mxu0
      %v2655 = vmax.f32 %v2533, %v2625
      %v2656 = vmax.f32 %v2534, %v2628
      %v2657 = vmax.f32 %v2535, %v2633
      %v2658 = vmax.f32 %v2536, %v2636
      %v2659 = vmax.f32 %v2537, %v2641
      %v2660 = vmax.f32 %v2538, %v2644
      %v2661 = vmax.f32 %v2539, %v2649
      %v2662 = vmax.f32 %v2540, %v2652
      %s2663 = scalar_lea.vmem %s4, 448
      %v2664 = vld [vmem:[%s2663] sm:$0xff]
      %v2665 = vld [vmem:[%s2663 + $0x8] sm:$0xff]
      %v2666 = vld [vmem:[%s2663 + $0x10] sm:$0xff]
      %v2667 = vld [vmem:[%s2663 + $0x18] sm:$0xff]
      %v2668 = vld [vmem:[%s2663 + $0x20] sm:$0xff]
      %v2669 = vld [vmem:[%s2663 + $0x28] sm:$0xff]
      %v2670 = vld [vmem:[%s2663 + $0x30] sm:$0xff]
      %v2671 = vld [vmem:[%s2663 + $0x38] sm:$0xff]
      %v2680 = vunpack.c.l.b16 %v2664
      %v2681 = vunpack.c.h.b16 %v2664
      %v2682 = vunpack.c.l.b16 %v2665
      %v2683 = vunpack.c.h.b16 %v2665
      %v2684 = vunpack.c.l.b16 %v2666
      %v2685 = vunpack.c.h.b16 %v2666
      %v2686 = vunpack.c.l.b16 %v2667
      %v2687 = vunpack.c.h.b16 %v2667
      %v2688 = vunpack.c.l.b16 %v2668
      %v2689 = vunpack.c.h.b16 %v2668
      %v2690 = vunpack.c.l.b16 %v2669
      %v2691 = vunpack.c.h.b16 %v2669
      %v2692 = vunpack.c.l.b16 %v2670
      %v2693 = vunpack.c.h.b16 %v2670
      %v2694 = vunpack.c.l.b16 %v2671
      %v2695 = vunpack.c.h.b16 %v2671
      %v2696 = vpack.c.b16 %v2682, %v2680
      %v2697 = vpack.c.b16 %v2683, %v2681
      %v2698 = vpack.c.b16 %v2686, %v2684
      %v2699 = vpack.c.b16 %v2687, %v2685
      %v2700 = vpack.c.b16 %v2690, %v2688
      %v2701 = vpack.c.b16 %v2691, %v2689
      %v2702 = vpack.c.b16 %v2694, %v2692
      %v2703 = vpack.c.b16 %v2695, %v2693
      %2712 = vmatprep.subr.bf16.mxu0 0
      %2713 = vmatpush1.bf16.msra.mxu0 %v1802
      %2714 = vmatprep.subr.bf16.mxu0 0
      %2715 = vmatpush1.bf16.msra.mxu0 %v1803
      %2716 = vmatprep.subr.bf16.mxu0 0
      %2717 = vmatpush1.bf16.msra.mxu0 %v1804
      %2718 = vmatprep.subr.bf16.mxu0 0
      %2719 = vmatpush1.bf16.msra.mxu0 %v1805
      %2720 = vmatprep.subr.bf16.mxu0 0
      %2721 = vmatpush1.bf16.msra.mxu0 %v1806
      %2722 = vmatprep.subr.bf16.mxu0 0
      %2723 = vmatpush1.bf16.msra.mxu0 %v1807
      %2724 = vmatprep.subr.bf16.mxu0 0
      %2725 = vmatpush1.bf16.msra.mxu0 %v1808
      %2726 = vmatprep.subr.bf16.mxu0 0
      %2727 = vmatpush1.bf16.msra.mxu0 %v1809
      %2728 = vmatprep.subr.bf16.mxu0 0
      %2729 = vmatpush1.bf16.msra.mxu0 %v1810
      %2730 = vmatprep.subr.bf16.mxu0 0
      %2731 = vmatpush1.bf16.msra.mxu0 %v1811
      %2732 = vmatprep.subr.bf16.mxu0 0
      %2733 = vmatpush1.bf16.msra.mxu0 %v1812
      %2734 = vmatprep.subr.bf16.mxu0 0
      %2735 = vmatpush1.bf16.msra.mxu0 %v1813
      %2736 = vmatprep.subr.bf16.mxu0 0
      %2737 = vmatpush1.bf16.msra.mxu0 %v1814
      %2738 = vmatprep.subr.bf16.mxu0 0
      %2739 = vmatpush1.bf16.msra.mxu0 %v1815
      %2740 = vmatprep.subr.bf16.mxu0 0
      %2741 = vmatpush1.bf16.msra.mxu0 %v1816
      %2742 = vmatprep.subr.bf16.mxu0 0
      %2743 = vmatpush1.bf16.msra.mxu0 %v1817
      %2744 = vmatprep.mubr.bf16.mxu0 %v2697
      %2745 = vmatmul.mubr.bf16.gmra.mrb[0].mxu0 %v2696
      %v2746 = vpop.f32.mrb[0].mxu0
      %v2747 = vadd.f32 0.0, %v2746
      %v2748 = vpop.f32.mrb[0].mxu0
      %v2749 = vpop.f32.mrb[0].mxu0
      %v2750 = vadd.f32 0.0, %v2749
      %v2751 = vpop.f32.mrb[0].mxu0
      %2752 = vmatprep.mubr.bf16.mxu0 %v2699
      %2753 = vmatmul.mubr.bf16.gmra.mrb[0].mxu0 %v2698
      %v2754 = vpop.f32.mrb[0].mxu0
      %v2755 = vadd.f32 0.0, %v2754
      %v2756 = vpop.f32.mrb[0].mxu0
      %v2757 = vpop.f32.mrb[0].mxu0
      %v2758 = vadd.f32 0.0, %v2757
      %v2759 = vpop.f32.mrb[0].mxu0
      %2760 = vmatprep.mubr.bf16.mxu0 %v2701
      %2761 = vmatmul.mubr.bf16.gmra.mrb[0].mxu0 %v2700
      %v2762 = vpop.f32.mrb[0].mxu0
      %v2763 = vadd.f32 0.0, %v2762
      %v2764 = vpop.f32.mrb[0].mxu0
      %v2765 = vpop.f32.mrb[0].mxu0
      %v2766 = vadd.f32 0.0, %v2765
      %v2767 = vpop.f32.mrb[0].mxu0
      %2768 = vmatprep.mubr.bf16.mxu0 %v2703
      %2769 = vmatmul.mubr.bf16.gmra.mrb[0].mxu0 %v2702
      %v2770 = vpop.f32.mrb[0].mxu0
      %v2771 = vadd.f32 0.0, %v2770
      %v2772 = vpop.f32.mrb[0].mxu0
      %v2773 = vpop.f32.mrb[0].mxu0
      %v2774 = vadd.f32 0.0, %v2773
      %v2775 = vpop.f32.mrb[0].mxu0
      %2776 = vdwg.mxu0
      %v2777 = vmax.f32 %v2655, %v2747
      %v2778 = vmax.f32 %v2656, %v2750
      %v2779 = vmax.f32 %v2657, %v2755
      %v2780 = vmax.f32 %v2658, %v2758
      %v2781 = vmax.f32 %v2659, %v2763
      %v2782 = vmax.f32 %v2660, %v2766
      %v2783 = vmax.f32 %v2661, %v2771
      %v2784 = vmax.f32 %v2662, %v2774
      %s2785 = scalar_lea.vmem %s4, 512
      %v2786 = vld [vmem:[%s2785] sm:$0xff]
      %v2787 = vld [vmem:[%s2785 + $0x8] sm:$0xff]
      %v2788 = vld [vmem:[%s2785 + $0x10] sm:$0xff]
      %v2789 = vld [vmem:[%s2785 + $0x18] sm:$0xff]
      %v2790 = vld [vmem:[%s2785 + $0x20] sm:$0xff]
      %v2791 = vld [vmem:[%s2785 + $0x28] sm:$0xff]
      %v2792 = vld [vmem:[%s2785 + $0x30] sm:$0xff]
      %v2793 = vld [vmem:[%s2785 + $0x38] sm:$0xff]
      %v2802 = vunpack.c.l.b16 %v2786
      %v2803 = vunpack.c.h.b16 %v2786
      %v2804 = vunpack.c.l.b16 %v2787
      %v2805 = vunpack.c.h.b16 %v2787
      %v2806 = vunpack.c.l.b16 %v2788
      %v2807 = vunpack.c.h.b16 %v2788
      %v2808 = vunpack.c.l.b16 %v2789
      %v2809 = vunpack.c.h.b16 %v2789
      %v2810 = vunpack.c.l.b16 %v2790
      %v2811 = vunpack.c.h.b16 %v2790
      %v2812 = vunpack.c.l.b16 %v2791
      %v2813 = vunpack.c.h.b16 %v2791
      %v2814 = vunpack.c.l.b16 %v2792
      %v2815 = vunpack.c.h.b16 %v2792
      %v2816 = vunpack.c.l.b16 %v2793
      %v2817 = vunpack.c.h.b16 %v2793
      %v2818 = vpack.c.b16 %v2804, %v2802
      %v2819 = vpack.c.b16 %v2805, %v2803
      %v2820 = vpack.c.b16 %v2808, %v2806
      %v2821 = vpack.c.b16 %v2809, %v2807
      %v2822 = vpack.c.b16 %v2812, %v2810
      %v2823 = vpack.c.b16 %v2813, %v2811
      %v2824 = vpack.c.b16 %v2816, %v2814
      %v2825 = vpack.c.b16 %v2817, %v2815
      %2834 = vmatprep.subr.bf16.mxu0 0
      %2835 = vmatpush1.bf16.msra.mxu0 %v1802
      %2836 = vmatprep.subr.bf16.mxu0 0
      %2837 = vmatpush1.bf16.msra.mxu0 %v1803
      %2838 = vmatprep.subr.bf16.mxu0 0
      %2839 = vmatpush1.bf16.msra.mxu0 %v1804
      %2840 = vmatprep.subr.bf16.mxu0 0
      %2841 = vmatpush1.bf16.msra.mxu0 %v1805
      %2842 = vmatprep.subr.bf16.mxu0 0
      %2843 = vmatpush1.bf16.msra.mxu0 %v1806
      %2844 = vmatprep.subr.bf16.mxu0 0
      %2845 = vmatpush1.bf16.msra.mxu0 %v1807
      %2846 = vmatprep.subr.bf16.mxu0 0
      %2847 = vmatpush1.bf16.msra.mxu0 %v1808
      %2848 = vmatprep.subr.bf16.mxu0 0
      %2849 = vmatpush1.bf16.msra.mxu0 %v1809
      %2850 = vmatprep.subr.bf16.mxu0 0
      %2851 = vmatpush1.bf16.msra.mxu0 %v1810
      %2852 = vmatprep.subr.bf16.mxu0 0
      %2853 = vmatpush1.bf16.msra.mxu0 %v1811
      %2854 = vmatprep.subr.bf16.mxu0 0
      %2855 = vmatpush1.bf16.msra.mxu0 %v1812
      %2856 = vmatprep.subr.bf16.mxu0 0
      %2857 = vmatpush1.bf16.msra.mxu0 %v1813
      %2858 = vmatprep.subr.bf16.mxu0 0
      %2859 = vmatpush1.bf16.msra.mxu0 %v1814
      %2860 = vmatprep.subr.bf16.mxu0 0
      %2861 = vmatpush1.bf16.msra.mxu0 %v1815
      %2862 = vmatprep.subr.bf16.mxu0 0
      %2863 = vmatpush1.bf16.msra.mxu0 %v1816
      %2864 = vmatprep.subr.bf16.mxu0 0
      %2865 = vmatpush1.bf16.msra.mxu0 %v1817
      %2866 = vmatprep.mubr.bf16.mxu0 %v2819
      %2867 = vmatmul.mubr.bf16.gmra.mrb[0].mxu0 %v2818
      %v2868 = vpop.f32.mrb[0].mxu0
      %v2869 = vadd.f32 0.0, %v2868
      %v2870 = vpop.f32.mrb[0].mxu0
      %v2871 = vpop.f32.mrb[0].mxu0
      %v2872 = vadd.f32 0.0, %v2871
      %v2873 = vpop.f32.mrb[0].mxu0
      %2874 = vmatprep.mubr.bf16.mxu0 %v2821
      %2875 = vmatmul.mubr.bf16.gmra.mrb[0].mxu0 %v2820
      %v2876 = vpop.f32.mrb[0].mxu0
      %v2877 = vadd.f32 0.0, %v2876
      %v2878 = vpop.f32.mrb[0].mxu0
      %v2879 = vpop.f32.mrb[0].mxu0
      %v2880 = vadd.f32 0.0, %v2879
      %v2881 = vpop.f32.mrb[0].mxu0
      %2882 = vmatprep.mubr.bf16.mxu0 %v2823
      %2883 = vmatmul.mubr.bf16.gmra.mrb[0].mxu0 %v2822
      %v2884 = vpop.f32.mrb[0].mxu0
      %v2885 = vadd.f32 0.0, %v2884
      %v2886 = vpop.f32.mrb[0].mxu0
      %v2887 = vpop.f32.mrb[0].mxu0
      %v2888 = vadd.f32 0.0, %v2887
      %v2889 = vpop.f32.mrb[0].mxu0
      %2890 = vmatprep.mubr.bf16.mxu0 %v2825
      %2891 = vmatmul.mubr.bf16.gmra.mrb[0].mxu0 %v2824
      %v2892 = vpop.f32.mrb[0].mxu0
      %v2893 = vadd.f32 0.0, %v2892
      %v2894 = vpop.f32.mrb[0].mxu0
      %v2895 = vpop.f32.mrb[0].mxu0
      %v2896 = vadd.f32 0.0, %v2895
      %v2897 = vpop.f32.mrb[0].mxu0
      %2898 = vdwg.mxu0
      %v2899 = vmax.f32 %v2777, %v2869
      %v2900 = vmax.f32 %v2778, %v2872
      %v2901 = vmax.f32 %v2779, %v2877
      %v2902 = vmax.f32 %v2780, %v2880
      %v2903 = vmax.f32 %v2781, %v2885
      %v2904 = vmax.f32 %v2782, %v2888
      %v2905 = vmax.f32 %v2783, %v2893
      %v2906 = vmax.f32 %v2784, %v2896
      %v2907 = vpack.c.bf16 %v2900, %v2899
      %v2908 = vpack.c.bf16 %v2902, %v2901
      %v2909 = vpack.c.bf16 %v2904, %v2903
      %v2910 = vpack.c.bf16 %v2906, %v2905
      %v2915 = vunpack.c.l.b16 %v2907
      %v2916 = vunpack.c.h.b16 %v2907
      %v2917 = vunpack.c.l.b16 %v2908
      %v2918 = vunpack.c.h.b16 %v2908
      %v2919 = vunpack.c.l.b16 %v2909
      %v2920 = vunpack.c.h.b16 %v2909
      %v2921 = vunpack.c.l.b16 %v2910
      %v2922 = vunpack.c.h.b16 %v2910
      %v2923 = vpack.c.b16 %v2915, %v2915
      %v2924 = vpack.c.b16 %v2916, %v2916
      %v2925 = vpack.c.b16 %v2917, %v2917
      %v2926 = vpack.c.b16 %v2918, %v2918
      %v2927 = vpack.c.b16 %v2919, %v2919
      %v2928 = vpack.c.b16 %v2920, %v2920
      %v2929 = vpack.c.b16 %v2921, %v2921
      %v2930 = vpack.c.b16 %v2922, %v2922
      %vm2939 = vcmask 519168
      %2940 = vst.msk [vmem:[%s224] sm:$0xf] %vm2939, %v2923
      %2941 = vst.msk [vmem:[%s224 + $0x4] sm:$0xf] %vm2939, %v2924
      %2942 = vst.msk [vmem:[%s224 + $0x8] sm:$0xf] %vm2939, %v2925
      %2943 = vst.msk [vmem:[%s224 + $0xc] sm:$0xf] %vm2939, %v2926
      %2944 = vst.msk [vmem:[%s224 + $0x10] sm:$0xf] %vm2939, %v2927
      %2945 = vst.msk [vmem:[%s224 + $0x14] sm:$0xf] %vm2939, %v2928
      %2946 = vst.msk [vmem:[%s224 + $0x18] sm:$0xf] %vm2939, %v2929
      %2947 = vst.msk [vmem:[%s224 + $0x1c] sm:$0xf] %vm2939, %v2930
      %p2948 = scmp.lt.s32.totalorder %s16, 1
      %s2949 = scalar_select %p2948, %s16, 1
      %s2950 = smul.addr %s2949, 8
      %s2951 = smul.addr %s2950, 4
      %s2952 = scalar_lea.vmem %s5, %s2951
      // Predicated region
      $region41: #{videonet_forward.5} parent=39 // pred_check
        %p2953 = pneg %p144
      $region42: #{videonet_forward.5} parent=39 // pred_check_branch
        %2955 = sbr.rel (%p2953) target = $region44
      $region43: #{videonet_forward.5} parent=39 // pred_region
        _
      $region44: #{videonet_forward.5} parent=39 // pred_fallthru
        _
    $region40: #{videonet_forward.5} parent=5 // pred_fallthru
      _
    %p2956 = scmp.le.s32.totalorder 2, %s11
    // Predicated region
    $region45: #{videonet_forward.5} parent=5 // pred_check
      %p2957 = pneg %p2956
    $region46: #{videonet_forward.5} parent=5 // pred_check_branch
      %2959 = sbr.rel (%p2957) target = $region48
    $region47: #{videonet_forward.5} parent=5 // pred_region
      %s2960 = ssub.s32 %s11, 2
      // Predicated region
      $region49: #{videonet_forward.5} parent=47 // pred_check
        %p2961 = pneg %p150
      $region50: #{videonet_forward.5} parent=47 // pred_check_branch
        %2963 = sbr.rel (%p2961) target = $region52
      $region51: #{videonet_forward.5} parent=47 // pred_region
        %p2964 = scmp.lt.s32.totalorder %s17, 1
        %s2965 = scalar_select %p2964, %s17, 1
        %s2966 = smul.addr %s2965, 8
        %s2967 = smul.addr %s2966, 4
        %s2968 = scalar_lea.vmem %s5, %s2967
      $region52: #{videonet_forward.5} parent=47 // pred_fallthru
        _
    $region48: #{videonet_forward.5} parent=5 // pred_fallthru
      _
  $region6: #{videonet_forward.5} parent=0 // loop_footer
    %s15 = sadd.s32 1, %s11
  $region7: #{videonet_forward.5} parent=0 // loop_footer_branch
    %10 = sbr.rel target = $region3
  $region8: #{videonet_forward.5} parent=0 // loop_exit
    _

// kernel: videonet_forward.6
$region0: #{videonet_forward.6}
  #allocation0 [shape = 'u32[]', space=smem, size = 0x4, offset = 0x4, fixed_abs, tag = 'smem constant byte address 0x4 - core index']
  #allocation1 [shape = 'u32[144,128]{1,0:T(1,128)}', space=vmem, size = 0x12000, scoped, tag = 'internal scratch']
  %s0 = inlined_call_operand.vmem [shape: bf16[2,64,1728], index: 0, kind: input, shape index: {}]
  %s1 = inlined_call_operand.vmem [shape: bf16[1728,64], index: 1, kind: input, shape index: {}]
  %s2 = inlined_call_operand.vmem [shape: f32[1,64], index: 2, kind: input, shape index: {}]
  %s3 = inlined_call_operand.vmem [shape: f32[1,64], index: 3, kind: input, shape index: {}]
  %s4 = inlined_call_operand.vmem [shape: bf16[2,64,64], index: 4, kind: output, shape index: {}]
  %s5 = sld [smem:[#allocation0]]
  $region49: #{videonet_forward.6} parent=0
    _
  %s7 = ssub.s32 1, %s5
  %s8 = scalar_select 0, %s7, %s5
  loop: start=0, step=1, limit=4
  $region2: #{videonet_forward.6} parent=0 // loop_pre_header
    _
  $region3: #{videonet_forward.6} parent=0 // loop_header
    %s10 = sphi 0, %s14
    %p11 = scmp.ge.s32.totalorder %s10, 4
    %s20 = sphi 0, %s22
    %s23 = sphi 0, %s20
    %s24 = sphi 0, %s23
    %s40 = sphi 0, %s24
    %s44 = sphi 0, %s44
    %s46 = sphi 0, %s44
    %s47 = sphi 0, %s46
    %s61 = sphi 0, %s47
    %s65 = sphi 0, %s65
    %s67 = sphi 0, %s65
    %s68 = sphi 0, %s67
    %s82 = sphi 0, %s68
    %s86 = sphi 0, %s86
    %s88 = sphi 0, %s86
    %s89 = sphi 0, %s88
    %s103 = sphi 0, %s89
    %s109 = sphi 0, %s111
    %s112 = sphi 0, %s109
    %s113 = sphi 0, %s112
    %s129 = sphi 0, %s113
  $region4: #{videonet_forward.6} parent=0 // loop_header_branch
    %13 = sbr.rel (%p11) target = $region8
  $region5: #{videonet_forward.6} parent=0 // loop_body
    %s15 = ssub.s32 %s10, 1
    %s16 = ssub.s32 %s10, 2
    %s17 = sadd.s32 %s10, 1
    %s18 = ssub.s32 %s10, %s17
    %p19 = scmp.eq.s32.totalorder %s18, 0
    %s21 = sadd.s32 %s20, 1
    %s22 = scalar_select %p19, %s20, %s21
    %p25 = pneg %p19
    %p26 = scmp.eq.s32.totalorder %s10, 1
    %p27 = por %p25, %p26
    %p28 = scmp.ne.s32.totalorder %s20, %s23
    %p29 = scmp.eq.s32.totalorder %s10, 0
    %p30 = por %p28, %p29
    %p31 = scmp.ne.s32.totalorder %s20, %s23
    %p32 = scmp.eq.s32.totalorder %s15, 1
    %p33 = por %p31, %p32
    %p34 = scmp.ne.s32.totalorder %s23, %s24
    %p35 = scmp.eq.s32.totalorder %s15, 0
    %p36 = por %p34, %p35
    %p37 = scmp.ne.s32.totalorder %s23, %s24
    %p38 = scmp.eq.s32.totalorder %s16, 1
    %p39 = por %p37, %p38
    %p41 = scmp.ne.s32.totalorder %s24, %s40
    %p42 = scmp.eq.s32.totalorder %s16, 0
    %p43 = por %p41, %p42
    %s45 = sadd.s32 %s44, 1
    %p48 = scmp.eq.s32.totalorder %s10, 1
    %p49 = scmp.ne.s32.totalorder %s44, %s46
    %p50 = scmp.eq.s32.totalorder %s10, 0
    %p51 = por %p49, %p50
    %p52 = scmp.ne.s32.totalorder %s44, %s46
    %p53 = scmp.eq.s32.totalorder %s15, 1
    %p54 = por %p52, %p53
    %p55 = scmp.ne.s32.totalorder %s46, %s47
    %p56 = scmp.eq.s32.totalorder %s15, 0
    %p57 = por %p55, %p56
    %p58 = scmp.ne.s32.totalorder %s46, %s47
    %p59 = scmp.eq.s32.totalorder %s16, 1
    %p60 = por %p58, %p59
    %p62 = scmp.ne.s32.totalorder %s47, %s61
    %p63 = scmp.eq.s32.totalorder %s16, 0
    %p64 = por %p62, %p63
    %s66 = sadd.s32 %s65, 1
    %p69 = scmp.eq.s32.totalorder %s10, 1
    %p70 = scmp.ne.s32.totalorder %s65, %s67
    %p71 = scmp.eq.s32.totalorder %s10, 0
    %p72 = por %p70, %p71
    %p73 = scmp.ne.s32.totalorder %s65, %s67
    %p74 = scmp.eq.s32.totalorder %s15, 1
    %p75 = por %p73, %p74
    %p76 = scmp.ne.s32.totalorder %s67, %s68
    %p77 = scmp.eq.s32.totalorder %s15, 0
    %p78 = por %p76, %p77
    %p79 = scmp.ne.s32.totalorder %s67, %s68
    %p80 = scmp.eq.s32.totalorder %s16, 1
    %p81 = por %p79, %p80
    %p83 = scmp.ne.s32.totalorder %s68, %s82
    %p84 = scmp.eq.s32.totalorder %s16, 0
    %p85 = por %p83, %p84
    %s87 = sadd.s32 %s86, 1
    %p90 = scmp.eq.s32.totalorder %s10, 1
    %p91 = scmp.ne.s32.totalorder %s86, %s88
    %p92 = scmp.eq.s32.totalorder %s10, 0
    %p93 = por %p91, %p92
    %p94 = scmp.ne.s32.totalorder %s86, %s88
    %p95 = scmp.eq.s32.totalorder %s15, 1
    %p96 = por %p94, %p95
    %p97 = scmp.ne.s32.totalorder %s88, %s89
    %p98 = scmp.eq.s32.totalorder %s15, 0
    %p99 = por %p97, %p98
    %p100 = scmp.ne.s32.totalorder %s88, %s89
    %p101 = scmp.eq.s32.totalorder %s16, 1
    %p102 = por %p100, %p101
    %p104 = scmp.ne.s32.totalorder %s89, %s103
    %p105 = scmp.eq.s32.totalorder %s16, 0
    %p106 = por %p104, %p105
    %s107 = ssub.s32 %s10, %s17
    %p108 = scmp.eq.s32.totalorder %s107, 0
    %s110 = sadd.s32 %s109, 1
    %s111 = scalar_select %p108, %s109, %s110
    %p114 = pneg %p108
    %p115 = scmp.eq.s32.totalorder %s10, 1
    %p116 = por %p114, %p115
    %p117 = scmp.ne.s32.totalorder %s109, %s112
    %p118 = scmp.eq.s32.totalorder %s10, 0
    %p119 = por %p117, %p118
    %p120 = scmp.ne.s32.totalorder %s109, %s112
    %p121 = scmp.eq.s32.totalorder %s15, 1
    %p122 = por %p120, %p121
    %p123 = scmp.ne.s32.totalorder %s112, %s113
    %p124 = scmp.eq.s32.totalorder %s15, 0
    %p125 = por %p123, %p124
    %p126 = scmp.ne.s32.totalorder %s112, %s113
    %p127 = scmp.eq.s32.totalorder %s16, 1
    %p128 = por %p126, %p127
    %p130 = scmp.ne.s32.totalorder %s113, %s129
    %p131 = scmp.eq.s32.totalorder %s16, 0
    %p132 = por %p130, %p131
    %p133 = scmp.le.s32.totalorder 1, %s10
    %p134 = scmp.lt.s32.totalorder %s10, 3
    %p135 = pnand %p133, %p134
    %p136 = pneg %p135
    // Predicated region
    $region9: #{videonet_forward.6} parent=5 // pred_check
      _
    $region10: #{videonet_forward.6} parent=5 // pred_check_branch
      %138 = sbr.rel (%p135) target = $region12
    $region11: #{videonet_forward.6} parent=5 // pred_region
      %s139 = ssub.s32 %s10, 1
      // Predicated region
      $region13: #{videonet_forward.6} parent=11 // pred_check
        %p140 = pneg %p57
      $region14: #{videonet_forward.6} parent=11 // pred_check_branch
        %142 = sbr.rel (%p140) target = $region16
      $region15: #{videonet_forward.6} parent=11 // pred_region
        _
      $region16: #{videonet_forward.6} parent=11 // pred_fallthru
        _
      // Predicated region
      $region17: #{videonet_forward.6} parent=11 // pred_check
        %p143 = pneg %p78
      $region18: #{videonet_forward.6} parent=11 // pred_check_branch
        %145 = sbr.rel (%p143) target = $region20
      $region19: #{videonet_forward.6} parent=11 // pred_region
        _
      $region20: #{videonet_forward.6} parent=11 // pred_fallthru
        _
      // Predicated region
      $region21: #{videonet_forward.6} parent=11 // pred_check
        %p146 = pneg %p99
      $region22: #{videonet_forward.6} parent=11 // pred_check_branch
        %148 = sbr.rel (%p146) target = $region24
      $region23: #{videonet_forward.6} parent=11 // pred_region
        _
      $region24: #{videonet_forward.6} parent=11 // pred_fallthru
        _
    $region12: #{videonet_forward.6} parent=5 // pred_fallthru
      _
    %p149 = scmp.lt.s32.totalorder %s10, 2
    // Predicated region
    $region25: #{videonet_forward.6} parent=5 // pred_check
      %p150 = pneg %p149
    $region26: #{videonet_forward.6} parent=5 // pred_check_branch
      %152 = sbr.rel (%p150) target = $region28
    $region27: #{videonet_forward.6} parent=5 // pred_region
      // Predicated region
      $region29: #{videonet_forward.6} parent=27 // pred_check
        %p153 = pneg %p30
      $region30: #{videonet_forward.6} parent=27 // pred_check_branch
        %155 = sbr.rel (%p153) target = $region32
      $region31: #{videonet_forward.6} parent=27 // pred_region
        %p156 = scmp.lt.s32.totalorder %s10, 1
        %s157 = scalar_select %p156, %s10, 1
        %s158 = smul.addr %s157, 112
        %s159 = smul.addr %s158, 4
        %s160 = scalar_lea.vmem %s0, %s159
      $region32: #{videonet_forward.6} parent=27 // pred_fallthru
        _
    $region28: #{videonet_forward.6} parent=5 // pred_fallthru
      _
    %p161 = scmp.le.s32.totalorder 1, %s10
    %p162 = scmp.lt.s32.totalorder %s10, 3
    %p163 = pnand %p161, %p162
    %p164 = pneg %p163
    // Predicated region
    $region33: #{videonet_forward.6} parent=5 // pred_check
      _
    $region34: #{videonet_forward.6} parent=5 // pred_check_branch
      %166 = sbr.rel (%p163) target = $region36
    $region35: #{videonet_forward.6} parent=5 // pred_region
      %s167 = ssub.s32 %s10, 1
      %p168 = scmp.lt.s32.totalorder %s15, 1
      %s169 = scalar_select %p168, %s15, 1
      %s170 = smul.addr %s169, 112
      %s171 = smul.addr %s170, 4
      %s172 = scalar_lea.vmem %s0, %s171
      %p173 = pneg %p36
      %p174 = pneg %p33
      %p175 = pneg %p57
      %p176 = pneg %p54
      %p177 = pneg %p78
      %p178 = pneg %p75
      %p179 = pneg %p99
      %p180 = pneg %p96
      %p181 = pneg %p125
      %p182 = pneg %p122
      %p183 = scmp.lt.s32.totalorder %s15, 1
      %s184 = scalar_select %p183, %s15, 1
      %s185 = smul.addr %s184, 8
      %s186 = smul.addr %s185, 4
      %s187 = scalar_lea.vmem %s4, %s186
      %p188 = scmp.lt.s32.totalorder %s15, 1
      %s189 = scalar_select %p188, %s15, 1
      %s190 = smul.addr %s189, 112
      %s191 = smul.addr %s190, 4
      %s192 = scalar_lea.vmem %s0, %s191
      %p193 = scmp.lt.s32.totalorder %s15, 1
      %s194 = scalar_select %p193, %s15, 1
      %s195 = smul.addr %s194, 8
      %s196 = smul.addr %s195, 4
      %s197 = scalar_lea.vmem %s4, %s196
      %v199 = vld [vmem:[%s192] sm:$0xff]
      %v200 = vld [vmem:[%s192 + $0x8] sm:$0xff]
      %v201 = vld [vmem:[%s192 + $0x10] sm:$0xff]
      %v202 = vld [vmem:[%s192 + $0x18] sm:$0xff]
      %v203 = vld [vmem:[%s192 + $0x20] sm:$0xff]
      %v204 = vld [vmem:[%s192 + $0x28] sm:$0xff]
      %v205 = vld [vmem:[%s192 + $0x30] sm:$0xff]
      %v206 = vld [vmem:[%s192 + $0x38] sm:$0xff]
      %v207 = vld [vmem:[%s192 + $0x40] sm:$0xff]
      %v208 = vld [vmem:[%s192 + $0x48] sm:$0xff]
      %v209 = vld [vmem:[%s192 + $0x50] sm:$0xff]
      %v210 = vld [vmem:[%s192 + $0x58] sm:$0xff]
      %v211 = vld [vmem:[%s192 + $0x60] sm:$0xff]
      %v212 = vld [vmem:[%s192 + $0x68] sm:$0xff]
      %v213 = vld [vmem:[%s192 + $0x70] sm:$0xff]
      %v214 = vld [vmem:[%s192 + $0x78] sm:$0xff]
      %v215 = vld [vmem:[%s192 + $0x80] sm:$0xff]
      %v216 = vld [vmem:[%s192 + $0x88] sm:$0xff]
      %v217 = vld [vmem:[%s192 + $0x90] sm:$0xff]
      %v218 = vld [vmem:[%s192 + $0x98] sm:$0xff]
      %v219 = vld [vmem:[%s192 + $0xa0] sm:$0xff]
      %v220 = vld [vmem:[%s192 + $0xa8] sm:$0xff]
      %v221 = vld [vmem:[%s192 + $0xb0] sm:$0xff]
      %v222 = vld [vmem:[%s192 + $0xb8] sm:$0xff]
      %v223 = vld [vmem:[%s192 + $0xc0] sm:$0xff]
      %v224 = vld [vmem:[%s192 + $0xc8] sm:$0xff]
      %v225 = vld [vmem:[%s192 + $0xd0] sm:$0xff]
      %v226 = vld [vmem:[%s192 + $0xd8] sm:$0xff]
      %v227 = vld [vmem:[%s192 + $0xe0] sm:$0xff]
      %v228 = vld [vmem:[%s192 + $0xe8] sm:$0xff]
      %v229 = vld [vmem:[%s192 + $0xf0] sm:$0xff]
      %v230 = vld [vmem:[%s192 + $0xf8] sm:$0xff]
      %v231 = vld [vmem:[%s192 + $0x100] sm:$0xff]
      %v232 = vld [vmem:[%s192 + $0x108] sm:$0xff]
      %v233 = vld [vmem:[%s192 + $0x110] sm:$0xff]
      %v234 = vld [vmem:[%s192 + $0x118] sm:$0xff]
      %v235 = vld [vmem:[%s192 + $0x120] sm:$0xff]
      %v236 = vld [vmem:[%s192 + $0x128] sm:$0xff]
      %v237 = vld [vmem:[%s192 + $0x130] sm:$0xff]
      %v238 = vld [vmem:[%s192 + $0x138] sm:$0xff]
      %v239 = vld [vmem:[%s192 + $0x140] sm:$0xff]
      %v240 = vld [vmem:[%s192 + $0x148] sm:$0xff]
      %v241 = vld [vmem:[%s192 + $0x150] sm:$0xff]
      %v242 = vld [vmem:[%s192 + $0x158] sm:$0xff]
      %v243 = vld [vmem:[%s192 + $0x160] sm:$0xff]
      %v244 = vld [vmem:[%s192 + $0x168] sm:$0xff]
      %v245 = vld [vmem:[%s192 + $0x170] sm:$0xff]
      %v246 = vld [vmem:[%s192 + $0x178] sm:$0xff]
      %v247 = vld [vmem:[%s192 + $0x180] sm:$0xff]
      %v248 = vld [vmem:[%s192 + $0x188] sm:$0xff]
      %v249 = vld [vmem:[%s192 + $0x190] sm:$0xff]
      %v250 = vld [vmem:[%s192 + $0x198] sm:$0xff]
      %v251 = vld [vmem:[%s192 + $0x1a0] sm:$0xff]
      %v252 = vld [vmem:[%s192 + $0x1a8] sm:$0xff]
      %v253 = vld [vmem:[%s192 + $0x1b0] sm:$0xff]
      %v254 = vld [vmem:[%s192 + $0x1b8] sm:$0xff]
      %v255 = vld [vmem:[%s1] sm:$0xf]
      %v256 = vld [vmem:[%s1 + $0x4] sm:$0xf]
      %v257 = vld [vmem:[%s1 + $0x8] sm:$0xf]
      %v258 = vld [vmem:[%s1 + $0xc] sm:$0xf]
      %v259 = vld [vmem:[%s1 + $0x10] sm:$0xf]
      %v260 = vld [vmem:[%s1 + $0x14] sm:$0xf]
      %v261 = vld [vmem:[%s1 + $0x18] sm:$0xf]
      %v262 = vld [vmem:[%s1 + $0x1c] sm:$0xf]
      %v263 = vld [vmem:[%s1 + $0x20] sm:$0xf]
      %v264 = vld [vmem:[%s1 + $0x24] sm:$0xf]
      %v265 = vld [vmem:[%s1 + $0x28] sm:$0xf]
      %v266 = vld [vmem:[%s1 + $0x2c] sm:$0xf]
      %v267 = vld [vmem:[%s1 + $0x30] sm:$0xf]
      %v268 = vld [vmem:[%s1 + $0x34] sm:$0xf]
      %v269 = vld [vmem:[%s1 + $0x38] sm:$0xf]
      %v270 = vld [vmem:[%s1 + $0x3c] sm:$0xf]
      %v271 = vld [vmem:[%s1 + $0x40] sm:$0xf]
      %v272 = vld [vmem:[%s1 + $0x44] sm:$0xf]
      %v273 = vld [vmem:[%s1 + $0x48] sm:$0xf]
      %v274 = vld [vmem:[%s1 + $0x4c] sm:$0xf]
      %v275 = vld [vmem:[%s1 + $0x50] sm:$0xf]
      %v276 = vld [vmem:[%s1 + $0x54] sm:$0xf]
      %v277 = vld [vmem:[%s1 + $0x58] sm:$0xf]
      %v278 = vld [vmem:[%s1 + $0x5c] sm:$0xf]
      %v279 = vld [vmem:[%s1 + $0x60] sm:$0xf]
      %v280 = vld [vmem:[%s1 + $0x64] sm:$0xf]
      %v281 = vld [vmem:[%s1 + $0x68] sm:$0xf]
      %v282 = vld [vmem:[%s1 + $0x6c] sm:$0xf]
      %v283 = vld [vmem:[%s1 + $0x70] sm:$0xf]
      %v284 = vld [vmem:[%s1 + $0x74] sm:$0xf]
      %v285 = vld [vmem:[%s1 + $0x78] sm:$0xf]
      %v286 = vld [vmem:[%s1 + $0x7c] sm:$0xf]
      %v287 = vld [vmem:[%s1 + $0x80] sm:$0xf]
      %v288 = vld [vmem:[%s1 + $0x84] sm:$0xf]
      %v289 = vld [vmem:[%s1 + $0x88] sm:$0xf]
      %v290 = vld [vmem:[%s1 + $0x8c] sm:$0xf]
      %v291 = vld [vmem:[%s1 + $0x90] sm:$0xf]
      %v292 = vld [vmem:[%s1 + $0x94] sm:$0xf]
      %v293 = vld [vmem:[%s1 + $0x98] sm:$0xf]
      %v294 = vld [vmem:[%s1 + $0x9c] sm:$0xf]
      %v295 = vld [vmem:[%s1 + $0xa0] sm:$0xf]
      %v296 = vld [vmem:[%s1 + $0xa4] sm:$0xf]
      %v297 = vld [vmem:[%s1 + $0xa8] sm:$0xf]
      %v298 = vld [vmem:[%s1 + $0xac] sm:$0xf]
      %v299 = vld [vmem:[%s1 + $0xb0] sm:$0xf]
      %v300 = vld [vmem:[%s1 + $0xb4] sm:$0xf]
      %v301 = vld [vmem:[%s1 + $0xb8] sm:$0xf]
      %v302 = vld [vmem:[%s1 + $0xbc] sm:$0xf]
      %v303 = vld [vmem:[%s1 + $0xc0] sm:$0xf]
      %v304 = vld [vmem:[%s1 + $0xc4] sm:$0xf]
      %v305 = vld [vmem:[%s1 + $0xc8] sm:$0xf]
      %v306 = vld [vmem:[%s1 + $0xcc] sm:$0xf]
      %v307 = vld [vmem:[%s1 + $0xd0] sm:$0xf]
      %v308 = vld [vmem:[%s1 + $0xd4] sm:$0xf]
      %v309 = vld [vmem:[%s1 + $0xd8] sm:$0xf]
      %v310 = vld [vmem:[%s1 + $0xdc] sm:$0xf]
      %v311 = vld [vmem:[%s1 + $0xe0] sm:$0xf]
      %v312 = vld [vmem:[%s1 + $0xe4] sm:$0xf]
      %v313 = vld [vmem:[%s1 + $0xe8] sm:$0xf]
      %v314 = vld [vmem:[%s1 + $0xec] sm:$0xf]
      %v315 = vld [vmem:[%s1 + $0xf0] sm:$0xf]
      %v316 = vld [vmem:[%s1 + $0xf4] sm:$0xf]
      %v317 = vld [vmem:[%s1 + $0xf8] sm:$0xf]
      %v318 = vld [vmem:[%s1 + $0xfc] sm:$0xf]
      %v319 = vld [vmem:[%s1 + $0x100] sm:$0xf]
      %v320 = vld [vmem:[%s1 + $0x104] sm:$0xf]
      %v321 = vld [vmem:[%s1 + $0x108] sm:$0xf]
      %v322 = vld [vmem:[%s1 + $0x10c] sm:$0xf]
      %v323 = vld [vmem:[%s1 + $0x110] sm:$0xf]
      %v324 = vld [vmem:[%s1 + $0x114] sm:$0xf]
      %v325 = vld [vmem:[%s1 + $0x118] sm:$0xf]
      %v326 = vld [vmem:[%s1 + $0x11c] sm:$0xf]
      %v327 = vld [vmem:[%s1 + $0x120] sm:$0xf]
      %v328 = vld [vmem:[%s1 + $0x124] sm:$0xf]
      %v329 = vld [vmem:[%s1 + $0x128] sm:$0xf]
      %v330 = vld [vmem:[%s1 + $0x12c] sm:$0xf]
      %v331 = vld [vmem:[%s1 + $0x130] sm:$0xf]
      %v332 = vld [vmem:[%s1 + $0x134] sm:$0xf]
      %v333 = vld [vmem:[%s1 + $0x138] sm:$0xf]
      %v334 = vld [vmem:[%s1 + $0x13c] sm:$0xf]
      %v335 = vld [vmem:[%s1 + $0x140] sm:$0xf]
      %v336 = vld [vmem:[%s1 + $0x144] sm:$0xf]
      %v337 = vld [vmem:[%s1 + $0x148] sm:$0xf]
      %v338 = vld [vmem:[%s1 + $0x14c] sm:$0xf]
      %v339 = vld [vmem:[%s1 + $0x150] sm:$0xf]
      %v340 = vld [vmem:[%s1 + $0x154] sm:$0xf]
      %v341 = vld [vmem:[%s1 + $0x158] sm:$0xf]
      %v342 = vld [vmem:[%s1 + $0x15c] sm:$0xf]
      %v343 = vld [vmem:[%s1 + $0x160] sm:$0xf]
      %v344 = vld [vmem:[%s1 + $0x164] sm:$0xf]
      %v345 = vld [vmem:[%s1 + $0x168] sm:$0xf]
      %v346 = vld [vmem:[%s1 + $0x16c] sm:$0xf]
      %v347 = vld [vmem:[%s1 + $0x170] sm:$0xf]
      %v348 = vld [vmem:[%s1 + $0x174] sm:$0xf]
      %v349 = vld [vmem:[%s1 + $0x178] sm:$0xf]
      %v350 = vld [vmem:[%s1 + $0x17c] sm:$0xf]
      %v351 = vld [vmem:[%s1 + $0x180] sm:$0xf]
      %v352 = vld [vmem:[%s1 + $0x184] sm:$0xf]
      %v353 = vld [vmem:[%s1 + $0x188] sm:$0xf]
      %v354 = vld [vmem:[%s1 + $0x18c] sm:$0xf]
      %v355 = vld [vmem:[%s1 + $0x190] sm:$0xf]
      %v356 = vld [vmem:[%s1 + $0x194] sm:$0xf]
      %v357 = vld [vmem:[%s1 + $0x198] sm:$0xf]
      %v358 = vld [vmem:[%s1 + $0x19c] sm:$0xf]
      %v359 = vld [vmem:[%s1 + $0x1a0] sm:$0xf]
      %v360 = vld [vmem:[%s1 + $0x1a4] sm:$0xf]
      %v361 = vld [vmem:[%s1 + $0x1a8] sm:$0xf]
      %v362 = vld [vmem:[%s1 + $0x1ac] sm:$0xf]
      %v363 = vld [vmem:[%s1 + $0x1b0] sm:$0xf]
      %v364 = vld [vmem:[%s1 + $0x1b4] sm:$0xf]
      %v365 = vld [vmem:[%s1 + $0x1b8] sm:$0xf]
      %v366 = vld [vmem:[%s1 + $0x1bc] sm:$0xf]
      %v367 = vld [vmem:[%s1 + $0x1c0] sm:$0xf]
      %v368 = vld [vmem:[%s1 + $0x1c4] sm:$0xf]
      %v369 = vld [vmem:[%s1 + $0x1c8] sm:$0xf]
      %v370 = vld [vmem:[%s1 + $0x1cc] sm:$0xf]
      %v371 = vld [vmem:[%s1 + $0x1d0] sm:$0xf]
      %v372 = vld [vmem:[%s1 + $0x1d4] sm:$0xf]
      %v373 = vld [vmem:[%s1 + $0x1d8] sm:$0xf]
      %v374 = vld [vmem:[%s1 + $0x1dc] sm:$0xf]
      %v375 = vld [vmem:[%s1 + $0x1e0] sm:$0xf]
      %v376 = vld [vmem:[%s1 + $0x1e4] sm:$0xf]
      %v377 = vld [vmem:[%s1 + $0x1e8] sm:$0xf]
      %v378 = vld [vmem:[%s1 + $0x1ec] sm:$0xf]
      %v379 = vld [vmem:[%s1 + $0x1f0] sm:$0xf]
      %v380 = vld [vmem:[%s1 + $0x1f4] sm:$0xf]
      %v381 = vld [vmem:[%s1 + $0x1f8] sm:$0xf]
      %v382 = vld [vmem:[%s1 + $0x1fc] sm:$0xf]
      %v383 = vld [vmem:[%s1 + $0x200] sm:$0xf]
      %v384 = vld [vmem:[%s1 + $0x204] sm:$0xf]
      %v385 = vld [vmem:[%s1 + $0x208] sm:$0xf]
      %v386 = vld [vmem:[%s1 + $0x20c] sm:$0xf]
      %v387 = vld [vmem:[%s1 + $0x210] sm:$0xf]
      %v388 = vld [vmem:[%s1 + $0x214] sm:$0xf]
      %v389 = vld [vmem:[%s1 + $0x218] sm:$0xf]
      %v390 = vld [vmem:[%s1 + $0x21c] sm:$0xf]
      %v391 = vld [vmem:[%s1 + $0x220] sm:$0xf]
      %v392 = vld [vmem:[%s1 + $0x224] sm:$0xf]
      %v393 = vld [vmem:[%s1 + $0x228] sm:$0xf]
      %v394 = vld [vmem:[%s1 + $0x22c] sm:$0xf]
      %v395 = vld [vmem:[%s1 + $0x230] sm:$0xf]
      %v396 = vld [vmem:[%s1 + $0x234] sm:$0xf]
      %v397 = vld [vmem:[%s1 + $0x238] sm:$0xf]
      %v398 = vld [vmem:[%s1 + $0x23c] sm:$0xf]
      %v399 = vld [vmem:[%s1 + $0x240] sm:$0xf]
      %v400 = vld [vmem:[%s1 + $0x244] sm:$0xf]
      %v401 = vld [vmem:[%s1 + $0x248] sm:$0xf]
      %v402 = vld [vmem:[%s1 + $0x24c] sm:$0xf]
      %v403 = vld [vmem:[%s1 + $0x250] sm:$0xf]
      %v404 = vld [vmem:[%s1 + $0x254] sm:$0xf]
      %v405 = vld [vmem:[%s1 + $0x258] sm:$0xf]
      %v406 = vld [vmem:[%s1 + $0x25c] sm:$0xf]
      %v407 = vld [vmem:[%s1 + $0x260] sm:$0xf]
      %v408 = vld [vmem:[%s1 + $0x264] sm:$0xf]
      %v409 = vld [vmem:[%s1 + $0x268] sm:$0xf]
      %v410 = vld [vmem:[%s1 + $0x26c] sm:$0xf]
      %v411 = vld [vmem:[%s1 + $0x270] sm:$0xf]
      %v412 = vld [vmem:[%s1 + $0x274] sm:$0xf]
      %v413 = vld [vmem:[%s1 + $0x278] sm:$0xf]
      %v414 = vld [vmem:[%s1 + $0x27c] sm:$0xf]
      %v415 = vld [vmem:[%s1 + $0x280] sm:$0xf]
      %v416 = vld [vmem:[%s1 + $0x284] sm:$0xf]
      %v417 = vld [vmem:[%s1 + $0x288] sm:$0xf]
      %v418 = vld [vmem:[%s1 + $0x28c] sm:$0xf]
      %v419 = vld [vmem:[%s1 + $0x290] sm:$0xf]
      %v420 = vld [vmem:[%s1 + $0x294] sm:$0xf]
      %v421 = vld [vmem:[%s1 + $0x298] sm:$0xf]
      %v422 = vld [vmem:[%s1 + $0x29c] sm:$0xf]
      %v423 = vld [vmem:[%s1 + $0x2a0] sm:$0xf]
      %v424 = vld [vmem:[%s1 + $0x2a4] sm:$0xf]
      %v425 = vld [vmem:[%s1 + $0x2a8] sm:$0xf]
      %v426 = vld [vmem:[%s1 + $0x2ac] sm:$0xf]
      %v427 = vld [vmem:[%s1 + $0x2b0] sm:$0xf]
      %v428 = vld [vmem:[%s1 + $0x2b4] sm:$0xf]
      %v429 = vld [vmem:[%s1 + $0x2b8] sm:$0xf]
      %v430 = vld [vmem:[%s1 + $0x2bc] sm:$0xf]
      %v431 = vld [vmem:[%s1 + $0x2c0] sm:$0xf]
      %v432 = vld [vmem:[%s1 + $0x2c4] sm:$0xf]
      %v433 = vld [vmem:[%s1 + $0x2c8] sm:$0xf]
      %v434 = vld [vmem:[%s1 + $0x2cc] sm:$0xf]
      %v435 = vld [vmem:[%s1 + $0x2d0] sm:$0xf]
      %v436 = vld [vmem:[%s1 + $0x2d4] sm:$0xf]
      %v437 = vld [vmem:[%s1 + $0x2d8] sm:$0xf]
      %v438 = vld [vmem:[%s1 + $0x2dc] sm:$0xf]
      %v439 = vld [vmem:[%s1 + $0x2e0] sm:$0xf]
      %v440 = vld [vmem:[%s1 + $0x2e4] sm:$0xf]
      %v441 = vld [vmem:[%s1 + $0x2e8] sm:$0xf]
      %v442 = vld [vmem:[%s1 + $0x2ec] sm:$0xf]
      %v443 = vld [vmem:[%s1 + $0x2f0] sm:$0xf]
      %v444 = vld [vmem:[%s1 + $0x2f4] sm:$0xf]
      %v445 = vld [vmem:[%s1 + $0x2f8] sm:$0xf]
      %v446 = vld [vmem:[%s1 + $0x2fc] sm:$0xf]
      %v447 = vld [vmem:[%s1 + $0x300] sm:$0xf]
      %v448 = vld [vmem:[%s1 + $0x304] sm:$0xf]
      %v449 = vld [vmem:[%s1 + $0x308] sm:$0xf]
      %v450 = vld [vmem:[%s1 + $0x30c] sm:$0xf]
      %v451 = vld [vmem:[%s1 + $0x310] sm:$0xf]
      %v452 = vld [vmem:[%s1 + $0x314] sm:$0xf]
      %v453 = vld [vmem:[%s1 + $0x318] sm:$0xf]
      %v454 = vld [vmem:[%s1 + $0x31c] sm:$0xf]
      %v455 = vld [vmem:[%s1 + $0x320] sm:$0xf]
      %v456 = vld [vmem:[%s1 + $0x324] sm:$0xf]
      %v457 = vld [vmem:[%s1 + $0x328] sm:$0xf]
      %v458 = vld [vmem:[%s1 + $0x32c] sm:$0xf]
      %v459 = vld [vmem:[%s1 + $0x330] sm:$0xf]
      %v460 = vld [vmem:[%s1 + $0x334] sm:$0xf]
      %v461 = vld [vmem:[%s1 + $0x338] sm:$0xf]
      %v462 = vld [vmem:[%s1 + $0x33c] sm:$0xf]
      %v463 = vld [vmem:[%s1 + $0x340] sm:$0xf]
      %v464 = vld [vmem:[%s1 + $0x344] sm:$0xf]
      %v465 = vld [vmem:[%s1 + $0x348] sm:$0xf]
      %v466 = vld [vmem:[%s1 + $0x34c] sm:$0xf]
      %v467 = vld [vmem:[%s1 + $0x350] sm:$0xf]
      %v468 = vld [vmem:[%s1 + $0x354] sm:$0xf]
      %v469 = vld [vmem:[%s1 + $0x358] sm:$0xf]
      %v470 = vld [vmem:[%s1 + $0x35c] sm:$0xf]
      %v527 = vunpack.c.l.b16 %v199
      %v528 = vunpack.c.h.b16 %v199
      %v529 = vunpack.c.l.b16 %v200
      %v530 = vunpack.c.h.b16 %v200
      %v531 = vunpack.c.l.b16 %v201
      %v532 = vunpack.c.h.b16 %v201
      %v533 = vunpack.c.l.b16 %v202
      %v534 = vunpack.c.h.b16 %v202
      %v535 = vunpack.c.l.b16 %v203
      %v536 = vunpack.c.h.b16 %v203
      %v537 = vunpack.c.l.b16 %v204
      %v538 = vunpack.c.h.b16 %v204
      %v539 = vunpack.c.l.b16 %v205
      %v540 = vunpack.c.h.b16 %v205
      %v541 = vunpack.c.l.b16 %v206
      %v542 = vunpack.c.h.b16 %v206
      %v543 = vunpack.c.l.b16 %v207
      %v544 = vunpack.c.h.b16 %v207
      %v545 = vunpack.c.l.b16 %v208
      %v546 = vunpack.c.h.b16 %v208
      %v547 = vunpack.c.l.b16 %v209
      %v548 = vunpack.c.h.b16 %v209
      %v549 = vunpack.c.l.b16 %v210
      %v550 = vunpack.c.h.b16 %v210
      %v551 = vunpack.c.l.b16 %v211
      %v552 = vunpack.c.h.b16 %v211
      %v553 = vunpack.c.l.b16 %v212
      %v554 = vunpack.c.h.b16 %v212
      %v555 = vunpack.c.l.b16 %v213
      %v556 = vunpack.c.h.b16 %v213
      %v557 = vunpack.c.l.b16 %v214
      %v558 = vunpack.c.h.b16 %v214
      %v559 = vunpack.c.l.b16 %v215
      %v560 = vunpack.c.h.b16 %v215
      %v561 = vunpack.c.l.b16 %v216
      %v562 = vunpack.c.h.b16 %v216
      %v563 = vunpack.c.l.b16 %v217
      %v564 = vunpack.c.h.b16 %v217
      %v565 = vunpack.c.l.b16 %v218
      %v566 = vunpack.c.h.b16 %v218
      %v567 = vunpack.c.l.b16 %v219
      %v568 = vunpack.c.h.b16 %v219
      %v569 = vunpack.c.l.b16 %v220
      %v570 = vunpack.c.h.b16 %v220
      %v571 = vunpack.c.l.b16 %v221
      %v572 = vunpack.c.h.b16 %v221
      %v573 = vunpack.c.l.b16 %v222
      %v574 = vunpack.c.h.b16 %v222
      %v575 = vunpack.c.l.b16 %v223
      %v576 = vunpack.c.h.b16 %v223
      %v577 = vunpack.c.l.b16 %v224
      %v578 = vunpack.c.h.b16 %v224
      %v579 = vunpack.c.l.b16 %v225
      %v580 = vunpack.c.h.b16 %v225
      %v581 = vunpack.c.l.b16 %v226
      %v582 = vunpack.c.h.b16 %v226
      %v583 = vunpack.c.l.b16 %v227
      %v584 = vunpack.c.h.b16 %v227
      %v585 = vunpack.c.l.b16 %v228
      %v586 = vunpack.c.h.b16 %v228
      %v587 = vunpack.c.l.b16 %v229
      %v588 = vunpack.c.h.b16 %v229
      %v589 = vunpack.c.l.b16 %v230
      %v590 = vunpack.c.h.b16 %v230
      %v591 = vunpack.c.l.b16 %v231
      %v592 = vunpack.c.h.b16 %v231
      %v593 = vunpack.c.l.b16 %v232
      %v594 = vunpack.c.h.b16 %v232
      %v595 = vunpack.c.l.b16 %v233
      %v596 = vunpack.c.h.b16 %v233
      %v597 = vunpack.c.l.b16 %v234
      %v598 = vunpack.c.h.b16 %v234
      %v599 = vunpack.c.l.b16 %v235
      %v600 = vunpack.c.h.b16 %v235
      %v601 = vunpack.c.l.b16 %v236
      %v602 = vunpack.c.h.b16 %v236
      %v603 = vunpack.c.l.b16 %v237
      %v604 = vunpack.c.h.b16 %v237
      %v605 = vunpack.c.l.b16 %v238
      %v606 = vunpack.c.h.b16 %v238
      %v607 = vunpack.c.l.b16 %v239
      %v608 = vunpack.c.h.b16 %v239
      %v609 = vunpack.c.l.b16 %v240
      %v610 = vunpack.c.h.b16 %v240
      %v611 = vunpack.c.l.b16 %v241
      %v612 = vunpack.c.h.b16 %v241
      %v613 = vunpack.c.l.b16 %v242
      %v614 = vunpack.c.h.b16 %v242
      %v615 = vunpack.c.l.b16 %v243
      %v616 = vunpack.c.h.b16 %v243
      %v617 = vunpack.c.l.b16 %v244
      %v618 = vunpack.c.h.b16 %v244
      %v619 = vunpack.c.l.b16 %v245
      %v620 = vunpack.c.h.b16 %v245
      %v621 = vunpack.c.l.b16 %v246
      %v622 = vunpack.c.h.b16 %v246
      %v623 = vunpack.c.l.b16 %v247
      %v624 = vunpack.c.h.b16 %v247
      %v625 = vunpack.c.l.b16 %v248
      %v626 = vunpack.c.h.b16 %v248
      %v627 = vunpack.c.l.b16 %v249
      %v628 = vunpack.c.h.b16 %v249
      %v629 = vunpack.c.l.b16 %v250
      %v630 = vunpack.c.h.b16 %v250
      %v631 = vunpack.c.l.b16 %v251
      %v632 = vunpack.c.h.b16 %v251
      %v633 = vunpack.c.l.b16 %v252
      %v634 = vunpack.c.h.b16 %v252
      %v635 = vunpack.c.l.b16 %v253
      %v636 = vunpack.c.h.b16 %v253
      %v637 = vunpack.c.l.b16 %v254
      %v638 = vunpack.c.h.b16 %v254
      %v639 = vpack.c.b16 %v541, %v527
      %v640 = vpack.c.b16 %v542, %v528
      %v641 = vpack.c.b16 %v543, %v529
      %v642 = vpack.c.b16 %v544, %v530
      %v643 = vpack.c.b16 %v545, %v531
      %v644 = vpack.c.b16 %v546, %v532
      %v645 = vpack.c.b16 %v547, %v533
      %v646 = vpack.c.b16 %v548, %v534
      %v647 = vpack.c.b16 %v549, %v535
      %v648 = vpack.c.b16 %v550, %v536
      %v649 = vpack.c.b16 %v551, %v537
      %v650 = vpack.c.b16 %v552, %v538
      %v651 = vpack.c.b16 %v553, %v539
      %v652 = vpack.c.b16 %v554, %v540
      %v653 = vpack.c.b16 %v569, %v555
      %v654 = vpack.c.b16 %v570, %v556
      %v655 = vpack.c.b16 %v571, %v557
      %v656 = vpack.c.b16 %v572, %v558
      %v657 = vpack.c.b16 %v573, %v559
      %v658 = vpack.c.b16 %v574, %v560
      %v659 = vpack.c.b16 %v575, %v561
      %v660 = vpack.c.b16 %v576, %v562
      %v661 = vpack.c.b16 %v577, %v563
      %v662 = vpack.c.b16 %v578, %v564
      %v663 = vpack.c.b16 %v579, %v565
      %v664 = vpack.c.b16 %v580, %v566
      %v665 = vpack.c.b16 %v581, %v567
      %v666 = vpack.c.b16 %v582, %v568
      %v667 = vpack.c.b16 %v597, %v583
      %v668 = vpack.c.b16 %v598, %v584
      %v669 = vpack.c.b16 %v599, %v585
      %v670 = vpack.c.b16 %v600, %v586
      %v671 = vpack.c.b16 %v601, %v587
      %v672 = vpack.c.b16 %v602, %v588
      %v673 = vpack.c.b16 %v603, %v589
      %v674 = vpack.c.b16 %v604, %v590
      %v675 = vpack.c.b16 %v605, %v591
      %v676 = vpack.c.b16 %v606, %v592
      %v677 = vpack.c.b16 %v607, %v593
      %v678 = vpack.c.b16 %v608, %v594
      %v679 = vpack.c.b16 %v609, %v595
      %v680 = vpack.c.b16 %v610, %v596
      %v681 = vpack.c.b16 %v625, %v611
      %v682 = vpack.c.b16 %v626, %v612
      %v683 = vpack.c.b16 %v627, %v613
      %v684 = vpack.c.b16 %v628, %v614
      %v685 = vpack.c.b16 %v629, %v615
      %v686 = vpack.c.b16 %v630, %v616
      %v687 = vpack.c.b16 %v631, %v617
      %v688 = vpack.c.b16 %v632, %v618
      %v689 = vpack.c.b16 %v633, %v619
      %v690 = vpack.c.b16 %v634, %v620
      %v691 = vpack.c.b16 %v635, %v621
      %v692 = vpack.c.b16 %v636, %v622
      %v693 = vpack.c.b16 %v637, %v623
      %v694 = vpack.c.b16 %v638, %v624
      %v963 = vunpack.c.l.b16 %v255
      %v964 = vunpack.c.l.b16 %v256
      %v965 = vunpack.c.l.b16 %v257
      %v966 = vunpack.c.l.b16 %v258
      %v967 = vunpack.c.l.b16 %v259
      %v968 = vunpack.c.l.b16 %v260
      %v969 = vunpack.c.l.b16 %v261
      %v970 = vunpack.c.l.b16 %v262
      %v971 = vunpack.c.l.b16 %v263
      %v972 = vunpack.c.l.b16 %v264
      %v973 = vunpack.c.l.b16 %v265
      %v974 = vunpack.c.l.b16 %v266
      %v975 = vunpack.c.l.b16 %v267
      %v976 = vunpack.c.l.b16 %v268
      %v977 = vunpack.c.l.b16 %v269
      %v978 = vunpack.c.l.b16 %v270
      %v979 = vunpack.c.l.b16 %v271
      %v980 = vunpack.c.l.b16 %v272
      %v981 = vunpack.c.l.b16 %v273
      %v982 = vunpack.c.l.b16 %v274
      %v983 = vunpack.c.l.b16 %v275
      %v984 = vunpack.c.l.b16 %v276
      %v985 = vunpack.c.l.b16 %v277
      %v986 = vunpack.c.l.b16 %v278
      %v987 = vunpack.c.l.b16 %v279
      %v988 = vunpack.c.l.b16 %v280
      %v989 = vunpack.c.l.b16 %v281
      %v990 = vunpack.c.l.b16 %v282
      %v991 = vunpack.c.l.b16 %v283
      %v992 = vunpack.c.l.b16 %v284
      %v993 = vunpack.c.l.b16 %v285
      %v994 = vunpack.c.l.b16 %v286
      %v995 = vunpack.c.l.b16 %v287
      %v996 = vunpack.c.l.b16 %v288
      %v997 = vunpack.c.l.b16 %v289
      %v998 = vunpack.c.l.b16 %v290
      %v999 = vunpack.c.l.b16 %v291
      %v1000 = vunpack.c.l.b16 %v292
      %v1001 = vunpack.c.l.b16 %v293
      %v1002 = vunpack.c.l.b16 %v294
      %v1003 = vunpack.c.l.b16 %v295
      %v1004 = vunpack.c.l.b16 %v296
      %v1005 = vunpack.c.l.b16 %v297
      %v1006 = vunpack.c.l.b16 %v298
      %v1007 = vunpack.c.l.b16 %v299
      %v1008 = vunpack.c.l.b16 %v300
      %v1009 = vunpack.c.l.b16 %v301
      %v1010 = vunpack.c.l.b16 %v302
      %v1011 = vunpack.c.l.b16 %v303
      %v1012 = vunpack.c.l.b16 %v304
      %v1013 = vunpack.c.l.b16 %v305
      %v1014 = vunpack.c.l.b16 %v306
      %v1015 = vunpack.c.l.b16 %v307
      %v1016 = vunpack.c.l.b16 %v308
      %v1017 = vunpack.c.l.b16 %v309
      %v1018 = vunpack.c.l.b16 %v310
      %v1019 = vunpack.c.l.b16 %v311
      %v1020 = vunpack.c.l.b16 %v312
      %v1021 = vunpack.c.l.b16 %v313
      %v1022 = vunpack.c.l.b16 %v314
      %v1023 = vunpack.c.l.b16 %v315
      %v1024 = vunpack.c.l.b16 %v316
      %v1025 = vunpack.c.l.b16 %v317
      %v1026 = vunpack.c.l.b16 %v318
      %v1027 = vunpack.c.l.b16 %v319
      %v1028 = vunpack.c.l.b16 %v320
      %v1029 = vunpack.c.l.b16 %v321
      %v1030 = vunpack.c.l.b16 %v322
      %v1031 = vunpack.c.l.b16 %v323
      %v1032 = vunpack.c.l.b16 %v324
      %v1033 = vunpack.c.l.b16 %v325
      %v1034 = vunpack.c.l.b16 %v326
      %v1035 = vunpack.c.l.b16 %v327
      %v1036 = vunpack.c.l.b16 %v328
      %v1037 = vunpack.c.l.b16 %v329
      %v1038 = vunpack.c.l.b16 %v330
      %v1039 = vunpack.c.l.b16 %v331
      %v1040 = vunpack.c.l.b16 %v332
      %v1041 = vunpack.c.l.b16 %v333
      %v1042 = vunpack.c.l.b16 %v334
      %v1043 = vunpack.c.l.b16 %v335
      %v1044 = vunpack.c.l.b16 %v336
      %v1045 = vunpack.c.l.b16 %v337
      %v1046 = vunpack.c.l.b16 %v338
      %v1047 = vunpack.c.l.b16 %v339
      %v1048 = vunpack.c.l.b16 %v340
      %v1049 = vunpack.c.l.b16 %v341
      %v1050 = vunpack.c.l.b16 %v342
      %v1051 = vunpack.c.l.b16 %v343
      %v1052 = vunpack.c.l.b16 %v344
      %v1053 = vunpack.c.l.b16 %v345
      %v1054 = vunpack.c.l.b16 %v346
      %v1055 = vunpack.c.l.b16 %v347
      %v1056 = vunpack.c.l.b16 %v348
      %v1057 = vunpack.c.l.b16 %v349
      %v1058 = vunpack.c.l.b16 %v350
      %v1059 = vunpack.c.l.b16 %v351
      %v1060 = vunpack.c.l.b16 %v352
      %v1061 = vunpack.c.l.b16 %v353
      %v1062 = vunpack.c.l.b16 %v354
      %v1063 = vunpack.c.l.b16 %v355
      %v1064 = vunpack.c.l.b16 %v356
      %v1065 = vunpack.c.l.b16 %v357
      %v1066 = vunpack.c.l.b16 %v358
      %v1067 = vunpack.c.l.b16 %v359
      %v1068 = vunpack.c.l.b16 %v360
      %v1069 = vunpack.c.l.b16 %v361
      %v1070 = vunpack.c.l.b16 %v362
      %v1071 = vunpack.c.l.b16 %v363
      %v1072 = vunpack.c.l.b16 %v364
      %v1073 = vunpack.c.l.b16 %v365
      %v1074 = vunpack.c.l.b16 %v366
      %v1075 = vunpack.c.l.b16 %v367
      %v1076 = vunpack.c.l.b16 %v368
      %v1077 = vunpack.c.l.b16 %v369
      %v1078 = vunpack.c.l.b16 %v370
      %v1079 = vunpack.c.l.b16 %v371
      %v1080 = vunpack.c.l.b16 %v372
      %v1081 = vunpack.c.l.b16 %v373
      %v1082 = vunpack.c.l.b16 %v374
      %v1083 = vunpack.c.l.b16 %v375
      %v1084 = vunpack.c.l.b16 %v376
      %v1085 = vunpack.c.l.b16 %v377
      %v1086 = vunpack.c.l.b16 %v378
      %v1087 = vunpack.c.l.b16 %v379
      %v1088 = vunpack.c.l.b16 %v380
      %v1089 = vunpack.c.l.b16 %v381
      %v1090 = vunpack.c.l.b16 %v382
      %v1091 = vunpack.c.l.b16 %v383
      %v1092 = vunpack.c.l.b16 %v384
      %v1093 = vunpack.c.l.b16 %v385
      %v1094 = vunpack.c.l.b16 %v386
      %v1095 = vunpack.c.l.b16 %v387
      %v1096 = vunpack.c.l.b16 %v388
      %v1097 = vunpack.c.l.b16 %v389
      %v1098 = vunpack.c.l.b16 %v390
      %v1099 = vunpack.c.l.b16 %v391
      %v1100 = vunpack.c.l.b16 %v392
      %v1101 = vunpack.c.l.b16 %v393
      %v1102 = vunpack.c.l.b16 %v394
      %v1103 = vunpack.c.l.b16 %v395
      %v1104 = vunpack.c.l.b16 %v396
      %v1105 = vunpack.c.l.b16 %v397
      %v1106 = vunpack.c.l.b16 %v398
      %v1107 = vunpack.c.l.b16 %v399
      %v1108 = vunpack.c.l.b16 %v400
      %v1109 = vunpack.c.l.b16 %v401
      %v1110 = vunpack.c.l.b16 %v402
      %v1111 = vunpack.c.l.b16 %v403
      %v1112 = vunpack.c.l.b16 %v404
      %v1113 = vunpack.c.l.b16 %v405
      %v1114 = vunpack.c.l.b16 %v406
      %v1115 = vunpack.c.l.b16 %v407
      %v1116 = vunpack.c.l.b16 %v408
      %v1117 = vunpack.c.l.b16 %v409
      %v1118 = vunpack.c.l.b16 %v410
      %v1119 = vunpack.c.l.b16 %v411
      %v1120 = vunpack.c.l.b16 %v412
      %v1121 = vunpack.c.l.b16 %v413
      %v1122 = vunpack.c.l.b16 %v414
      %v1123 = vunpack.c.l.b16 %v415
      %v1124 = vunpack.c.l.b16 %v416
      %v1125 = vunpack.c.l.b16 %v417
      %v1126 = vunpack.c.l.b16 %v418
      %v1127 = vunpack.c.l.b16 %v419
      %v1128 = vunpack.c.l.b16 %v420
      %v1129 = vunpack.c.l.b16 %v421
      %v1130 = vunpack.c.l.b16 %v422
      %v1131 = vunpack.c.l.b16 %v423
      %v1132 = vunpack.c.l.b16 %v424
      %v1133 = vunpack.c.l.b16 %v425
      %v1134 = vunpack.c.l.b16 %v426
      %v1135 = vunpack.c.l.b16 %v427
      %v1136 = vunpack.c.l.b16 %v428
      %v1137 = vunpack.c.l.b16 %v429
      %v1138 = vunpack.c.l.b16 %v430
      %v1139 = vunpack.c.l.b16 %v431
      %v1140 = vunpack.c.l.b16 %v432
      %v1141 = vunpack.c.l.b16 %v433
      %v1142 = vunpack.c.l.b16 %v434
      %v1143 = vunpack.c.l.b16 %v435
      %v1144 = vunpack.c.l.b16 %v436
      %v1145 = vunpack.c.l.b16 %v437
      %v1146 = vunpack.c.l.b16 %v438
      %v1147 = vunpack.c.l.b16 %v439
      %v1148 = vunpack.c.l.b16 %v440
      %v1149 = vunpack.c.l.b16 %v441
      %v1150 = vunpack.c.l.b16 %v442
      %v1151 = vunpack.c.l.b16 %v443
      %v1152 = vunpack.c.l.b16 %v444
      %v1153 = vunpack.c.l.b16 %v445
      %v1154 = vunpack.c.l.b16 %v446
      %v1155 = vunpack.c.l.b16 %v447
      %v1156 = vunpack.c.l.b16 %v448
      %v1157 = vunpack.c.l.b16 %v449
      %v1158 = vunpack.c.l.b16 %v450
      %v1159 = vunpack.c.l.b16 %v451
      %v1160 = vunpack.c.l.b16 %v452
      %v1161 = vunpack.c.l.b16 %v453
      %v1162 = vunpack.c.l.b16 %v454
      %v1163 = vunpack.c.l.b16 %v455
      %v1164 = vunpack.c.l.b16 %v456
      %v1165 = vunpack.c.l.b16 %v457
      %v1166 = vunpack.c.l.b16 %v458
      %v1167 = vunpack.c.l.b16 %v459
      %v1168 = vunpack.c.l.b16 %v460
      %v1169 = vunpack.c.l.b16 %v461
      %v1170 = vunpack.c.l.b16 %v462
      %v1171 = vunpack.c.l.b16 %v463
      %v1172 = vunpack.c.l.b16 %v464
      %v1173 = vunpack.c.l.b16 %v465
      %v1174 = vunpack.c.l.b16 %v466
      %v1175 = vunpack.c.l.b16 %v467
      %v1176 = vunpack.c.l.b16 %v468
      %v1177 = vunpack.c.l.b16 %v469
      %v1178 = vunpack.c.l.b16 %v470
      %v1179 = vpack.c.b16 %v964, %v963
      %v1180 = vpack.c.b16 %v966, %v965
      %v1181 = vpack.c.b16 %v968, %v967
      %v1182 = vpack.c.b16 %v970, %v969
      %v1183 = vpack.c.b16 %v972, %v971
      %v1184 = vpack.c.b16 %v974, %v973
      %v1185 = vpack.c.b16 %v976, %v975
      %v1186 = vpack.c.b16 %v978, %v977
      %v1187 = vpack.c.b16 %v980, %v979
      %v1188 = vpack.c.b16 %v982, %v981
      %v1189 = vpack.c.b16 %v984, %v983
      %v1190 = vpack.c.b16 %v986, %v985
      %v1191 = vpack.c.b16 %v988, %v987
      %v1192 = vpack.c.b16 %v990, %v989
      %v1193 = vpack.c.b16 %v992, %v991
      %v1194 = vpack.c.b16 %v994, %v993
      %v1195 = vpack.c.b16 %v996, %v995
      %v1196 = vpack.c.b16 %v998, %v997
      %v1197 = vpack.c.b16 %v1000, %v999
      %v1198 = vpack.c.b16 %v1002, %v1001
      %v1199 = vpack.c.b16 %v1004, %v1003
      %v1200 = vpack.c.b16 %v1006, %v1005
      %v1201 = vpack.c.b16 %v1008, %v1007
      %v1202 = vpack.c.b16 %v1010, %v1009
      %v1203 = vpack.c.b16 %v1012, %v1011
      %v1204 = vpack.c.b16 %v1014, %v1013
      %v1205 = vpack.c.b16 %v1016, %v1015
      %v1206 = vpack.c.b16 %v1018, %v1017
      %v1207 = vpack.c.b16 %v1020, %v1019
      %v1208 = vpack.c.b16 %v1022, %v1021
      %v1209 = vpack.c.b16 %v1024, %v1023
      %v1210 = vpack.c.b16 %v1026, %v1025
      %v1211 = vpack.c.b16 %v1028, %v1027
      %v1212 = vpack.c.b16 %v1030, %v1029
      %v1213 = vpack.c.b16 %v1032, %v1031
      %v1214 = vpack.c.b16 %v1034, %v1033
      %v1215 = vpack.c.b16 %v1036, %v1035
      %v1216 = vpack.c.b16 %v1038, %v1037
      %v1217 = vpack.c.b16 %v1040, %v1039
      %v1218 = vpack.c.b16 %v1042, %v1041
      %v1219 = vpack.c.b16 %v1044, %v1043
      %v1220 = vpack.c.b16 %v1046, %v1045
      %v1221 = vpack.c.b16 %v1048, %v1047
      %v1222 = vpack.c.b16 %v1050, %v1049
      %v1223 = vpack.c.b16 %v1052, %v1051
      %v1224 = vpack.c.b16 %v1054, %v1053
      %v1225 = vpack.c.b16 %v1056, %v1055
      %v1226 = vpack.c.b16 %v1058, %v1057
      %v1227 = vpack.c.b16 %v1060, %v1059
      %v1228 = vpack.c.b16 %v1062, %v1061
      %v1229 = vpack.c.b16 %v1064, %v1063
      %v1230 = vpack.c.b16 %v1066, %v1065
      %v1231 = vpack.c.b16 %v1068, %v1067
      %v1232 = vpack.c.b16 %v1070, %v1069
      %v1233 = vpack.c.b16 %v1072, %v1071
      %v1234 = vpack.c.b16 %v1074, %v1073
      %v1235 = vpack.c.b16 %v1076, %v1075
      %v1236 = vpack.c.b16 %v1078, %v1077
      %v1237 = vpack.c.b16 %v1080, %v1079
      %v1238 = vpack.c.b16 %v1082, %v1081
      %v1239 = vpack.c.b16 %v1084, %v1083
      %v1240 = vpack.c.b16 %v1086, %v1085
      %v1241 = vpack.c.b16 %v1088, %v1087
      %v1242 = vpack.c.b16 %v1090, %v1089
      %v1243 = vpack.c.b16 %v1092, %v1091
      %v1244 = vpack.c.b16 %v1094, %v1093
      %v1245 = vpack.c.b16 %v1096, %v1095
      %v1246 = vpack.c.b16 %v1098, %v1097
      %v1247 = vpack.c.b16 %v1100, %v1099
      %v1248 = vpack.c.b16 %v1102, %v1101
      %v1249 = vpack.c.b16 %v1104, %v1103
      %v1250 = vpack.c.b16 %v1106, %v1105
      %v1251 = vpack.c.b16 %v1108, %v1107
      %v1252 = vpack.c.b16 %v1110, %v1109
      %v1253 = vpack.c.b16 %v1112, %v1111
      %v1254 = vpack.c.b16 %v1114, %v1113
      %v1255 = vpack.c.b16 %v1116, %v1115
      %v1256 = vpack.c.b16 %v1118, %v1117
      %v1257 = vpack.c.b16 %v1120, %v1119
      %v1258 = vpack.c.b16 %v1122, %v1121
      %v1259 = vpack.c.b16 %v1124, %v1123
      %v1260 = vpack.c.b16 %v1126, %v1125
      %v1261 = vpack.c.b16 %v1128, %v1127
      %v1262 = vpack.c.b16 %v1130, %v1129
      %v1263 = vpack.c.b16 %v1132, %v1131
      %v1264 = vpack.c.b16 %v1134, %v1133
      %v1265 = vpack.c.b16 %v1136, %v1135
      %v1266 = vpack.c.b16 %v1138, %v1137
      %v1267 = vpack.c.b16 %v1140, %v1139
      %v1268 = vpack.c.b16 %v1142, %v1141
      %v1269 = vpack.c.b16 %v1144, %v1143
      %v1270 = vpack.c.b16 %v1146, %v1145
      %v1271 = vpack.c.b16 %v1148, %v1147
      %v1272 = vpack.c.b16 %v1150, %v1149
      %v1273 = vpack.c.b16 %v1152, %v1151
      %v1274 = vpack.c.b16 %v1154, %v1153
      %v1275 = vpack.c.b16 %v1156, %v1155
      %v1276 = vpack.c.b16 %v1158, %v1157
      %v1277 = vpack.c.b16 %v1160, %v1159
      %v1278 = vpack.c.b16 %v1162, %v1161
      %v1279 = vpack.c.b16 %v1164, %v1163
      %v1280 = vpack.c.b16 %v1166, %v1165
      %v1281 = vpack.c.b16 %v1168, %v1167
      %v1282 = vpack.c.b16 %v1170, %v1169
      %v1283 = vpack.c.b16 %v1172, %v1171
      %v1284 = vpack.c.b16 %v1174, %v1173
      %v1285 = vpack.c.b16 %v1176, %v1175
      %v1286 = vpack.c.b16 %v1178, %v1177
      %vm1395 = vcmask 523264
      %v1397 = vsel %vm1395, %v652, 0
      %v1400 = vsel %vm1395, %v666, 0
      %v1403 = vsel %vm1395, %v680, 0
      %v1406 = vsel %vm1395, %v694, 0
      %1408 = vmatprep.subr.bf16.mxu0 0
      %1409 = vmatpush1.bf16.msra.mxu0 %v1179
      %1410 = vmatprep.subr.bf16.mxu0 0
      %1411 = vmatpush1.bf16.msra.mxu0 %v1180
      %1412 = vmatprep.subr.bf16.mxu0 0
      %1413 = vmatpush1.bf16.msra.mxu0 %v1181
      %1414 = vmatprep.subr.bf16.mxu0 0
      %1415 = vmatpush1.bf16.msra.mxu0 %v1182
      %1416 = vmatprep.subr.bf16.mxu0 0
      %1417 = vmatpush1.bf16.msra.mxu0 %v1183
      %1418 = vmatprep.subr.bf16.mxu0 0
      %1419 = vmatpush1.bf16.msra.mxu0 %v1184
      %1420 = vmatprep.subr.bf16.mxu0 0
      %1421 = vmatpush1.bf16.msra.mxu0 %v1185
      %1422 = vmatprep.subr.bf16.mxu0 0
      %1423 = vmatpush1.bf16.msra.mxu0 %v1186
      %1424 = vmatprep.subr.bf16.mxu0 0
      %1425 = vmatpush1.bf16.msra.mxu0 %v1187
      %1426 = vmatprep.subr.bf16.mxu0 0
      %1427 = vmatpush1.bf16.msra.mxu0 %v1188
      %1428 = vmatprep.subr.bf16.mxu0 0
      %1429 = vmatpush1.bf16.msra.mxu0 %v1189
      %1430 = vmatprep.subr.bf16.mxu0 0
      %1431 = vmatpush1.bf16.msra.mxu0 %v1190
      %1432 = vmatprep.subr.bf16.mxu0 0
      %1433 = vmatpush1.bf16.msra.mxu0 %v1191
      %1434 = vmatprep.subr.bf16.mxu0 0
      %1435 = vmatpush1.bf16.msra.mxu0 %v1192
      %1436 = vmatprep.subr.bf16.mxu0 0
      %1437 = vmatpush1.bf16.msra.mxu0 %v1193
      %1438 = vmatprep.subr.bf16.mxu0 0
      %1439 = vmatpush1.bf16.msra.mxu0 %v1194
      %1440 = vmatprep.mubr.bf16.mxu0 %v640
      %1441 = vmatmul.mubr.bf16.gmra.mrb[0].mxu0 %v639
      %v1442 = vpop.f32.mrb[0].mxu0
      %v1443 = vadd.f32 0.0, %v1442
      %v1444 = vpop.f32.mrb[0].mxu0
      %v1445 = vpop.f32.mrb[0].mxu0
      %v1446 = vadd.f32 0.0, %v1445
      %v1447 = vpop.f32.mrb[0].mxu0
      %1448 = vmatprep.mubr.bf16.mxu0 %v654
      %1449 = vmatmul.mubr.bf16.gmra.mrb[0].mxu0 %v653
      %v1450 = vpop.f32.mrb[0].mxu0
      %v1451 = vadd.f32 0.0, %v1450
      %v1452 = vpop.f32.mrb[0].mxu0
      %v1453 = vpop.f32.mrb[0].mxu0
      %v1454 = vadd.f32 0.0, %v1453
      %v1455 = vpop.f32.mrb[0].mxu0
      %1456 = vmatprep.mubr.bf16.mxu0 %v668
      %1457 = vmatmul.mubr.bf16.gmra.mrb[0].mxu0 %v667
      %v1458 = vpop.f32.mrb[0].mxu0
      %v1459 = vadd.f32 0.0, %v1458
      %v1460 = vpop.f32.mrb[0].mxu0
      %v1461 = vpop.f32.mrb[0].mxu0
      %v1462 = vadd.f32 0.0, %v1461
      %v1463 = vpop.f32.mrb[0].mxu0
      %1464 = vmatprep.mubr.bf16.mxu0 %v682
      %1465 = vmatmul.mubr.bf16.gmra.mrb[0].mxu0 %v681
      %v1466 = vpop.f32.mrb[0].mxu0
      %v1467 = vadd.f32 0.0, %v1466
      %v1468 = vpop.f32.mrb[0].mxu0
      %v1469 = vpop.f32.mrb[0].mxu0
      %v1470 = vadd.f32 0.0, %v1469
      %v1471 = vpop.f32.mrb[0].mxu0
      %1472 = vdwg.mxu0
      %1473 = vmatprep.subr.bf16.mxu0 0
      %1474 = vmatpush1.bf16.msra.mxu0 %v1195
      %1475 = vmatprep.subr.bf16.mxu0 0
      %1476 = vmatpush1.bf16.msra.mxu0 %v1196
      %1477 = vmatprep.subr.bf16.mxu0 0
      %1478 = vmatpush1.bf16.msra.mxu0 %v1197
      %1479 = vmatprep.subr.bf16.mxu0 0
      %1480 = vmatpush1.bf16.msra.mxu0 %v1198
      %1481 = vmatprep.subr.bf16.mxu0 0
      %1482 = vmatpush1.bf16.msra.mxu0 %v1199
      %1483 = vmatprep.subr.bf16.mxu0 0
      %1484 = vmatpush1.bf16.msra.mxu0 %v1200
      %1485 = vmatprep.subr.bf16.mxu0 0
      %1486 = vmatpush1.bf16.msra.mxu0 %v1201
      %1487 = vmatprep.subr.bf16.mxu0 0
      %1488 = vmatpush1.bf16.msra.mxu0 %v1202
      %1489 = vmatprep.subr.bf16.mxu0 0
      %1490 = vmatpush1.bf16.msra.mxu0 %v1203
      %1491 = vmatprep.subr.bf16.mxu0 0
      %1492 = vmatpush1.bf16.msra.mxu0 %v1204
      %1493 = vmatprep.subr.bf16.mxu0 0
      %1494 = vmatpush1.bf16.msra.mxu0 %v1205
      %1495 = vmatprep.subr.bf16.mxu0 0
      %1496 = vmatpush1.bf16.msra.mxu0 %v1206
      %1497 = vmatprep.subr.bf16.mxu0 0
      %1498 = vmatpush1.bf16.msra.mxu0 %v1207
      %1499 = vmatprep.subr.bf16.mxu0 0
      %1500 = vmatpush1.bf16.msra.mxu0 %v1208
      %1501 = vmatprep.subr.bf16.mxu0 0
      %1502 = vmatpush1.bf16.msra.mxu0 %v1209
      %1503 = vmatprep.subr.bf16.mxu0 0
      %1504 = vmatpush1.bf16.msra.mxu0 %v1210
      %1505 = vmatprep.mubr.bf16.mxu0 %v642
      %1506 = vmatmul.mubr.bf16.gmra.mrb[0].mxu0 %v641
      %v1507 = vpop.f32.mrb[0].mxu0
      %v1508 = vadd.f32 %v1443, %v1507
      %v1509 = vpop.f32.mrb[0].mxu0
      %v1510 = vpop.f32.mrb[0].mxu0
      %v1511 = vadd.f32 %v1446, %v1510
      %v1512 = vpop.f32.mrb[0].mxu0
      %1513 = vmatprep.mubr.bf16.mxu0 %v656
      %1514 = vmatmul.mubr.bf16.gmra.mrb[0].mxu0 %v655
      %v1515 = vpop.f32.mrb[0].mxu0
      %v1516 = vadd.f32 %v1451, %v1515
      %v1517 = vpop.f32.mrb[0].mxu0
      %v1518 = vpop.f32.mrb[0].mxu0
      %v1519 = vadd.f32 %v1454, %v1518
      %v1520 = vpop.f32.mrb[0].mxu0
      %1521 = vmatprep.mubr.bf16.mxu0 %v670
      %1522 = vmatmul.mubr.bf16.gmra.mrb[0].mxu0 %v669
      %v1523 = vpop.f32.mrb[0].mxu0
      %v1524 = vadd.f32 %v1459, %v1523
      %v1525 = vpop.f32.mrb[0].mxu0
      %v1526 = vpop.f32.mrb[0].mxu0
      %v1527 = vadd.f32 %v1462, %v1526
      %v1528 = vpop.f32.mrb[0].mxu0
      %1529 = vmatprep.mubr.bf16.mxu0 %v684
      %1530 = vmatmul.mubr.bf16.gmra.mrb[0].mxu0 %v683
      %v1531 = vpop.f32.mrb[0].mxu0
      %v1532 = vadd.f32 %v1467, %v1531
      %v1533 = vpop.f32.mrb[0].mxu0
      %v1534 = vpop.f32.mrb[0].mxu0
      %v1535 = vadd.f32 %v1470, %v1534
      %v1536 = vpop.f32.mrb[0].mxu0
      %1537 = vdwg.mxu0
      %1538 = vmatprep.subr.bf16.mxu0 0
      %1539 = vmatpush1.bf16.msra.mxu0 %v1211
      %1540 = vmatprep.subr.bf16.mxu0 0
      %1541 = vmatpush1.bf16.msra.mxu0 %v1212
      %1542 = vmatprep.subr.bf16.mxu0 0
      %1543 = vmatpush1.bf16.msra.mxu0 %v1213
      %1544 = vmatprep.subr.bf16.mxu0 0
      %1545 = vmatpush1.bf16.msra.mxu0 %v1214
      %1546 = vmatprep.subr.bf16.mxu0 0
      %1547 = vmatpush1.bf16.msra.mxu0 %v1215
      %1548 = vmatprep.subr.bf16.mxu0 0
      %1549 = vmatpush1.bf16.msra.mxu0 %v1216
      %1550 = vmatprep.subr.bf16.mxu0 0
      %1551 = vmatpush1.bf16.msra.mxu0 %v1217
      %1552 = vmatprep.subr.bf16.mxu0 0
      %1553 = vmatpush1.bf16.msra.mxu0 %v1218
      %1554 = vmatprep.subr.bf16.mxu0 0
      %1555 = vmatpush1.bf16.msra.mxu0 %v1219
      %1556 = vmatprep.subr.bf16.mxu0 0
      %1557 = vmatpush1.bf16.msra.mxu0 %v1220
      %1558 = vmatprep.subr.bf16.mxu0 0
      %1559 = vmatpush1.bf16.msra.mxu0 %v1221
      %1560 = vmatprep.subr.bf16.mxu0 0
      %1561 = vmatpush1.bf16.msra.mxu0 %v1222
      %1562 = vmatprep.subr.bf16.mxu0 0
      %1563 = vmatpush1.bf16.msra.mxu0 %v1223
      %1564 = vmatprep.subr.bf16.mxu0 0
      %1565 = vmatpush1.bf16.msra.mxu0 %v1224
      %1566 = vmatprep.subr.bf16.mxu0 0
      %1567 = vmatpush1.bf16.msra.mxu0 %v1225
      %1568 = vmatprep.subr.bf16.mxu0 0
      %1569 = vmatpush1.bf16.msra.mxu0 %v1226
      %1570 = vmatprep.mubr.bf16.mxu0 %v644
      %1571 = vmatmul.mubr.bf16.gmra.mrb[0].mxu0 %v643
      %v1572 = vpop.f32.mrb[0].mxu0
      %v1573 = vadd.f32 %v1508, %v1572
      %v1574 = vpop.f32.mrb[0].mxu0
      %v1575 = vpop.f32.mrb[0].mxu0
      %v1576 = vadd.f32 %v1511, %v1575
      %v1577 = vpop.f32.mrb[0].mxu0
      %1578 = vmatprep.mubr.bf16.mxu0 %v658
      %1579 = vmatmul.mubr.bf16.gmra.mrb[0].mxu0 %v657
      %v1580 = vpop.f32.mrb[0].mxu0
      %v1581 = vadd.f32 %v1516, %v1580
      %v1582 = vpop.f32.mrb[0].mxu0
      %v1583 = vpop.f32.mrb[0].mxu0
      %v1584 = vadd.f32 %v1519, %v1583
      %v1585 = vpop.f32.mrb[0].mxu0
      %1586 = vmatprep.mubr.bf16.mxu0 %v672
      %1587 = vmatmul.mubr.bf16.gmra.mrb[0].mxu0 %v671
      %v1588 = vpop.f32.mrb[0].mxu0
      %v1589 = vadd.f32 %v1524, %v1588
      %v1590 = vpop.f32.mrb[0].mxu0
      %v1591 = vpop.f32.mrb[0].mxu0
      %v1592 = vadd.f32 %v1527, %v1591
      %v1593 = vpop.f32.mrb[0].mxu0
      %1594 = vmatprep.mubr.bf16.mxu0 %v686
      %1595 = vmatmul.mubr.bf16.gmra.mrb[0].mxu0 %v685
      %v1596 = vpop.f32.mrb[0].mxu0
      %v1597 = vadd.f32 %v1532, %v1596
      %v1598 = vpop.f32.mrb[0].mxu0
      %v1599 = vpop.f32.mrb[0].mxu0
      %v1600 = vadd.f32 %v1535, %v1599
      %v1601 = vpop.f32.mrb[0].mxu0
      %1602 = vdwg.mxu0
      %1603 = vmatprep.subr.bf16.mxu0 0
      %1604 = vmatpush1.bf16.msra.mxu0 %v1227
      %1605 = vmatprep.subr.bf16.mxu0 0
      %1606 = vmatpush1.bf16.msra.mxu0 %v1228
      %1607 = vmatprep.subr.bf16.mxu0 0
      %1608 = vmatpush1.bf16.msra.mxu0 %v1229
      %1609 = vmatprep.subr.bf16.mxu0 0
      %1610 = vmatpush1.bf16.msra.mxu0 %v1230
      %1611 = vmatprep.subr.bf16.mxu0 0
      %1612 = vmatpush1.bf16.msra.mxu0 %v1231
      %1613 = vmatprep.subr.bf16.mxu0 0
      %1614 = vmatpush1.bf16.msra.mxu0 %v1232
      %1615 = vmatprep.subr.bf16.mxu0 0
      %1616 = vmatpush1.bf16.msra.mxu0 %v1233
      %1617 = vmatprep.subr.bf16.mxu0 0
      %1618 = vmatpush1.bf16.msra.mxu0 %v1234
      %1619 = vmatprep.subr.bf16.mxu0 0
      %1620 = vmatpush1.bf16.msra.mxu0 %v1235
      %1621 = vmatprep.subr.bf16.mxu0 0
      %1622 = vmatpush1.bf16.msra.mxu0 %v1236
      %1623 = vmatprep.subr.bf16.mxu0 0
      %1624 = vmatpush1.bf16.msra.mxu0 %v1237
      %1625 = vmatprep.subr.bf16.mxu0 0
      %1626 = vmatpush1.bf16.msra.mxu0 %v1238
      %1627 = vmatprep.subr.bf16.mxu0 0
      %1628 = vmatpush1.bf16.msra.mxu0 %v1239
      %1629 = vmatprep.subr.bf16.mxu0 0
      %1630 = vmatpush1.bf16.msra.mxu0 %v1240
      %1631 = vmatprep.subr.bf16.mxu0 0
      %1632 = vmatpush1.bf16.msra.mxu0 %v1241
      %1633 = vmatprep.subr.bf16.mxu0 0
      %1634 = vmatpush1.bf16.msra.mxu0 %v1242
      %1635 = vmatprep.mubr.bf16.mxu0 %v646
      %1636 = vmatmul.mubr.bf16.gmra.mrb[0].mxu0 %v645
      %v1637 = vpop.f32.mrb[0].mxu0
      %v1638 = vadd.f32 %v1573, %v1637
      %v1639 = vpop.f32.mrb[0].mxu0
      %v1640 = vpop.f32.mrb[0].mxu0
      %v1641 = vadd.f32 %v1576, %v1640
      %v1642 = vpop.f32.mrb[0].mxu0
      %1643 = vmatprep.mubr.bf16.mxu0 %v660
      %1644 = vmatmul.mubr.bf16.gmra.mrb[0].mxu0 %v659
      %v1645 = vpop.f32.mrb[0].mxu0
      %v1646 = vadd.f32 %v1581, %v1645
      %v1647 = vpop.f32.mrb[0].mxu0
      %v1648 = vpop.f32.mrb[0].mxu0
      %v1649 = vadd.f32 %v1584, %v1648
      %v1650 = vpop.f32.mrb[0].mxu0
      %1651 = vmatprep.mubr.bf16.mxu0 %v674
      %1652 = vmatmul.mubr.bf16.gmra.mrb[0].mxu0 %v673
      %v1653 = vpop.f32.mrb[0].mxu0
      %v1654 = vadd.f32 %v1589, %v1653
      %v1655 = vpop.f32.mrb[0].mxu0
      %v1656 = vpop.f32.mrb[0].mxu0
      %v1657 = vadd.f32 %v1592, %v1656
      %v1658 = vpop.f32.mrb[0].mxu0
      %1659 = vmatprep.mubr.bf16.mxu0 %v688
      %1660 = vmatmul.mubr.bf16.gmra.mrb[0].mxu0 %v687
      %v1661 = vpop.f32.mrb[0].mxu0
      %v1662 = vadd.f32 %v1597, %v1661
      %v1663 = vpop.f32.mrb[0].mxu0
      %v1664 = vpop.f32.mrb[0].mxu0
      %v1665 = vadd.f32 %v1600, %v1664
      %v1666 = vpop.f32.mrb[0].mxu0
      %1667 = vdwg.mxu0
      %1668 = vmatprep.subr.bf16.mxu0 0
      %1669 = vmatpush1.bf16.msra.mxu0 %v1243
      %1670 = vmatprep.subr.bf16.mxu0 0
      %1671 = vmatpush1.bf16.msra.mxu0 %v1244
      %1672 = vmatprep.subr.bf16.mxu0 0
      %1673 = vmatpush1.bf16.msra.mxu0 %v1245
      %1674 = vmatprep.subr.bf16.mxu0 0
      %1675 = vmatpush1.bf16.msra.mxu0 %v1246
      %1676 = vmatprep.subr.bf16.mxu0 0
      %1677 = vmatpush1.bf16.msra.mxu0 %v1247
      %1678 = vmatprep.subr.bf16.mxu0 0
      %1679 = vmatpush1.bf16.msra.mxu0 %v1248
      %1680 = vmatprep.subr.bf16.mxu0 0
      %1681 = vmatpush1.bf16.msra.mxu0 %v1249
      %1682 = vmatprep.subr.bf16.mxu0 0
      %1683 = vmatpush1.bf16.msra.mxu0 %v1250
      %1684 = vmatprep.subr.bf16.mxu0 0
      %1685 = vmatpush1.bf16.msra.mxu0 %v1251
      %1686 = vmatprep.subr.bf16.mxu0 0
      %1687 = vmatpush1.bf16.msra.mxu0 %v1252
      %1688 = vmatprep.subr.bf16.mxu0 0
      %1689 = vmatpush1.bf16.msra.mxu0 %v1253
      %1690 = vmatprep.subr.bf16.mxu0 0
      %1691 = vmatpush1.bf16.msra.mxu0 %v1254
      %1692 = vmatprep.subr.bf16.mxu0 0
      %1693 = vmatpush1.bf16.msra.mxu0 %v1255
      %1694 = vmatprep.subr.bf16.mxu0 0
      %1695 = vmatpush1.bf16.msra.mxu0 %v1256
      %1696 = vmatprep.subr.bf16.mxu0 0
      %1697 = vmatpush1.bf16.msra.mxu0 %v1257
      %1698 = vmatprep.subr.bf16.mxu0 0
      %1699 = vmatpush1.bf16.msra.mxu0 %v1258
      %1700 = vmatprep.mubr.bf16.mxu0 %v648
      %1701 = vmatmul.mubr.bf16.gmra.mrb[0].mxu0 %v647
      %v1702 = vpop.f32.mrb[0].mxu0
      %v1703 = vadd.f32 %v1638, %v1702
      %v1704 = vpop.f32.mrb[0].mxu0
      %v1705 = vpop.f32.mrb[0].mxu0
      %v1706 = vadd.f32 %v1641, %v1705
      %v1707 = vpop.f32.mrb[0].mxu0
      %1708 = vmatprep.mubr.bf16.mxu0 %v662
      %1709 = vmatmul.mubr.bf16.gmra.mrb[0].mxu0 %v661
      %v1710 = vpop.f32.mrb[0].mxu0
      %v1711 = vadd.f32 %v1646, %v1710
      %v1712 = vpop.f32.mrb[0].mxu0
      %v1713 = vpop.f32.mrb[0].mxu0
      %v1714 = vadd.f32 %v1649, %v1713
      %v1715 = vpop.f32.mrb[0].mxu0
      %1716 = vmatprep.mubr.bf16.mxu0 %v676
      %1717 = vmatmul.mubr.bf16.gmra.mrb[0].mxu0 %v675
      %v1718 = vpop.f32.mrb[0].mxu0
      %v1719 = vadd.f32 %v1654, %v1718
      %v1720 = vpop.f32.mrb[0].mxu0
      %v1721 = vpop.f32.mrb[0].mxu0
      %v1722 = vadd.f32 %v1657, %v1721
      %v1723 = vpop.f32.mrb[0].mxu0
      %1724 = vmatprep.mubr.bf16.mxu0 %v690
      %1725 = vmatmul.mubr.bf16.gmra.mrb[0].mxu0 %v689
      %v1726 = vpop.f32.mrb[0].mxu0
      %v1727 = vadd.f32 %v1662, %v1726
      %v1728 = vpop.f32.mrb[0].mxu0
      %v1729 = vpop.f32.mrb[0].mxu0
      %v1730 = vadd.f32 %v1665, %v1729
      %v1731 = vpop.f32.mrb[0].mxu0
      %1732 = vdwg.mxu0
      %1733 = vmatprep.subr.bf16.mxu0 0
      %1734 = vmatpush1.bf16.msra.mxu0 %v1259
      %1735 = vmatprep.subr.bf16.mxu0 0
      %1736 = vmatpush1.bf16.msra.mxu0 %v1260
      %1737 = vmatprep.subr.bf16.mxu0 0
      %1738 = vmatpush1.bf16.msra.mxu0 %v1261
      %1739 = vmatprep.subr.bf16.mxu0 0
      %1740 = vmatpush1.bf16.msra.mxu0 %v1262
      %1741 = vmatprep.subr.bf16.mxu0 0
      %1742 = vmatpush1.bf16.msra.mxu0 %v1263
      %1743 = vmatprep.subr.bf16.mxu0 0
      %1744 = vmatpush1.bf16.msra.mxu0 %v1264
      %1745 = vmatprep.subr.bf16.mxu0 0
      %1746 = vmatpush1.bf16.msra.mxu0 %v1265
      %1747 = vmatprep.subr.bf16.mxu0 0
      %1748 = vmatpush1.bf16.msra.mxu0 %v1266
      %1749 = vmatprep.subr.bf16.mxu0 0
      %1750 = vmatpush1.bf16.msra.mxu0 %v1267
      %1751 = vmatprep.subr.bf16.mxu0 0
      %1752 = vmatpush1.bf16.msra.mxu0 %v1268
      %1753 = vmatprep.subr.bf16.mxu0 0
      %1754 = vmatpush1.bf16.msra.mxu0 %v1269
      %1755 = vmatprep.subr.bf16.mxu0 0
      %1756 = vmatpush1.bf16.msra.mxu0 %v1270
      %1757 = vmatprep.subr.bf16.mxu0 0
      %1758 = vmatpush1.bf16.msra.mxu0 %v1271
      %1759 = vmatprep.subr.bf16.mxu0 0
      %1760 = vmatpush1.bf16.msra.mxu0 %v1272
      %1761 = vmatprep.subr.bf16.mxu0 0
      %1762 = vmatpush1.bf16.msra.mxu0 %v1273
      %1763 = vmatprep.subr.bf16.mxu0 0
      %1764 = vmatpush1.bf16.msra.mxu0 %v1274
      %1765 = vmatprep.mubr.bf16.mxu0 %v650
      %1766 = vmatmul.mubr.bf16.gmra.mrb[0].mxu0 %v649
      %v1767 = vpop.f32.mrb[0].mxu0
      %v1768 = vadd.f32 %v1703, %v1767
      %v1769 = vpop.f32.mrb[0].mxu0
      %v1770 = vpop.f32.mrb[0].mxu0
      %v1771 = vadd.f32 %v1706, %v1770
      %v1772 = vpop.f32.mrb[0].mxu0
      %1773 = vmatprep.mubr.bf16.mxu0 %v664
      %1774 = vmatmul.mubr.bf16.gmra.mrb[0].mxu0 %v663
      %v1775 = vpop.f32.mrb[0].mxu0
      %v1776 = vadd.f32 %v1711, %v1775
      %v1777 = vpop.f32.mrb[0].mxu0
      %v1778 = vpop.f32.mrb[0].mxu0
      %v1779 = vadd.f32 %v1714, %v1778
      %v1780 = vpop.f32.mrb[0].mxu0
      %1781 = vmatprep.mubr.bf16.mxu0 %v678
      %1782 = vmatmul.mubr.bf16.gmra.mrb[0].mxu0 %v677
      %v1783 = vpop.f32.mrb[0].mxu0
      %v1784 = vadd.f32 %v1719, %v1783
      %v1785 = vpop.f32.mrb[0].mxu0
      %v1786 = vpop.f32.mrb[0].mxu0
      %v1787 = vadd.f32 %v1722, %v1786
      %v1788 = vpop.f32.mrb[0].mxu0
      %1789 = vmatprep.mubr.bf16.mxu0 %v692
      %1790 = vmatmul.mubr.bf16.gmra.mrb[0].mxu0 %v691
      %v1791 = vpop.f32.mrb[0].mxu0
      %v1792 = vadd.f32 %v1727, %v1791
      %v1793 = vpop.f32.mrb[0].mxu0
      %v1794 = vpop.f32.mrb[0].mxu0
      %v1795 = vadd.f32 %v1730, %v1794
      %v1796 = vpop.f32.mrb[0].mxu0
      %1797 = vdwg.mxu0
      %1798 = vmatprep.subr.bf16.mxu0 0
      %1799 = vmatpush1.bf16.msra.mxu0 %v1275
      %1800 = vmatprep.subr.bf16.mxu0 0
      %1801 = vmatpush1.bf16.msra.mxu0 %v1276
      %1802 = vmatprep.subr.bf16.mxu0 0
      %1803 = vmatpush1.bf16.msra.mxu0 %v1277
      %1804 = vmatprep.subr.bf16.mxu0 0
      %1805 = vmatpush1.bf16.msra.mxu0 %v1278
      %1806 = vmatprep.subr.bf16.mxu0 0
      %1807 = vmatpush1.bf16.msra.mxu0 %v1279
      %1808 = vmatprep.subr.bf16.mxu0 0
      %1809 = vmatpush1.bf16.msra.mxu0 %v1280
      %1810 = vmatprep.subr.bf16.mxu0 0
      %1811 = vmatpush1.bf16.msra.mxu0 %v1281
      %1812 = vmatprep.subr.bf16.mxu0 0
      %1813 = vmatpush1.bf16.msra.mxu0 %v1282
      %1814 = vmatprep.subr.bf16.mxu0 0
      %1815 = vmatpush1.bf16.msra.mxu0 %v1283
      %1816 = vmatprep.subr.bf16.mxu0 0
      %1817 = vmatpush1.bf16.msra.mxu0 %v1284
      %1818 = vmatprep.subr.bf16.mxu0 0
      %1819 = vmatpush1.bf16.msra.mxu0 %v1285
      %1820 = vmatprep.subr.bf16.mxu0 0
      %1821 = vmatpush1.bf16.msra.mxu0 %v1286
      %1822 = vmatprep.subr.bf16.mxu0 0
      %1823 = vmatpush1.bf16.msra.mxu0 0
      %1824 = vmatprep.subr.bf16.mxu0 0
      %1825 = vmatpush1.bf16.msra.mxu0 0
      %1826 = vmatprep.subr.bf16.mxu0 0
      %1827 = vmatpush1.bf16.msra.mxu0 0
      %1828 = vmatprep.subr.bf16.mxu0 0
      %1829 = vmatpush1.bf16.msra.mxu0 0
      %1830 = vmatprep.mubr.bf16.mxu0 %v1397
      %1831 = vmatmul.mubr.bf16.gmra.mrb[0].mxu0 %v651
      %v1832 = vpop.f32.mrb[0].mxu0
      %v1833 = vadd.f32 %v1768, %v1832
      %v1834 = vpop.f32.mrb[0].mxu0
      %v1835 = vpop.f32.mrb[0].mxu0
      %v1836 = vadd.f32 %v1771, %v1835
      %v1837 = vpop.f32.mrb[0].mxu0
      %1838 = vmatprep.mubr.bf16.mxu0 %v1400
      %1839 = vmatmul.mubr.bf16.gmra.mrb[0].mxu0 %v665
      %v1840 = vpop.f32.mrb[0].mxu0
      %v1841 = vadd.f32 %v1776, %v1840
      %v1842 = vpop.f32.mrb[0].mxu0
      %v1843 = vpop.f32.mrb[0].mxu0
      %v1844 = vadd.f32 %v1779, %v1843
      %v1845 = vpop.f32.mrb[0].mxu0
      %1846 = vmatprep.mubr.bf16.mxu0 %v1403
      %1847 = vmatmul.mubr.bf16.gmra.mrb[0].mxu0 %v679
      %v1848 = vpop.f32.mrb[0].mxu0
      %v1849 = vadd.f32 %v1784, %v1848
      %v1850 = vpop.f32.mrb[0].mxu0
      %v1851 = vpop.f32.mrb[0].mxu0
      %v1852 = vadd.f32 %v1787, %v1851
      %v1853 = vpop.f32.mrb[0].mxu0
      %1854 = vmatprep.mubr.bf16.mxu0 %v1406
      %1855 = vmatmul.mubr.bf16.gmra.mrb[0].mxu0 %v693
      %v1856 = vpop.f32.mrb[0].mxu0
      %v1857 = vadd.f32 %v1792, %v1856
      %v1858 = vpop.f32.mrb[0].mxu0
      %v1859 = vpop.f32.mrb[0].mxu0
      %v1860 = vadd.f32 %v1795, %v1859
      %v1861 = vpop.f32.mrb[0].mxu0
      %1862 = vdwg.mxu0
      %v1863 = vld [vmem:[%s2] sm:$0x1]
      %v1865 = vlaneseq
      %v1866 = vshrl.u32 %v1865, 7
      %v1867 = vsub.s32 0, %v1866
      %v1868 = vrot.slane %v1863, %v1867
      %v1870 = vmul.f32 %v1833, %v1868
      %v1871 = vmul.f32 %v1836, %v1868
      %v1872 = vmul.f32 %v1841, %v1868
      %v1873 = vmul.f32 %v1844, %v1868
      %v1874 = vmul.f32 %v1849, %v1868
      %v1875 = vmul.f32 %v1852, %v1868
      %v1876 = vmul.f32 %v1857, %v1868
      %v1877 = vmul.f32 %v1860, %v1868
      %v1878 = vld [vmem:[%s3] sm:$0x1]
      %v1880 = vlaneseq
      %v1881 = vshrl.u32 %v1880, 7
      %v1882 = vsub.s32 0, %v1881
      %v1883 = vrot.slane %v1878, %v1882
      %v1885 = vadd.f32 %v1870, %v1883
      %v1886 = vadd.f32 %v1871, %v1883
      %v1887 = vadd.f32 %v1872, %v1883
      %v1888 = vadd.f32 %v1873, %v1883
      %v1889 = vadd.f32 %v1874, %v1883
      %v1890 = vadd.f32 %v1875, %v1883
      %v1891 = vadd.f32 %v1876, %v1883
      %v1892 = vadd.f32 %v1877, %v1883
      %v1893 = vmax.f32 %v1885, 0.0
      %v1894 = vmax.f32 %v1886, 0.0
      %v1895 = vmax.f32 %v1887, 0.0
      %v1896 = vmax.f32 %v1888, 0.0
      %v1897 = vmax.f32 %v1889, 0.0
      %v1898 = vmax.f32 %v1890, 0.0
      %v1899 = vmax.f32 %v1891, 0.0
      %v1900 = vmax.f32 %v1892, 0.0
      %v1901 = vpack.c.bf16 %v1894, %v1893
      %v1902 = vpack.c.bf16 %v1896, %v1895
      %v1903 = vpack.c.bf16 %v1898, %v1897
      %v1904 = vpack.c.bf16 %v1900, %v1899
      %v1909 = vunpack.c.l.b16 %v1901
      %v1910 = vunpack.c.h.b16 %v1901
      %v1911 = vunpack.c.l.b16 %v1902
      %v1912 = vunpack.c.h.b16 %v1902
      %v1913 = vunpack.c.l.b16 %v1903
      %v1914 = vunpack.c.h.b16 %v1903
      %v1915 = vunpack.c.l.b16 %v1904
      %v1916 = vunpack.c.h.b16 %v1904
      %v1917 = vpack.c.b16 %v1909, %v1909
      %v1918 = vpack.c.b16 %v1910, %v1910
      %v1919 = vpack.c.b16 %v1911, %v1911
      %v1920 = vpack.c.b16 %v1912, %v1912
      %v1921 = vpack.c.b16 %v1913, %v1913
      %v1922 = vpack.c.b16 %v1914, %v1914
      %v1923 = vpack.c.b16 %v1915, %v1915
      %v1924 = vpack.c.b16 %v1916, %v1916
      %vm1933 = vcmask 519168
      %1934 = vst.msk [vmem:[%s197] sm:$0xf] %vm1933, %v1917
      %1935 = vst.msk [vmem:[%s197 + $0x4] sm:$0xf] %vm1933, %v1918
      %1936 = vst.msk [vmem:[%s197 + $0x8] sm:$0xf] %vm1933, %v1919
      %1937 = vst.msk [vmem:[%s197 + $0xc] sm:$0xf] %vm1933, %v1920
      %1938 = vst.msk [vmem:[%s197 + $0x10] sm:$0xf] %vm1933, %v1921
      %1939 = vst.msk [vmem:[%s197 + $0x14] sm:$0xf] %vm1933, %v1922
      %1940 = vst.msk [vmem:[%s197 + $0x18] sm:$0xf] %vm1933, %v1923
      %1941 = vst.msk [vmem:[%s197 + $0x1c] sm:$0xf] %vm1933, %v1924
      %p1942 = scmp.lt.s32.totalorder %s15, 1
      %s1943 = scalar_select %p1942, %s15, 1
      %s1944 = smul.addr %s1943, 8
      %s1945 = smul.addr %s1944, 4
      %s1946 = scalar_lea.vmem %s4, %s1945
      // Predicated region
      $region37: #{videonet_forward.6} parent=35 // pred_check
        %p1947 = pneg %p122
      $region38: #{videonet_forward.6} parent=35 // pred_check_branch
        %1949 = sbr.rel (%p1947) target = $region40
      $region39: #{videonet_forward.6} parent=35 // pred_region
        _
      $region40: #{videonet_forward.6} parent=35 // pred_fallthru
        _
    $region36: #{videonet_forward.6} parent=5 // pred_fallthru
      _
    %p1950 = scmp.le.s32.totalorder 2, %s10
    // Predicated region
    $region41: #{videonet_forward.6} parent=5 // pred_check
      %p1951 = pneg %p1950
    $region42: #{videonet_forward.6} parent=5 // pred_check_branch
      %1953 = sbr.rel (%p1951) target = $region44
    $region43: #{videonet_forward.6} parent=5 // pred_region
      %s1954 = ssub.s32 %s10, 2
      // Predicated region
      $region45: #{videonet_forward.6} parent=43 // pred_check
        %p1955 = pneg %p128
      $region46: #{videonet_forward.6} parent=43 // pred_check_branch
        %1957 = sbr.rel (%p1955) target = $region48
      $region47: #{videonet_forward.6} parent=43 // pred_region
        %p1958 = scmp.lt.s32.totalorder %s16, 1
        %s1959 = scalar_select %p1958, %s16, 1
        %s1960 = smul.addr %s1959, 8
        %s1961 = smul.addr %s1960, 4
        %s1962 = scalar_lea.vmem %s4, %s1961
      $region48: #{videonet_forward.6} parent=43 // pred_fallthru
        _
    $region44: #{videonet_forward.6} parent=5 // pred_fallthru
      _
  $region6: #{videonet_forward.6} parent=0 // loop_footer
    %s14 = sadd.s32 1, %s10
  $region7: #{videonet_forward.6} parent=0 // loop_footer_branch
    %9 = sbr.rel target = $region3
  $region8: #{videonet_forward.6} parent=0 // loop_exit
    _

// kernel: videonet_forward.7
$region0: #{videonet_forward.7}
  #allocation0 [shape = 'u32[]', space=smem, size = 0x4, offset = 0x4, fixed_abs, tag = 'smem constant byte address 0x4 - core index']
  #allocation1 [shape = 'u32[144,128]{1,0:T(1,128)}', space=vmem, size = 0x12000, scoped, tag = 'internal scratch']
  %s0 = inlined_call_operand.vmem [shape: bf16[2,64,1728], index: 0, kind: input, shape index: {}]
  %s1 = inlined_call_operand.vmem [shape: bf16[1728,64], index: 1, kind: input, shape index: {}]
  %s2 = inlined_call_operand.vmem [shape: f32[1,64], index: 2, kind: input, shape index: {}]
  %s3 = inlined_call_operand.vmem [shape: f32[1,64], index: 3, kind: input, shape index: {}]
  %s4 = inlined_call_operand.vmem [shape: bf16[2,64,64], index: 4, kind: input, shape index: {}]
  %s5 = inlined_call_operand.vmem [shape: bf16[2,64,64], index: 5, kind: output, shape index: {}]
  %s6 = sld [smem:[#allocation0]]
  $region53: #{videonet_forward.7} parent=0
    _
  %s8 = ssub.s32 1, %s6
  %s9 = scalar_select 0, %s8, %s6
  loop: start=0, step=1, limit=4
  $region2: #{videonet_forward.7} parent=0 // loop_pre_header
    _
  $region3: #{videonet_forward.7} parent=0 // loop_header
    %s11 = sphi 0, %s15
    %p12 = scmp.ge.s32.totalorder %s11, 4
    %s21 = sphi 0, %s23
    %s24 = sphi 0, %s21
    %s25 = sphi 0, %s24
    %s41 = sphi 0, %s25
    %s45 = sphi 0, %s45
    %s47 = sphi 0, %s45
    %s48 = sphi 0, %s47
    %s62 = sphi 0, %s48
    %s66 = sphi 0, %s66
    %s68 = sphi 0, %s66
    %s69 = sphi 0, %s68
    %s83 = sphi 0, %s69
    %s87 = sphi 0, %s87
    %s89 = sphi 0, %s87
    %s90 = sphi 0, %s89
    %s104 = sphi 0, %s90
    %s110 = sphi 0, %s112
    %s113 = sphi 0, %s110
    %s114 = sphi 0, %s113
    %s130 = sphi 0, %s114
    %s136 = sphi 0, %s138
    %s139 = sphi 0, %s136
    %s140 = sphi 0, %s139
    %s156 = sphi 0, %s140
  $region4: #{videonet_forward.7} parent=0 // loop_header_branch
    %14 = sbr.rel (%p12) target = $region8
  $region5: #{videonet_forward.7} parent=0 // loop_body
    %s16 = ssub.s32 %s11, 1
    %s17 = ssub.s32 %s11, 2
    %s18 = sadd.s32 %s11, 1
    %s19 = ssub.s32 %s11, %s18
    %p20 = scmp.eq.s32.totalorder %s19, 0
    %s22 = sadd.s32 %s21, 1
    %s23 = scalar_select %p20, %s21, %s22
    %p26 = pneg %p20
    %p27 = scmp.eq.s32.totalorder %s11, 1
    %p28 = por %p26, %p27
    %p29 = scmp.ne.s32.totalorder %s21, %s24
    %p30 = scmp.eq.s32.totalorder %s11, 0
    %p31 = por %p29, %p30
    %p32 = scmp.ne.s32.totalorder %s21, %s24
    %p33 = scmp.eq.s32.totalorder %s16, 1
    %p34 = por %p32, %p33
    %p35 = scmp.ne.s32.totalorder %s24, %s25
    %p36 = scmp.eq.s32.totalorder %s16, 0
    %p37 = por %p35, %p36
    %p38 = scmp.ne.s32.totalorder %s24, %s25
    %p39 = scmp.eq.s32.totalorder %s17, 1
    %p40 = por %p38, %p39
    %p42 = scmp.ne.s32.totalorder %s25, %s41
    %p43 = scmp.eq.s32.totalorder %s17, 0
    %p44 = por %p42, %p43
    %s46 = sadd.s32 %s45, 1
    %p49 = scmp.eq.s32.totalorder %s11, 1
    %p50 = scmp.ne.s32.totalorder %s45, %s47
    %p51 = scmp.eq.s32.totalorder %s11, 0
    %p52 = por %p50, %p51
    %p53 = scmp.ne.s32.totalorder %s45, %s47
    %p54 = scmp.eq.s32.totalorder %s16, 1
    %p55 = por %p53, %p54
    %p56 = scmp.ne.s32.totalorder %s47, %s48
    %p57 = scmp.eq.s32.totalorder %s16, 0
    %p58 = por %p56, %p57
    %p59 = scmp.ne.s32.totalorder %s47, %s48
    %p60 = scmp.eq.s32.totalorder %s17, 1
    %p61 = por %p59, %p60
    %p63 = scmp.ne.s32.totalorder %s48, %s62
    %p64 = scmp.eq.s32.totalorder %s17, 0
    %p65 = por %p63, %p64
    %s67 = sadd.s32 %s66, 1
    %p70 = scmp.eq.s32.totalorder %s11, 1
    %p71 = scmp.ne.s32.totalorder %s66, %s68
    %p72 = scmp.eq.s32.totalorder %s11, 0
    %p73 = por %p71, %p72
    %p74 = scmp.ne.s32.totalorder %s66, %s68
    %p75 = scmp.eq.s32.totalorder %s16, 1
    %p76 = por %p74, %p75
    %p77 = scmp.ne.s32.totalorder %s68, %s69
    %p78 = scmp.eq.s32.totalorder %s16, 0
    %p79 = por %p77, %p78
    %p80 = scmp.ne.s32.totalorder %s68, %s69
    %p81 = scmp.eq.s32.totalorder %s17, 1
    %p82 = por %p80, %p81
    %p84 = scmp.ne.s32.totalorder %s69, %s83
    %p85 = scmp.eq.s32.totalorder %s17, 0
    %p86 = por %p84, %p85
    %s88 = sadd.s32 %s87, 1
    %p91 = scmp.eq.s32.totalorder %s11, 1
    %p92 = scmp.ne.s32.totalorder %s87, %s89
    %p93 = scmp.eq.s32.totalorder %s11, 0
    %p94 = por %p92, %p93
    %p95 = scmp.ne.s32.totalorder %s87, %s89
    %p96 = scmp.eq.s32.totalorder %s16, 1
    %p97 = por %p95, %p96
    %p98 = scmp.ne.s32.totalorder %s89, %s90
    %p99 = scmp.eq.s32.totalorder %s16, 0
    %p100 = por %p98, %p99
    %p101 = scmp.ne.s32.totalorder %s89, %s90
    %p102 = scmp.eq.s32.totalorder %s17, 1
    %p103 = por %p101, %p102
    %p105 = scmp.ne.s32.totalorder %s90, %s104
    %p106 = scmp.eq.s32.totalorder %s17, 0
    %p107 = por %p105, %p106
    %s108 = ssub.s32 %s11, %s18
    %p109 = scmp.eq.s32.totalorder %s108, 0
    %s111 = sadd.s32 %s110, 1
    %s112 = scalar_select %p109, %s110, %s111
    %p115 = pneg %p109
    %p116 = scmp.eq.s32.totalorder %s11, 1
    %p117 = por %p115, %p116
    %p118 = scmp.ne.s32.totalorder %s110, %s113
    %p119 = scmp.eq.s32.totalorder %s11, 0
    %p120 = por %p118, %p119
    %p121 = scmp.ne.s32.totalorder %s110, %s113
    %p122 = scmp.eq.s32.totalorder %s16, 1
    %p123 = por %p121, %p122
    %p124 = scmp.ne.s32.totalorder %s113, %s114
    %p125 = scmp.eq.s32.totalorder %s16, 0
    %p126 = por %p124, %p125
    %p127 = scmp.ne.s32.totalorder %s113, %s114
    %p128 = scmp.eq.s32.totalorder %s17, 1
    %p129 = por %p127, %p128
    %p131 = scmp.ne.s32.totalorder %s114, %s130
    %p132 = scmp.eq.s32.totalorder %s17, 0
    %p133 = por %p131, %p132
    %s134 = ssub.s32 %s11, %s18
    %p135 = scmp.eq.s32.totalorder %s134, 0
    %s137 = sadd.s32 %s136, 1
    %s138 = scalar_select %p135, %s136, %s137
    %p141 = pneg %p135
    %p142 = scmp.eq.s32.totalorder %s11, 1
    %p143 = por %p141, %p142
    %p144 = scmp.ne.s32.totalorder %s136, %s139
    %p145 = scmp.eq.s32.totalorder %s11, 0
    %p146 = por %p144, %p145
    %p147 = scmp.ne.s32.totalorder %s136, %s139
    %p148 = scmp.eq.s32.totalorder %s16, 1
    %p149 = por %p147, %p148
    %p150 = scmp.ne.s32.totalorder %s139, %s140
    %p151 = scmp.eq.s32.totalorder %s16, 0
    %p152 = por %p150, %p151
    %p153 = scmp.ne.s32.totalorder %s139, %s140
    %p154 = scmp.eq.s32.totalorder %s17, 1
    %p155 = por %p153, %p154
    %p157 = scmp.ne.s32.totalorder %s140, %s156
    %p158 = scmp.eq.s32.totalorder %s17, 0
    %p159 = por %p157, %p158
    %p160 = scmp.le.s32.totalorder 1, %s11
    %p161 = scmp.lt.s32.totalorder %s11, 3
    %p162 = pnand %p160, %p161
    %p163 = pneg %p162
    // Predicated region
    $region9: #{videonet_forward.7} parent=5 // pred_check
      _
    $region10: #{videonet_forward.7} parent=5 // pred_check_branch
      %165 = sbr.rel (%p162) target = $region12
    $region11: #{videonet_forward.7} parent=5 // pred_region
      %s166 = ssub.s32 %s11, 1
      // Predicated region
      $region13: #{videonet_forward.7} parent=11 // pred_check
        %p167 = pneg %p58
      $region14: #{videonet_forward.7} parent=11 // pred_check_branch
        %169 = sbr.rel (%p167) target = $region16
      $region15: #{videonet_forward.7} parent=11 // pred_region
        _
      $region16: #{videonet_forward.7} parent=11 // pred_fallthru
        _
      // Predicated region
      $region17: #{videonet_forward.7} parent=11 // pred_check
        %p170 = pneg %p79
      $region18: #{videonet_forward.7} parent=11 // pred_check_branch
        %172 = sbr.rel (%p170) target = $region20
      $region19: #{videonet_forward.7} parent=11 // pred_region
        _
      $region20: #{videonet_forward.7} parent=11 // pred_fallthru
        _
      // Predicated region
      $region21: #{videonet_forward.7} parent=11 // pred_check
        %p173 = pneg %p100
      $region22: #{videonet_forward.7} parent=11 // pred_check_branch
        %175 = sbr.rel (%p173) target = $region24
      $region23: #{videonet_forward.7} parent=11 // pred_region
        _
      $region24: #{videonet_forward.7} parent=11 // pred_fallthru
        _
    $region12: #{videonet_forward.7} parent=5 // pred_fallthru
      _
    %p176 = scmp.lt.s32.totalorder %s11, 2
    // Predicated region
    $region25: #{videonet_forward.7} parent=5 // pred_check
      %p177 = pneg %p176
    $region26: #{videonet_forward.7} parent=5 // pred_check_branch
      %179 = sbr.rel (%p177) target = $region28
    $region27: #{videonet_forward.7} parent=5 // pred_region
      // Predicated region
      $region29: #{videonet_forward.7} parent=27 // pred_check
        %p180 = pneg %p31
      $region30: #{videonet_forward.7} parent=27 // pred_check_branch
        %182 = sbr.rel (%p180) target = $region32
      $region31: #{videonet_forward.7} parent=27 // pred_region
        %p183 = scmp.lt.s32.totalorder %s11, 1
        %s184 = scalar_select %p183, %s11, 1
        %s185 = smul.addr %s184, 112
        %s186 = smul.addr %s185, 4
        %s187 = scalar_lea.vmem %s0, %s186
      $region32: #{videonet_forward.7} parent=27 // pred_fallthru
        _
      // Predicated region
      $region33: #{videonet_forward.7} parent=27 // pred_check
        %p188 = pneg %p120
      $region34: #{videonet_forward.7} parent=27 // pred_check_branch
        %190 = sbr.rel (%p188) target = $region36
      $region35: #{videonet_forward.7} parent=27 // pred_region
        %p191 = scmp.lt.s32.totalorder %s11, 1
        %s192 = scalar_select %p191, %s11, 1
        %s193 = smul.addr %s192, 8
        %s194 = smul.addr %s193, 4
        %s195 = scalar_lea.vmem %s4, %s194
      $region36: #{videonet_forward.7} parent=27 // pred_fallthru
        _
    $region28: #{videonet_forward.7} parent=5 // pred_fallthru
      _
    %p196 = scmp.le.s32.totalorder 1, %s11
    %p197 = scmp.lt.s32.totalorder %s11, 3
    %p198 = pnand %p196, %p197
    %p199 = pneg %p198
    // Predicated region
    $region37: #{videonet_forward.7} parent=5 // pred_check
      _
    $region38: #{videonet_forward.7} parent=5 // pred_check_branch
      %201 = sbr.rel (%p198) target = $region40
    $region39: #{videonet_forward.7} parent=5 // pred_region
      %s202 = ssub.s32 %s11, 1
      %p203 = scmp.lt.s32.totalorder %s16, 1
      %s204 = scalar_select %p203, %s16, 1
      %s205 = smul.addr %s204, 112
      %s206 = smul.addr %s205, 4
      %s207 = scalar_lea.vmem %s0, %s206
      %p208 = pneg %p37
      %p209 = pneg %p34
      %p210 = pneg %p58
      %p211 = pneg %p55
      %p212 = pneg %p79
      %p213 = pneg %p76
      %p214 = pneg %p100
      %p215 = pneg %p97
      %p216 = scmp.lt.s32.totalorder %s16, 1
      %s217 = scalar_select %p216, %s16, 1
      %s218 = smul.addr %s217, 8
      %s219 = smul.addr %s218, 4
      %s220 = scalar_lea.vmem %s4, %s219
      %p221 = pneg %p126
      %p222 = pneg %p123
      %p223 = pneg %p152
      %p224 = pneg %p149
      %p225 = scmp.lt.s32.totalorder %s16, 1
      %s226 = scalar_select %p225, %s16, 1
      %s227 = smul.addr %s226, 8
      %s228 = smul.addr %s227, 4
      %s229 = scalar_lea.vmem %s5, %s228
      %p230 = scmp.lt.s32.totalorder %s16, 1
      %s231 = scalar_select %p230, %s16, 1
      %s232 = smul.addr %s231, 112
      %s233 = smul.addr %s232, 4
      %s234 = scalar_lea.vmem %s0, %s233
      %p235 = scmp.lt.s32.totalorder %s16, 1
      %s236 = scalar_select %p235, %s16, 1
      %s237 = smul.addr %s236, 8
      %s238 = smul.addr %s237, 4
      %s239 = scalar_lea.vmem %s4, %s238
      %p240 = scmp.lt.s32.totalorder %s16, 1
      %s241 = scalar_select %p240, %s16, 1
      %s242 = smul.addr %s241, 8
      %s243 = smul.addr %s242, 4
      %s244 = scalar_lea.vmem %s5, %s243
      %v246 = vld [vmem:[%s234] sm:$0xff]
      %v247 = vld [vmem:[%s234 + $0x8] sm:$0xff]
      %v248 = vld [vmem:[%s234 + $0x10] sm:$0xff]
      %v249 = vld [vmem:[%s234 + $0x18] sm:$0xff]
      %v250 = vld [vmem:[%s234 + $0x20] sm:$0xff]
      %v251 = vld [vmem:[%s234 + $0x28] sm:$0xff]
      %v252 = vld [vmem:[%s234 + $0x30] sm:$0xff]
      %v253 = vld [vmem:[%s234 + $0x38] sm:$0xff]
      %v254 = vld [vmem:[%s234 + $0x40] sm:$0xff]
      %v255 = vld [vmem:[%s234 + $0x48] sm:$0xff]
      %v256 = vld [vmem:[%s234 + $0x50] sm:$0xff]
      %v257 = vld [vmem:[%s234 + $0x58] sm:$0xff]
      %v258 = vld [vmem:[%s234 + $0x60] sm:$0xff]
      %v259 = vld [vmem:[%s234 + $0x68] sm:$0xff]
      %v260 = vld [vmem:[%s234 + $0x70] sm:$0xff]
      %v261 = vld [vmem:[%s234 + $0x78] sm:$0xff]
      %v262 = vld [vmem:[%s234 + $0x80] sm:$0xff]
      %v263 = vld [vmem:[%s234 + $0x88] sm:$0xff]
      %v264 = vld [vmem:[%s234 + $0x90] sm:$0xff]
      %v265 = vld [vmem:[%s234 + $0x98] sm:$0xff]
      %v266 = vld [vmem:[%s234 + $0xa0] sm:$0xff]
      %v267 = vld [vmem:[%s234 + $0xa8] sm:$0xff]
      %v268 = vld [vmem:[%s234 + $0xb0] sm:$0xff]
      %v269 = vld [vmem:[%s234 + $0xb8] sm:$0xff]
      %v270 = vld [vmem:[%s234 + $0xc0] sm:$0xff]
      %v271 = vld [vmem:[%s234 + $0xc8] sm:$0xff]
      %v272 = vld [vmem:[%s234 + $0xd0] sm:$0xff]
      %v273 = vld [vmem:[%s234 + $0xd8] sm:$0xff]
      %v274 = vld [vmem:[%s234 + $0xe0] sm:$0xff]
      %v275 = vld [vmem:[%s234 + $0xe8] sm:$0xff]
      %v276 = vld [vmem:[%s234 + $0xf0] sm:$0xff]
      %v277 = vld [vmem:[%s234 + $0xf8] sm:$0xff]
      %v278 = vld [vmem:[%s234 + $0x100] sm:$0xff]
      %v279 = vld [vmem:[%s234 + $0x108] sm:$0xff]
      %v280 = vld [vmem:[%s234 + $0x110] sm:$0xff]
      %v281 = vld [vmem:[%s234 + $0x118] sm:$0xff]
      %v282 = vld [vmem:[%s234 + $0x120] sm:$0xff]
      %v283 = vld [vmem:[%s234 + $0x128] sm:$0xff]
      %v284 = vld [vmem:[%s234 + $0x130] sm:$0xff]
      %v285 = vld [vmem:[%s234 + $0x138] sm:$0xff]
      %v286 = vld [vmem:[%s234 + $0x140] sm:$0xff]
      %v287 = vld [vmem:[%s234 + $0x148] sm:$0xff]
      %v288 = vld [vmem:[%s234 + $0x150] sm:$0xff]
      %v289 = vld [vmem:[%s234 + $0x158] sm:$0xff]
      %v290 = vld [vmem:[%s234 + $0x160] sm:$0xff]
      %v291 = vld [vmem:[%s234 + $0x168] sm:$0xff]
      %v292 = vld [vmem:[%s234 + $0x170] sm:$0xff]
      %v293 = vld [vmem:[%s234 + $0x178] sm:$0xff]
      %v294 = vld [vmem:[%s234 + $0x180] sm:$0xff]
      %v295 = vld [vmem:[%s234 + $0x188] sm:$0xff]
      %v296 = vld [vmem:[%s234 + $0x190] sm:$0xff]
      %v297 = vld [vmem:[%s234 + $0x198] sm:$0xff]
      %v298 = vld [vmem:[%s234 + $0x1a0] sm:$0xff]
      %v299 = vld [vmem:[%s234 + $0x1a8] sm:$0xff]
      %v300 = vld [vmem:[%s234 + $0x1b0] sm:$0xff]
      %v301 = vld [vmem:[%s234 + $0x1b8] sm:$0xff]
      %v302 = vld [vmem:[%s1] sm:$0xf]
      %v303 = vld [vmem:[%s1 + $0x4] sm:$0xf]
      %v304 = vld [vmem:[%s1 + $0x8] sm:$0xf]
      %v305 = vld [vmem:[%s1 + $0xc] sm:$0xf]
      %v306 = vld [vmem:[%s1 + $0x10] sm:$0xf]
      %v307 = vld [vmem:[%s1 + $0x14] sm:$0xf]
      %v308 = vld [vmem:[%s1 + $0x18] sm:$0xf]
      %v309 = vld [vmem:[%s1 + $0x1c] sm:$0xf]
      %v310 = vld [vmem:[%s1 + $0x20] sm:$0xf]
      %v311 = vld [vmem:[%s1 + $0x24] sm:$0xf]
      %v312 = vld [vmem:[%s1 + $0x28] sm:$0xf]
      %v313 = vld [vmem:[%s1 + $0x2c] sm:$0xf]
      %v314 = vld [vmem:[%s1 + $0x30] sm:$0xf]
      %v315 = vld [vmem:[%s1 + $0x34] sm:$0xf]
      %v316 = vld [vmem:[%s1 + $0x38] sm:$0xf]
      %v317 = vld [vmem:[%s1 + $0x3c] sm:$0xf]
      %v318 = vld [vmem:[%s1 + $0x40] sm:$0xf]
      %v319 = vld [vmem:[%s1 + $0x44] sm:$0xf]
      %v320 = vld [vmem:[%s1 + $0x48] sm:$0xf]
      %v321 = vld [vmem:[%s1 + $0x4c] sm:$0xf]
      %v322 = vld [vmem:[%s1 + $0x50] sm:$0xf]
      %v323 = vld [vmem:[%s1 + $0x54] sm:$0xf]
      %v324 = vld [vmem:[%s1 + $0x58] sm:$0xf]
      %v325 = vld [vmem:[%s1 + $0x5c] sm:$0xf]
      %v326 = vld [vmem:[%s1 + $0x60] sm:$0xf]
      %v327 = vld [vmem:[%s1 + $0x64] sm:$0xf]
      %v328 = vld [vmem:[%s1 + $0x68] sm:$0xf]
      %v329 = vld [vmem:[%s1 + $0x6c] sm:$0xf]
      %v330 = vld [vmem:[%s1 + $0x70] sm:$0xf]
      %v331 = vld [vmem:[%s1 + $0x74] sm:$0xf]
      %v332 = vld [vmem:[%s1 + $0x78] sm:$0xf]
      %v333 = vld [vmem:[%s1 + $0x7c] sm:$0xf]
      %v334 = vld [vmem:[%s1 + $0x80] sm:$0xf]
      %v335 = vld [vmem:[%s1 + $0x84] sm:$0xf]
      %v336 = vld [vmem:[%s1 + $0x88] sm:$0xf]
      %v337 = vld [vmem:[%s1 + $0x8c] sm:$0xf]
      %v338 = vld [vmem:[%s1 + $0x90] sm:$0xf]
      %v339 = vld [vmem:[%s1 + $0x94] sm:$0xf]
      %v340 = vld [vmem:[%s1 + $0x98] sm:$0xf]
      %v341 = vld [vmem:[%s1 + $0x9c] sm:$0xf]
      %v342 = vld [vmem:[%s1 + $0xa0] sm:$0xf]
      %v343 = vld [vmem:[%s1 + $0xa4] sm:$0xf]
      %v344 = vld [vmem:[%s1 + $0xa8] sm:$0xf]
      %v345 = vld [vmem:[%s1 + $0xac] sm:$0xf]
      %v346 = vld [vmem:[%s1 + $0xb0] sm:$0xf]
      %v347 = vld [vmem:[%s1 + $0xb4] sm:$0xf]
      %v348 = vld [vmem:[%s1 + $0xb8] sm:$0xf]
      %v349 = vld [vmem:[%s1 + $0xbc] sm:$0xf]
      %v350 = vld [vmem:[%s1 + $0xc0] sm:$0xf]
      %v351 = vld [vmem:[%s1 + $0xc4] sm:$0xf]
      %v352 = vld [vmem:[%s1 + $0xc8] sm:$0xf]
      %v353 = vld [vmem:[%s1 + $0xcc] sm:$0xf]
      %v354 = vld [vmem:[%s1 + $0xd0] sm:$0xf]
      %v355 = vld [vmem:[%s1 + $0xd4] sm:$0xf]
      %v356 = vld [vmem:[%s1 + $0xd8] sm:$0xf]
      %v357 = vld [vmem:[%s1 + $0xdc] sm:$0xf]
      %v358 = vld [vmem:[%s1 + $0xe0] sm:$0xf]
      %v359 = vld [vmem:[%s1 + $0xe4] sm:$0xf]
      %v360 = vld [vmem:[%s1 + $0xe8] sm:$0xf]
      %v361 = vld [vmem:[%s1 + $0xec] sm:$0xf]
      %v362 = vld [vmem:[%s1 + $0xf0] sm:$0xf]
      %v363 = vld [vmem:[%s1 + $0xf4] sm:$0xf]
      %v364 = vld [vmem:[%s1 + $0xf8] sm:$0xf]
      %v365 = vld [vmem:[%s1 + $0xfc] sm:$0xf]
      %v366 = vld [vmem:[%s1 + $0x100] sm:$0xf]
      %v367 = vld [vmem:[%s1 + $0x104] sm:$0xf]
      %v368 = vld [vmem:[%s1 + $0x108] sm:$0xf]
      %v369 = vld [vmem:[%s1 + $0x10c] sm:$0xf]
      %v370 = vld [vmem:[%s1 + $0x110] sm:$0xf]
      %v371 = vld [vmem:[%s1 + $0x114] sm:$0xf]
      %v372 = vld [vmem:[%s1 + $0x118] sm:$0xf]
      %v373 = vld [vmem:[%s1 + $0x11c] sm:$0xf]
      %v374 = vld [vmem:[%s1 + $0x120] sm:$0xf]
      %v375 = vld [vmem:[%s1 + $0x124] sm:$0xf]
      %v376 = vld [vmem:[%s1 + $0x128] sm:$0xf]
      %v377 = vld [vmem:[%s1 + $0x12c] sm:$0xf]
      %v378 = vld [vmem:[%s1 + $0x130] sm:$0xf]
      %v379 = vld [vmem:[%s1 + $0x134] sm:$0xf]
      %v380 = vld [vmem:[%s1 + $0x138] sm:$0xf]
      %v381 = vld [vmem:[%s1 + $0x13c] sm:$0xf]
      %v382 = vld [vmem:[%s1 + $0x140] sm:$0xf]
      %v383 = vld [vmem:[%s1 + $0x144] sm:$0xf]
      %v384 = vld [vmem:[%s1 + $0x148] sm:$0xf]
      %v385 = vld [vmem:[%s1 + $0x14c] sm:$0xf]
      %v386 = vld [vmem:[%s1 + $0x150] sm:$0xf]
      %v387 = vld [vmem:[%s1 + $0x154] sm:$0xf]
      %v388 = vld [vmem:[%s1 + $0x158] sm:$0xf]
      %v389 = vld [vmem:[%s1 + $0x15c] sm:$0xf]
      %v390 = vld [vmem:[%s1 + $0x160] sm:$0xf]
      %v391 = vld [vmem:[%s1 + $0x164] sm:$0xf]
      %v392 = vld [vmem:[%s1 + $0x168] sm:$0xf]
      %v393 = vld [vmem:[%s1 + $0x16c] sm:$0xf]
      %v394 = vld [vmem:[%s1 + $0x170] sm:$0xf]
      %v395 = vld [vmem:[%s1 + $0x174] sm:$0xf]
      %v396 = vld [vmem:[%s1 + $0x178] sm:$0xf]
      %v397 = vld [vmem:[%s1 + $0x17c] sm:$0xf]
      %v398 = vld [vmem:[%s1 + $0x180] sm:$0xf]
      %v399 = vld [vmem:[%s1 + $0x184] sm:$0xf]
      %v400 = vld [vmem:[%s1 + $0x188] sm:$0xf]
      %v401 = vld [vmem:[%s1 + $0x18c] sm:$0xf]
      %v402 = vld [vmem:[%s1 + $0x190] sm:$0xf]
      %v403 = vld [vmem:[%s1 + $0x194] sm:$0xf]
      %v404 = vld [vmem:[%s1 + $0x198] sm:$0xf]
      %v405 = vld [vmem:[%s1 + $0x19c] sm:$0xf]
      %v406 = vld [vmem:[%s1 + $0x1a0] sm:$0xf]
      %v407 = vld [vmem:[%s1 + $0x1a4] sm:$0xf]
      %v408 = vld [vmem:[%s1 + $0x1a8] sm:$0xf]
      %v409 = vld [vmem:[%s1 + $0x1ac] sm:$0xf]
      %v410 = vld [vmem:[%s1 + $0x1b0] sm:$0xf]
      %v411 = vld [vmem:[%s1 + $0x1b4] sm:$0xf]
      %v412 = vld [vmem:[%s1 + $0x1b8] sm:$0xf]
      %v413 = vld [vmem:[%s1 + $0x1bc] sm:$0xf]
      %v414 = vld [vmem:[%s1 + $0x1c0] sm:$0xf]
      %v415 = vld [vmem:[%s1 + $0x1c4] sm:$0xf]
      %v416 = vld [vmem:[%s1 + $0x1c8] sm:$0xf]
      %v417 = vld [vmem:[%s1 + $0x1cc] sm:$0xf]
      %v418 = vld [vmem:[%s1 + $0x1d0] sm:$0xf]
      %v419 = vld [vmem:[%s1 + $0x1d4] sm:$0xf]
      %v420 = vld [vmem:[%s1 + $0x1d8] sm:$0xf]
      %v421 = vld [vmem:[%s1 + $0x1dc] sm:$0xf]
      %v422 = vld [vmem:[%s1 + $0x1e0] sm:$0xf]
      %v423 = vld [vmem:[%s1 + $0x1e4] sm:$0xf]
      %v424 = vld [vmem:[%s1 + $0x1e8] sm:$0xf]
      %v425 = vld [vmem:[%s1 + $0x1ec] sm:$0xf]
      %v426 = vld [vmem:[%s1 + $0x1f0] sm:$0xf]
      %v427 = vld [vmem:[%s1 + $0x1f4] sm:$0xf]
      %v428 = vld [vmem:[%s1 + $0x1f8] sm:$0xf]
      %v429 = vld [vmem:[%s1 + $0x1fc] sm:$0xf]
      %v430 = vld [vmem:[%s1 + $0x200] sm:$0xf]
      %v431 = vld [vmem:[%s1 + $0x204] sm:$0xf]
      %v432 = vld [vmem:[%s1 + $0x208] sm:$0xf]
      %v433 = vld [vmem:[%s1 + $0x20c] sm:$0xf]
      %v434 = vld [vmem:[%s1 + $0x210] sm:$0xf]
      %v435 = vld [vmem:[%s1 + $0x214] sm:$0xf]
      %v436 = vld [vmem:[%s1 + $0x218] sm:$0xf]
      %v437 = vld [vmem:[%s1 + $0x21c] sm:$0xf]
      %v438 = vld [vmem:[%s1 + $0x220] sm:$0xf]
      %v439 = vld [vmem:[%s1 + $0x224] sm:$0xf]
      %v440 = vld [vmem:[%s1 + $0x228] sm:$0xf]
      %v441 = vld [vmem:[%s1 + $0x22c] sm:$0xf]
      %v442 = vld [vmem:[%s1 + $0x230] sm:$0xf]
      %v443 = vld [vmem:[%s1 + $0x234] sm:$0xf]
      %v444 = vld [vmem:[%s1 + $0x238] sm:$0xf]
      %v445 = vld [vmem:[%s1 + $0x23c] sm:$0xf]
      %v446 = vld [vmem:[%s1 + $0x240] sm:$0xf]
      %v447 = vld [vmem:[%s1 + $0x244] sm:$0xf]
      %v448 = vld [vmem:[%s1 + $0x248] sm:$0xf]
      %v449 = vld [vmem:[%s1 + $0x24c] sm:$0xf]
      %v450 = vld [vmem:[%s1 + $0x250] sm:$0xf]
      %v451 = vld [vmem:[%s1 + $0x254] sm:$0xf]
      %v452 = vld [vmem:[%s1 + $0x258] sm:$0xf]
      %v453 = vld [vmem:[%s1 + $0x25c] sm:$0xf]
      %v454 = vld [vmem:[%s1 + $0x260] sm:$0xf]
      %v455 = vld [vmem:[%s1 + $0x264] sm:$0xf]
      %v456 = vld [vmem:[%s1 + $0x268] sm:$0xf]
      %v457 = vld [vmem:[%s1 + $0x26c] sm:$0xf]
      %v458 = vld [vmem:[%s1 + $0x270] sm:$0xf]
      %v459 = vld [vmem:[%s1 + $0x274] sm:$0xf]
      %v460 = vld [vmem:[%s1 + $0x278] sm:$0xf]
      %v461 = vld [vmem:[%s1 + $0x27c] sm:$0xf]
      %v462 = vld [vmem:[%s1 + $0x280] sm:$0xf]
      %v463 = vld [vmem:[%s1 + $0x284] sm:$0xf]
      %v464 = vld [vmem:[%s1 + $0x288] sm:$0xf]
      %v465 = vld [vmem:[%s1 + $0x28c] sm:$0xf]
      %v466 = vld [vmem:[%s1 + $0x290] sm:$0xf]
      %v467 = vld [vmem:[%s1 + $0x294] sm:$0xf]
      %v468 = vld [vmem:[%s1 + $0x298] sm:$0xf]
      %v469 = vld [vmem:[%s1 + $0x29c] sm:$0xf]
      %v470 = vld [vmem:[%s1 + $0x2a0] sm:$0xf]
      %v471 = vld [vmem:[%s1 + $0x2a4] sm:$0xf]
      %v472 = vld [vmem:[%s1 + $0x2a8] sm:$0xf]
      %v473 = vld [vmem:[%s1 + $0x2ac] sm:$0xf]
      %v474 = vld [vmem:[%s1 + $0x2b0] sm:$0xf]
      %v475 = vld [vmem:[%s1 + $0x2b4] sm:$0xf]
      %v476 = vld [vmem:[%s1 + $0x2b8] sm:$0xf]
      %v477 = vld [vmem:[%s1 + $0x2bc] sm:$0xf]
      %v478 = vld [vmem:[%s1 + $0x2c0] sm:$0xf]
      %v479 = vld [vmem:[%s1 + $0x2c4] sm:$0xf]
      %v480 = vld [vmem:[%s1 + $0x2c8] sm:$0xf]
      %v481 = vld [vmem:[%s1 + $0x2cc] sm:$0xf]
      %v482 = vld [vmem:[%s1 + $0x2d0] sm:$0xf]
      %v483 = vld [vmem:[%s1 + $0x2d4] sm:$0xf]
      %v484 = vld [vmem:[%s1 + $0x2d8] sm:$0xf]
      %v485 = vld [vmem:[%s1 + $0x2dc] sm:$0xf]
      %v486 = vld [vmem:[%s1 + $0x2e0] sm:$0xf]
      %v487 = vld [vmem:[%s1 + $0x2e4] sm:$0xf]
      %v488 = vld [vmem:[%s1 + $0x2e8] sm:$0xf]
      %v489 = vld [vmem:[%s1 + $0x2ec] sm:$0xf]
      %v490 = vld [vmem:[%s1 + $0x2f0] sm:$0xf]
      %v491 = vld [vmem:[%s1 + $0x2f4] sm:$0xf]
      %v492 = vld [vmem:[%s1 + $0x2f8] sm:$0xf]
      %v493 = vld [vmem:[%s1 + $0x2fc] sm:$0xf]
      %v494 = vld [vmem:[%s1 + $0x300] sm:$0xf]
      %v495 = vld [vmem:[%s1 + $0x304] sm:$0xf]
      %v496 = vld [vmem:[%s1 + $0x308] sm:$0xf]
      %v497 = vld [vmem:[%s1 + $0x30c] sm:$0xf]
      %v498 = vld [vmem:[%s1 + $0x310] sm:$0xf]
      %v499 = vld [vmem:[%s1 + $0x314] sm:$0xf]
      %v500 = vld [vmem:[%s1 + $0x318] sm:$0xf]
      %v501 = vld [vmem:[%s1 + $0x31c] sm:$0xf]
      %v502 = vld [vmem:[%s1 + $0x320] sm:$0xf]
      %v503 = vld [vmem:[%s1 + $0x324] sm:$0xf]
      %v504 = vld [vmem:[%s1 + $0x328] sm:$0xf]
      %v505 = vld [vmem:[%s1 + $0x32c] sm:$0xf]
      %v506 = vld [vmem:[%s1 + $0x330] sm:$0xf]
      %v507 = vld [vmem:[%s1 + $0x334] sm:$0xf]
      %v508 = vld [vmem:[%s1 + $0x338] sm:$0xf]
      %v509 = vld [vmem:[%s1 + $0x33c] sm:$0xf]
      %v510 = vld [vmem:[%s1 + $0x340] sm:$0xf]
      %v511 = vld [vmem:[%s1 + $0x344] sm:$0xf]
      %v512 = vld [vmem:[%s1 + $0x348] sm:$0xf]
      %v513 = vld [vmem:[%s1 + $0x34c] sm:$0xf]
      %v514 = vld [vmem:[%s1 + $0x350] sm:$0xf]
      %v515 = vld [vmem:[%s1 + $0x354] sm:$0xf]
      %v516 = vld [vmem:[%s1 + $0x358] sm:$0xf]
      %v517 = vld [vmem:[%s1 + $0x35c] sm:$0xf]
      %v518 = vld [vmem:[%s239] sm:$0xf]
      %v519 = vld [vmem:[%s239 + $0x4] sm:$0xf]
      %v520 = vld [vmem:[%s239 + $0x8] sm:$0xf]
      %v521 = vld [vmem:[%s239 + $0xc] sm:$0xf]
      %v522 = vld [vmem:[%s239 + $0x10] sm:$0xf]
      %v523 = vld [vmem:[%s239 + $0x14] sm:$0xf]
      %v524 = vld [vmem:[%s239 + $0x18] sm:$0xf]
      %v525 = vld [vmem:[%s239 + $0x1c] sm:$0xf]
      %v526 = vunpack.c.l.bf16 %v518
      %v527 = vunpack.c.l.bf16 %v519
      %v528 = vunpack.c.l.bf16 %v520
      %v529 = vunpack.c.l.bf16 %v521
      %v530 = vunpack.c.l.bf16 %v522
      %v531 = vunpack.c.l.bf16 %v523
      %v532 = vunpack.c.l.bf16 %v524
      %v533 = vunpack.c.l.bf16 %v525
      %v590 = vunpack.c.l.b16 %v246
      %v591 = vunpack.c.h.b16 %v246
      %v592 = vunpack.c.l.b16 %v247
      %v593 = vunpack.c.h.b16 %v247
      %v594 = vunpack.c.l.b16 %v248
      %v595 = vunpack.c.h.b16 %v248
      %v596 = vunpack.c.l.b16 %v249
      %v597 = vunpack.c.h.b16 %v249
      %v598 = vunpack.c.l.b16 %v250
      %v599 = vunpack.c.h.b16 %v250
      %v600 = vunpack.c.l.b16 %v251
      %v601 = vunpack.c.h.b16 %v251
      %v602 = vunpack.c.l.b16 %v252
      %v603 = vunpack.c.h.b16 %v252
      %v604 = vunpack.c.l.b16 %v253
      %v605 = vunpack.c.h.b16 %v253
      %v606 = vunpack.c.l.b16 %v254
      %v607 = vunpack.c.h.b16 %v254
      %v608 = vunpack.c.l.b16 %v255
      %v609 = vunpack.c.h.b16 %v255
      %v610 = vunpack.c.l.b16 %v256
      %v611 = vunpack.c.h.b16 %v256
      %v612 = vunpack.c.l.b16 %v257
      %v613 = vunpack.c.h.b16 %v257
      %v614 = vunpack.c.l.b16 %v258
      %v615 = vunpack.c.h.b16 %v258
      %v616 = vunpack.c.l.b16 %v259
      %v617 = vunpack.c.h.b16 %v259
      %v618 = vunpack.c.l.b16 %v260
      %v619 = vunpack.c.h.b16 %v260
      %v620 = vunpack.c.l.b16 %v261
      %v621 = vunpack.c.h.b16 %v261
      %v622 = vunpack.c.l.b16 %v262
      %v623 = vunpack.c.h.b16 %v262
      %v624 = vunpack.c.l.b16 %v263
      %v625 = vunpack.c.h.b16 %v263
      %v626 = vunpack.c.l.b16 %v264
      %v627 = vunpack.c.h.b16 %v264
      %v628 = vunpack.c.l.b16 %v265
      %v629 = vunpack.c.h.b16 %v265
      %v630 = vunpack.c.l.b16 %v266
      %v631 = vunpack.c.h.b16 %v266
      %v632 = vunpack.c.l.b16 %v267
      %v633 = vunpack.c.h.b16 %v267
      %v634 = vunpack.c.l.b16 %v268
      %v635 = vunpack.c.h.b16 %v268
      %v636 = vunpack.c.l.b16 %v269
      %v637 = vunpack.c.h.b16 %v269
      %v638 = vunpack.c.l.b16 %v270
      %v639 = vunpack.c.h.b16 %v270
      %v640 = vunpack.c.l.b16 %v271
      %v641 = vunpack.c.h.b16 %v271
      %v642 = vunpack.c.l.b16 %v272
      %v643 = vunpack.c.h.b16 %v272
      %v644 = vunpack.c.l.b16 %v273
      %v645 = vunpack.c.h.b16 %v273
      %v646 = vunpack.c.l.b16 %v274
      %v647 = vunpack.c.h.b16 %v274
      %v648 = vunpack.c.l.b16 %v275
      %v649 = vunpack.c.h.b16 %v275
      %v650 = vunpack.c.l.b16 %v276
      %v651 = vunpack.c.h.b16 %v276
      %v652 = vunpack.c.l.b16 %v277
      %v653 = vunpack.c.h.b16 %v277
      %v654 = vunpack.c.l.b16 %v278
      %v655 = vunpack.c.h.b16 %v278
      %v656 = vunpack.c.l.b16 %v279
      %v657 = vunpack.c.h.b16 %v279
      %v658 = vunpack.c.l.b16 %v280
      %v659 = vunpack.c.h.b16 %v280
      %v660 = vunpack.c.l.b16 %v281
      %v661 = vunpack.c.h.b16 %v281
      %v662 = vunpack.c.l.b16 %v282
      %v663 = vunpack.c.h.b16 %v282
      %v664 = vunpack.c.l.b16 %v283
      %v665 = vunpack.c.h.b16 %v283
      %v666 = vunpack.c.l.b16 %v284
      %v667 = vunpack.c.h.b16 %v284
      %v668 = vunpack.c.l.b16 %v285
      %v669 = vunpack.c.h.b16 %v285
      %v670 = vunpack.c.l.b16 %v286
      %v671 = vunpack.c.h.b16 %v286
      %v672 = vunpack.c.l.b16 %v287
      %v673 = vunpack.c.h.b16 %v287
      %v674 = vunpack.c.l.b16 %v288
      %v675 = vunpack.c.h.b16 %v288
      %v676 = vunpack.c.l.b16 %v289
      %v677 = vunpack.c.h.b16 %v289
      %v678 = vunpack.c.l.b16 %v290
      %v679 = vunpack.c.h.b16 %v290
      %v680 = vunpack.c.l.b16 %v291
      %v681 = vunpack.c.h.b16 %v291
      %v682 = vunpack.c.l.b16 %v292
      %v683 = vunpack.c.h.b16 %v292
      %v684 = vunpack.c.l.b16 %v293
      %v685 = vunpack.c.h.b16 %v293
      %v686 = vunpack.c.l.b16 %v294
      %v687 = vunpack.c.h.b16 %v294
      %v688 = vunpack.c.l.b16 %v295
      %v689 = vunpack.c.h.b16 %v295
      %v690 = vunpack.c.l.b16 %v296
      %v691 = vunpack.c.h.b16 %v296
      %v692 = vunpack.c.l.b16 %v297
      %v693 = vunpack.c.h.b16 %v297
      %v694 = vunpack.c.l.b16 %v298
      %v695 = vunpack.c.h.b16 %v298
      %v696 = vunpack.c.l.b16 %v299
      %v697 = vunpack.c.h.b16 %v299
      %v698 = vunpack.c.l.b16 %v300
      %v699 = vunpack.c.h.b16 %v300
      %v700 = vunpack.c.l.b16 %v301
      %v701 = vunpack.c.h.b16 %v301
      %v702 = vpack.c.b16 %v604, %v590
      %v703 = vpack.c.b16 %v605, %v591
      %v704 = vpack.c.b16 %v606, %v592
      %v705 = vpack.c.b16 %v607, %v593
      %v706 = vpack.c.b16 %v608, %v594
      %v707 = vpack.c.b16 %v609, %v595
      %v708 = vpack.c.b16 %v610, %v596
      %v709 = vpack.c.b16 %v611, %v597
      %v710 = vpack.c.b16 %v612, %v598
      %v711 = vpack.c.b16 %v613, %v599
      %v712 = vpack.c.b16 %v614, %v600
      %v713 = vpack.c.b16 %v615, %v601
      %v714 = vpack.c.b16 %v616, %v602
      %v715 = vpack.c.b16 %v617, %v603
      %v716 = vpack.c.b16 %v632, %v618
      %v717 = vpack.c.b16 %v633, %v619
      %v718 = vpack.c.b16 %v634, %v620
      %v719 = vpack.c.b16 %v635, %v621
      %v720 = vpack.c.b16 %v636, %v622
      %v721 = vpack.c.b16 %v637, %v623
      %v722 = vpack.c.b16 %v638, %v624
      %v723 = vpack.c.b16 %v639, %v625
      %v724 = vpack.c.b16 %v640, %v626
      %v725 = vpack.c.b16 %v641, %v627
      %v726 = vpack.c.b16 %v642, %v628
      %v727 = vpack.c.b16 %v643, %v629
      %v728 = vpack.c.b16 %v644, %v630
      %v729 = vpack.c.b16 %v645, %v631
      %v730 = vpack.c.b16 %v660, %v646
      %v731 = vpack.c.b16 %v661, %v647
      %v732 = vpack.c.b16 %v662, %v648
      %v733 = vpack.c.b16 %v663, %v649
      %v734 = vpack.c.b16 %v664, %v650
      %v735 = vpack.c.b16 %v665, %v651
      %v736 = vpack.c.b16 %v666, %v652
      %v737 = vpack.c.b16 %v667, %v653
      %v738 = vpack.c.b16 %v668, %v654
      %v739 = vpack.c.b16 %v669, %v655
      %v740 = vpack.c.b16 %v670, %v656
      %v741 = vpack.c.b16 %v671, %v657
      %v742 = vpack.c.b16 %v672, %v658
      %v743 = vpack.c.b16 %v673, %v659
      %v744 = vpack.c.b16 %v688, %v674
      %v745 = vpack.c.b16 %v689, %v675
      %v746 = vpack.c.b16 %v690, %v676
      %v747 = vpack.c.b16 %v691, %v677
      %v748 = vpack.c.b16 %v692, %v678
      %v749 = vpack.c.b16 %v693, %v679
      %v750 = vpack.c.b16 %v694, %v680
      %v751 = vpack.c.b16 %v695, %v681
      %v752 = vpack.c.b16 %v696, %v682
      %v753 = vpack.c.b16 %v697, %v683
      %v754 = vpack.c.b16 %v698, %v684
      %v755 = vpack.c.b16 %v699, %v685
      %v756 = vpack.c.b16 %v700, %v686
      %v757 = vpack.c.b16 %v701, %v687
      %v1026 = vunpack.c.l.b16 %v302
      %v1027 = vunpack.c.l.b16 %v303
      %v1028 = vunpack.c.l.b16 %v304
      %v1029 = vunpack.c.l.b16 %v305
      %v1030 = vunpack.c.l.b16 %v306
      %v1031 = vunpack.c.l.b16 %v307
      %v1032 = vunpack.c.l.b16 %v308
      %v1033 = vunpack.c.l.b16 %v309
      %v1034 = vunpack.c.l.b16 %v310
      %v1035 = vunpack.c.l.b16 %v311
      %v1036 = vunpack.c.l.b16 %v312
      %v1037 = vunpack.c.l.b16 %v313
      %v1038 = vunpack.c.l.b16 %v314
      %v1039 = vunpack.c.l.b16 %v315
      %v1040 = vunpack.c.l.b16 %v316
      %v1041 = vunpack.c.l.b16 %v317
      %v1042 = vunpack.c.l.b16 %v318
      %v1043 = vunpack.c.l.b16 %v319
      %v1044 = vunpack.c.l.b16 %v320
      %v1045 = vunpack.c.l.b16 %v321
      %v1046 = vunpack.c.l.b16 %v322
      %v1047 = vunpack.c.l.b16 %v323
      %v1048 = vunpack.c.l.b16 %v324
      %v1049 = vunpack.c.l.b16 %v325
      %v1050 = vunpack.c.l.b16 %v326
      %v1051 = vunpack.c.l.b16 %v327
      %v1052 = vunpack.c.l.b16 %v328
      %v1053 = vunpack.c.l.b16 %v329
      %v1054 = vunpack.c.l.b16 %v330
      %v1055 = vunpack.c.l.b16 %v331
      %v1056 = vunpack.c.l.b16 %v332
      %v1057 = vunpack.c.l.b16 %v333
      %v1058 = vunpack.c.l.b16 %v334
      %v1059 = vunpack.c.l.b16 %v335
      %v1060 = vunpack.c.l.b16 %v336
      %v1061 = vunpack.c.l.b16 %v337
      %v1062 = vunpack.c.l.b16 %v338
      %v1063 = vunpack.c.l.b16 %v339
      %v1064 = vunpack.c.l.b16 %v340
      %v1065 = vunpack.c.l.b16 %v341
      %v1066 = vunpack.c.l.b16 %v342
      %v1067 = vunpack.c.l.b16 %v343
      %v1068 = vunpack.c.l.b16 %v344
      %v1069 = vunpack.c.l.b16 %v345
      %v1070 = vunpack.c.l.b16 %v346
      %v1071 = vunpack.c.l.b16 %v347
      %v1072 = vunpack.c.l.b16 %v348
      %v1073 = vunpack.c.l.b16 %v349
      %v1074 = vunpack.c.l.b16 %v350
      %v1075 = vunpack.c.l.b16 %v351
      %v1076 = vunpack.c.l.b16 %v352
      %v1077 = vunpack.c.l.b16 %v353
      %v1078 = vunpack.c.l.b16 %v354
      %v1079 = vunpack.c.l.b16 %v355
      %v1080 = vunpack.c.l.b16 %v356
      %v1081 = vunpack.c.l.b16 %v357
      %v1082 = vunpack.c.l.b16 %v358
      %v1083 = vunpack.c.l.b16 %v359
      %v1084 = vunpack.c.l.b16 %v360
      %v1085 = vunpack.c.l.b16 %v361
      %v1086 = vunpack.c.l.b16 %v362
      %v1087 = vunpack.c.l.b16 %v363
      %v1088 = vunpack.c.l.b16 %v364
      %v1089 = vunpack.c.l.b16 %v365
      %v1090 = vunpack.c.l.b16 %v366
      %v1091 = vunpack.c.l.b16 %v367
      %v1092 = vunpack.c.l.b16 %v368
      %v1093 = vunpack.c.l.b16 %v369
      %v1094 = vunpack.c.l.b16 %v370
      %v1095 = vunpack.c.l.b16 %v371
      %v1096 = vunpack.c.l.b16 %v372
      %v1097 = vunpack.c.l.b16 %v373
      %v1098 = vunpack.c.l.b16 %v374
      %v1099 = vunpack.c.l.b16 %v375
      %v1100 = vunpack.c.l.b16 %v376
      %v1101 = vunpack.c.l.b16 %v377
      %v1102 = vunpack.c.l.b16 %v378
      %v1103 = vunpack.c.l.b16 %v379
      %v1104 = vunpack.c.l.b16 %v380
      %v1105 = vunpack.c.l.b16 %v381
      %v1106 = vunpack.c.l.b16 %v382
      %v1107 = vunpack.c.l.b16 %v383
      %v1108 = vunpack.c.l.b16 %v384
      %v1109 = vunpack.c.l.b16 %v385
      %v1110 = vunpack.c.l.b16 %v386
      %v1111 = vunpack.c.l.b16 %v387
      %v1112 = vunpack.c.l.b16 %v388
      %v1113 = vunpack.c.l.b16 %v389
      %v1114 = vunpack.c.l.b16 %v390
      %v1115 = vunpack.c.l.b16 %v391
      %v1116 = vunpack.c.l.b16 %v392
      %v1117 = vunpack.c.l.b16 %v393
      %v1118 = vunpack.c.l.b16 %v394
      %v1119 = vunpack.c.l.b16 %v395
      %v1120 = vunpack.c.l.b16 %v396
      %v1121 = vunpack.c.l.b16 %v397
      %v1122 = vunpack.c.l.b16 %v398
      %v1123 = vunpack.c.l.b16 %v399
      %v1124 = vunpack.c.l.b16 %v400
      %v1125 = vunpack.c.l.b16 %v401
      %v1126 = vunpack.c.l.b16 %v402
      %v1127 = vunpack.c.l.b16 %v403
      %v1128 = vunpack.c.l.b16 %v404
      %v1129 = vunpack.c.l.b16 %v405
      %v1130 = vunpack.c.l.b16 %v406
      %v1131 = vunpack.c.l.b16 %v407
      %v1132 = vunpack.c.l.b16 %v408
      %v1133 = vunpack.c.l.b16 %v409
      %v1134 = vunpack.c.l.b16 %v410
      %v1135 = vunpack.c.l.b16 %v411
      %v1136 = vunpack.c.l.b16 %v412
      %v1137 = vunpack.c.l.b16 %v413
      %v1138 = vunpack.c.l.b16 %v414
      %v1139 = vunpack.c.l.b16 %v415
      %v1140 = vunpack.c.l.b16 %v416
      %v1141 = vunpack.c.l.b16 %v417
      %v1142 = vunpack.c.l.b16 %v418
      %v1143 = vunpack.c.l.b16 %v419
      %v1144 = vunpack.c.l.b16 %v420
      %v1145 = vunpack.c.l.b16 %v421
      %v1146 = vunpack.c.l.b16 %v422
      %v1147 = vunpack.c.l.b16 %v423
      %v1148 = vunpack.c.l.b16 %v424
      %v1149 = vunpack.c.l.b16 %v425
      %v1150 = vunpack.c.l.b16 %v426
      %v1151 = vunpack.c.l.b16 %v427
      %v1152 = vunpack.c.l.b16 %v428
      %v1153 = vunpack.c.l.b16 %v429
      %v1154 = vunpack.c.l.b16 %v430
      %v1155 = vunpack.c.l.b16 %v431
      %v1156 = vunpack.c.l.b16 %v432
      %v1157 = vunpack.c.l.b16 %v433
      %v1158 = vunpack.c.l.b16 %v434
      %v1159 = vunpack.c.l.b16 %v435
      %v1160 = vunpack.c.l.b16 %v436
      %v1161 = vunpack.c.l.b16 %v437
      %v1162 = vunpack.c.l.b16 %v438
      %v1163 = vunpack.c.l.b16 %v439
      %v1164 = vunpack.c.l.b16 %v440
      %v1165 = vunpack.c.l.b16 %v441
      %v1166 = vunpack.c.l.b16 %v442
      %v1167 = vunpack.c.l.b16 %v443
      %v1168 = vunpack.c.l.b16 %v444
      %v1169 = vunpack.c.l.b16 %v445
      %v1170 = vunpack.c.l.b16 %v446
      %v1171 = vunpack.c.l.b16 %v447
      %v1172 = vunpack.c.l.b16 %v448
      %v1173 = vunpack.c.l.b16 %v449
      %v1174 = vunpack.c.l.b16 %v450
      %v1175 = vunpack.c.l.b16 %v451
      %v1176 = vunpack.c.l.b16 %v452
      %v1177 = vunpack.c.l.b16 %v453
      %v1178 = vunpack.c.l.b16 %v454
      %v1179 = vunpack.c.l.b16 %v455
      %v1180 = vunpack.c.l.b16 %v456
      %v1181 = vunpack.c.l.b16 %v457
      %v1182 = vunpack.c.l.b16 %v458
      %v1183 = vunpack.c.l.b16 %v459
      %v1184 = vunpack.c.l.b16 %v460
      %v1185 = vunpack.c.l.b16 %v461
      %v1186 = vunpack.c.l.b16 %v462
      %v1187 = vunpack.c.l.b16 %v463
      %v1188 = vunpack.c.l.b16 %v464
      %v1189 = vunpack.c.l.b16 %v465
      %v1190 = vunpack.c.l.b16 %v466
      %v1191 = vunpack.c.l.b16 %v467
      %v1192 = vunpack.c.l.b16 %v468
      %v1193 = vunpack.c.l.b16 %v469
      %v1194 = vunpack.c.l.b16 %v470
      %v1195 = vunpack.c.l.b16 %v471
      %v1196 = vunpack.c.l.b16 %v472
      %v1197 = vunpack.c.l.b16 %v473
      %v1198 = vunpack.c.l.b16 %v474
      %v1199 = vunpack.c.l.b16 %v475
      %v1200 = vunpack.c.l.b16 %v476
      %v1201 = vunpack.c.l.b16 %v477
      %v1202 = vunpack.c.l.b16 %v478
      %v1203 = vunpack.c.l.b16 %v479
      %v1204 = vunpack.c.l.b16 %v480
      %v1205 = vunpack.c.l.b16 %v481
      %v1206 = vunpack.c.l.b16 %v482
      %v1207 = vunpack.c.l.b16 %v483
      %v1208 = vunpack.c.l.b16 %v484
      %v1209 = vunpack.c.l.b16 %v485
      %v1210 = vunpack.c.l.b16 %v486
      %v1211 = vunpack.c.l.b16 %v487
      %v1212 = vunpack.c.l.b16 %v488
      %v1213 = vunpack.c.l.b16 %v489
      %v1214 = vunpack.c.l.b16 %v490
      %v1215 = vunpack.c.l.b16 %v491
      %v1216 = vunpack.c.l.b16 %v492
      %v1217 = vunpack.c.l.b16 %v493
      %v1218 = vunpack.c.l.b16 %v494
      %v1219 = vunpack.c.l.b16 %v495
      %v1220 = vunpack.c.l.b16 %v496
      %v1221 = vunpack.c.l.b16 %v497
      %v1222 = vunpack.c.l.b16 %v498
      %v1223 = vunpack.c.l.b16 %v499
      %v1224 = vunpack.c.l.b16 %v500
      %v1225 = vunpack.c.l.b16 %v501
      %v1226 = vunpack.c.l.b16 %v502
      %v1227 = vunpack.c.l.b16 %v503
      %v1228 = vunpack.c.l.b16 %v504
      %v1229 = vunpack.c.l.b16 %v505
      %v1230 = vunpack.c.l.b16 %v506
      %v1231 = vunpack.c.l.b16 %v507
      %v1232 = vunpack.c.l.b16 %v508
      %v1233 = vunpack.c.l.b16 %v509
      %v1234 = vunpack.c.l.b16 %v510
      %v1235 = vunpack.c.l.b16 %v511
      %v1236 = vunpack.c.l.b16 %v512
      %v1237 = vunpack.c.l.b16 %v513
      %v1238 = vunpack.c.l.b16 %v514
      %v1239 = vunpack.c.l.b16 %v515
      %v1240 = vunpack.c.l.b16 %v516
      %v1241 = vunpack.c.l.b16 %v517
      %v1242 = vpack.c.b16 %v1027, %v1026
      %v1243 = vpack.c.b16 %v1029, %v1028
      %v1244 = vpack.c.b16 %v1031, %v1030
      %v1245 = vpack.c.b16 %v1033, %v1032
      %v1246 = vpack.c.b16 %v1035, %v1034
      %v1247 = vpack.c.b16 %v1037, %v1036
      %v1248 = vpack.c.b16 %v1039, %v1038
      %v1249 = vpack.c.b16 %v1041, %v1040
      %v1250 = vpack.c.b16 %v1043, %v1042
      %v1251 = vpack.c.b16 %v1045, %v1044
      %v1252 = vpack.c.b16 %v1047, %v1046
      %v1253 = vpack.c.b16 %v1049, %v1048
      %v1254 = vpack.c.b16 %v1051, %v1050
      %v1255 = vpack.c.b16 %v1053, %v1052
      %v1256 = vpack.c.b16 %v1055, %v1054
      %v1257 = vpack.c.b16 %v1057, %v1056
      %v1258 = vpack.c.b16 %v1059, %v1058
      %v1259 = vpack.c.b16 %v1061, %v1060
      %v1260 = vpack.c.b16 %v1063, %v1062
      %v1261 = vpack.c.b16 %v1065, %v1064
      %v1262 = vpack.c.b16 %v1067, %v1066
      %v1263 = vpack.c.b16 %v1069, %v1068
      %v1264 = vpack.c.b16 %v1071, %v1070
      %v1265 = vpack.c.b16 %v1073, %v1072
      %v1266 = vpack.c.b16 %v1075, %v1074
      %v1267 = vpack.c.b16 %v1077, %v1076
      %v1268 = vpack.c.b16 %v1079, %v1078
      %v1269 = vpack.c.b16 %v1081, %v1080
      %v1270 = vpack.c.b16 %v1083, %v1082
      %v1271 = vpack.c.b16 %v1085, %v1084
      %v1272 = vpack.c.b16 %v1087, %v1086
      %v1273 = vpack.c.b16 %v1089, %v1088
      %v1274 = vpack.c.b16 %v1091, %v1090
      %v1275 = vpack.c.b16 %v1093, %v1092
      %v1276 = vpack.c.b16 %v1095, %v1094
      %v1277 = vpack.c.b16 %v1097, %v1096
      %v1278 = vpack.c.b16 %v1099, %v1098
      %v1279 = vpack.c.b16 %v1101, %v1100
      %v1280 = vpack.c.b16 %v1103, %v1102
      %v1281 = vpack.c.b16 %v1105, %v1104
      %v1282 = vpack.c.b16 %v1107, %v1106
      %v1283 = vpack.c.b16 %v1109, %v1108
      %v1284 = vpack.c.b16 %v1111, %v1110
      %v1285 = vpack.c.b16 %v1113, %v1112
      %v1286 = vpack.c.b16 %v1115, %v1114
      %v1287 = vpack.c.b16 %v1117, %v1116
      %v1288 = vpack.c.b16 %v1119, %v1118
      %v1289 = vpack.c.b16 %v1121, %v1120
      %v1290 = vpack.c.b16 %v1123, %v1122
      %v1291 = vpack.c.b16 %v1125, %v1124
      %v1292 = vpack.c.b16 %v1127, %v1126
      %v1293 = vpack.c.b16 %v1129, %v1128
      %v1294 = vpack.c.b16 %v1131, %v1130
      %v1295 = vpack.c.b16 %v1133, %v1132
      %v1296 = vpack.c.b16 %v1135, %v1134
      %v1297 = vpack.c.b16 %v1137, %v1136
      %v1298 = vpack.c.b16 %v1139, %v1138
      %v1299 = vpack.c.b16 %v1141, %v1140
      %v1300 = vpack.c.b16 %v1143, %v1142
      %v1301 = vpack.c.b16 %v1145, %v1144
      %v1302 = vpack.c.b16 %v1147, %v1146
      %v1303 = vpack.c.b16 %v1149, %v1148
      %v1304 = vpack.c.b16 %v1151, %v1150
      %v1305 = vpack.c.b16 %v1153, %v1152
      %v1306 = vpack.c.b16 %v1155, %v1154
      %v1307 = vpack.c.b16 %v1157, %v1156
      %v1308 = vpack.c.b16 %v1159, %v1158
      %v1309 = vpack.c.b16 %v1161, %v1160
      %v1310 = vpack.c.b16 %v1163, %v1162
      %v1311 = vpack.c.b16 %v1165, %v1164
      %v1312 = vpack.c.b16 %v1167, %v1166
      %v1313 = vpack.c.b16 %v1169, %v1168
      %v1314 = vpack.c.b16 %v1171, %v1170
      %v1315 = vpack.c.b16 %v1173, %v1172
      %v1316 = vpack.c.b16 %v1175, %v1174
      %v1317 = vpack.c.b16 %v1177, %v1176
      %v1318 = vpack.c.b16 %v1179, %v1178
      %v1319 = vpack.c.b16 %v1181, %v1180
      %v1320 = vpack.c.b16 %v1183, %v1182
      %v1321 = vpack.c.b16 %v1185, %v1184
      %v1322 = vpack.c.b16 %v1187, %v1186
      %v1323 = vpack.c.b16 %v1189, %v1188
      %v1324 = vpack.c.b16 %v1191, %v1190
      %v1325 = vpack.c.b16 %v1193, %v1192
      %v1326 = vpack.c.b16 %v1195, %v1194
      %v1327 = vpack.c.b16 %v1197, %v1196
      %v1328 = vpack.c.b16 %v1199, %v1198
      %v1329 = vpack.c.b16 %v1201, %v1200
      %v1330 = vpack.c.b16 %v1203, %v1202
      %v1331 = vpack.c.b16 %v1205, %v1204
      %v1332 = vpack.c.b16 %v1207, %v1206
      %v1333 = vpack.c.b16 %v1209, %v1208
      %v1334 = vpack.c.b16 %v1211, %v1210
      %v1335 = vpack.c.b16 %v1213, %v1212
      %v1336 = vpack.c.b16 %v1215, %v1214
      %v1337 = vpack.c.b16 %v1217, %v1216
      %v1338 = vpack.c.b16 %v1219, %v1218
      %v1339 = vpack.c.b16 %v1221, %v1220
      %v1340 = vpack.c.b16 %v1223, %v1222
      %v1341 = vpack.c.b16 %v1225, %v1224
      %v1342 = vpack.c.b16 %v1227, %v1226
      %v1343 = vpack.c.b16 %v1229, %v1228
      %v1344 = vpack.c.b16 %v1231, %v1230
      %v1345 = vpack.c.b16 %v1233, %v1232
      %v1346 = vpack.c.b16 %v1235, %v1234
      %v1347 = vpack.c.b16 %v1237, %v1236
      %v1348 = vpack.c.b16 %v1239, %v1238
      %v1349 = vpack.c.b16 %v1241, %v1240
      %vm1458 = vcmask 523264
      %v1460 = vsel %vm1458, %v715, 0
      %v1463 = vsel %vm1458, %v729, 0
      %v1466 = vsel %vm1458, %v743, 0
      %v1469 = vsel %vm1458, %v757, 0
      %1471 = vmatprep.subr.bf16.mxu0 0
      %1472 = vmatpush1.bf16.msra.mxu0 %v1242
      %1473 = vmatprep.subr.bf16.mxu0 0
      %1474 = vmatpush1.bf16.msra.mxu0 %v1243
      %1475 = vmatprep.subr.bf16.mxu0 0
      %1476 = vmatpush1.bf16.msra.mxu0 %v1244
      %1477 = vmatprep.subr.bf16.mxu0 0
      %1478 = vmatpush1.bf16.msra.mxu0 %v1245
      %1479 = vmatprep.subr.bf16.mxu0 0
      %1480 = vmatpush1.bf16.msra.mxu0 %v1246
      %1481 = vmatprep.subr.bf16.mxu0 0
      %1482 = vmatpush1.bf16.msra.mxu0 %v1247
      %1483 = vmatprep.subr.bf16.mxu0 0
      %1484 = vmatpush1.bf16.msra.mxu0 %v1248
      %1485 = vmatprep.subr.bf16.mxu0 0
      %1486 = vmatpush1.bf16.msra.mxu0 %v1249
      %1487 = vmatprep.subr.bf16.mxu0 0
      %1488 = vmatpush1.bf16.msra.mxu0 %v1250
      %1489 = vmatprep.subr.bf16.mxu0 0
      %1490 = vmatpush1.bf16.msra.mxu0 %v1251
      %1491 = vmatprep.subr.bf16.mxu0 0
      %1492 = vmatpush1.bf16.msra.mxu0 %v1252
      %1493 = vmatprep.subr.bf16.mxu0 0
      %1494 = vmatpush1.bf16.msra.mxu0 %v1253
      %1495 = vmatprep.subr.bf16.mxu0 0
      %1496 = vmatpush1.bf16.msra.mxu0 %v1254
      %1497 = vmatprep.subr.bf16.mxu0 0
      %1498 = vmatpush1.bf16.msra.mxu0 %v1255
      %1499 = vmatprep.subr.bf16.mxu0 0
      %1500 = vmatpush1.bf16.msra.mxu0 %v1256
      %1501 = vmatprep.subr.bf16.mxu0 0
      %1502 = vmatpush1.bf16.msra.mxu0 %v1257
      %1503 = vmatprep.mubr.bf16.mxu0 %v703
      %1504 = vmatmul.mubr.bf16.gmra.mrb[0].mxu0 %v702
      %v1505 = vpop.f32.mrb[0].mxu0
      %v1506 = vadd.f32 %v526, %v1505
      %v1507 = vpop.f32.mrb[0].mxu0
      %v1508 = vpop.f32.mrb[0].mxu0
      %v1509 = vadd.f32 %v527, %v1508
      %v1510 = vpop.f32.mrb[0].mxu0
      %1511 = vmatprep.mubr.bf16.mxu0 %v717
      %1512 = vmatmul.mubr.bf16.gmra.mrb[0].mxu0 %v716
      %v1513 = vpop.f32.mrb[0].mxu0
      %v1514 = vadd.f32 %v528, %v1513
      %v1515 = vpop.f32.mrb[0].mxu0
      %v1516 = vpop.f32.mrb[0].mxu0
      %v1517 = vadd.f32 %v529, %v1516
      %v1518 = vpop.f32.mrb[0].mxu0
      %1519 = vmatprep.mubr.bf16.mxu0 %v731
      %1520 = vmatmul.mubr.bf16.gmra.mrb[0].mxu0 %v730
      %v1521 = vpop.f32.mrb[0].mxu0
      %v1522 = vadd.f32 %v530, %v1521
      %v1523 = vpop.f32.mrb[0].mxu0
      %v1524 = vpop.f32.mrb[0].mxu0
      %v1525 = vadd.f32 %v531, %v1524
      %v1526 = vpop.f32.mrb[0].mxu0
      %1527 = vmatprep.mubr.bf16.mxu0 %v745
      %1528 = vmatmul.mubr.bf16.gmra.mrb[0].mxu0 %v744
      %v1529 = vpop.f32.mrb[0].mxu0
      %v1530 = vadd.f32 %v532, %v1529
      %v1531 = vpop.f32.mrb[0].mxu0
      %v1532 = vpop.f32.mrb[0].mxu0
      %v1533 = vadd.f32 %v533, %v1532
      %v1534 = vpop.f32.mrb[0].mxu0
      %1535 = vdwg.mxu0
      %1536 = vmatprep.subr.bf16.mxu0 0
      %1537 = vmatpush1.bf16.msra.mxu0 %v1258
      %1538 = vmatprep.subr.bf16.mxu0 0
      %1539 = vmatpush1.bf16.msra.mxu0 %v1259
      %1540 = vmatprep.subr.bf16.mxu0 0
      %1541 = vmatpush1.bf16.msra.mxu0 %v1260
      %1542 = vmatprep.subr.bf16.mxu0 0
      %1543 = vmatpush1.bf16.msra.mxu0 %v1261
      %1544 = vmatprep.subr.bf16.mxu0 0
      %1545 = vmatpush1.bf16.msra.mxu0 %v1262
      %1546 = vmatprep.subr.bf16.mxu0 0
      %1547 = vmatpush1.bf16.msra.mxu0 %v1263
      %1548 = vmatprep.subr.bf16.mxu0 0
      %1549 = vmatpush1.bf16.msra.mxu0 %v1264
      %1550 = vmatprep.subr.bf16.mxu0 0
      %1551 = vmatpush1.bf16.msra.mxu0 %v1265
      %1552 = vmatprep.subr.bf16.mxu0 0
      %1553 = vmatpush1.bf16.msra.mxu0 %v1266
      %1554 = vmatprep.subr.bf16.mxu0 0
      %1555 = vmatpush1.bf16.msra.mxu0 %v1267
      %1556 = vmatprep.subr.bf16.mxu0 0
      %1557 = vmatpush1.bf16.msra.mxu0 %v1268
      %1558 = vmatprep.subr.bf16.mxu0 0
      %1559 = vmatpush1.bf16.msra.mxu0 %v1269
      %1560 = vmatprep.subr.bf16.mxu0 0
      %1561 = vmatpush1.bf16.msra.mxu0 %v1270
      %1562 = vmatprep.subr.bf16.mxu0 0
      %1563 = vmatpush1.bf16.msra.mxu0 %v1271
      %1564 = vmatprep.subr.bf16.mxu0 0
      %1565 = vmatpush1.bf16.msra.mxu0 %v1272
      %1566 = vmatprep.subr.bf16.mxu0 0
      %1567 = vmatpush1.bf16.msra.mxu0 %v1273
      %1568 = vmatprep.mubr.bf16.mxu0 %v705
      %1569 = vmatmul.mubr.bf16.gmra.mrb[0].mxu0 %v704
      %v1570 = vpop.f32.mrb[0].mxu0
      %v1571 = vadd.f32 %v1506, %v1570
      %v1572 = vpop.f32.mrb[0].mxu0
      %v1573 = vpop.f32.mrb[0].mxu0
      %v1574 = vadd.f32 %v1509, %v1573
      %v1575 = vpop.f32.mrb[0].mxu0
      %1576 = vmatprep.mubr.bf16.mxu0 %v719
      %1577 = vmatmul.mubr.bf16.gmra.mrb[0].mxu0 %v718
      %v1578 = vpop.f32.mrb[0].mxu0
      %v1579 = vadd.f32 %v1514, %v1578
      %v1580 = vpop.f32.mrb[0].mxu0
      %v1581 = vpop.f32.mrb[0].mxu0
      %v1582 = vadd.f32 %v1517, %v1581
      %v1583 = vpop.f32.mrb[0].mxu0
      %1584 = vmatprep.mubr.bf16.mxu0 %v733
      %1585 = vmatmul.mubr.bf16.gmra.mrb[0].mxu0 %v732
      %v1586 = vpop.f32.mrb[0].mxu0
      %v1587 = vadd.f32 %v1522, %v1586
      %v1588 = vpop.f32.mrb[0].mxu0
      %v1589 = vpop.f32.mrb[0].mxu0
      %v1590 = vadd.f32 %v1525, %v1589
      %v1591 = vpop.f32.mrb[0].mxu0
      %1592 = vmatprep.mubr.bf16.mxu0 %v747
      %1593 = vmatmul.mubr.bf16.gmra.mrb[0].mxu0 %v746
      %v1594 = vpop.f32.mrb[0].mxu0
      %v1595 = vadd.f32 %v1530, %v1594
      %v1596 = vpop.f32.mrb[0].mxu0
      %v1597 = vpop.f32.mrb[0].mxu0
      %v1598 = vadd.f32 %v1533, %v1597
      %v1599 = vpop.f32.mrb[0].mxu0
      %1600 = vdwg.mxu0
      %1601 = vmatprep.subr.bf16.mxu0 0
      %1602 = vmatpush1.bf16.msra.mxu0 %v1274
      %1603 = vmatprep.subr.bf16.mxu0 0
      %1604 = vmatpush1.bf16.msra.mxu0 %v1275
      %1605 = vmatprep.subr.bf16.mxu0 0
      %1606 = vmatpush1.bf16.msra.mxu0 %v1276
      %1607 = vmatprep.subr.bf16.mxu0 0
      %1608 = vmatpush1.bf16.msra.mxu0 %v1277
      %1609 = vmatprep.subr.bf16.mxu0 0
      %1610 = vmatpush1.bf16.msra.mxu0 %v1278
      %1611 = vmatprep.subr.bf16.mxu0 0
      %1612 = vmatpush1.bf16.msra.mxu0 %v1279
      %1613 = vmatprep.subr.bf16.mxu0 0
      %1614 = vmatpush1.bf16.msra.mxu0 %v1280
      %1615 = vmatprep.subr.bf16.mxu0 0
      %1616 = vmatpush1.bf16.msra.mxu0 %v1281
      %1617 = vmatprep.subr.bf16.mxu0 0
      %1618 = vmatpush1.bf16.msra.mxu0 %v1282
      %1619 = vmatprep.subr.bf16.mxu0 0
      %1620 = vmatpush1.bf16.msra.mxu0 %v1283
      %1621 = vmatprep.subr.bf16.mxu0 0
      %1622 = vmatpush1.bf16.msra.mxu0 %v1284
      %1623 = vmatprep.subr.bf16.mxu0 0
      %1624 = vmatpush1.bf16.msra.mxu0 %v1285
      %1625 = vmatprep.subr.bf16.mxu0 0
      %1626 = vmatpush1.bf16.msra.mxu0 %v1286
      %1627 = vmatprep.subr.bf16.mxu0 0
      %1628 = vmatpush1.bf16.msra.mxu0 %v1287
      %1629 = vmatprep.subr.bf16.mxu0 0
      %1630 = vmatpush1.bf16.msra.mxu0 %v1288
      %1631 = vmatprep.subr.bf16.mxu0 0
      %1632 = vmatpush1.bf16.msra.mxu0 %v1289
      %1633 = vmatprep.mubr.bf16.mxu0 %v707
      %1634 = vmatmul.mubr.bf16.gmra.mrb[0].mxu0 %v706
      %v1635 = vpop.f32.mrb[0].mxu0
      %v1636 = vadd.f32 %v1571, %v1635
      %v1637 = vpop.f32.mrb[0].mxu0
      %v1638 = vpop.f32.mrb[0].mxu0
      %v1639 = vadd.f32 %v1574, %v1638
      %v1640 = vpop.f32.mrb[0].mxu0
      %1641 = vmatprep.mubr.bf16.mxu0 %v721
      %1642 = vmatmul.mubr.bf16.gmra.mrb[0].mxu0 %v720
      %v1643 = vpop.f32.mrb[0].mxu0
      %v1644 = vadd.f32 %v1579, %v1643
      %v1645 = vpop.f32.mrb[0].mxu0
      %v1646 = vpop.f32.mrb[0].mxu0
      %v1647 = vadd.f32 %v1582, %v1646
      %v1648 = vpop.f32.mrb[0].mxu0
      %1649 = vmatprep.mubr.bf16.mxu0 %v735
      %1650 = vmatmul.mubr.bf16.gmra.mrb[0].mxu0 %v734
      %v1651 = vpop.f32.mrb[0].mxu0
      %v1652 = vadd.f32 %v1587, %v1651
      %v1653 = vpop.f32.mrb[0].mxu0
      %v1654 = vpop.f32.mrb[0].mxu0
      %v1655 = vadd.f32 %v1590, %v1654
      %v1656 = vpop.f32.mrb[0].mxu0
      %1657 = vmatprep.mubr.bf16.mxu0 %v749
      %1658 = vmatmul.mubr.bf16.gmra.mrb[0].mxu0 %v748
      %v1659 = vpop.f32.mrb[0].mxu0
      %v1660 = vadd.f32 %v1595, %v1659
      %v1661 = vpop.f32.mrb[0].mxu0
      %v1662 = vpop.f32.mrb[0].mxu0
      %v1663 = vadd.f32 %v1598, %v1662
      %v1664 = vpop.f32.mrb[0].mxu0
      %1665 = vdwg.mxu0
      %1666 = vmatprep.subr.bf16.mxu0 0
      %1667 = vmatpush1.bf16.msra.mxu0 %v1290
      %1668 = vmatprep.subr.bf16.mxu0 0
      %1669 = vmatpush1.bf16.msra.mxu0 %v1291
      %1670 = vmatprep.subr.bf16.mxu0 0
      %1671 = vmatpush1.bf16.msra.mxu0 %v1292
      %1672 = vmatprep.subr.bf16.mxu0 0
      %1673 = vmatpush1.bf16.msra.mxu0 %v1293
      %1674 = vmatprep.subr.bf16.mxu0 0
      %1675 = vmatpush1.bf16.msra.mxu0 %v1294
      %1676 = vmatprep.subr.bf16.mxu0 0
      %1677 = vmatpush1.bf16.msra.mxu0 %v1295
      %1678 = vmatprep.subr.bf16.mxu0 0
      %1679 = vmatpush1.bf16.msra.mxu0 %v1296
      %1680 = vmatprep.subr.bf16.mxu0 0
      %1681 = vmatpush1.bf16.msra.mxu0 %v1297
      %1682 = vmatprep.subr.bf16.mxu0 0
      %1683 = vmatpush1.bf16.msra.mxu0 %v1298
      %1684 = vmatprep.subr.bf16.mxu0 0
      %1685 = vmatpush1.bf16.msra.mxu0 %v1299
      %1686 = vmatprep.subr.bf16.mxu0 0
      %1687 = vmatpush1.bf16.msra.mxu0 %v1300
      %1688 = vmatprep.subr.bf16.mxu0 0
      %1689 = vmatpush1.bf16.msra.mxu0 %v1301
      %1690 = vmatprep.subr.bf16.mxu0 0
      %1691 = vmatpush1.bf16.msra.mxu0 %v1302
      %1692 = vmatprep.subr.bf16.mxu0 0
      %1693 = vmatpush1.bf16.msra.mxu0 %v1303
      %1694 = vmatprep.subr.bf16.mxu0 0
      %1695 = vmatpush1.bf16.msra.mxu0 %v1304
      %1696 = vmatprep.subr.bf16.mxu0 0
      %1697 = vmatpush1.bf16.msra.mxu0 %v1305
      %1698 = vmatprep.mubr.bf16.mxu0 %v709
      %1699 = vmatmul.mubr.bf16.gmra.mrb[0].mxu0 %v708
      %v1700 = vpop.f32.mrb[0].mxu0
      %v1701 = vadd.f32 %v1636, %v1700
      %v1702 = vpop.f32.mrb[0].mxu0
      %v1703 = vpop.f32.mrb[0].mxu0
      %v1704 = vadd.f32 %v1639, %v1703
      %v1705 = vpop.f32.mrb[0].mxu0
      %1706 = vmatprep.mubr.bf16.mxu0 %v723
      %1707 = vmatmul.mubr.bf16.gmra.mrb[0].mxu0 %v722
      %v1708 = vpop.f32.mrb[0].mxu0
      %v1709 = vadd.f32 %v1644, %v1708
      %v1710 = vpop.f32.mrb[0].mxu0
      %v1711 = vpop.f32.mrb[0].mxu0
      %v1712 = vadd.f32 %v1647, %v1711
      %v1713 = vpop.f32.mrb[0].mxu0
      %1714 = vmatprep.mubr.bf16.mxu0 %v737
      %1715 = vmatmul.mubr.bf16.gmra.mrb[0].mxu0 %v736
      %v1716 = vpop.f32.mrb[0].mxu0
      %v1717 = vadd.f32 %v1652, %v1716
      %v1718 = vpop.f32.mrb[0].mxu0
      %v1719 = vpop.f32.mrb[0].mxu0
      %v1720 = vadd.f32 %v1655, %v1719
      %v1721 = vpop.f32.mrb[0].mxu0
      %1722 = vmatprep.mubr.bf16.mxu0 %v751
      %1723 = vmatmul.mubr.bf16.gmra.mrb[0].mxu0 %v750
      %v1724 = vpop.f32.mrb[0].mxu0
      %v1725 = vadd.f32 %v1660, %v1724
      %v1726 = vpop.f32.mrb[0].mxu0
      %v1727 = vpop.f32.mrb[0].mxu0
      %v1728 = vadd.f32 %v1663, %v1727
      %v1729 = vpop.f32.mrb[0].mxu0
      %1730 = vdwg.mxu0
      %1731 = vmatprep.subr.bf16.mxu0 0
      %1732 = vmatpush1.bf16.msra.mxu0 %v1306
      %1733 = vmatprep.subr.bf16.mxu0 0
      %1734 = vmatpush1.bf16.msra.mxu0 %v1307
      %1735 = vmatprep.subr.bf16.mxu0 0
      %1736 = vmatpush1.bf16.msra.mxu0 %v1308
      %1737 = vmatprep.subr.bf16.mxu0 0
      %1738 = vmatpush1.bf16.msra.mxu0 %v1309
      %1739 = vmatprep.subr.bf16.mxu0 0
      %1740 = vmatpush1.bf16.msra.mxu0 %v1310
      %1741 = vmatprep.subr.bf16.mxu0 0
      %1742 = vmatpush1.bf16.msra.mxu0 %v1311
      %1743 = vmatprep.subr.bf16.mxu0 0
      %1744 = vmatpush1.bf16.msra.mxu0 %v1312
      %1745 = vmatprep.subr.bf16.mxu0 0
      %1746 = vmatpush1.bf16.msra.mxu0 %v1313
      %1747 = vmatprep.subr.bf16.mxu0 0
      %1748 = vmatpush1.bf16.msra.mxu0 %v1314
      %1749 = vmatprep.subr.bf16.mxu0 0
      %1750 = vmatpush1.bf16.msra.mxu0 %v1315
      %1751 = vmatprep.subr.bf16.mxu0 0
      %1752 = vmatpush1.bf16.msra.mxu0 %v1316
      %1753 = vmatprep.subr.bf16.mxu0 0
      %1754 = vmatpush1.bf16.msra.mxu0 %v1317
      %1755 = vmatprep.subr.bf16.mxu0 0
      %1756 = vmatpush1.bf16.msra.mxu0 %v1318
      %1757 = vmatprep.subr.bf16.mxu0 0
      %1758 = vmatpush1.bf16.msra.mxu0 %v1319
      %1759 = vmatprep.subr.bf16.mxu0 0
      %1760 = vmatpush1.bf16.msra.mxu0 %v1320
      %1761 = vmatprep.subr.bf16.mxu0 0
      %1762 = vmatpush1.bf16.msra.mxu0 %v1321
      %1763 = vmatprep.mubr.bf16.mxu0 %v711
      %1764 = vmatmul.mubr.bf16.gmra.mrb[0].mxu0 %v710
      %v1765 = vpop.f32.mrb[0].mxu0
      %v1766 = vadd.f32 %v1701, %v1765
      %v1767 = vpop.f32.mrb[0].mxu0
      %v1768 = vpop.f32.mrb[0].mxu0
      %v1769 = vadd.f32 %v1704, %v1768
      %v1770 = vpop.f32.mrb[0].mxu0
      %1771 = vmatprep.mubr.bf16.mxu0 %v725
      %1772 = vmatmul.mubr.bf16.gmra.mrb[0].mxu0 %v724
      %v1773 = vpop.f32.mrb[0].mxu0
      %v1774 = vadd.f32 %v1709, %v1773
      %v1775 = vpop.f32.mrb[0].mxu0
      %v1776 = vpop.f32.mrb[0].mxu0
      %v1777 = vadd.f32 %v1712, %v1776
      %v1778 = vpop.f32.mrb[0].mxu0
      %1779 = vmatprep.mubr.bf16.mxu0 %v739
      %1780 = vmatmul.mubr.bf16.gmra.mrb[0].mxu0 %v738
      %v1781 = vpop.f32.mrb[0].mxu0
      %v1782 = vadd.f32 %v1717, %v1781
      %v1783 = vpop.f32.mrb[0].mxu0
      %v1784 = vpop.f32.mrb[0].mxu0
      %v1785 = vadd.f32 %v1720, %v1784
      %v1786 = vpop.f32.mrb[0].mxu0
      %1787 = vmatprep.mubr.bf16.mxu0 %v753
      %1788 = vmatmul.mubr.bf16.gmra.mrb[0].mxu0 %v752
      %v1789 = vpop.f32.mrb[0].mxu0
      %v1790 = vadd.f32 %v1725, %v1789
      %v1791 = vpop.f32.mrb[0].mxu0
      %v1792 = vpop.f32.mrb[0].mxu0
      %v1793 = vadd.f32 %v1728, %v1792
      %v1794 = vpop.f32.mrb[0].mxu0
      %1795 = vdwg.mxu0
      %1796 = vmatprep.subr.bf16.mxu0 0
      %1797 = vmatpush1.bf16.msra.mxu0 %v1322
      %1798 = vmatprep.subr.bf16.mxu0 0
      %1799 = vmatpush1.bf16.msra.mxu0 %v1323
      %1800 = vmatprep.subr.bf16.mxu0 0
      %1801 = vmatpush1.bf16.msra.mxu0 %v1324
      %1802 = vmatprep.subr.bf16.mxu0 0
      %1803 = vmatpush1.bf16.msra.mxu0 %v1325
      %1804 = vmatprep.subr.bf16.mxu0 0
      %1805 = vmatpush1.bf16.msra.mxu0 %v1326
      %1806 = vmatprep.subr.bf16.mxu0 0
      %1807 = vmatpush1.bf16.msra.mxu0 %v1327
      %1808 = vmatprep.subr.bf16.mxu0 0
      %1809 = vmatpush1.bf16.msra.mxu0 %v1328
      %1810 = vmatprep.subr.bf16.mxu0 0
      %1811 = vmatpush1.bf16.msra.mxu0 %v1329
      %1812 = vmatprep.subr.bf16.mxu0 0
      %1813 = vmatpush1.bf16.msra.mxu0 %v1330
      %1814 = vmatprep.subr.bf16.mxu0 0
      %1815 = vmatpush1.bf16.msra.mxu0 %v1331
      %1816 = vmatprep.subr.bf16.mxu0 0
      %1817 = vmatpush1.bf16.msra.mxu0 %v1332
      %1818 = vmatprep.subr.bf16.mxu0 0
      %1819 = vmatpush1.bf16.msra.mxu0 %v1333
      %1820 = vmatprep.subr.bf16.mxu0 0
      %1821 = vmatpush1.bf16.msra.mxu0 %v1334
      %1822 = vmatprep.subr.bf16.mxu0 0
      %1823 = vmatpush1.bf16.msra.mxu0 %v1335
      %1824 = vmatprep.subr.bf16.mxu0 0
      %1825 = vmatpush1.bf16.msra.mxu0 %v1336
      %1826 = vmatprep.subr.bf16.mxu0 0
      %1827 = vmatpush1.bf16.msra.mxu0 %v1337
      %1828 = vmatprep.mubr.bf16.mxu0 %v713
      %1829 = vmatmul.mubr.bf16.gmra.mrb[0].mxu0 %v712
      %v1830 = vpop.f32.mrb[0].mxu0
      %v1831 = vadd.f32 %v1766, %v1830
      %v1832 = vpop.f32.mrb[0].mxu0
      %v1833 = vpop.f32.mrb[0].mxu0
      %v1834 = vadd.f32 %v1769, %v1833
      %v1835 = vpop.f32.mrb[0].mxu0
      %1836 = vmatprep.mubr.bf16.mxu0 %v727
      %1837 = vmatmul.mubr.bf16.gmra.mrb[0].mxu0 %v726
      %v1838 = vpop.f32.mrb[0].mxu0
      %v1839 = vadd.f32 %v1774, %v1838
      %v1840 = vpop.f32.mrb[0].mxu0
      %v1841 = vpop.f32.mrb[0].mxu0
      %v1842 = vadd.f32 %v1777, %v1841
      %v1843 = vpop.f32.mrb[0].mxu0
      %1844 = vmatprep.mubr.bf16.mxu0 %v741
      %1845 = vmatmul.mubr.bf16.gmra.mrb[0].mxu0 %v740
      %v1846 = vpop.f32.mrb[0].mxu0
      %v1847 = vadd.f32 %v1782, %v1846
      %v1848 = vpop.f32.mrb[0].mxu0
      %v1849 = vpop.f32.mrb[0].mxu0
      %v1850 = vadd.f32 %v1785, %v1849
      %v1851 = vpop.f32.mrb[0].mxu0
      %1852 = vmatprep.mubr.bf16.mxu0 %v755
      %1853 = vmatmul.mubr.bf16.gmra.mrb[0].mxu0 %v754
      %v1854 = vpop.f32.mrb[0].mxu0
      %v1855 = vadd.f32 %v1790, %v1854
      %v1856 = vpop.f32.mrb[0].mxu0
      %v1857 = vpop.f32.mrb[0].mxu0
      %v1858 = vadd.f32 %v1793, %v1857
      %v1859 = vpop.f32.mrb[0].mxu0
      %1860 = vdwg.mxu0
      %1861 = vmatprep.subr.bf16.mxu0 0
      %1862 = vmatpush1.bf16.msra.mxu0 %v1338
      %1863 = vmatprep.subr.bf16.mxu0 0
      %1864 = vmatpush1.bf16.msra.mxu0 %v1339
      %1865 = vmatprep.subr.bf16.mxu0 0
      %1866 = vmatpush1.bf16.msra.mxu0 %v1340
      %1867 = vmatprep.subr.bf16.mxu0 0
      %1868 = vmatpush1.bf16.msra.mxu0 %v1341
      %1869 = vmatprep.subr.bf16.mxu0 0
      %1870 = vmatpush1.bf16.msra.mxu0 %v1342
      %1871 = vmatprep.subr.bf16.mxu0 0
      %1872 = vmatpush1.bf16.msra.mxu0 %v1343
      %1873 = vmatprep.subr.bf16.mxu0 0
      %1874 = vmatpush1.bf16.msra.mxu0 %v1344
      %1875 = vmatprep.subr.bf16.mxu0 0
      %1876 = vmatpush1.bf16.msra.mxu0 %v1345
      %1877 = vmatprep.subr.bf16.mxu0 0
      %1878 = vmatpush1.bf16.msra.mxu0 %v1346
      %1879 = vmatprep.subr.bf16.mxu0 0
      %1880 = vmatpush1.bf16.msra.mxu0 %v1347
      %1881 = vmatprep.subr.bf16.mxu0 0
      %1882 = vmatpush1.bf16.msra.mxu0 %v1348
      %1883 = vmatprep.subr.bf16.mxu0 0
      %1884 = vmatpush1.bf16.msra.mxu0 %v1349
      %1885 = vmatprep.subr.bf16.mxu0 0
      %1886 = vmatpush1.bf16.msra.mxu0 0
      %1887 = vmatprep.subr.bf16.mxu0 0
      %1888 = vmatpush1.bf16.msra.mxu0 0
      %1889 = vmatprep.subr.bf16.mxu0 0
      %1890 = vmatpush1.bf16.msra.mxu0 0
      %1891 = vmatprep.subr.bf16.mxu0 0
      %1892 = vmatpush1.bf16.msra.mxu0 0
      %1893 = vmatprep.mubr.bf16.mxu0 %v1460
      %1894 = vmatmul.mubr.bf16.gmra.mrb[0].mxu0 %v714
      %v1895 = vpop.f32.mrb[0].mxu0
      %v1896 = vadd.f32 %v1831, %v1895
      %v1897 = vpop.f32.mrb[0].mxu0
      %v1898 = vpop.f32.mrb[0].mxu0
      %v1899 = vadd.f32 %v1834, %v1898
      %v1900 = vpop.f32.mrb[0].mxu0
      %1901 = vmatprep.mubr.bf16.mxu0 %v1463
      %1902 = vmatmul.mubr.bf16.gmra.mrb[0].mxu0 %v728
      %v1903 = vpop.f32.mrb[0].mxu0
      %v1904 = vadd.f32 %v1839, %v1903
      %v1905 = vpop.f32.mrb[0].mxu0
      %v1906 = vpop.f32.mrb[0].mxu0
      %v1907 = vadd.f32 %v1842, %v1906
      %v1908 = vpop.f32.mrb[0].mxu0
      %1909 = vmatprep.mubr.bf16.mxu0 %v1466
      %1910 = vmatmul.mubr.bf16.gmra.mrb[0].mxu0 %v742
      %v1911 = vpop.f32.mrb[0].mxu0
      %v1912 = vadd.f32 %v1847, %v1911
      %v1913 = vpop.f32.mrb[0].mxu0
      %v1914 = vpop.f32.mrb[0].mxu0
      %v1915 = vadd.f32 %v1850, %v1914
      %v1916 = vpop.f32.mrb[0].mxu0
      %1917 = vmatprep.mubr.bf16.mxu0 %v1469
      %1918 = vmatmul.mubr.bf16.gmra.mrb[0].mxu0 %v756
      %v1919 = vpop.f32.mrb[0].mxu0
      %v1920 = vadd.f32 %v1855, %v1919
      %v1921 = vpop.f32.mrb[0].mxu0
      %v1922 = vpop.f32.mrb[0].mxu0
      %v1923 = vadd.f32 %v1858, %v1922
      %v1924 = vpop.f32.mrb[0].mxu0
      %1925 = vdwg.mxu0
      %v1926 = vld [vmem:[%s2] sm:$0x1]
      %v1928 = vlaneseq
      %v1929 = vshrl.u32 %v1928, 7
      %v1930 = vsub.s32 0, %v1929
      %v1931 = vrot.slane %v1926, %v1930
      %v1933 = vmul.f32 %v1896, %v1931
      %v1934 = vmul.f32 %v1899, %v1931
      %v1935 = vmul.f32 %v1904, %v1931
      %v1936 = vmul.f32 %v1907, %v1931
      %v1937 = vmul.f32 %v1912, %v1931
      %v1938 = vmul.f32 %v1915, %v1931
      %v1939 = vmul.f32 %v1920, %v1931
      %v1940 = vmul.f32 %v1923, %v1931
      %v1941 = vld [vmem:[%s3] sm:$0x1]
      %v1943 = vlaneseq
      %v1944 = vshrl.u32 %v1943, 7
      %v1945 = vsub.s32 0, %v1944
      %v1946 = vrot.slane %v1941, %v1945
      %v1948 = vadd.f32 %v1933, %v1946
      %v1949 = vadd.f32 %v1934, %v1946
      %v1950 = vadd.f32 %v1935, %v1946
      %v1951 = vadd.f32 %v1936, %v1946
      %v1952 = vadd.f32 %v1937, %v1946
      %v1953 = vadd.f32 %v1938, %v1946
      %v1954 = vadd.f32 %v1939, %v1946
      %v1955 = vadd.f32 %v1940, %v1946
      %v1956 = vmax.f32 %v1948, 0.0
      %v1957 = vmax.f32 %v1949, 0.0
      %v1958 = vmax.f32 %v1950, 0.0
      %v1959 = vmax.f32 %v1951, 0.0
      %v1960 = vmax.f32 %v1952, 0.0
      %v1961 = vmax.f32 %v1953, 0.0
      %v1962 = vmax.f32 %v1954, 0.0
      %v1963 = vmax.f32 %v1955, 0.0
      %v1964 = vpack.c.bf16 %v1957, %v1956
      %v1965 = vpack.c.bf16 %v1959, %v1958
      %v1966 = vpack.c.bf16 %v1961, %v1960
      %v1967 = vpack.c.bf16 %v1963, %v1962
      %v1972 = vunpack.c.l.b16 %v1964
      %v1973 = vunpack.c.h.b16 %v1964
      %v1974 = vunpack.c.l.b16 %v1965
      %v1975 = vunpack.c.h.b16 %v1965
      %v1976 = vunpack.c.l.b16 %v1966
      %v1977 = vunpack.c.h.b16 %v1966
      %v1978 = vunpack.c.l.b16 %v1967
      %v1979 = vunpack.c.h.b16 %v1967
      %v1980 = vpack.c.b16 %v1972, %v1972
      %v1981 = vpack.c.b16 %v1973, %v1973
      %v1982 = vpack.c.b16 %v1974, %v1974
      %v1983 = vpack.c.b16 %v1975, %v1975
      %v1984 = vpack.c.b16 %v1976, %v1976
      %v1985 = vpack.c.b16 %v1977, %v1977
      %v1986 = vpack.c.b16 %v1978, %v1978
      %v1987 = vpack.c.b16 %v1979, %v1979
      %vm1996 = vcmask 519168
      %1997 = vst.msk [vmem:[%s244] sm:$0xf] %vm1996, %v1980
      %1998 = vst.msk [vmem:[%s244 + $0x4] sm:$0xf] %vm1996, %v1981
      %1999 = vst.msk [vmem:[%s244 + $0x8] sm:$0xf] %vm1996, %v1982
      %2000 = vst.msk [vmem:[%s244 + $0xc] sm:$0xf] %vm1996, %v1983
      %2001 = vst.msk [vmem:[%s244 + $0x10] sm:$0xf] %vm1996, %v1984
      %2002 = vst.msk [vmem:[%s244 + $0x14] sm:$0xf] %vm1996, %v1985
      %2003 = vst.msk [vmem:[%s244 + $0x18] sm:$0xf] %vm1996, %v1986
      %2004 = vst.msk [vmem:[%s244 + $0x1c] sm:$0xf] %vm1996, %v1987
      %p2005 = scmp.lt.s32.totalorder %s16, 1
      %s2006 = scalar_select %p2005, %s16, 1
      %s2007 = smul.addr %s2006, 8
      %s2008 = smul.addr %s2007, 4
      %s2009 = scalar_lea.vmem %s5, %s2008
      // Predicated region
      $region41: #{videonet_forward.7} parent=39 // pred_check
        %p2010 = pneg %p149
      $region42: #{videonet_forward.7} parent=39 // pred_check_branch
        %2012 = sbr.rel (%p2010) target = $region44
      $region43: #{videonet_forward.7} parent=39 // pred_region
        _
      $region44: #{videonet_forward.7} parent=39 // pred_fallthru
        _
    $region40: #{videonet_forward.7} parent=5 // pred_fallthru
      _
    %p2013 = scmp.le.s32.totalorder 2, %s11
    // Predicated region
    $region45: #{videonet_forward.7} parent=5 // pred_check
      %p2014 = pneg %p2013
    $region46: #{videonet_forward.7} parent=5 // pred_check_branch
      %2016 = sbr.rel (%p2014) target = $region48
    $region47: #{videonet_forward.7} parent=5 // pred_region
      %s2017 = ssub.s32 %s11, 2
      // Predicated region
      $region49: #{videonet_forward.7} parent=47 // pred_check
        %p2018 = pneg %p155
      $region50: #{videonet_forward.7} parent=47 // pred_check_branch
        %2020 = sbr.rel (%p2018) target = $region52
      $region51: #{videonet_forward.7} parent=47 // pred_region
        %p2021 = scmp.lt.s32.totalorder %s17, 1
        %s2022 = scalar_select %p2021, %s17, 1
        %s2023 = smul.addr %s2022, 8
        %s2024 = smul.addr %s2023, 4
        %s2025 = scalar_lea.vmem %s5, %s2024
      $region52: #{videonet_forward.7} parent=47 // pred_fallthru
        _
    $region48: #{videonet_forward.7} parent=5 // pred_fallthru
      _
  $region6: #{videonet_forward.7} parent=0 // loop_footer
    %s15 = sadd.s32 1, %s11
  $region7: #{videonet_forward.7} parent=0 // loop_footer_branch
    %10 = sbr.rel target = $region3
  $region8: #{videonet_forward.7} parent=0 // loop_exit
    _

// kernel: videonet_forward.8
$region0: #{videonet_forward.8}
  #allocation0 [shape = 'u32[]', space=smem, size = 0x4, offset = 0x4, fixed_abs, tag = 'smem constant byte address 0x4 - core index']
  #allocation1 [shape = 'u32[144,128]{1,0:T(1,128)}', space=vmem, size = 0x12000, scoped, tag = 'internal scratch']
  %s0 = inlined_call_operand.vmem [shape: bf16[2,8,1728], index: 0, kind: input, shape index: {}]
  %s1 = inlined_call_operand.vmem [shape: bf16[1728,64], index: 1, kind: input, shape index: {}]
  %s2 = inlined_call_operand.vmem [shape: f32[1,64], index: 2, kind: input, shape index: {}]
  %s3 = inlined_call_operand.vmem [shape: f32[1,64], index: 3, kind: input, shape index: {}]
  %s4 = inlined_call_operand.vmem [shape: bf16[2,8,64], index: 4, kind: output, shape index: {}]
  %s5 = sld [smem:[#allocation0]]
  $region49: #{videonet_forward.8} parent=0
    _
  %s7 = ssub.s32 1, %s5
  %s8 = scalar_select 0, %s7, %s5
  loop: start=0, step=1, limit=4
  $region2: #{videonet_forward.8} parent=0 // loop_pre_header
    _
  $region3: #{videonet_forward.8} parent=0 // loop_header
    %s10 = sphi 0, %s14
    %p11 = scmp.ge.s32.totalorder %s10, 4
    %s20 = sphi 0, %s22
    %s23 = sphi 0, %s20
    %s24 = sphi 0, %s23
    %s40 = sphi 0, %s24
    %s44 = sphi 0, %s44
    %s46 = sphi 0, %s44
    %s47 = sphi 0, %s46
    %s61 = sphi 0, %s47
    %s65 = sphi 0, %s65
    %s67 = sphi 0, %s65
    %s68 = sphi 0, %s67
    %s82 = sphi 0, %s68
    %s86 = sphi 0, %s86
    %s88 = sphi 0, %s86
    %s89 = sphi 0, %s88
    %s103 = sphi 0, %s89
    %s109 = sphi 0, %s111
    %s112 = sphi 0, %s109
    %s113 = sphi 0, %s112
    %s129 = sphi 0, %s113
  $region4: #{videonet_forward.8} parent=0 // loop_header_branch
    %13 = sbr.rel (%p11) target = $region8
  $region5: #{videonet_forward.8} parent=0 // loop_body
    %s15 = ssub.s32 %s10, 1
    %s16 = ssub.s32 %s10, 2
    %s17 = sadd.s32 %s10, 1
    %s18 = ssub.s32 %s10, %s17
    %p19 = scmp.eq.s32.totalorder %s18, 0
    %s21 = sadd.s32 %s20, 1
    %s22 = scalar_select %p19, %s20, %s21
    %p25 = pneg %p19
    %p26 = scmp.eq.s32.totalorder %s10, 1
    %p27 = por %p25, %p26
    %p28 = scmp.ne.s32.totalorder %s20, %s23
    %p29 = scmp.eq.s32.totalorder %s10, 0
    %p30 = por %p28, %p29
    %p31 = scmp.ne.s32.totalorder %s20, %s23
    %p32 = scmp.eq.s32.totalorder %s15, 1
    %p33 = por %p31, %p32
    %p34 = scmp.ne.s32.totalorder %s23, %s24
    %p35 = scmp.eq.s32.totalorder %s15, 0
    %p36 = por %p34, %p35
    %p37 = scmp.ne.s32.totalorder %s23, %s24
    %p38 = scmp.eq.s32.totalorder %s16, 1
    %p39 = por %p37, %p38
    %p41 = scmp.ne.s32.totalorder %s24, %s40
    %p42 = scmp.eq.s32.totalorder %s16, 0
    %p43 = por %p41, %p42
    %s45 = sadd.s32 %s44, 1
    %p48 = scmp.eq.s32.totalorder %s10, 1
    %p49 = scmp.ne.s32.totalorder %s44, %s46
    %p50 = scmp.eq.s32.totalorder %s10, 0
    %p51 = por %p49, %p50
    %p52 = scmp.ne.s32.totalorder %s44, %s46
    %p53 = scmp.eq.s32.totalorder %s15, 1
    %p54 = por %p52, %p53
    %p55 = scmp.ne.s32.totalorder %s46, %s47
    %p56 = scmp.eq.s32.totalorder %s15, 0
    %p57 = por %p55, %p56
    %p58 = scmp.ne.s32.totalorder %s46, %s47
    %p59 = scmp.eq.s32.totalorder %s16, 1
    %p60 = por %p58, %p59
    %p62 = scmp.ne.s32.totalorder %s47, %s61
    %p63 = scmp.eq.s32.totalorder %s16, 0
    %p64 = por %p62, %p63
    %s66 = sadd.s32 %s65, 1
    %p69 = scmp.eq.s32.totalorder %s10, 1
    %p70 = scmp.ne.s32.totalorder %s65, %s67
    %p71 = scmp.eq.s32.totalorder %s10, 0
    %p72 = por %p70, %p71
    %p73 = scmp.ne.s32.totalorder %s65, %s67
    %p74 = scmp.eq.s32.totalorder %s15, 1
    %p75 = por %p73, %p74
    %p76 = scmp.ne.s32.totalorder %s67, %s68
    %p77 = scmp.eq.s32.totalorder %s15, 0
    %p78 = por %p76, %p77
    %p79 = scmp.ne.s32.totalorder %s67, %s68
    %p80 = scmp.eq.s32.totalorder %s16, 1
    %p81 = por %p79, %p80
    %p83 = scmp.ne.s32.totalorder %s68, %s82
    %p84 = scmp.eq.s32.totalorder %s16, 0
    %p85 = por %p83, %p84
    %s87 = sadd.s32 %s86, 1
    %p90 = scmp.eq.s32.totalorder %s10, 1
    %p91 = scmp.ne.s32.totalorder %s86, %s88
    %p92 = scmp.eq.s32.totalorder %s10, 0
    %p93 = por %p91, %p92
    %p94 = scmp.ne.s32.totalorder %s86, %s88
    %p95 = scmp.eq.s32.totalorder %s15, 1
    %p96 = por %p94, %p95
    %p97 = scmp.ne.s32.totalorder %s88, %s89
    %p98 = scmp.eq.s32.totalorder %s15, 0
    %p99 = por %p97, %p98
    %p100 = scmp.ne.s32.totalorder %s88, %s89
    %p101 = scmp.eq.s32.totalorder %s16, 1
    %p102 = por %p100, %p101
    %p104 = scmp.ne.s32.totalorder %s89, %s103
    %p105 = scmp.eq.s32.totalorder %s16, 0
    %p106 = por %p104, %p105
    %s107 = ssub.s32 %s10, %s17
    %p108 = scmp.eq.s32.totalorder %s107, 0
    %s110 = sadd.s32 %s109, 1
    %s111 = scalar_select %p108, %s109, %s110
    %p114 = pneg %p108
    %p115 = scmp.eq.s32.totalorder %s10, 1
    %p116 = por %p114, %p115
    %p117 = scmp.ne.s32.totalorder %s109, %s112
    %p118 = scmp.eq.s32.totalorder %s10, 0
    %p119 = por %p117, %p118
    %p120 = scmp.ne.s32.totalorder %s109, %s112
    %p121 = scmp.eq.s32.totalorder %s15, 1
    %p122 = por %p120, %p121
    %p123 = scmp.ne.s32.totalorder %s112, %s113
    %p124 = scmp.eq.s32.totalorder %s15, 0
    %p125 = por %p123, %p124
    %p126 = scmp.ne.s32.totalorder %s112, %s113
    %p127 = scmp.eq.s32.totalorder %s16, 1
    %p128 = por %p126, %p127
    %p130 = scmp.ne.s32.totalorder %s113, %s129
    %p131 = scmp.eq.s32.totalorder %s16, 0
    %p132 = por %p130, %p131
    %p133 = scmp.le.s32.totalorder 1, %s10
    %p134 = scmp.lt.s32.totalorder %s10, 3
    %p135 = pnand %p133, %p134
    %p136 = pneg %p135
    // Predicated region
    $region9: #{videonet_forward.8} parent=5 // pred_check
      _
    $region10: #{videonet_forward.8} parent=5 // pred_check_branch
      %138 = sbr.rel (%p135) target = $region12
    $region11: #{videonet_forward.8} parent=5 // pred_region
      %s139 = ssub.s32 %s10, 1
      // Predicated region
      $region13: #{videonet_forward.8} parent=11 // pred_check
        %p140 = pneg %p57
      $region14: #{videonet_forward.8} parent=11 // pred_check_branch
        %142 = sbr.rel (%p140) target = $region16
      $region15: #{videonet_forward.8} parent=11 // pred_region
        _
      $region16: #{videonet_forward.8} parent=11 // pred_fallthru
        _
      // Predicated region
      $region17: #{videonet_forward.8} parent=11 // pred_check
        %p143 = pneg %p78
      $region18: #{videonet_forward.8} parent=11 // pred_check_branch
        %145 = sbr.rel (%p143) target = $region20
      $region19: #{videonet_forward.8} parent=11 // pred_region
        _
      $region20: #{videonet_forward.8} parent=11 // pred_fallthru
        _
      // Predicated region
      $region21: #{videonet_forward.8} parent=11 // pred_check
        %p146 = pneg %p99
      $region22: #{videonet_forward.8} parent=11 // pred_check_branch
        %148 = sbr.rel (%p146) target = $region24
      $region23: #{videonet_forward.8} parent=11 // pred_region
        _
      $region24: #{videonet_forward.8} parent=11 // pred_fallthru
        _
    $region12: #{videonet_forward.8} parent=5 // pred_fallthru
      _
    %p149 = scmp.lt.s32.totalorder %s10, 2
    // Predicated region
    $region25: #{videonet_forward.8} parent=5 // pred_check
      %p150 = pneg %p149
    $region26: #{videonet_forward.8} parent=5 // pred_check_branch
      %152 = sbr.rel (%p150) target = $region28
    $region27: #{videonet_forward.8} parent=5 // pred_region
      // Predicated region
      $region29: #{videonet_forward.8} parent=27 // pred_check
        %p153 = pneg %p30
      $region30: #{videonet_forward.8} parent=27 // pred_check_branch
        %155 = sbr.rel (%p153) target = $region32
      $region31: #{videonet_forward.8} parent=27 // pred_region
        %p156 = scmp.lt.s32.totalorder %s10, 1
        %s157 = scalar_select %p156, %s10, 1
        %s158 = smul.addr %s157, 14
        %s159 = smul.addr %s158, 4
        %s160 = scalar_lea.vmem %s0, %s159
      $region32: #{videonet_forward.8} parent=27 // pred_fallthru
        _
    $region28: #{videonet_forward.8} parent=5 // pred_fallthru
      _
    %p161 = scmp.le.s32.totalorder 1, %s10
    %p162 = scmp.lt.s32.totalorder %s10, 3
    %p163 = pnand %p161, %p162
    %p164 = pneg %p163
    // Predicated region
    $region33: #{videonet_forward.8} parent=5 // pred_check
      _
    $region34: #{videonet_forward.8} parent=5 // pred_check_branch
      %166 = sbr.rel (%p163) target = $region36
    $region35: #{videonet_forward.8} parent=5 // pred_region
      %s167 = ssub.s32 %s10, 1
      %p168 = scmp.lt.s32.totalorder %s15, 1
      %s169 = scalar_select %p168, %s15, 1
      %s170 = smul.addr %s169, 14
      %s171 = smul.addr %s170, 4
      %s172 = scalar_lea.vmem %s0, %s171
      %p173 = pneg %p36
      %p174 = pneg %p33
      %p175 = pneg %p57
      %p176 = pneg %p54
      %p177 = pneg %p78
      %p178 = pneg %p75
      %p179 = pneg %p99
      %p180 = pneg %p96
      %p181 = pneg %p125
      %p182 = pneg %p122
      %p183 = scmp.lt.s32.totalorder %s15, 1
      %s184 = scalar_select %p183, %s15, 1
      %s185 = smul.addr %s184, 4
      %s186 = scalar_lea.vmem %s4, %s185
      %p187 = scmp.lt.s32.totalorder %s15, 1
      %s188 = scalar_select %p187, %s15, 1
      %s189 = smul.addr %s188, 14
      %s190 = smul.addr %s189, 4
      %s191 = scalar_lea.vmem %s0, %s190
      %p192 = scmp.lt.s32.totalorder %s15, 1
      %s193 = scalar_select %p192, %s15, 1
      %s194 = smul.addr %s193, 4
      %s195 = scalar_lea.vmem %s4, %s194
      %v197 = vld [vmem:[%s191] sm:$0xff]
      %v198 = vld [vmem:[%s191 + $0x8] sm:$0xff]
      %v199 = vld [vmem:[%s191 + $0x10] sm:$0xff]
      %v200 = vld [vmem:[%s191 + $0x18] sm:$0xff]
      %v201 = vld [vmem:[%s191 + $0x20] sm:$0xff]
      %v202 = vld [vmem:[%s191 + $0x28] sm:$0xff]
      %v203 = vld [vmem:[%s191 + $0x30] sm:$0xff]
      %v204 = vld [vmem:[%s1] sm:$0xf]
      %v205 = vld [vmem:[%s1 + $0x4] sm:$0xf]
      %v206 = vld [vmem:[%s1 + $0x8] sm:$0xf]
      %v207 = vld [vmem:[%s1 + $0xc] sm:$0xf]
      %v208 = vld [vmem:[%s1 + $0x10] sm:$0xf]
      %v209 = vld [vmem:[%s1 + $0x14] sm:$0xf]
      %v210 = vld [vmem:[%s1 + $0x18] sm:$0xf]
      %v211 = vld [vmem:[%s1 + $0x1c] sm:$0xf]
      %v212 = vld [vmem:[%s1 + $0x20] sm:$0xf]
      %v213 = vld [vmem:[%s1 + $0x24] sm:$0xf]
      %v214 = vld [vmem:[%s1 + $0x28] sm:$0xf]
      %v215 = vld [vmem:[%s1 + $0x2c] sm:$0xf]
      %v216 = vld [vmem:[%s1 + $0x30] sm:$0xf]
      %v217 = vld [vmem:[%s1 + $0x34] sm:$0xf]
      %v218 = vld [vmem:[%s1 + $0x38] sm:$0xf]
      %v219 = vld [vmem:[%s1 + $0x3c] sm:$0xf]
      %v220 = vld [vmem:[%s1 + $0x40] sm:$0xf]
      %v221 = vld [vmem:[%s1 + $0x44] sm:$0xf]
      %v222 = vld [vmem:[%s1 + $0x48] sm:$0xf]
      %v223 = vld [vmem:[%s1 + $0x4c] sm:$0xf]
      %v224 = vld [vmem:[%s1 + $0x50] sm:$0xf]
      %v225 = vld [vmem:[%s1 + $0x54] sm:$0xf]
      %v226 = vld [vmem:[%s1 + $0x58] sm:$0xf]
      %v227 = vld [vmem:[%s1 + $0x5c] sm:$0xf]
      %v228 = vld [vmem:[%s1 + $0x60] sm:$0xf]
      %v229 = vld [vmem:[%s1 + $0x64] sm:$0xf]
      %v230 = vld [vmem:[%s1 + $0x68] sm:$0xf]
      %v231 = vld [vmem:[%s1 + $0x6c] sm:$0xf]
      %v232 = vld [vmem:[%s1 + $0x70] sm:$0xf]
      %v233 = vld [vmem:[%s1 + $0x74] sm:$0xf]
      %v234 = vld [vmem:[%s1 + $0x78] sm:$0xf]
      %v235 = vld [vmem:[%s1 + $0x7c] sm:$0xf]
      %v236 = vld [vmem:[%s1 + $0x80] sm:$0xf]
      %v237 = vld [vmem:[%s1 + $0x84] sm:$0xf]
      %v238 = vld [vmem:[%s1 + $0x88] sm:$0xf]
      %v239 = vld [vmem:[%s1 + $0x8c] sm:$0xf]
      %v240 = vld [vmem:[%s1 + $0x90] sm:$0xf]
      %v241 = vld [vmem:[%s1 + $0x94] sm:$0xf]
      %v242 = vld [vmem:[%s1 + $0x98] sm:$0xf]
      %v243 = vld [vmem:[%s1 + $0x9c] sm:$0xf]
      %v244 = vld [vmem:[%s1 + $0xa0] sm:$0xf]
      %v245 = vld [vmem:[%s1 + $0xa4] sm:$0xf]
      %v246 = vld [vmem:[%s1 + $0xa8] sm:$0xf]
      %v247 = vld [vmem:[%s1 + $0xac] sm:$0xf]
      %v248 = vld [vmem:[%s1 + $0xb0] sm:$0xf]
      %v249 = vld [vmem:[%s1 + $0xb4] sm:$0xf]
      %v250 = vld [vmem:[%s1 + $0xb8] sm:$0xf]
      %v251 = vld [vmem:[%s1 + $0xbc] sm:$0xf]
      %v252 = vld [vmem:[%s1 + $0xc0] sm:$0xf]
      %v253 = vld [vmem:[%s1 + $0xc4] sm:$0xf]
      %v254 = vld [vmem:[%s1 + $0xc8] sm:$0xf]
      %v255 = vld [vmem:[%s1 + $0xcc] sm:$0xf]
      %v256 = vld [vmem:[%s1 + $0xd0] sm:$0xf]
      %v257 = vld [vmem:[%s1 + $0xd4] sm:$0xf]
      %v258 = vld [vmem:[%s1 + $0xd8] sm:$0xf]
      %v259 = vld [vmem:[%s1 + $0xdc] sm:$0xf]
      %v260 = vld [vmem:[%s1 + $0xe0] sm:$0xf]
      %v261 = vld [vmem:[%s1 + $0xe4] sm:$0xf]
      %v262 = vld [vmem:[%s1 + $0xe8] sm:$0xf]
      %v263 = vld [vmem:[%s1 + $0xec] sm:$0xf]
      %v264 = vld [vmem:[%s1 + $0xf0] sm:$0xf]
      %v265 = vld [vmem:[%s1 + $0xf4] sm:$0xf]
      %v266 = vld [vmem:[%s1 + $0xf8] sm:$0xf]
      %v267 = vld [vmem:[%s1 + $0xfc] sm:$0xf]
      %v268 = vld [vmem:[%s1 + $0x100] sm:$0xf]
      %v269 = vld [vmem:[%s1 + $0x104] sm:$0xf]
      %v270 = vld [vmem:[%s1 + $0x108] sm:$0xf]
      %v271 = vld [vmem:[%s1 + $0x10c] sm:$0xf]
      %v272 = vld [vmem:[%s1 + $0x110] sm:$0xf]
      %v273 = vld [vmem:[%s1 + $0x114] sm:$0xf]
      %v274 = vld [vmem:[%s1 + $0x118] sm:$0xf]
      %v275 = vld [vmem:[%s1 + $0x11c] sm:$0xf]
      %v276 = vld [vmem:[%s1 + $0x120] sm:$0xf]
      %v277 = vld [vmem:[%s1 + $0x124] sm:$0xf]
      %v278 = vld [vmem:[%s1 + $0x128] sm:$0xf]
      %v279 = vld [vmem:[%s1 + $0x12c] sm:$0xf]
      %v280 = vld [vmem:[%s1 + $0x130] sm:$0xf]
      %v281 = vld [vmem:[%s1 + $0x134] sm:$0xf]
      %v282 = vld [vmem:[%s1 + $0x138] sm:$0xf]
      %v283 = vld [vmem:[%s1 + $0x13c] sm:$0xf]
      %v284 = vld [vmem:[%s1 + $0x140] sm:$0xf]
      %v285 = vld [vmem:[%s1 + $0x144] sm:$0xf]
      %v286 = vld [vmem:[%s1 + $0x148] sm:$0xf]
      %v287 = vld [vmem:[%s1 + $0x14c] sm:$0xf]
      %v288 = vld [vmem:[%s1 + $0x150] sm:$0xf]
      %v289 = vld [vmem:[%s1 + $0x154] sm:$0xf]
      %v290 = vld [vmem:[%s1 + $0x158] sm:$0xf]
      %v291 = vld [vmem:[%s1 + $0x15c] sm:$0xf]
      %v292 = vld [vmem:[%s1 + $0x160] sm:$0xf]
      %v293 = vld [vmem:[%s1 + $0x164] sm:$0xf]
      %v294 = vld [vmem:[%s1 + $0x168] sm:$0xf]
      %v295 = vld [vmem:[%s1 + $0x16c] sm:$0xf]
      %v296 = vld [vmem:[%s1 + $0x170] sm:$0xf]
      %v297 = vld [vmem:[%s1 + $0x174] sm:$0xf]
      %v298 = vld [vmem:[%s1 + $0x178] sm:$0xf]
      %v299 = vld [vmem:[%s1 + $0x17c] sm:$0xf]
      %v300 = vld [vmem:[%s1 + $0x180] sm:$0xf]
      %v301 = vld [vmem:[%s1 + $0x184] sm:$0xf]
      %v302 = vld [vmem:[%s1 + $0x188] sm:$0xf]
      %v303 = vld [vmem:[%s1 + $0x18c] sm:$0xf]
      %v304 = vld [vmem:[%s1 + $0x190] sm:$0xf]
      %v305 = vld [vmem:[%s1 + $0x194] sm:$0xf]
      %v306 = vld [vmem:[%s1 + $0x198] sm:$0xf]
      %v307 = vld [vmem:[%s1 + $0x19c] sm:$0xf]
      %v308 = vld [vmem:[%s1 + $0x1a0] sm:$0xf]
      %v309 = vld [vmem:[%s1 + $0x1a4] sm:$0xf]
      %v310 = vld [vmem:[%s1 + $0x1a8] sm:$0xf]
      %v311 = vld [vmem:[%s1 + $0x1ac] sm:$0xf]
      %v312 = vld [vmem:[%s1 + $0x1b0] sm:$0xf]
      %v313 = vld [vmem:[%s1 + $0x1b4] sm:$0xf]
      %v314 = vld [vmem:[%s1 + $0x1b8] sm:$0xf]
      %v315 = vld [vmem:[%s1 + $0x1bc] sm:$0xf]
      %v316 = vld [vmem:[%s1 + $0x1c0] sm:$0xf]
      %v317 = vld [vmem:[%s1 + $0x1c4] sm:$0xf]
      %v318 = vld [vmem:[%s1 + $0x1c8] sm:$0xf]
      %v319 = vld [vmem:[%s1 + $0x1cc] sm:$0xf]
      %v320 = vld [vmem:[%s1 + $0x1d0] sm:$0xf]
      %v321 = vld [vmem:[%s1 + $0x1d4] sm:$0xf]
      %v322 = vld [vmem:[%s1 + $0x1d8] sm:$0xf]
      %v323 = vld [vmem:[%s1 + $0x1dc] sm:$0xf]
      %v324 = vld [vmem:[%s1 + $0x1e0] sm:$0xf]
      %v325 = vld [vmem:[%s1 + $0x1e4] sm:$0xf]
      %v326 = vld [vmem:[%s1 + $0x1e8] sm:$0xf]
      %v327 = vld [vmem:[%s1 + $0x1ec] sm:$0xf]
      %v328 = vld [vmem:[%s1 + $0x1f0] sm:$0xf]
      %v329 = vld [vmem:[%s1 + $0x1f4] sm:$0xf]
      %v330 = vld [vmem:[%s1 + $0x1f8] sm:$0xf]
      %v331 = vld [vmem:[%s1 + $0x1fc] sm:$0xf]
      %v332 = vld [vmem:[%s1 + $0x200] sm:$0xf]
      %v333 = vld [vmem:[%s1 + $0x204] sm:$0xf]
      %v334 = vld [vmem:[%s1 + $0x208] sm:$0xf]
      %v335 = vld [vmem:[%s1 + $0x20c] sm:$0xf]
      %v336 = vld [vmem:[%s1 + $0x210] sm:$0xf]
      %v337 = vld [vmem:[%s1 + $0x214] sm:$0xf]
      %v338 = vld [vmem:[%s1 + $0x218] sm:$0xf]
      %v339 = vld [vmem:[%s1 + $0x21c] sm:$0xf]
      %v340 = vld [vmem:[%s1 + $0x220] sm:$0xf]
      %v341 = vld [vmem:[%s1 + $0x224] sm:$0xf]
      %v342 = vld [vmem:[%s1 + $0x228] sm:$0xf]
      %v343 = vld [vmem:[%s1 + $0x22c] sm:$0xf]
      %v344 = vld [vmem:[%s1 + $0x230] sm:$0xf]
      %v345 = vld [vmem:[%s1 + $0x234] sm:$0xf]
      %v346 = vld [vmem:[%s1 + $0x238] sm:$0xf]
      %v347 = vld [vmem:[%s1 + $0x23c] sm:$0xf]
      %v348 = vld [vmem:[%s1 + $0x240] sm:$0xf]
      %v349 = vld [vmem:[%s1 + $0x244] sm:$0xf]
      %v350 = vld [vmem:[%s1 + $0x248] sm:$0xf]
      %v351 = vld [vmem:[%s1 + $0x24c] sm:$0xf]
      %v352 = vld [vmem:[%s1 + $0x250] sm:$0xf]
      %v353 = vld [vmem:[%s1 + $0x254] sm:$0xf]
      %v354 = vld [vmem:[%s1 + $0x258] sm:$0xf]
      %v355 = vld [vmem:[%s1 + $0x25c] sm:$0xf]
      %v356 = vld [vmem:[%s1 + $0x260] sm:$0xf]
      %v357 = vld [vmem:[%s1 + $0x264] sm:$0xf]
      %v358 = vld [vmem:[%s1 + $0x268] sm:$0xf]
      %v359 = vld [vmem:[%s1 + $0x26c] sm:$0xf]
      %v360 = vld [vmem:[%s1 + $0x270] sm:$0xf]
      %v361 = vld [vmem:[%s1 + $0x274] sm:$0xf]
      %v362 = vld [vmem:[%s1 + $0x278] sm:$0xf]
      %v363 = vld [vmem:[%s1 + $0x27c] sm:$0xf]
      %v364 = vld [vmem:[%s1 + $0x280] sm:$0xf]
      %v365 = vld [vmem:[%s1 + $0x284] sm:$0xf]
      %v366 = vld [vmem:[%s1 + $0x288] sm:$0xf]
      %v367 = vld [vmem:[%s1 + $0x28c] sm:$0xf]
      %v368 = vld [vmem:[%s1 + $0x290] sm:$0xf]
      %v369 = vld [vmem:[%s1 + $0x294] sm:$0xf]
      %v370 = vld [vmem:[%s1 + $0x298] sm:$0xf]
      %v371 = vld [vmem:[%s1 + $0x29c] sm:$0xf]
      %v372 = vld [vmem:[%s1 + $0x2a0] sm:$0xf]
      %v373 = vld [vmem:[%s1 + $0x2a4] sm:$0xf]
      %v374 = vld [vmem:[%s1 + $0x2a8] sm:$0xf]
      %v375 = vld [vmem:[%s1 + $0x2ac] sm:$0xf]
      %v376 = vld [vmem:[%s1 + $0x2b0] sm:$0xf]
      %v377 = vld [vmem:[%s1 + $0x2b4] sm:$0xf]
      %v378 = vld [vmem:[%s1 + $0x2b8] sm:$0xf]
      %v379 = vld [vmem:[%s1 + $0x2bc] sm:$0xf]
      %v380 = vld [vmem:[%s1 + $0x2c0] sm:$0xf]
      %v381 = vld [vmem:[%s1 + $0x2c4] sm:$0xf]
      %v382 = vld [vmem:[%s1 + $0x2c8] sm:$0xf]
      %v383 = vld [vmem:[%s1 + $0x2cc] sm:$0xf]
      %v384 = vld [vmem:[%s1 + $0x2d0] sm:$0xf]
      %v385 = vld [vmem:[%s1 + $0x2d4] sm:$0xf]
      %v386 = vld [vmem:[%s1 + $0x2d8] sm:$0xf]
      %v387 = vld [vmem:[%s1 + $0x2dc] sm:$0xf]
      %v388 = vld [vmem:[%s1 + $0x2e0] sm:$0xf]
      %v389 = vld [vmem:[%s1 + $0x2e4] sm:$0xf]
      %v390 = vld [vmem:[%s1 + $0x2e8] sm:$0xf]
      %v391 = vld [vmem:[%s1 + $0x2ec] sm:$0xf]
      %v392 = vld [vmem:[%s1 + $0x2f0] sm:$0xf]
      %v393 = vld [vmem:[%s1 + $0x2f4] sm:$0xf]
      %v394 = vld [vmem:[%s1 + $0x2f8] sm:$0xf]
      %v395 = vld [vmem:[%s1 + $0x2fc] sm:$0xf]
      %v396 = vld [vmem:[%s1 + $0x300] sm:$0xf]
      %v397 = vld [vmem:[%s1 + $0x304] sm:$0xf]
      %v398 = vld [vmem:[%s1 + $0x308] sm:$0xf]
      %v399 = vld [vmem:[%s1 + $0x30c] sm:$0xf]
      %v400 = vld [vmem:[%s1 + $0x310] sm:$0xf]
      %v401 = vld [vmem:[%s1 + $0x314] sm:$0xf]
      %v402 = vld [vmem:[%s1 + $0x318] sm:$0xf]
      %v403 = vld [vmem:[%s1 + $0x31c] sm:$0xf]
      %v404 = vld [vmem:[%s1 + $0x320] sm:$0xf]
      %v405 = vld [vmem:[%s1 + $0x324] sm:$0xf]
      %v406 = vld [vmem:[%s1 + $0x328] sm:$0xf]
      %v407 = vld [vmem:[%s1 + $0x32c] sm:$0xf]
      %v408 = vld [vmem:[%s1 + $0x330] sm:$0xf]
      %v409 = vld [vmem:[%s1 + $0x334] sm:$0xf]
      %v410 = vld [vmem:[%s1 + $0x338] sm:$0xf]
      %v411 = vld [vmem:[%s1 + $0x33c] sm:$0xf]
      %v412 = vld [vmem:[%s1 + $0x340] sm:$0xf]
      %v413 = vld [vmem:[%s1 + $0x344] sm:$0xf]
      %v414 = vld [vmem:[%s1 + $0x348] sm:$0xf]
      %v415 = vld [vmem:[%s1 + $0x34c] sm:$0xf]
      %v416 = vld [vmem:[%s1 + $0x350] sm:$0xf]
      %v417 = vld [vmem:[%s1 + $0x354] sm:$0xf]
      %v418 = vld [vmem:[%s1 + $0x358] sm:$0xf]
      %v419 = vld [vmem:[%s1 + $0x35c] sm:$0xf]
      %v427 = vunpack.c.l.b16 %v197
      %v428 = vunpack.c.h.b16 %v197
      %v429 = vunpack.c.l.b16 %v198
      %v430 = vunpack.c.h.b16 %v198
      %v431 = vunpack.c.l.b16 %v199
      %v432 = vunpack.c.h.b16 %v199
      %v433 = vunpack.c.l.b16 %v200
      %v434 = vunpack.c.h.b16 %v200
      %v435 = vunpack.c.l.b16 %v201
      %v436 = vunpack.c.h.b16 %v201
      %v437 = vunpack.c.l.b16 %v202
      %v438 = vunpack.c.h.b16 %v202
      %v439 = vunpack.c.l.b16 %v203
      %v440 = vunpack.c.h.b16 %v203
      %v441 = vpack.c.b16 %v427, %v427
      %v442 = vpack.c.b16 %v428, %v428
      %v443 = vpack.c.b16 %v429, %v429
      %v444 = vpack.c.b16 %v430, %v430
      %v445 = vpack.c.b16 %v431, %v431
      %v446 = vpack.c.b16 %v432, %v432
      %v447 = vpack.c.b16 %v433, %v433
      %v448 = vpack.c.b16 %v434, %v434
      %v449 = vpack.c.b16 %v435, %v435
      %v450 = vpack.c.b16 %v436, %v436
      %v451 = vpack.c.b16 %v437, %v437
      %v452 = vpack.c.b16 %v438, %v438
      %v453 = vpack.c.b16 %v439, %v439
      %v454 = vpack.c.b16 %v440, %v440
      %v684 = vunpack.c.l.b16 %v204
      %v685 = vunpack.c.l.b16 %v205
      %v686 = vunpack.c.l.b16 %v206
      %v687 = vunpack.c.l.b16 %v207
      %v688 = vunpack.c.l.b16 %v208
      %v689 = vunpack.c.l.b16 %v209
      %v690 = vunpack.c.l.b16 %v210
      %v691 = vunpack.c.l.b16 %v211
      %v692 = vunpack.c.l.b16 %v212
      %v693 = vunpack.c.l.b16 %v213
      %v694 = vunpack.c.l.b16 %v214
      %v695 = vunpack.c.l.b16 %v215
      %v696 = vunpack.c.l.b16 %v216
      %v697 = vunpack.c.l.b16 %v217
      %v698 = vunpack.c.l.b16 %v218
      %v699 = vunpack.c.l.b16 %v219
      %v700 = vunpack.c.l.b16 %v220
      %v701 = vunpack.c.l.b16 %v221
      %v702 = vunpack.c.l.b16 %v222
      %v703 = vunpack.c.l.b16 %v223
      %v704 = vunpack.c.l.b16 %v224
      %v705 = vunpack.c.l.b16 %v225
      %v706 = vunpack.c.l.b16 %v226
      %v707 = vunpack.c.l.b16 %v227
      %v708 = vunpack.c.l.b16 %v228
      %v709 = vunpack.c.l.b16 %v229
      %v710 = vunpack.c.l.b16 %v230
      %v711 = vunpack.c.l.b16 %v231
      %v712 = vunpack.c.l.b16 %v232
      %v713 = vunpack.c.l.b16 %v233
      %v714 = vunpack.c.l.b16 %v234
      %v715 = vunpack.c.l.b16 %v235
      %v716 = vunpack.c.l.b16 %v236
      %v717 = vunpack.c.l.b16 %v237
      %v718 = vunpack.c.l.b16 %v238
      %v719 = vunpack.c.l.b16 %v239
      %v720 = vunpack.c.l.b16 %v240
      %v721 = vunpack.c.l.b16 %v241
      %v722 = vunpack.c.l.b16 %v242
      %v723 = vunpack.c.l.b16 %v243
      %v724 = vunpack.c.l.b16 %v244
      %v725 = vunpack.c.l.b16 %v245
      %v726 = vunpack.c.l.b16 %v246
      %v727 = vunpack.c.l.b16 %v247
      %v728 = vunpack.c.l.b16 %v248
      %v729 = vunpack.c.l.b16 %v249
      %v730 = vunpack.c.l.b16 %v250
      %v731 = vunpack.c.l.b16 %v251
      %v732 = vunpack.c.l.b16 %v252
      %v733 = vunpack.c.l.b16 %v253
      %v734 = vunpack.c.l.b16 %v254
      %v735 = vunpack.c.l.b16 %v255
      %v736 = vunpack.c.l.b16 %v256
      %v737 = vunpack.c.l.b16 %v257
      %v738 = vunpack.c.l.b16 %v258
      %v739 = vunpack.c.l.b16 %v259
      %v740 = vunpack.c.l.b16 %v260
      %v741 = vunpack.c.l.b16 %v261
      %v742 = vunpack.c.l.b16 %v262
      %v743 = vunpack.c.l.b16 %v263
      %v744 = vunpack.c.l.b16 %v264
      %v745 = vunpack.c.l.b16 %v265
      %v746 = vunpack.c.l.b16 %v266
      %v747 = vunpack.c.l.b16 %v267
      %v748 = vunpack.c.l.b16 %v268
      %v749 = vunpack.c.l.b16 %v269
      %v750 = vunpack.c.l.b16 %v270
      %v751 = vunpack.c.l.b16 %v271
      %v752 = vunpack.c.l.b16 %v272
      %v753 = vunpack.c.l.b16 %v273
      %v754 = vunpack.c.l.b16 %v274
      %v755 = vunpack.c.l.b16 %v275
      %v756 = vunpack.c.l.b16 %v276
      %v757 = vunpack.c.l.b16 %v277
      %v758 = vunpack.c.l.b16 %v278
      %v759 = vunpack.c.l.b16 %v279
      %v760 = vunpack.c.l.b16 %v280
      %v761 = vunpack.c.l.b16 %v281
      %v762 = vunpack.c.l.b16 %v282
      %v763 = vunpack.c.l.b16 %v283
      %v764 = vunpack.c.l.b16 %v284
      %v765 = vunpack.c.l.b16 %v285
      %v766 = vunpack.c.l.b16 %v286
      %v767 = vunpack.c.l.b16 %v287
      %v768 = vunpack.c.l.b16 %v288
      %v769 = vunpack.c.l.b16 %v289
      %v770 = vunpack.c.l.b16 %v290
      %v771 = vunpack.c.l.b16 %v291
      %v772 = vunpack.c.l.b16 %v292
      %v773 = vunpack.c.l.b16 %v293
      %v774 = vunpack.c.l.b16 %v294
      %v775 = vunpack.c.l.b16 %v295
      %v776 = vunpack.c.l.b16 %v296
      %v777 = vunpack.c.l.b16 %v297
      %v778 = vunpack.c.l.b16 %v298
      %v779 = vunpack.c.l.b16 %v299
      %v780 = vunpack.c.l.b16 %v300
      %v781 = vunpack.c.l.b16 %v301
      %v782 = vunpack.c.l.b16 %v302
      %v783 = vunpack.c.l.b16 %v303
      %v784 = vunpack.c.l.b16 %v304
      %v785 = vunpack.c.l.b16 %v305
      %v786 = vunpack.c.l.b16 %v306
      %v787 = vunpack.c.l.b16 %v307
      %v788 = vunpack.c.l.b16 %v308
      %v789 = vunpack.c.l.b16 %v309
      %v790 = vunpack.c.l.b16 %v310
      %v791 = vunpack.c.l.b16 %v311
      %v792 = vunpack.c.l.b16 %v312
      %v793 = vunpack.c.l.b16 %v313
      %v794 = vunpack.c.l.b16 %v314
      %v795 = vunpack.c.l.b16 %v315
      %v796 = vunpack.c.l.b16 %v316
      %v797 = vunpack.c.l.b16 %v317
      %v798 = vunpack.c.l.b16 %v318
      %v799 = vunpack.c.l.b16 %v319
      %v800 = vunpack.c.l.b16 %v320
      %v801 = vunpack.c.l.b16 %v321
      %v802 = vunpack.c.l.b16 %v322
      %v803 = vunpack.c.l.b16 %v323
      %v804 = vunpack.c.l.b16 %v324
      %v805 = vunpack.c.l.b16 %v325
      %v806 = vunpack.c.l.b16 %v326
      %v807 = vunpack.c.l.b16 %v327
      %v808 = vunpack.c.l.b16 %v328
      %v809 = vunpack.c.l.b16 %v329
      %v810 = vunpack.c.l.b16 %v330
      %v811 = vunpack.c.l.b16 %v331
      %v812 = vunpack.c.l.b16 %v332
      %v813 = vunpack.c.l.b16 %v333
      %v814 = vunpack.c.l.b16 %v334
      %v815 = vunpack.c.l.b16 %v335
      %v816 = vunpack.c.l.b16 %v336
      %v817 = vunpack.c.l.b16 %v337
      %v818 = vunpack.c.l.b16 %v338
      %v819 = vunpack.c.l.b16 %v339
      %v820 = vunpack.c.l.b16 %v340
      %v821 = vunpack.c.l.b16 %v341
      %v822 = vunpack.c.l.b16 %v342
      %v823 = vunpack.c.l.b16 %v343
      %v824 = vunpack.c.l.b16 %v344
      %v825 = vunpack.c.l.b16 %v345
      %v826 = vunpack.c.l.b16 %v346
      %v827 = vunpack.c.l.b16 %v347
      %v828 = vunpack.c.l.b16 %v348
      %v829 = vunpack.c.l.b16 %v349
      %v830 = vunpack.c.l.b16 %v350
      %v831 = vunpack.c.l.b16 %v351
      %v832 = vunpack.c.l.b16 %v352
      %v833 = vunpack.c.l.b16 %v353
      %v834 = vunpack.c.l.b16 %v354
      %v835 = vunpack.c.l.b16 %v355
      %v836 = vunpack.c.l.b16 %v356
      %v837 = vunpack.c.l.b16 %v357
      %v838 = vunpack.c.l.b16 %v358
      %v839 = vunpack.c.l.b16 %v359
      %v840 = vunpack.c.l.b16 %v360
      %v841 = vunpack.c.l.b16 %v361
      %v842 = vunpack.c.l.b16 %v362
      %v843 = vunpack.c.l.b16 %v363
      %v844 = vunpack.c.l.b16 %v364
      %v845 = vunpack.c.l.b16 %v365
      %v846 = vunpack.c.l.b16 %v366
      %v847 = vunpack.c.l.b16 %v367
      %v848 = vunpack.c.l.b16 %v368
      %v849 = vunpack.c.l.b16 %v369
      %v850 = vunpack.c.l.b16 %v370
      %v851 = vunpack.c.l.b16 %v371
      %v852 = vunpack.c.l.b16 %v372
      %v853 = vunpack.c.l.b16 %v373
      %v854 = vunpack.c.l.b16 %v374
      %v855 = vunpack.c.l.b16 %v375
      %v856 = vunpack.c.l.b16 %v376
      %v857 = vunpack.c.l.b16 %v377
      %v858 = vunpack.c.l.b16 %v378
      %v859 = vunpack.c.l.b16 %v379
      %v860 = vunpack.c.l.b16 %v380
      %v861 = vunpack.c.l.b16 %v381
      %v862 = vunpack.c.l.b16 %v382
      %v863 = vunpack.c.l.b16 %v383
      %v864 = vunpack.c.l.b16 %v384
      %v865 = vunpack.c.l.b16 %v385
      %v866 = vunpack.c.l.b16 %v386
      %v867 = vunpack.c.l.b16 %v387
      %v868 = vunpack.c.l.b16 %v388
      %v869 = vunpack.c.l.b16 %v389
      %v870 = vunpack.c.l.b16 %v390
      %v871 = vunpack.c.l.b16 %v391
      %v872 = vunpack.c.l.b16 %v392
      %v873 = vunpack.c.l.b16 %v393
      %v874 = vunpack.c.l.b16 %v394
      %v875 = vunpack.c.l.b16 %v395
      %v876 = vunpack.c.l.b16 %v396
      %v877 = vunpack.c.l.b16 %v397
      %v878 = vunpack.c.l.b16 %v398
      %v879 = vunpack.c.l.b16 %v399
      %v880 = vunpack.c.l.b16 %v400
      %v881 = vunpack.c.l.b16 %v401
      %v882 = vunpack.c.l.b16 %v402
      %v883 = vunpack.c.l.b16 %v403
      %v884 = vunpack.c.l.b16 %v404
      %v885 = vunpack.c.l.b16 %v405
      %v886 = vunpack.c.l.b16 %v406
      %v887 = vunpack.c.l.b16 %v407
      %v888 = vunpack.c.l.b16 %v408
      %v889 = vunpack.c.l.b16 %v409
      %v890 = vunpack.c.l.b16 %v410
      %v891 = vunpack.c.l.b16 %v411
      %v892 = vunpack.c.l.b16 %v412
      %v893 = vunpack.c.l.b16 %v413
      %v894 = vunpack.c.l.b16 %v414
      %v895 = vunpack.c.l.b16 %v415
      %v896 = vunpack.c.l.b16 %v416
      %v897 = vunpack.c.l.b16 %v417
      %v898 = vunpack.c.l.b16 %v418
      %v899 = vunpack.c.l.b16 %v419
      %v900 = vpack.c.b16 %v685, %v684
      %v901 = vpack.c.b16 %v687, %v686
      %v902 = vpack.c.b16 %v689, %v688
      %v903 = vpack.c.b16 %v691, %v690
      %v904 = vpack.c.b16 %v693, %v692
      %v905 = vpack.c.b16 %v695, %v694
      %v906 = vpack.c.b16 %v697, %v696
      %v907 = vpack.c.b16 %v699, %v698
      %v908 = vpack.c.b16 %v701, %v700
      %v909 = vpack.c.b16 %v703, %v702
      %v910 = vpack.c.b16 %v705, %v704
      %v911 = vpack.c.b16 %v707, %v706
      %v912 = vpack.c.b16 %v709, %v708
      %v913 = vpack.c.b16 %v711, %v710
      %v914 = vpack.c.b16 %v713, %v712
      %v915 = vpack.c.b16 %v715, %v714
      %v916 = vpack.c.b16 %v717, %v716
      %v917 = vpack.c.b16 %v719, %v718
      %v918 = vpack.c.b16 %v721, %v720
      %v919 = vpack.c.b16 %v723, %v722
      %v920 = vpack.c.b16 %v725, %v724
      %v921 = vpack.c.b16 %v727, %v726
      %v922 = vpack.c.b16 %v729, %v728
      %v923 = vpack.c.b16 %v731, %v730
      %v924 = vpack.c.b16 %v733, %v732
      %v925 = vpack.c.b16 %v735, %v734
      %v926 = vpack.c.b16 %v737, %v736
      %v927 = vpack.c.b16 %v739, %v738
      %v928 = vpack.c.b16 %v741, %v740
      %v929 = vpack.c.b16 %v743, %v742
      %v930 = vpack.c.b16 %v745, %v744
      %v931 = vpack.c.b16 %v747, %v746
      %v932 = vpack.c.b16 %v749, %v748
      %v933 = vpack.c.b16 %v751, %v750
      %v934 = vpack.c.b16 %v753, %v752
      %v935 = vpack.c.b16 %v755, %v754
      %v936 = vpack.c.b16 %v757, %v756
      %v937 = vpack.c.b16 %v759, %v758
      %v938 = vpack.c.b16 %v761, %v760
      %v939 = vpack.c.b16 %v763, %v762
      %v940 = vpack.c.b16 %v765, %v764
      %v941 = vpack.c.b16 %v767, %v766
      %v942 = vpack.c.b16 %v769, %v768
      %v943 = vpack.c.b16 %v771, %v770
      %v944 = vpack.c.b16 %v773, %v772
      %v945 = vpack.c.b16 %v775, %v774
      %v946 = vpack.c.b16 %v777, %v776
      %v947 = vpack.c.b16 %v779, %v778
      %v948 = vpack.c.b16 %v781, %v780
      %v949 = vpack.c.b16 %v783, %v782
      %v950 = vpack.c.b16 %v785, %v784
      %v951 = vpack.c.b16 %v787, %v786
      %v952 = vpack.c.b16 %v789, %v788
      %v953 = vpack.c.b16 %v791, %v790
      %v954 = vpack.c.b16 %v793, %v792
      %v955 = vpack.c.b16 %v795, %v794
      %v956 = vpack.c.b16 %v797, %v796
      %v957 = vpack.c.b16 %v799, %v798
      %v958 = vpack.c.b16 %v801, %v800
      %v959 = vpack.c.b16 %v803, %v802
      %v960 = vpack.c.b16 %v805, %v804
      %v961 = vpack.c.b16 %v807, %v806
      %v962 = vpack.c.b16 %v809, %v808
      %v963 = vpack.c.b16 %v811, %v810
      %v964 = vpack.c.b16 %v813, %v812
      %v965 = vpack.c.b16 %v815, %v814
      %v966 = vpack.c.b16 %v817, %v816
      %v967 = vpack.c.b16 %v819, %v818
      %v968 = vpack.c.b16 %v821, %v820
      %v969 = vpack.c.b16 %v823, %v822
      %v970 = vpack.c.b16 %v825, %v824
      %v971 = vpack.c.b16 %v827, %v826
      %v972 = vpack.c.b16 %v829, %v828
      %v973 = vpack.c.b16 %v831, %v830
      %v974 = vpack.c.b16 %v833, %v832
      %v975 = vpack.c.b16 %v835, %v834
      %v976 = vpack.c.b16 %v837, %v836
      %v977 = vpack.c.b16 %v839, %v838
      %v978 = vpack.c.b16 %v841, %v840
      %v979 = vpack.c.b16 %v843, %v842
      %v980 = vpack.c.b16 %v845, %v844
      %v981 = vpack.c.b16 %v847, %v846
      %v982 = vpack.c.b16 %v849, %v848
      %v983 = vpack.c.b16 %v851, %v850
      %v984 = vpack.c.b16 %v853, %v852
      %v985 = vpack.c.b16 %v855, %v854
      %v986 = vpack.c.b16 %v857, %v856
      %v987 = vpack.c.b16 %v859, %v858
      %v988 = vpack.c.b16 %v861, %v860
      %v989 = vpack.c.b16 %v863, %v862
      %v990 = vpack.c.b16 %v865, %v864
      %v991 = vpack.c.b16 %v867, %v866
      %v992 = vpack.c.b16 %v869, %v868
      %v993 = vpack.c.b16 %v871, %v870
      %v994 = vpack.c.b16 %v873, %v872
      %v995 = vpack.c.b16 %v875, %v874
      %v996 = vpack.c.b16 %v877, %v876
      %v997 = vpack.c.b16 %v879, %v878
      %v998 = vpack.c.b16 %v881, %v880
      %v999 = vpack.c.b16 %v883, %v882
      %v1000 = vpack.c.b16 %v885, %v884
      %v1001 = vpack.c.b16 %v887, %v886
      %v1002 = vpack.c.b16 %v889, %v888
      %v1003 = vpack.c.b16 %v891, %v890
      %v1004 = vpack.c.b16 %v893, %v892
      %v1005 = vpack.c.b16 %v895, %v894
      %v1006 = vpack.c.b16 %v897, %v896
      %v1007 = vpack.c.b16 %v899, %v898
      %vm1116 = vcmask 523264
      %v1118 = vsel %vm1116, %v454, 0
      %1120 = vmatprep.subr.bf16.mxu0 0
      %1121 = vmatpush1.bf16.msra.mxu0 %v900
      %1122 = vmatprep.subr.bf16.mxu0 0
      %1123 = vmatpush1.bf16.msra.mxu0 %v901
      %1124 = vmatprep.subr.bf16.mxu0 0
      %1125 = vmatpush1.bf16.msra.mxu0 %v902
      %1126 = vmatprep.subr.bf16.mxu0 0
      %1127 = vmatpush1.bf16.msra.mxu0 %v903
      %1128 = vmatprep.subr.bf16.mxu0 0
      %1129 = vmatpush1.bf16.msra.mxu0 %v904
      %1130 = vmatprep.subr.bf16.mxu0 0
      %1131 = vmatpush1.bf16.msra.mxu0 %v905
      %1132 = vmatprep.subr.bf16.mxu0 0
      %1133 = vmatpush1.bf16.msra.mxu0 %v906
      %1134 = vmatprep.subr.bf16.mxu0 0
      %1135 = vmatpush1.bf16.msra.mxu0 %v907
      %1136 = vmatprep.subr.bf16.mxu0 0
      %1137 = vmatpush1.bf16.msra.mxu0 %v908
      %1138 = vmatprep.subr.bf16.mxu0 0
      %1139 = vmatpush1.bf16.msra.mxu0 %v909
      %1140 = vmatprep.subr.bf16.mxu0 0
      %1141 = vmatpush1.bf16.msra.mxu0 %v910
      %1142 = vmatprep.subr.bf16.mxu0 0
      %1143 = vmatpush1.bf16.msra.mxu0 %v911
      %1144 = vmatprep.subr.bf16.mxu0 0
      %1145 = vmatpush1.bf16.msra.mxu0 %v912
      %1146 = vmatprep.subr.bf16.mxu0 0
      %1147 = vmatpush1.bf16.msra.mxu0 %v913
      %1148 = vmatprep.subr.bf16.mxu0 0
      %1149 = vmatpush1.bf16.msra.mxu0 %v914
      %1150 = vmatprep.subr.bf16.mxu0 0
      %1151 = vmatpush1.bf16.msra.mxu0 %v915
      %1152 = vmatprep.mubr.bf16.mxu0 %v442
      %1153 = vmatmul.mubr.bf16.gmra.mrb[0].mxu0 %v441
      %v1154 = vpop.f32.mrb[0].mxu0
      %v1155 = vadd.f32 0.0, %v1154
      %v1156 = vpop.f32.mrb[0].mxu0
      %v1157 = vpop.f32.mrb[0].mxu0
      %v1158 = vpop.f32.mrb[0].mxu0
      %1159 = vdwg.mxu0
      %1160 = vmatprep.subr.bf16.mxu0 0
      %1161 = vmatpush1.bf16.msra.mxu0 %v916
      %1162 = vmatprep.subr.bf16.mxu0 0
      %1163 = vmatpush1.bf16.msra.mxu0 %v917
      %1164 = vmatprep.subr.bf16.mxu0 0
      %1165 = vmatpush1.bf16.msra.mxu0 %v918
      %1166 = vmatprep.subr.bf16.mxu0 0
      %1167 = vmatpush1.bf16.msra.mxu0 %v919
      %1168 = vmatprep.subr.bf16.mxu0 0
      %1169 = vmatpush1.bf16.msra.mxu0 %v920
      %1170 = vmatprep.subr.bf16.mxu0 0
      %1171 = vmatpush1.bf16.msra.mxu0 %v921
      %1172 = vmatprep.subr.bf16.mxu0 0
      %1173 = vmatpush1.bf16.msra.mxu0 %v922
      %1174 = vmatprep.subr.bf16.mxu0 0
      %1175 = vmatpush1.bf16.msra.mxu0 %v923
      %1176 = vmatprep.subr.bf16.mxu0 0
      %1177 = vmatpush1.bf16.msra.mxu0 %v924
      %1178 = vmatprep.subr.bf16.mxu0 0
      %1179 = vmatpush1.bf16.msra.mxu0 %v925
      %1180 = vmatprep.subr.bf16.mxu0 0
      %1181 = vmatpush1.bf16.msra.mxu0 %v926
      %1182 = vmatprep.subr.bf16.mxu0 0
      %1183 = vmatpush1.bf16.msra.mxu0 %v927
      %1184 = vmatprep.subr.bf16.mxu0 0
      %1185 = vmatpush1.bf16.msra.mxu0 %v928
      %1186 = vmatprep.subr.bf16.mxu0 0
      %1187 = vmatpush1.bf16.msra.mxu0 %v929
      %1188 = vmatprep.subr.bf16.mxu0 0
      %1189 = vmatpush1.bf16.msra.mxu0 %v930
      %1190 = vmatprep.subr.bf16.mxu0 0
      %1191 = vmatpush1.bf16.msra.mxu0 %v931
      %1192 = vmatprep.mubr.bf16.mxu0 %v444
      %1193 = vmatmul.mubr.bf16.gmra.mrb[0].mxu0 %v443
      %v1194 = vpop.f32.mrb[0].mxu0
      %v1195 = vadd.f32 %v1155, %v1194
      %v1196 = vpop.f32.mrb[0].mxu0
      %v1197 = vpop.f32.mrb[0].mxu0
      %v1198 = vpop.f32.mrb[0].mxu0
      %1199 = vdwg.mxu0
      %1200 = vmatprep.subr.bf16.mxu0 0
      %1201 = vmatpush1.bf16.msra.mxu0 %v932
      %1202 = vmatprep.subr.bf16.mxu0 0
      %1203 = vmatpush1.bf16.msra.mxu0 %v933
      %1204 = vmatprep.subr.bf16.mxu0 0
      %1205 = vmatpush1.bf16.msra.mxu0 %v934
      %1206 = vmatprep.subr.bf16.mxu0 0
      %1207 = vmatpush1.bf16.msra.mxu0 %v935
      %1208 = vmatprep.subr.bf16.mxu0 0
      %1209 = vmatpush1.bf16.msra.mxu0 %v936
      %1210 = vmatprep.subr.bf16.mxu0 0
      %1211 = vmatpush1.bf16.msra.mxu0 %v937
      %1212 = vmatprep.subr.bf16.mxu0 0
      %1213 = vmatpush1.bf16.msra.mxu0 %v938
      %1214 = vmatprep.subr.bf16.mxu0 0
      %1215 = vmatpush1.bf16.msra.mxu0 %v939
      %1216 = vmatprep.subr.bf16.mxu0 0
      %1217 = vmatpush1.bf16.msra.mxu0 %v940
      %1218 = vmatprep.subr.bf16.mxu0 0
      %1219 = vmatpush1.bf16.msra.mxu0 %v941
      %1220 = vmatprep.subr.bf16.mxu0 0
      %1221 = vmatpush1.bf16.msra.mxu0 %v942
      %1222 = vmatprep.subr.bf16.mxu0 0
      %1223 = vmatpush1.bf16.msra.mxu0 %v943
      %1224 = vmatprep.subr.bf16.mxu0 0
      %1225 = vmatpush1.bf16.msra.mxu0 %v944
      %1226 = vmatprep.subr.bf16.mxu0 0
      %1227 = vmatpush1.bf16.msra.mxu0 %v945
      %1228 = vmatprep.subr.bf16.mxu0 0
      %1229 = vmatpush1.bf16.msra.mxu0 %v946
      %1230 = vmatprep.subr.bf16.mxu0 0
      %1231 = vmatpush1.bf16.msra.mxu0 %v947
      %1232 = vmatprep.mubr.bf16.mxu0 %v446
      %1233 = vmatmul.mubr.bf16.gmra.mrb[0].mxu0 %v445
      %v1234 = vpop.f32.mrb[0].mxu0
      %v1235 = vadd.f32 %v1195, %v1234
      %v1236 = vpop.f32.mrb[0].mxu0
      %v1237 = vpop.f32.mrb[0].mxu0
      %v1238 = vpop.f32.mrb[0].mxu0
      %1239 = vdwg.mxu0
      %1240 = vmatprep.subr.bf16.mxu0 0
      %1241 = vmatpush1.bf16.msra.mxu0 %v948
      %1242 = vmatprep.subr.bf16.mxu0 0
      %1243 = vmatpush1.bf16.msra.mxu0 %v949
      %1244 = vmatprep.subr.bf16.mxu0 0
      %1245 = vmatpush1.bf16.msra.mxu0 %v950
      %1246 = vmatprep.subr.bf16.mxu0 0
      %1247 = vmatpush1.bf16.msra.mxu0 %v951
      %1248 = vmatprep.subr.bf16.mxu0 0
      %1249 = vmatpush1.bf16.msra.mxu0 %v952
      %1250 = vmatprep.subr.bf16.mxu0 0
      %1251 = vmatpush1.bf16.msra.mxu0 %v953
      %1252 = vmatprep.subr.bf16.mxu0 0
      %1253 = vmatpush1.bf16.msra.mxu0 %v954
      %1254 = vmatprep.subr.bf16.mxu0 0
      %1255 = vmatpush1.bf16.msra.mxu0 %v955
      %1256 = vmatprep.subr.bf16.mxu0 0
      %1257 = vmatpush1.bf16.msra.mxu0 %v956
      %1258 = vmatprep.subr.bf16.mxu0 0
      %1259 = vmatpush1.bf16.msra.mxu0 %v957
      %1260 = vmatprep.subr.bf16.mxu0 0
      %1261 = vmatpush1.bf16.msra.mxu0 %v958
      %1262 = vmatprep.subr.bf16.mxu0 0
      %1263 = vmatpush1.bf16.msra.mxu0 %v959
      %1264 = vmatprep.subr.bf16.mxu0 0
      %1265 = vmatpush1.bf16.msra.mxu0 %v960
      %1266 = vmatprep.subr.bf16.mxu0 0
      %1267 = vmatpush1.bf16.msra.mxu0 %v961
      %1268 = vmatprep.subr.bf16.mxu0 0
      %1269 = vmatpush1.bf16.msra.mxu0 %v962
      %1270 = vmatprep.subr.bf16.mxu0 0
      %1271 = vmatpush1.bf16.msra.mxu0 %v963
      %1272 = vmatprep.mubr.bf16.mxu0 %v448
      %1273 = vmatmul.mubr.bf16.gmra.mrb[0].mxu0 %v447
      %v1274 = vpop.f32.mrb[0].mxu0
      %v1275 = vadd.f32 %v1235, %v1274
      %v1276 = vpop.f32.mrb[0].mxu0
      %v1277 = vpop.f32.mrb[0].mxu0
      %v1278 = vpop.f32.mrb[0].mxu0
      %1279 = vdwg.mxu0
      %1280 = vmatprep.subr.bf16.mxu0 0
      %1281 = vmatpush1.bf16.msra.mxu0 %v964
      %1282 = vmatprep.subr.bf16.mxu0 0
      %1283 = vmatpush1.bf16.msra.mxu0 %v965
      %1284 = vmatprep.subr.bf16.mxu0 0
      %1285 = vmatpush1.bf16.msra.mxu0 %v966
      %1286 = vmatprep.subr.bf16.mxu0 0
      %1287 = vmatpush1.bf16.msra.mxu0 %v967
      %1288 = vmatprep.subr.bf16.mxu0 0
      %1289 = vmatpush1.bf16.msra.mxu0 %v968
      %1290 = vmatprep.subr.bf16.mxu0 0
      %1291 = vmatpush1.bf16.msra.mxu0 %v969
      %1292 = vmatprep.subr.bf16.mxu0 0
      %1293 = vmatpush1.bf16.msra.mxu0 %v970
      %1294 = vmatprep.subr.bf16.mxu0 0
      %1295 = vmatpush1.bf16.msra.mxu0 %v971
      %1296 = vmatprep.subr.bf16.mxu0 0
      %1297 = vmatpush1.bf16.msra.mxu0 %v972
      %1298 = vmatprep.subr.bf16.mxu0 0
      %1299 = vmatpush1.bf16.msra.mxu0 %v973
      %1300 = vmatprep.subr.bf16.mxu0 0
      %1301 = vmatpush1.bf16.msra.mxu0 %v974
      %1302 = vmatprep.subr.bf16.mxu0 0
      %1303 = vmatpush1.bf16.msra.mxu0 %v975
      %1304 = vmatprep.subr.bf16.mxu0 0
      %1305 = vmatpush1.bf16.msra.mxu0 %v976
      %1306 = vmatprep.subr.bf16.mxu0 0
      %1307 = vmatpush1.bf16.msra.mxu0 %v977
      %1308 = vmatprep.subr.bf16.mxu0 0
      %1309 = vmatpush1.bf16.msra.mxu0 %v978
      %1310 = vmatprep.subr.bf16.mxu0 0
      %1311 = vmatpush1.bf16.msra.mxu0 %v979
      %1312 = vmatprep.mubr.bf16.mxu0 %v450
      %1313 = vmatmul.mubr.bf16.gmra.mrb[0].mxu0 %v449
      %v1314 = vpop.f32.mrb[0].mxu0
      %v1315 = vadd.f32 %v1275, %v1314
      %v1316 = vpop.f32.mrb[0].mxu0
      %v1317 = vpop.f32.mrb[0].mxu0
      %v1318 = vpop.f32.mrb[0].mxu0
      %1319 = vdwg.mxu0
      %1320 = vmatprep.subr.bf16.mxu0 0
      %1321 = vmatpush1.bf16.msra.mxu0 %v980
      %1322 = vmatprep.subr.bf16.mxu0 0
      %1323 = vmatpush1.bf16.msra.mxu0 %v981
      %1324 = vmatprep.subr.bf16.mxu0 0
      %1325 = vmatpush1.bf16.msra.mxu0 %v982
      %1326 = vmatprep.subr.bf16.mxu0 0
      %1327 = vmatpush1.bf16.msra.mxu0 %v983
      %1328 = vmatprep.subr.bf16.mxu0 0
      %1329 = vmatpush1.bf16.msra.mxu0 %v984
      %1330 = vmatprep.subr.bf16.mxu0 0
      %1331 = vmatpush1.bf16.msra.mxu0 %v985
      %1332 = vmatprep.subr.bf16.mxu0 0
      %1333 = vmatpush1.bf16.msra.mxu0 %v986
      %1334 = vmatprep.subr.bf16.mxu0 0
      %1335 = vmatpush1.bf16.msra.mxu0 %v987
      %1336 = vmatprep.subr.bf16.mxu0 0
      %1337 = vmatpush1.bf16.msra.mxu0 %v988
      %1338 = vmatprep.subr.bf16.mxu0 0
      %1339 = vmatpush1.bf16.msra.mxu0 %v989
      %1340 = vmatprep.subr.bf16.mxu0 0
      %1341 = vmatpush1.bf16.msra.mxu0 %v990
      %1342 = vmatprep.subr.bf16.mxu0 0
      %1343 = vmatpush1.bf16.msra.mxu0 %v991
      %1344 = vmatprep.subr.bf16.mxu0 0
      %1345 = vmatpush1.bf16.msra.mxu0 %v992
      %1346 = vmatprep.subr.bf16.mxu0 0
      %1347 = vmatpush1.bf16.msra.mxu0 %v993
      %1348 = vmatprep.subr.bf16.mxu0 0
      %1349 = vmatpush1.bf16.msra.mxu0 %v994
      %1350 = vmatprep.subr.bf16.mxu0 0
      %1351 = vmatpush1.bf16.msra.mxu0 %v995
      %1352 = vmatprep.mubr.bf16.mxu0 %v452
      %1353 = vmatmul.mubr.bf16.gmra.mrb[0].mxu0 %v451
      %v1354 = vpop.f32.mrb[0].mxu0
      %v1355 = vadd.f32 %v1315, %v1354
      %v1356 = vpop.f32.mrb[0].mxu0
      %v1357 = vpop.f32.mrb[0].mxu0
      %v1358 = vpop.f32.mrb[0].mxu0
      %1359 = vdwg.mxu0
      %1360 = vmatprep.subr.bf16.mxu0 0
      %1361 = vmatpush1.bf16.msra.mxu0 %v996
      %1362 = vmatprep.subr.bf16.mxu0 0
      %1363 = vmatpush1.bf16.msra.mxu0 %v997
      %1364 = vmatprep.subr.bf16.mxu0 0
      %1365 = vmatpush1.bf16.msra.mxu0 %v998
      %1366 = vmatprep.subr.bf16.mxu0 0
      %1367 = vmatpush1.bf16.msra.mxu0 %v999
      %1368 = vmatprep.subr.bf16.mxu0 0
      %1369 = vmatpush1.bf16.msra.mxu0 %v1000
      %1370 = vmatprep.subr.bf16.mxu0 0
      %1371 = vmatpush1.bf16.msra.mxu0 %v1001
      %1372 = vmatprep.subr.bf16.mxu0 0
      %1373 = vmatpush1.bf16.msra.mxu0 %v1002
      %1374 = vmatprep.subr.bf16.mxu0 0
      %1375 = vmatpush1.bf16.msra.mxu0 %v1003
      %1376 = vmatprep.subr.bf16.mxu0 0
      %1377 = vmatpush1.bf16.msra.mxu0 %v1004
      %1378 = vmatprep.subr.bf16.mxu0 0
      %1379 = vmatpush1.bf16.msra.mxu0 %v1005
      %1380 = vmatprep.subr.bf16.mxu0 0
      %1381 = vmatpush1.bf16.msra.mxu0 %v1006
      %1382 = vmatprep.subr.bf16.mxu0 0
      %1383 = vmatpush1.bf16.msra.mxu0 %v1007
      %1384 = vmatprep.subr.bf16.mxu0 0
      %1385 = vmatpush1.bf16.msra.mxu0 0
      %1386 = vmatprep.subr.bf16.mxu0 0
      %1387 = vmatpush1.bf16.msra.mxu0 0
      %1388 = vmatprep.subr.bf16.mxu0 0
      %1389 = vmatpush1.bf16.msra.mxu0 0
      %1390 = vmatprep.subr.bf16.mxu0 0
      %1391 = vmatpush1.bf16.msra.mxu0 0
      %1392 = vmatprep.mubr.bf16.mxu0 %v1118
      %1393 = vmatmul.mubr.bf16.gmra.mrb[0].mxu0 %v453
      %v1394 = vpop.f32.mrb[0].mxu0
      %v1395 = vadd.f32 %v1355, %v1394
      %v1396 = vpop.f32.mrb[0].mxu0
      %v1397 = vpop.f32.mrb[0].mxu0
      %v1398 = vpop.f32.mrb[0].mxu0
      %1399 = vdwg.mxu0
      %v1400 = vld [vmem:[%s2] sm:$0x1]
      %v1402 = vlaneseq
      %v1403 = vshrl.u32 %v1402, 7
      %v1404 = vsub.s32 0, %v1403
      %v1405 = vrot.slane %v1400, %v1404
      %v1407 = vmul.f32 %v1395, %v1405
      %v1408 = vld [vmem:[%s3] sm:$0x1]
      %v1410 = vlaneseq
      %v1411 = vshrl.u32 %v1410, 7
      %v1412 = vsub.s32 0, %v1411
      %v1413 = vrot.slane %v1408, %v1412
      %v1415 = vadd.f32 %v1407, %v1413
      %v1416 = vmax.f32 %v1415, 0.0
      %v1417 = vpack.c.bf16 %v1416, %v1416
      %vm1418 = vcmask 519168
      %1419 = vst.msk [vmem:[%s195] sm:$0xf] %vm1418, %v1417
      %p1420 = scmp.lt.s32.totalorder %s15, 1
      %s1421 = scalar_select %p1420, %s15, 1
      %s1422 = smul.addr %s1421, 4
      %s1423 = scalar_lea.vmem %s4, %s1422
      // Predicated region
      $region37: #{videonet_forward.8} parent=35 // pred_check
        %p1424 = pneg %p122
      $region38: #{videonet_forward.8} parent=35 // pred_check_branch
        %1426 = sbr.rel (%p1424) target = $region40
      $region39: #{videonet_forward.8} parent=35 // pred_region
        _
      $region40: #{videonet_forward.8} parent=35 // pred_fallthru
        _
    $region36: #{videonet_forward.8} parent=5 // pred_fallthru
      _
    %p1427 = scmp.le.s32.totalorder 2, %s10
    // Predicated region
    $region41: #{videonet_forward.8} parent=5 // pred_check
      %p1428 = pneg %p1427
    $region42: #{videonet_forward.8} parent=5 // pred_check_branch
      %1430 = sbr.rel (%p1428) target = $region44
    $region43: #{videonet_forward.8} parent=5 // pred_region
      %s1431 = ssub.s32 %s10, 2
      // Predicated region
      $region45: #{videonet_forward.8} parent=43 // pred_check
        %p1432 = pneg %p128
      $region46: #{videonet_forward.8} parent=43 // pred_check_branch
        %1434 = sbr.rel (%p1432) target = $region48
      $region47: #{videonet_forward.8} parent=43 // pred_region
        %p1435 = scmp.lt.s32.totalorder %s16, 1
        %s1436 = scalar_select %p1435, %s16, 1
        %s1437 = smul.addr %s1436, 4
        %s1438 = scalar_lea.vmem %s4, %s1437
      $region48: #{videonet_forward.8} parent=43 // pred_fallthru
        _
    $region44: #{videonet_forward.8} parent=5 // pred_fallthru
      _
  $region6: #{videonet_forward.8} parent=0 // loop_footer
    %s14 = sadd.s32 1, %s10
  $region7: #{videonet_forward.8} parent=0 // loop_footer_branch
    %9 = sbr.rel target = $region3
  $region8: #{videonet_forward.8} parent=0 // loop_exit
    _

// kernel: videonet_forward.9
$region0: #{videonet_forward.9}
  #allocation0 [shape = 'u32[]', space=smem, size = 0x4, offset = 0x4, fixed_abs, tag = 'smem constant byte address 0x4 - core index']
  #allocation1 [shape = 'u32[144,128]{1,0:T(1,128)}', space=vmem, size = 0x12000, scoped, tag = 'internal scratch']
  %s0 = inlined_call_operand.vmem [shape: bf16[2,8,1728], index: 0, kind: input, shape index: {}]
  %s1 = inlined_call_operand.vmem [shape: bf16[1728,64], index: 1, kind: input, shape index: {}]
  %s2 = inlined_call_operand.vmem [shape: f32[1,64], index: 2, kind: input, shape index: {}]
  %s3 = inlined_call_operand.vmem [shape: f32[1,64], index: 3, kind: input, shape index: {}]
  %s4 = inlined_call_operand.vmem [shape: bf16[2,8,64], index: 4, kind: input, shape index: {}]
  %s5 = inlined_call_operand.hbm [shape: f32[2,8,64], index: 5, kind: output, shape index: {}]
  %s6 = sld [smem:[#allocation0]]
  $region53: #{videonet_forward.9} parent=0
    _
  %s8 = ssub.s32 1, %s6
  %s9 = scalar_select 0, %s8, %s6
  $region1: #{videonet_forward.9} parent=0
    #allocation2 [shape = 'u8[8192]{0}', space=vmem, size = 0x2000, scoped, tag = 'output window, operand 0']
    #allocation3 [shape = 's32[2]{0}', space=sflag, size = 0x8, scoped, tag = 'scoped memory for videonet_forward.9']
    %10 = vsyncpa [#allocation3], 0
    %s11 = scalar_lea.sflag [#allocation3], 1
    %12 = vsyncpa %s11, 0
    loop: start=0, step=1, limit=4
    $region2: #{videonet_forward.9} parent=1 // loop_pre_header
      _
    $region3: #{videonet_forward.9} parent=1 // loop_header
      %s14 = sphi 0, %s18
      %p15 = scmp.ge.s32.totalorder %s14, 4
      %s24 = sphi 0, %s26
      %s27 = sphi 0, %s24
      %s28 = sphi 0, %s27
      %s44 = sphi 0, %s28
      %s48 = sphi 0, %s48
      %s50 = sphi 0, %s48
      %s51 = sphi 0, %s50
      %s65 = sphi 0, %s51
      %s69 = sphi 0, %s69
      %s71 = sphi 0, %s69
      %s72 = sphi 0, %s71
      %s86 = sphi 0, %s72
      %s90 = sphi 0, %s90
      %s92 = sphi 0, %s90
      %s93 = sphi 0, %s92
      %s107 = sphi 0, %s93
      %s113 = sphi 0, %s115
      %s116 = sphi 0, %s113
      %s117 = sphi 0, %s116
      %s133 = sphi 0, %s117
      %s139 = sphi 0, %s141
      %s142 = sphi 0, %s139
      %s143 = sphi 0, %s142
      %s159 = sphi 0, %s143
    $region4: #{videonet_forward.9} parent=1 // loop_header_branch
      %17 = sbr.rel (%p15) target = $region8
    $region5: #{videonet_forward.9} parent=1 // loop_body
      %s19 = ssub.s32 %s14, 1
      %s20 = ssub.s32 %s14, 2
      %s21 = sadd.s32 %s14, 1
      %s22 = ssub.s32 %s14, %s21
      %p23 = scmp.eq.s32.totalorder %s22, 0
      %s25 = sadd.s32 %s24, 1
      %s26 = scalar_select %p23, %s24, %s25
      %p29 = pneg %p23
      %p30 = scmp.eq.s32.totalorder %s14, 1
      %p31 = por %p29, %p30
      %p32 = scmp.ne.s32.totalorder %s24, %s27
      %p33 = scmp.eq.s32.totalorder %s14, 0
      %p34 = por %p32, %p33
      %p35 = scmp.ne.s32.totalorder %s24, %s27
      %p36 = scmp.eq.s32.totalorder %s19, 1
      %p37 = por %p35, %p36
      %p38 = scmp.ne.s32.totalorder %s27, %s28
      %p39 = scmp.eq.s32.totalorder %s19, 0
      %p40 = por %p38, %p39
      %p41 = scmp.ne.s32.totalorder %s27, %s28
      %p42 = scmp.eq.s32.totalorder %s20, 1
      %p43 = por %p41, %p42
      %p45 = scmp.ne.s32.totalorder %s28, %s44
      %p46 = scmp.eq.s32.totalorder %s20, 0
      %p47 = por %p45, %p46
      %s49 = sadd.s32 %s48, 1
      %p52 = scmp.eq.s32.totalorder %s14, 1
      %p53 = scmp.ne.s32.totalorder %s48, %s50
      %p54 = scmp.eq.s32.totalorder %s14, 0
      %p55 = por %p53, %p54
      %p56 = scmp.ne.s32.totalorder %s48, %s50
      %p57 = scmp.eq.s32.totalorder %s19, 1
      %p58 = por %p56, %p57
      %p59 = scmp.ne.s32.totalorder %s50, %s51
      %p60 = scmp.eq.s32.totalorder %s19, 0
      %p61 = por %p59, %p60
      %p62 = scmp.ne.s32.totalorder %s50, %s51
      %p63 = scmp.eq.s32.totalorder %s20, 1
      %p64 = por %p62, %p63
      %p66 = scmp.ne.s32.totalorder %s51, %s65
      %p67 = scmp.eq.s32.totalorder %s20, 0
      %p68 = por %p66, %p67
      %s70 = sadd.s32 %s69, 1
      %p73 = scmp.eq.s32.totalorder %s14, 1
      %p74 = scmp.ne.s32.totalorder %s69, %s71
      %p75 = scmp.eq.s32.totalorder %s14, 0
      %p76 = por %p74, %p75
      %p77 = scmp.ne.s32.totalorder %s69, %s71
      %p78 = scmp.eq.s32.totalorder %s19, 1
      %p79 = por %p77, %p78
      %p80 = scmp.ne.s32.totalorder %s71, %s72
      %p81 = scmp.eq.s32.totalorder %s19, 0
      %p82 = por %p80, %p81
      %p83 = scmp.ne.s32.totalorder %s71, %s72
      %p84 = scmp.eq.s32.totalorder %s20, 1
      %p85 = por %p83, %p84
      %p87 = scmp.ne.s32.totalorder %s72, %s86
      %p88 = scmp.eq.s32.totalorder %s20, 0
      %p89 = por %p87, %p88
      %s91 = sadd.s32 %s90, 1
      %p94 = scmp.eq.s32.totalorder %s14, 1
      %p95 = scmp.ne.s32.totalorder %s90, %s92
      %p96 = scmp.eq.s32.totalorder %s14, 0
      %p97 = por %p95, %p96
      %p98 = scmp.ne.s32.totalorder %s90, %s92
      %p99 = scmp.eq.s32.totalorder %s19, 1
      %p100 = por %p98, %p99
      %p101 = scmp.ne.s32.totalorder %s92, %s93
      %p102 = scmp.eq.s32.totalorder %s19, 0
      %p103 = por %p101, %p102
      %p104 = scmp.ne.s32.totalorder %s92, %s93
      %p105 = scmp.eq.s32.totalorder %s20, 1
      %p106 = por %p104, %p105
      %p108 = scmp.ne.s32.totalorder %s93, %s107
      %p109 = scmp.eq.s32.totalorder %s20, 0
      %p110 = por %p108, %p109
      %s111 = ssub.s32 %s14, %s21
      %p112 = scmp.eq.s32.totalorder %s111, 0
      %s114 = sadd.s32 %s113, 1
      %s115 = scalar_select %p112, %s113, %s114
      %p118 = pneg %p112
      %p119 = scmp.eq.s32.totalorder %s14, 1
      %p120 = por %p118, %p119
      %p121 = scmp.ne.s32.totalorder %s113, %s116
      %p122 = scmp.eq.s32.totalorder %s14, 0
      %p123 = por %p121, %p122
      %p124 = scmp.ne.s32.totalorder %s113, %s116
      %p125 = scmp.eq.s32.totalorder %s19, 1
      %p126 = por %p124, %p125
      %p127 = scmp.ne.s32.totalorder %s116, %s117
      %p128 = scmp.eq.s32.totalorder %s19, 0
      %p129 = por %p127, %p128
      %p130 = scmp.ne.s32.totalorder %s116, %s117
      %p131 = scmp.eq.s32.totalorder %s20, 1
      %p132 = por %p130, %p131
      %p134 = scmp.ne.s32.totalorder %s117, %s133
      %p135 = scmp.eq.s32.totalorder %s20, 0
      %p136 = por %p134, %p135
      %s137 = ssub.s32 %s14, %s21
      %p138 = scmp.eq.s32.totalorder %s137, 0
      %s140 = sadd.s32 %s139, 1
      %s141 = scalar_select %p138, %s139, %s140
      %p144 = pneg %p138
      %p145 = scmp.eq.s32.totalorder %s14, 1
      %p146 = por %p144, %p145
      %p147 = scmp.ne.s32.totalorder %s139, %s142
      %p148 = scmp.eq.s32.totalorder %s14, 0
      %p149 = por %p147, %p148
      %p150 = scmp.ne.s32.totalorder %s139, %s142
      %p151 = scmp.eq.s32.totalorder %s19, 1
      %p152 = por %p150, %p151
      %p153 = scmp.ne.s32.totalorder %s142, %s143
      %p154 = scmp.eq.s32.totalorder %s19, 0
      %p155 = por %p153, %p154
      %p156 = scmp.ne.s32.totalorder %s142, %s143
      %p157 = scmp.eq.s32.totalorder %s20, 1
      %p158 = por %p156, %p157
      %p160 = scmp.ne.s32.totalorder %s143, %s159
      %p161 = scmp.eq.s32.totalorder %s20, 0
      %p162 = por %p160, %p161
      %p163 = scmp.le.s32.totalorder 1, %s14
      %p164 = scmp.lt.s32.totalorder %s14, 3
      %p165 = pnand %p163, %p164
      %p166 = pneg %p165
      // Predicated region
      $region9: #{videonet_forward.9} parent=5 // pred_check
        _
      $region10: #{videonet_forward.9} parent=5 // pred_check_branch
        %168 = sbr.rel (%p165) target = $region12
      $region11: #{videonet_forward.9} parent=5 // pred_region
        %s169 = ssub.s32 %s14, 1
        // Predicated region
        $region13: #{videonet_forward.9} parent=11 // pred_check
          %p170 = pneg %p61
        $region14: #{videonet_forward.9} parent=11 // pred_check_branch
          %172 = sbr.rel (%p170) target = $region16
        $region15: #{videonet_forward.9} parent=11 // pred_region
          _
        $region16: #{videonet_forward.9} parent=11 // pred_fallthru
          _
        // Predicated region
        $region17: #{videonet_forward.9} parent=11 // pred_check
          %p173 = pneg %p82
        $region18: #{videonet_forward.9} parent=11 // pred_check_branch
          %175 = sbr.rel (%p173) target = $region20
        $region19: #{videonet_forward.9} parent=11 // pred_region
          _
        $region20: #{videonet_forward.9} parent=11 // pred_fallthru
          _
        // Predicated region
        $region21: #{videonet_forward.9} parent=11 // pred_check
          %p176 = pneg %p103
        $region22: #{videonet_forward.9} parent=11 // pred_check_branch
          %178 = sbr.rel (%p176) target = $region24
        $region23: #{videonet_forward.9} parent=11 // pred_region
          _
        $region24: #{videonet_forward.9} parent=11 // pred_fallthru
          _
      $region12: #{videonet_forward.9} parent=5 // pred_fallthru
        _
      %p179 = scmp.lt.s32.totalorder %s14, 2
      // Predicated region
      $region25: #{videonet_forward.9} parent=5 // pred_check
        %p180 = pneg %p179
      $region26: #{videonet_forward.9} parent=5 // pred_check_branch
        %182 = sbr.rel (%p180) target = $region28
      $region27: #{videonet_forward.9} parent=5 // pred_region
        // Predicated region
        $region29: #{videonet_forward.9} parent=27 // pred_check
          %p183 = pneg %p34
        $region30: #{videonet_forward.9} parent=27 // pred_check_branch
          %185 = sbr.rel (%p183) target = $region32
        $region31: #{videonet_forward.9} parent=27 // pred_region
          %p186 = scmp.lt.s32.totalorder %s14, 1
          %s187 = scalar_select %p186, %s14, 1
          %s188 = smul.addr %s187, 14
          %s189 = smul.addr %s188, 4
          %s190 = scalar_lea.vmem %s0, %s189
        $region32: #{videonet_forward.9} parent=27 // pred_fallthru
          _
        // Predicated region
        $region33: #{videonet_forward.9} parent=27 // pred_check
          %p191 = pneg %p123
        $region34: #{videonet_forward.9} parent=27 // pred_check_branch
          %193 = sbr.rel (%p191) target = $region36
        $region35: #{videonet_forward.9} parent=27 // pred_region
          %p194 = scmp.lt.s32.totalorder %s14, 1
          %s195 = scalar_select %p194, %s14, 1
          %s196 = smul.addr %s195, 4
          %s197 = scalar_lea.vmem %s4, %s196
        $region36: #{videonet_forward.9} parent=27 // pred_fallthru
          _
      $region28: #{videonet_forward.9} parent=5 // pred_fallthru
        _
      %p198 = scmp.le.s32.totalorder 1, %s14
      %p199 = scmp.lt.s32.totalorder %s14, 3
      %p200 = pnand %p198, %p199
      %p201 = pneg %p200
      // Predicated region
      $region37: #{videonet_forward.9} parent=5 // pred_check
        _
      $region38: #{videonet_forward.9} parent=5 // pred_check_branch
        %203 = sbr.rel (%p200) target = $region40
      $region39: #{videonet_forward.9} parent=5 // pred_region
        %s204 = ssub.s32 %s14, 1
        %p205 = scmp.lt.s32.totalorder %s19, 1
        %s206 = scalar_select %p205, %s19, 1
        %s207 = smul.addr %s206, 14
        %s208 = smul.addr %s207, 4
        %s209 = scalar_lea.vmem %s0, %s208
        %p210 = pneg %p40
        %p211 = pneg %p37
        %p212 = pneg %p61
        %p213 = pneg %p58
        %p214 = pneg %p82
        %p215 = pneg %p79
        %p216 = pneg %p103
        %p217 = pneg %p100
        %p218 = scmp.lt.s32.totalorder %s19, 1
        %s219 = scalar_select %p218, %s19, 1
        %s220 = smul.addr %s219, 4
        %s221 = scalar_lea.vmem %s4, %s220
        %p222 = pneg %p129
        %p223 = pneg %p126
        %p224 = pneg %p155
        %p225 = pneg %p152
        %s226 = sand.u32 %s142, 1
        %s227 = scalar_lea.sflag [#allocation3], %s226
        %s228 = sand.u32 %s142, 1
        %s229 = smul.addr %s228, 8
        %s230 = scalar_lea.vmem [#allocation2], %s229
        %p231 = scmp.lt.s32.totalorder %s19, 1
        %s232 = scalar_select %p231, %s19, 1
        %s233 = smul.addr %s232, 14
        %s234 = smul.addr %s233, 4
        %s235 = scalar_lea.vmem %s0, %s234
        %p236 = scmp.lt.s32.totalorder %s19, 1
        %s237 = scalar_select %p236, %s19, 1
        %s238 = smul.addr %s237, 4
        %s239 = scalar_lea.vmem %s4, %s238
        %v241 = vld [vmem:[%s235] sm:$0xff]
        %v242 = vld [vmem:[%s235 + $0x8] sm:$0xff]
        %v243 = vld [vmem:[%s235 + $0x10] sm:$0xff]
        %v244 = vld [vmem:[%s235 + $0x18] sm:$0xff]
        %v245 = vld [vmem:[%s235 + $0x20] sm:$0xff]
        %v246 = vld [vmem:[%s235 + $0x28] sm:$0xff]
        %v247 = vld [vmem:[%s235 + $0x30] sm:$0xff]
        %v248 = vld [vmem:[%s1] sm:$0xf]
        %v249 = vld [vmem:[%s1 + $0x4] sm:$0xf]
        %v250 = vld [vmem:[%s1 + $0x8] sm:$0xf]
        %v251 = vld [vmem:[%s1 + $0xc] sm:$0xf]
        %v252 = vld [vmem:[%s1 + $0x10] sm:$0xf]
        %v253 = vld [vmem:[%s1 + $0x14] sm:$0xf]
        %v254 = vld [vmem:[%s1 + $0x18] sm:$0xf]
        %v255 = vld [vmem:[%s1 + $0x1c] sm:$0xf]
        %v256 = vld [vmem:[%s1 + $0x20] sm:$0xf]
        %v257 = vld [vmem:[%s1 + $0x24] sm:$0xf]
        %v258 = vld [vmem:[%s1 + $0x28] sm:$0xf]
        %v259 = vld [vmem:[%s1 + $0x2c] sm:$0xf]
        %v260 = vld [vmem:[%s1 + $0x30] sm:$0xf]
        %v261 = vld [vmem:[%s1 + $0x34] sm:$0xf]
        %v262 = vld [vmem:[%s1 + $0x38] sm:$0xf]
        %v263 = vld [vmem:[%s1 + $0x3c] sm:$0xf]
        %v264 = vld [vmem:[%s1 + $0x40] sm:$0xf]
        %v265 = vld [vmem:[%s1 + $0x44] sm:$0xf]
        %v266 = vld [vmem:[%s1 + $0x48] sm:$0xf]
        %v267 = vld [vmem:[%s1 + $0x4c] sm:$0xf]
        %v268 = vld [vmem:[%s1 + $0x50] sm:$0xf]
        %v269 = vld [vmem:[%s1 + $0x54] sm:$0xf]
        %v270 = vld [vmem:[%s1 + $0x58] sm:$0xf]
        %v271 = vld [vmem:[%s1 + $0x5c] sm:$0xf]
        %v272 = vld [vmem:[%s1 + $0x60] sm:$0xf]
        %v273 = vld [vmem:[%s1 + $0x64] sm:$0xf]
        %v274 = vld [vmem:[%s1 + $0x68] sm:$0xf]
        %v275 = vld [vmem:[%s1 + $0x6c] sm:$0xf]
        %v276 = vld [vmem:[%s1 + $0x70] sm:$0xf]
        %v277 = vld [vmem:[%s1 + $0x74] sm:$0xf]
        %v278 = vld [vmem:[%s1 + $0x78] sm:$0xf]
        %v279 = vld [vmem:[%s1 + $0x7c] sm:$0xf]
        %v280 = vld [vmem:[%s1 + $0x80] sm:$0xf]
        %v281 = vld [vmem:[%s1 + $0x84] sm:$0xf]
        %v282 = vld [vmem:[%s1 + $0x88] sm:$0xf]
        %v283 = vld [vmem:[%s1 + $0x8c] sm:$0xf]
        %v284 = vld [vmem:[%s1 + $0x90] sm:$0xf]
        %v285 = vld [vmem:[%s1 + $0x94] sm:$0xf]
        %v286 = vld [vmem:[%s1 + $0x98] sm:$0xf]
        %v287 = vld [vmem:[%s1 + $0x9c] sm:$0xf]
        %v288 = vld [vmem:[%s1 + $0xa0] sm:$0xf]
        %v289 = vld [vmem:[%s1 + $0xa4] sm:$0xf]
        %v290 = vld [vmem:[%s1 + $0xa8] sm:$0xf]
        %v291 = vld [vmem:[%s1 + $0xac] sm:$0xf]
        %v292 = vld [vmem:[%s1 + $0xb0] sm:$0xf]
        %v293 = vld [vmem:[%s1 + $0xb4] sm:$0xf]
        %v294 = vld [vmem:[%s1 + $0xb8] sm:$0xf]
        %v295 = vld [vmem:[%s1 + $0xbc] sm:$0xf]
        %v296 = vld [vmem:[%s1 + $0xc0] sm:$0xf]
        %v297 = vld [vmem:[%s1 + $0xc4] sm:$0xf]
        %v298 = vld [vmem:[%s1 + $0xc8] sm:$0xf]
        %v299 = vld [vmem:[%s1 + $0xcc] sm:$0xf]
        %v300 = vld [vmem:[%s1 + $0xd0] sm:$0xf]
        %v301 = vld [vmem:[%s1 + $0xd4] sm:$0xf]
        %v302 = vld [vmem:[%s1 + $0xd8] sm:$0xf]
        %v303 = vld [vmem:[%s1 + $0xdc] sm:$0xf]
        %v304 = vld [vmem:[%s1 + $0xe0] sm:$0xf]
        %v305 = vld [vmem:[%s1 + $0xe4] sm:$0xf]
        %v306 = vld [vmem:[%s1 + $0xe8] sm:$0xf]
        %v307 = vld [vmem:[%s1 + $0xec] sm:$0xf]
        %v308 = vld [vmem:[%s1 + $0xf0] sm:$0xf]
        %v309 = vld [vmem:[%s1 + $0xf4] sm:$0xf]
        %v310 = vld [vmem:[%s1 + $0xf8] sm:$0xf]
        %v311 = vld [vmem:[%s1 + $0xfc] sm:$0xf]
        %v312 = vld [vmem:[%s1 + $0x100] sm:$0xf]
        %v313 = vld [vmem:[%s1 + $0x104] sm:$0xf]
        %v314 = vld [vmem:[%s1 + $0x108] sm:$0xf]
        %v315 = vld [vmem:[%s1 + $0x10c] sm:$0xf]
        %v316 = vld [vmem:[%s1 + $0x110] sm:$0xf]
        %v317 = vld [vmem:[%s1 + $0x114] sm:$0xf]
        %v318 = vld [vmem:[%s1 + $0x118] sm:$0xf]
        %v319 = vld [vmem:[%s1 + $0x11c] sm:$0xf]
        %v320 = vld [vmem:[%s1 + $0x120] sm:$0xf]
        %v321 = vld [vmem:[%s1 + $0x124] sm:$0xf]
        %v322 = vld [vmem:[%s1 + $0x128] sm:$0xf]
        %v323 = vld [vmem:[%s1 + $0x12c] sm:$0xf]
        %v324 = vld [vmem:[%s1 + $0x130] sm:$0xf]
        %v325 = vld [vmem:[%s1 + $0x134] sm:$0xf]
        %v326 = vld [vmem:[%s1 + $0x138] sm:$0xf]
        %v327 = vld [vmem:[%s1 + $0x13c] sm:$0xf]
        %v328 = vld [vmem:[%s1 + $0x140] sm:$0xf]
        %v329 = vld [vmem:[%s1 + $0x144] sm:$0xf]
        %v330 = vld [vmem:[%s1 + $0x148] sm:$0xf]
        %v331 = vld [vmem:[%s1 + $0x14c] sm:$0xf]
        %v332 = vld [vmem:[%s1 + $0x150] sm:$0xf]
        %v333 = vld [vmem:[%s1 + $0x154] sm:$0xf]
        %v334 = vld [vmem:[%s1 + $0x158] sm:$0xf]
        %v335 = vld [vmem:[%s1 + $0x15c] sm:$0xf]
        %v336 = vld [vmem:[%s1 + $0x160] sm:$0xf]
        %v337 = vld [vmem:[%s1 + $0x164] sm:$0xf]
        %v338 = vld [vmem:[%s1 + $0x168] sm:$0xf]
        %v339 = vld [vmem:[%s1 + $0x16c] sm:$0xf]
        %v340 = vld [vmem:[%s1 + $0x170] sm:$0xf]
        %v341 = vld [vmem:[%s1 + $0x174] sm:$0xf]
        %v342 = vld [vmem:[%s1 + $0x178] sm:$0xf]
        %v343 = vld [vmem:[%s1 + $0x17c] sm:$0xf]
        %v344 = vld [vmem:[%s1 + $0x180] sm:$0xf]
        %v345 = vld [vmem:[%s1 + $0x184] sm:$0xf]
        %v346 = vld [vmem:[%s1 + $0x188] sm:$0xf]
        %v347 = vld [vmem:[%s1 + $0x18c] sm:$0xf]
        %v348 = vld [vmem:[%s1 + $0x190] sm:$0xf]
        %v349 = vld [vmem:[%s1 + $0x194] sm:$0xf]
        %v350 = vld [vmem:[%s1 + $0x198] sm:$0xf]
        %v351 = vld [vmem:[%s1 + $0x19c] sm:$0xf]
        %v352 = vld [vmem:[%s1 + $0x1a0] sm:$0xf]
        %v353 = vld [vmem:[%s1 + $0x1a4] sm:$0xf]
        %v354 = vld [vmem:[%s1 + $0x1a8] sm:$0xf]
        %v355 = vld [vmem:[%s1 + $0x1ac] sm:$0xf]
        %v356 = vld [vmem:[%s1 + $0x1b0] sm:$0xf]
        %v357 = vld [vmem:[%s1 + $0x1b4] sm:$0xf]
        %v358 = vld [vmem:[%s1 + $0x1b8] sm:$0xf]
        %v359 = vld [vmem:[%s1 + $0x1bc] sm:$0xf]
        %v360 = vld [vmem:[%s1 + $0x1c0] sm:$0xf]
        %v361 = vld [vmem:[%s1 + $0x1c4] sm:$0xf]
        %v362 = vld [vmem:[%s1 + $0x1c8] sm:$0xf]
        %v363 = vld [vmem:[%s1 + $0x1cc] sm:$0xf]
        %v364 = vld [vmem:[%s1 + $0x1d0] sm:$0xf]
        %v365 = vld [vmem:[%s1 + $0x1d4] sm:$0xf]
        %v366 = vld [vmem:[%s1 + $0x1d8] sm:$0xf]
        %v367 = vld [vmem:[%s1 + $0x1dc] sm:$0xf]
        %v368 = vld [vmem:[%s1 + $0x1e0] sm:$0xf]
        %v369 = vld [vmem:[%s1 + $0x1e4] sm:$0xf]
        %v370 = vld [vmem:[%s1 + $0x1e8] sm:$0xf]
        %v371 = vld [vmem:[%s1 + $0x1ec] sm:$0xf]
        %v372 = vld [vmem:[%s1 + $0x1f0] sm:$0xf]
        %v373 = vld [vmem:[%s1 + $0x1f4] sm:$0xf]
        %v374 = vld [vmem:[%s1 + $0x1f8] sm:$0xf]
        %v375 = vld [vmem:[%s1 + $0x1fc] sm:$0xf]
        %v376 = vld [vmem:[%s1 + $0x200] sm:$0xf]
        %v377 = vld [vmem:[%s1 + $0x204] sm:$0xf]
        %v378 = vld [vmem:[%s1 + $0x208] sm:$0xf]
        %v379 = vld [vmem:[%s1 + $0x20c] sm:$0xf]
        %v380 = vld [vmem:[%s1 + $0x210] sm:$0xf]
        %v381 = vld [vmem:[%s1 + $0x214] sm:$0xf]
        %v382 = vld [vmem:[%s1 + $0x218] sm:$0xf]
        %v383 = vld [vmem:[%s1 + $0x21c] sm:$0xf]
        %v384 = vld [vmem:[%s1 + $0x220] sm:$0xf]
        %v385 = vld [vmem:[%s1 + $0x224] sm:$0xf]
        %v386 = vld [vmem:[%s1 + $0x228] sm:$0xf]
        %v387 = vld [vmem:[%s1 + $0x22c] sm:$0xf]
        %v388 = vld [vmem:[%s1 + $0x230] sm:$0xf]
        %v389 = vld [vmem:[%s1 + $0x234] sm:$0xf]
        %v390 = vld [vmem:[%s1 + $0x238] sm:$0xf]
        %v391 = vld [vmem:[%s1 + $0x23c] sm:$0xf]
        %v392 = vld [vmem:[%s1 + $0x240] sm:$0xf]
        %v393 = vld [vmem:[%s1 + $0x244] sm:$0xf]
        %v394 = vld [vmem:[%s1 + $0x248] sm:$0xf]
        %v395 = vld [vmem:[%s1 + $0x24c] sm:$0xf]
        %v396 = vld [vmem:[%s1 + $0x250] sm:$0xf]
        %v397 = vld [vmem:[%s1 + $0x254] sm:$0xf]
        %v398 = vld [vmem:[%s1 + $0x258] sm:$0xf]
        %v399 = vld [vmem:[%s1 + $0x25c] sm:$0xf]
        %v400 = vld [vmem:[%s1 + $0x260] sm:$0xf]
        %v401 = vld [vmem:[%s1 + $0x264] sm:$0xf]
        %v402 = vld [vmem:[%s1 + $0x268] sm:$0xf]
        %v403 = vld [vmem:[%s1 + $0x26c] sm:$0xf]
        %v404 = vld [vmem:[%s1 + $0x270] sm:$0xf]
        %v405 = vld [vmem:[%s1 + $0x274] sm:$0xf]
        %v406 = vld [vmem:[%s1 + $0x278] sm:$0xf]
        %v407 = vld [vmem:[%s1 + $0x27c] sm:$0xf]
        %v408 = vld [vmem:[%s1 + $0x280] sm:$0xf]
        %v409 = vld [vmem:[%s1 + $0x284] sm:$0xf]
        %v410 = vld [vmem:[%s1 + $0x288] sm:$0xf]
        %v411 = vld [vmem:[%s1 + $0x28c] sm:$0xf]
        %v412 = vld [vmem:[%s1 + $0x290] sm:$0xf]
        %v413 = vld [vmem:[%s1 + $0x294] sm:$0xf]
        %v414 = vld [vmem:[%s1 + $0x298] sm:$0xf]
        %v415 = vld [vmem:[%s1 + $0x29c] sm:$0xf]
        %v416 = vld [vmem:[%s1 + $0x2a0] sm:$0xf]
        %v417 = vld [vmem:[%s1 + $0x2a4] sm:$0xf]
        %v418 = vld [vmem:[%s1 + $0x2a8] sm:$0xf]
        %v419 = vld [vmem:[%s1 + $0x2ac] sm:$0xf]
        %v420 = vld [vmem:[%s1 + $0x2b0] sm:$0xf]
        %v421 = vld [vmem:[%s1 + $0x2b4] sm:$0xf]
        %v422 = vld [vmem:[%s1 + $0x2b8] sm:$0xf]
        %v423 = vld [vmem:[%s1 + $0x2bc] sm:$0xf]
        %v424 = vld [vmem:[%s1 + $0x2c0] sm:$0xf]
        %v425 = vld [vmem:[%s1 + $0x2c4] sm:$0xf]
        %v426 = vld [vmem:[%s1 + $0x2c8] sm:$0xf]
        %v427 = vld [vmem:[%s1 + $0x2cc] sm:$0xf]
        %v428 = vld [vmem:[%s1 + $0x2d0] sm:$0xf]
        %v429 = vld [vmem:[%s1 + $0x2d4] sm:$0xf]
        %v430 = vld [vmem:[%s1 + $0x2d8] sm:$0xf]
        %v431 = vld [vmem:[%s1 + $0x2dc] sm:$0xf]
        %v432 = vld [vmem:[%s1 + $0x2e0] sm:$0xf]
        %v433 = vld [vmem:[%s1 + $0x2e4] sm:$0xf]
        %v434 = vld [vmem:[%s1 + $0x2e8] sm:$0xf]
        %v435 = vld [vmem:[%s1 + $0x2ec] sm:$0xf]
        %v436 = vld [vmem:[%s1 + $0x2f0] sm:$0xf]
        %v437 = vld [vmem:[%s1 + $0x2f4] sm:$0xf]
        %v438 = vld [vmem:[%s1 + $0x2f8] sm:$0xf]
        %v439 = vld [vmem:[%s1 + $0x2fc] sm:$0xf]
        %v440 = vld [vmem:[%s1 + $0x300] sm:$0xf]
        %v441 = vld [vmem:[%s1 + $0x304] sm:$0xf]
        %v442 = vld [vmem:[%s1 + $0x308] sm:$0xf]
        %v443 = vld [vmem:[%s1 + $0x30c] sm:$0xf]
        %v444 = vld [vmem:[%s1 + $0x310] sm:$0xf]
        %v445 = vld [vmem:[%s1 + $0x314] sm:$0xf]
        %v446 = vld [vmem:[%s1 + $0x318] sm:$0xf]
        %v447 = vld [vmem:[%s1 + $0x31c] sm:$0xf]
        %v448 = vld [vmem:[%s1 + $0x320] sm:$0xf]
        %v449 = vld [vmem:[%s1 + $0x324] sm:$0xf]
        %v450 = vld [vmem:[%s1 + $0x328] sm:$0xf]
        %v451 = vld [vmem:[%s1 + $0x32c] sm:$0xf]
        %v452 = vld [vmem:[%s1 + $0x330] sm:$0xf]
        %v453 = vld [vmem:[%s1 + $0x334] sm:$0xf]
        %v454 = vld [vmem:[%s1 + $0x338] sm:$0xf]
        %v455 = vld [vmem:[%s1 + $0x33c] sm:$0xf]
        %v456 = vld [vmem:[%s1 + $0x340] sm:$0xf]
        %v457 = vld [vmem:[%s1 + $0x344] sm:$0xf]
        %v458 = vld [vmem:[%s1 + $0x348] sm:$0xf]
        %v459 = vld [vmem:[%s1 + $0x34c] sm:$0xf]
        %v460 = vld [vmem:[%s1 + $0x350] sm:$0xf]
        %v461 = vld [vmem:[%s1 + $0x354] sm:$0xf]
        %v462 = vld [vmem:[%s1 + $0x358] sm:$0xf]
        %v463 = vld [vmem:[%s1 + $0x35c] sm:$0xf]
        %v464 = vld [vmem:[%s239] sm:$0xf]
        %v465 = vunpack.c.l.bf16 %v464
        %v473 = vunpack.c.l.b16 %v241
        %v474 = vunpack.c.h.b16 %v241
        %v475 = vunpack.c.l.b16 %v242
        %v476 = vunpack.c.h.b16 %v242
        %v477 = vunpack.c.l.b16 %v243
        %v478 = vunpack.c.h.b16 %v243
        %v479 = vunpack.c.l.b16 %v244
        %v480 = vunpack.c.h.b16 %v244
        %v481 = vunpack.c.l.b16 %v245
        %v482 = vunpack.c.h.b16 %v245
        %v483 = vunpack.c.l.b16 %v246
        %v484 = vunpack.c.h.b16 %v246
        %v485 = vunpack.c.l.b16 %v247
        %v486 = vunpack.c.h.b16 %v247
        %v487 = vpack.c.b16 %v473, %v473
        %v488 = vpack.c.b16 %v474, %v474
        %v489 = vpack.c.b16 %v475, %v475
        %v490 = vpack.c.b16 %v476, %v476
        %v491 = vpack.c.b16 %v477, %v477
        %v492 = vpack.c.b16 %v478, %v478
        %v493 = vpack.c.b16 %v479, %v479
        %v494 = vpack.c.b16 %v480, %v480
        %v495 = vpack.c.b16 %v481, %v481
        %v496 = vpack.c.b16 %v482, %v482
        %v497 = vpack.c.b16 %v483, %v483
        %v498 = vpack.c.b16 %v484, %v484
        %v499 = vpack.c.b16 %v485, %v485
        %v500 = vpack.c.b16 %v486, %v486
        %v730 = vunpack.c.l.b16 %v248
        %v731 = vunpack.c.l.b16 %v249
        %v732 = vunpack.c.l.b16 %v250
        %v733 = vunpack.c.l.b16 %v251
        %v734 = vunpack.c.l.b16 %v252
        %v735 = vunpack.c.l.b16 %v253
        %v736 = vunpack.c.l.b16 %v254
        %v737 = vunpack.c.l.b16 %v255
        %v738 = vunpack.c.l.b16 %v256
        %v739 = vunpack.c.l.b16 %v257
        %v740 = vunpack.c.l.b16 %v258
        %v741 = vunpack.c.l.b16 %v259
        %v742 = vunpack.c.l.b16 %v260
        %v743 = vunpack.c.l.b16 %v261
        %v744 = vunpack.c.l.b16 %v262
        %v745 = vunpack.c.l.b16 %v263
        %v746 = vunpack.c.l.b16 %v264
        %v747 = vunpack.c.l.b16 %v265
        %v748 = vunpack.c.l.b16 %v266
        %v749 = vunpack.c.l.b16 %v267
        %v750 = vunpack.c.l.b16 %v268
        %v751 = vunpack.c.l.b16 %v269
        %v752 = vunpack.c.l.b16 %v270
        %v753 = vunpack.c.l.b16 %v271
        %v754 = vunpack.c.l.b16 %v272
        %v755 = vunpack.c.l.b16 %v273
        %v756 = vunpack.c.l.b16 %v274
        %v757 = vunpack.c.l.b16 %v275
        %v758 = vunpack.c.l.b16 %v276
        %v759 = vunpack.c.l.b16 %v277
        %v760 = vunpack.c.l.b16 %v278
        %v761 = vunpack.c.l.b16 %v279
        %v762 = vunpack.c.l.b16 %v280
        %v763 = vunpack.c.l.b16 %v281
        %v764 = vunpack.c.l.b16 %v282
        %v765 = vunpack.c.l.b16 %v283
        %v766 = vunpack.c.l.b16 %v284
        %v767 = vunpack.c.l.b16 %v285
        %v768 = vunpack.c.l.b16 %v286
        %v769 = vunpack.c.l.b16 %v287
        %v770 = vunpack.c.l.b16 %v288
        %v771 = vunpack.c.l.b16 %v289
        %v772 = vunpack.c.l.b16 %v290
        %v773 = vunpack.c.l.b16 %v291
        %v774 = vunpack.c.l.b16 %v292
        %v775 = vunpack.c.l.b16 %v293
        %v776 = vunpack.c.l.b16 %v294
        %v777 = vunpack.c.l.b16 %v295
        %v778 = vunpack.c.l.b16 %v296
        %v779 = vunpack.c.l.b16 %v297
        %v780 = vunpack.c.l.b16 %v298
        %v781 = vunpack.c.l.b16 %v299
        %v782 = vunpack.c.l.b16 %v300
        %v783 = vunpack.c.l.b16 %v301
        %v784 = vunpack.c.l.b16 %v302
        %v785 = vunpack.c.l.b16 %v303
        %v786 = vunpack.c.l.b16 %v304
        %v787 = vunpack.c.l.b16 %v305
        %v788 = vunpack.c.l.b16 %v306
        %v789 = vunpack.c.l.b16 %v307
        %v790 = vunpack.c.l.b16 %v308
        %v791 = vunpack.c.l.b16 %v309
        %v792 = vunpack.c.l.b16 %v310
        %v793 = vunpack.c.l.b16 %v311
        %v794 = vunpack.c.l.b16 %v312
        %v795 = vunpack.c.l.b16 %v313
        %v796 = vunpack.c.l.b16 %v314
        %v797 = vunpack.c.l.b16 %v315
        %v798 = vunpack.c.l.b16 %v316
        %v799 = vunpack.c.l.b16 %v317
        %v800 = vunpack.c.l.b16 %v318
        %v801 = vunpack.c.l.b16 %v319
        %v802 = vunpack.c.l.b16 %v320
        %v803 = vunpack.c.l.b16 %v321
        %v804 = vunpack.c.l.b16 %v322
        %v805 = vunpack.c.l.b16 %v323
        %v806 = vunpack.c.l.b16 %v324
        %v807 = vunpack.c.l.b16 %v325
        %v808 = vunpack.c.l.b16 %v326
        %v809 = vunpack.c.l.b16 %v327
        %v810 = vunpack.c.l.b16 %v328
        %v811 = vunpack.c.l.b16 %v329
        %v812 = vunpack.c.l.b16 %v330
        %v813 = vunpack.c.l.b16 %v331
        %v814 = vunpack.c.l.b16 %v332
        %v815 = vunpack.c.l.b16 %v333
        %v816 = vunpack.c.l.b16 %v334
        %v817 = vunpack.c.l.b16 %v335
        %v818 = vunpack.c.l.b16 %v336
        %v819 = vunpack.c.l.b16 %v337
        %v820 = vunpack.c.l.b16 %v338
        %v821 = vunpack.c.l.b16 %v339
        %v822 = vunpack.c.l.b16 %v340
        %v823 = vunpack.c.l.b16 %v341
        %v824 = vunpack.c.l.b16 %v342
        %v825 = vunpack.c.l.b16 %v343
        %v826 = vunpack.c.l.b16 %v344
        %v827 = vunpack.c.l.b16 %v345
        %v828 = vunpack.c.l.b16 %v346
        %v829 = vunpack.c.l.b16 %v347
        %v830 = vunpack.c.l.b16 %v348
        %v831 = vunpack.c.l.b16 %v349
        %v832 = vunpack.c.l.b16 %v350
        %v833 = vunpack.c.l.b16 %v351
        %v834 = vunpack.c.l.b16 %v352
        %v835 = vunpack.c.l.b16 %v353
        %v836 = vunpack.c.l.b16 %v354
        %v837 = vunpack.c.l.b16 %v355
        %v838 = vunpack.c.l.b16 %v356
        %v839 = vunpack.c.l.b16 %v357
        %v840 = vunpack.c.l.b16 %v358
        %v841 = vunpack.c.l.b16 %v359
        %v842 = vunpack.c.l.b16 %v360
        %v843 = vunpack.c.l.b16 %v361
        %v844 = vunpack.c.l.b16 %v362
        %v845 = vunpack.c.l.b16 %v363
        %v846 = vunpack.c.l.b16 %v364
        %v847 = vunpack.c.l.b16 %v365
        %v848 = vunpack.c.l.b16 %v366
        %v849 = vunpack.c.l.b16 %v367
        %v850 = vunpack.c.l.b16 %v368
        %v851 = vunpack.c.l.b16 %v369
        %v852 = vunpack.c.l.b16 %v370
        %v853 = vunpack.c.l.b16 %v371
        %v854 = vunpack.c.l.b16 %v372
        %v855 = vunpack.c.l.b16 %v373
        %v856 = vunpack.c.l.b16 %v374
        %v857 = vunpack.c.l.b16 %v375
        %v858 = vunpack.c.l.b16 %v376
        %v859 = vunpack.c.l.b16 %v377
        %v860 = vunpack.c.l.b16 %v378
        %v861 = vunpack.c.l.b16 %v379
        %v862 = vunpack.c.l.b16 %v380
        %v863 = vunpack.c.l.b16 %v381
        %v864 = vunpack.c.l.b16 %v382
        %v865 = vunpack.c.l.b16 %v383
        %v866 = vunpack.c.l.b16 %v384
        %v867 = vunpack.c.l.b16 %v385
        %v868 = vunpack.c.l.b16 %v386
        %v869 = vunpack.c.l.b16 %v387
        %v870 = vunpack.c.l.b16 %v388
        %v871 = vunpack.c.l.b16 %v389
        %v872 = vunpack.c.l.b16 %v390
        %v873 = vunpack.c.l.b16 %v391
        %v874 = vunpack.c.l.b16 %v392
        %v875 = vunpack.c.l.b16 %v393
        %v876 = vunpack.c.l.b16 %v394
        %v877 = vunpack.c.l.b16 %v395
        %v878 = vunpack.c.l.b16 %v396
        %v879 = vunpack.c.l.b16 %v397
        %v880 = vunpack.c.l.b16 %v398
        %v881 = vunpack.c.l.b16 %v399
        %v882 = vunpack.c.l.b16 %v400
        %v883 = vunpack.c.l.b16 %v401
        %v884 = vunpack.c.l.b16 %v402
        %v885 = vunpack.c.l.b16 %v403
        %v886 = vunpack.c.l.b16 %v404
        %v887 = vunpack.c.l.b16 %v405
        %v888 = vunpack.c.l.b16 %v406
        %v889 = vunpack.c.l.b16 %v407
        %v890 = vunpack.c.l.b16 %v408
        %v891 = vunpack.c.l.b16 %v409
        %v892 = vunpack.c.l.b16 %v410
        %v893 = vunpack.c.l.b16 %v411
        %v894 = vunpack.c.l.b16 %v412
        %v895 = vunpack.c.l.b16 %v413
        %v896 = vunpack.c.l.b16 %v414
        %v897 = vunpack.c.l.b16 %v415
        %v898 = vunpack.c.l.b16 %v416
        %v899 = vunpack.c.l.b16 %v417
        %v900 = vunpack.c.l.b16 %v418
        %v901 = vunpack.c.l.b16 %v419
        %v902 = vunpack.c.l.b16 %v420
        %v903 = vunpack.c.l.b16 %v421
        %v904 = vunpack.c.l.b16 %v422
        %v905 = vunpack.c.l.b16 %v423
        %v906 = vunpack.c.l.b16 %v424
        %v907 = vunpack.c.l.b16 %v425
        %v908 = vunpack.c.l.b16 %v426
        %v909 = vunpack.c.l.b16 %v427
        %v910 = vunpack.c.l.b16 %v428
        %v911 = vunpack.c.l.b16 %v429
        %v912 = vunpack.c.l.b16 %v430
        %v913 = vunpack.c.l.b16 %v431
        %v914 = vunpack.c.l.b16 %v432
        %v915 = vunpack.c.l.b16 %v433
        %v916 = vunpack.c.l.b16 %v434
        %v917 = vunpack.c.l.b16 %v435
        %v918 = vunpack.c.l.b16 %v436
        %v919 = vunpack.c.l.b16 %v437
        %v920 = vunpack.c.l.b16 %v438
        %v921 = vunpack.c.l.b16 %v439
        %v922 = vunpack.c.l.b16 %v440
        %v923 = vunpack.c.l.b16 %v441
        %v924 = vunpack.c.l.b16 %v442
        %v925 = vunpack.c.l.b16 %v443
        %v926 = vunpack.c.l.b16 %v444
        %v927 = vunpack.c.l.b16 %v445
        %v928 = vunpack.c.l.b16 %v446
        %v929 = vunpack.c.l.b16 %v447
        %v930 = vunpack.c.l.b16 %v448
        %v931 = vunpack.c.l.b16 %v449
        %v932 = vunpack.c.l.b16 %v450
        %v933 = vunpack.c.l.b16 %v451
        %v934 = vunpack.c.l.b16 %v452
        %v935 = vunpack.c.l.b16 %v453
        %v936 = vunpack.c.l.b16 %v454
        %v937 = vunpack.c.l.b16 %v455
        %v938 = vunpack.c.l.b16 %v456
        %v939 = vunpack.c.l.b16 %v457
        %v940 = vunpack.c.l.b16 %v458
        %v941 = vunpack.c.l.b16 %v459
        %v942 = vunpack.c.l.b16 %v460
        %v943 = vunpack.c.l.b16 %v461
        %v944 = vunpack.c.l.b16 %v462
        %v945 = vunpack.c.l.b16 %v463
        %v946 = vpack.c.b16 %v731, %v730
        %v947 = vpack.c.b16 %v733, %v732
        %v948 = vpack.c.b16 %v735, %v734
        %v949 = vpack.c.b16 %v737, %v736
        %v950 = vpack.c.b16 %v739, %v738
        %v951 = vpack.c.b16 %v741, %v740
        %v952 = vpack.c.b16 %v743, %v742
        %v953 = vpack.c.b16 %v745, %v744
        %v954 = vpack.c.b16 %v747, %v746
        %v955 = vpack.c.b16 %v749, %v748
        %v956 = vpack.c.b16 %v751, %v750
        %v957 = vpack.c.b16 %v753, %v752
        %v958 = vpack.c.b16 %v755, %v754
        %v959 = vpack.c.b16 %v757, %v756
        %v960 = vpack.c.b16 %v759, %v758
        %v961 = vpack.c.b16 %v761, %v760
        %v962 = vpack.c.b16 %v763, %v762
        %v963 = vpack.c.b16 %v765, %v764
        %v964 = vpack.c.b16 %v767, %v766
        %v965 = vpack.c.b16 %v769, %v768
        %v966 = vpack.c.b16 %v771, %v770
        %v967 = vpack.c.b16 %v773, %v772
        %v968 = vpack.c.b16 %v775, %v774
        %v969 = vpack.c.b16 %v777, %v776
        %v970 = vpack.c.b16 %v779, %v778
        %v971 = vpack.c.b16 %v781, %v780
        %v972 = vpack.c.b16 %v783, %v782
        %v973 = vpack.c.b16 %v785, %v784
        %v974 = vpack.c.b16 %v787, %v786
        %v975 = vpack.c.b16 %v789, %v788
        %v976 = vpack.c.b16 %v791, %v790
        %v977 = vpack.c.b16 %v793, %v792
        %v978 = vpack.c.b16 %v795, %v794
        %v979 = vpack.c.b16 %v797, %v796
        %v980 = vpack.c.b16 %v799, %v798
        %v981 = vpack.c.b16 %v801, %v800
        %v982 = vpack.c.b16 %v803, %v802
        %v983 = vpack.c.b16 %v805, %v804
        %v984 = vpack.c.b16 %v807, %v806
        %v985 = vpack.c.b16 %v809, %v808
        %v986 = vpack.c.b16 %v811, %v810
        %v987 = vpack.c.b16 %v813, %v812
        %v988 = vpack.c.b16 %v815, %v814
        %v989 = vpack.c.b16 %v817, %v816
        %v990 = vpack.c.b16 %v819, %v818
        %v991 = vpack.c.b16 %v821, %v820
        %v992 = vpack.c.b16 %v823, %v822
        %v993 = vpack.c.b16 %v825, %v824
        %v994 = vpack.c.b16 %v827, %v826
        %v995 = vpack.c.b16 %v829, %v828
        %v996 = vpack.c.b16 %v831, %v830
        %v997 = vpack.c.b16 %v833, %v832
        %v998 = vpack.c.b16 %v835, %v834
        %v999 = vpack.c.b16 %v837, %v836
        %v1000 = vpack.c.b16 %v839, %v838
        %v1001 = vpack.c.b16 %v841, %v840
        %v1002 = vpack.c.b16 %v843, %v842
        %v1003 = vpack.c.b16 %v845, %v844
        %v1004 = vpack.c.b16 %v847, %v846
        %v1005 = vpack.c.b16 %v849, %v848
        %v1006 = vpack.c.b16 %v851, %v850
        %v1007 = vpack.c.b16 %v853, %v852
        %v1008 = vpack.c.b16 %v855, %v854
        %v1009 = vpack.c.b16 %v857, %v856
        %v1010 = vpack.c.b16 %v859, %v858
        %v1011 = vpack.c.b16 %v861, %v860
        %v1012 = vpack.c.b16 %v863, %v862
        %v1013 = vpack.c.b16 %v865, %v864
        %v1014 = vpack.c.b16 %v867, %v866
        %v1015 = vpack.c.b16 %v869, %v868
        %v1016 = vpack.c.b16 %v871, %v870
        %v1017 = vpack.c.b16 %v873, %v872
        %v1018 = vpack.c.b16 %v875, %v874
        %v1019 = vpack.c.b16 %v877, %v876
        %v1020 = vpack.c.b16 %v879, %v878
        %v1021 = vpack.c.b16 %v881, %v880
        %v1022 = vpack.c.b16 %v883, %v882
        %v1023 = vpack.c.b16 %v885, %v884
        %v1024 = vpack.c.b16 %v887, %v886
        %v1025 = vpack.c.b16 %v889, %v888
        %v1026 = vpack.c.b16 %v891, %v890
        %v1027 = vpack.c.b16 %v893, %v892
        %v1028 = vpack.c.b16 %v895, %v894
        %v1029 = vpack.c.b16 %v897, %v896
        %v1030 = vpack.c.b16 %v899, %v898
        %v1031 = vpack.c.b16 %v901, %v900
        %v1032 = vpack.c.b16 %v903, %v902
        %v1033 = vpack.c.b16 %v905, %v904
        %v1034 = vpack.c.b16 %v907, %v906
        %v1035 = vpack.c.b16 %v909, %v908
        %v1036 = vpack.c.b16 %v911, %v910
        %v1037 = vpack.c.b16 %v913, %v912
        %v1038 = vpack.c.b16 %v915, %v914
        %v1039 = vpack.c.b16 %v917, %v916
        %v1040 = vpack.c.b16 %v919, %v918
        %v1041 = vpack.c.b16 %v921, %v920
        %v1042 = vpack.c.b16 %v923, %v922
        %v1043 = vpack.c.b16 %v925, %v924
        %v1044 = vpack.c.b16 %v927, %v926
        %v1045 = vpack.c.b16 %v929, %v928
        %v1046 = vpack.c.b16 %v931, %v930
        %v1047 = vpack.c.b16 %v933, %v932
        %v1048 = vpack.c.b16 %v935, %v934
        %v1049 = vpack.c.b16 %v937, %v936
        %v1050 = vpack.c.b16 %v939, %v938
        %v1051 = vpack.c.b16 %v941, %v940
        %v1052 = vpack.c.b16 %v943, %v942
        %v1053 = vpack.c.b16 %v945, %v944
        %vm1162 = vcmask 523264
        %v1164 = vsel %vm1162, %v500, 0
        %1166 = vmatprep.subr.bf16.mxu0 0
        %1167 = vmatpush1.bf16.msra.mxu0 %v946
        %1168 = vmatprep.subr.bf16.mxu0 0
        %1169 = vmatpush1.bf16.msra.mxu0 %v947
        %1170 = vmatprep.subr.bf16.mxu0 0
        %1171 = vmatpush1.bf16.msra.mxu0 %v948
        %1172 = vmatprep.subr.bf16.mxu0 0
        %1173 = vmatpush1.bf16.msra.mxu0 %v949
        %1174 = vmatprep.subr.bf16.mxu0 0
        %1175 = vmatpush1.bf16.msra.mxu0 %v950
        %1176 = vmatprep.subr.bf16.mxu0 0
        %1177 = vmatpush1.bf16.msra.mxu0 %v951
        %1178 = vmatprep.subr.bf16.mxu0 0
        %1179 = vmatpush1.bf16.msra.mxu0 %v952
        %1180 = vmatprep.subr.bf16.mxu0 0
        %1181 = vmatpush1.bf16.msra.mxu0 %v953
        %1182 = vmatprep.subr.bf16.mxu0 0
        %1183 = vmatpush1.bf16.msra.mxu0 %v954
        %1184 = vmatprep.subr.bf16.mxu0 0
        %1185 = vmatpush1.bf16.msra.mxu0 %v955
        %1186 = vmatprep.subr.bf16.mxu0 0
        %1187 = vmatpush1.bf16.msra.mxu0 %v956
        %1188 = vmatprep.subr.bf16.mxu0 0
        %1189 = vmatpush1.bf16.msra.mxu0 %v957
        %1190 = vmatprep.subr.bf16.mxu0 0
        %1191 = vmatpush1.bf16.msra.mxu0 %v958
        %1192 = vmatprep.subr.bf16.mxu0 0
        %1193 = vmatpush1.bf16.msra.mxu0 %v959
        %1194 = vmatprep.subr.bf16.mxu0 0
        %1195 = vmatpush1.bf16.msra.mxu0 %v960
        %1196 = vmatprep.subr.bf16.mxu0 0
        %1197 = vmatpush1.bf16.msra.mxu0 %v961
        %1198 = vmatprep.mubr.bf16.mxu0 %v488
        %1199 = vmatmul.mubr.bf16.gmra.mrb[0].mxu0 %v487
        %v1200 = vpop.f32.mrb[0].mxu0
        %v1201 = vadd.f32 %v465, %v1200
        %v1202 = vpop.f32.mrb[0].mxu0
        %v1203 = vpop.f32.mrb[0].mxu0
        %v1204 = vpop.f32.mrb[0].mxu0
        %1205 = vdwg.mxu0
        %1206 = vmatprep.subr.bf16.mxu0 0
        %1207 = vmatpush1.bf16.msra.mxu0 %v962
        %1208 = vmatprep.subr.bf16.mxu0 0
        %1209 = vmatpush1.bf16.msra.mxu0 %v963
        %1210 = vmatprep.subr.bf16.mxu0 0
        %1211 = vmatpush1.bf16.msra.mxu0 %v964
        %1212 = vmatprep.subr.bf16.mxu0 0
        %1213 = vmatpush1.bf16.msra.mxu0 %v965
        %1214 = vmatprep.subr.bf16.mxu0 0
        %1215 = vmatpush1.bf16.msra.mxu0 %v966
        %1216 = vmatprep.subr.bf16.mxu0 0
        %1217 = vmatpush1.bf16.msra.mxu0 %v967
        %1218 = vmatprep.subr.bf16.mxu0 0
        %1219 = vmatpush1.bf16.msra.mxu0 %v968
        %1220 = vmatprep.subr.bf16.mxu0 0
        %1221 = vmatpush1.bf16.msra.mxu0 %v969
        %1222 = vmatprep.subr.bf16.mxu0 0
        %1223 = vmatpush1.bf16.msra.mxu0 %v970
        %1224 = vmatprep.subr.bf16.mxu0 0
        %1225 = vmatpush1.bf16.msra.mxu0 %v971
        %1226 = vmatprep.subr.bf16.mxu0 0
        %1227 = vmatpush1.bf16.msra.mxu0 %v972
        %1228 = vmatprep.subr.bf16.mxu0 0
        %1229 = vmatpush1.bf16.msra.mxu0 %v973
        %1230 = vmatprep.subr.bf16.mxu0 0
        %1231 = vmatpush1.bf16.msra.mxu0 %v974
        %1232 = vmatprep.subr.bf16.mxu0 0
        %1233 = vmatpush1.bf16.msra.mxu0 %v975
        %1234 = vmatprep.subr.bf16.mxu0 0
        %1235 = vmatpush1.bf16.msra.mxu0 %v976
        %1236 = vmatprep.subr.bf16.mxu0 0
        %1237 = vmatpush1.bf16.msra.mxu0 %v977
        %1238 = vmatprep.mubr.bf16.mxu0 %v490
        %1239 = vmatmul.mubr.bf16.gmra.mrb[0].mxu0 %v489
        %v1240 = vpop.f32.mrb[0].mxu0
        %v1241 = vadd.f32 %v1201, %v1240
        %v1242 = vpop.f32.mrb[0].mxu0
        %v1243 = vpop.f32.mrb[0].mxu0
        %v1244 = vpop.f32.mrb[0].mxu0
        %1245 = vdwg.mxu0
        %1246 = vmatprep.subr.bf16.mxu0 0
        %1247 = vmatpush1.bf16.msra.mxu0 %v978
        %1248 = vmatprep.subr.bf16.mxu0 0
        %1249 = vmatpush1.bf16.msra.mxu0 %v979
        %1250 = vmatprep.subr.bf16.mxu0 0
        %1251 = vmatpush1.bf16.msra.mxu0 %v980
        %1252 = vmatprep.subr.bf16.mxu0 0
        %1253 = vmatpush1.bf16.msra.mxu0 %v981
        %1254 = vmatprep.subr.bf16.mxu0 0
        %1255 = vmatpush1.bf16.msra.mxu0 %v982
        %1256 = vmatprep.subr.bf16.mxu0 0
        %1257 = vmatpush1.bf16.msra.mxu0 %v983
        %1258 = vmatprep.subr.bf16.mxu0 0
        %1259 = vmatpush1.bf16.msra.mxu0 %v984
        %1260 = vmatprep.subr.bf16.mxu0 0
        %1261 = vmatpush1.bf16.msra.mxu0 %v985
        %1262 = vmatprep.subr.bf16.mxu0 0
        %1263 = vmatpush1.bf16.msra.mxu0 %v986
        %1264 = vmatprep.subr.bf16.mxu0 0
        %1265 = vmatpush1.bf16.msra.mxu0 %v987
        %1266 = vmatprep.subr.bf16.mxu0 0
        %1267 = vmatpush1.bf16.msra.mxu0 %v988
        %1268 = vmatprep.subr.bf16.mxu0 0
        %1269 = vmatpush1.bf16.msra.mxu0 %v989
        %1270 = vmatprep.subr.bf16.mxu0 0
        %1271 = vmatpush1.bf16.msra.mxu0 %v990
        %1272 = vmatprep.subr.bf16.mxu0 0
        %1273 = vmatpush1.bf16.msra.mxu0 %v991
        %1274 = vmatprep.subr.bf16.mxu0 0
        %1275 = vmatpush1.bf16.msra.mxu0 %v992
        %1276 = vmatprep.subr.bf16.mxu0 0
        %1277 = vmatpush1.bf16.msra.mxu0 %v993
        %1278 = vmatprep.mubr.bf16.mxu0 %v492
        %1279 = vmatmul.mubr.bf16.gmra.mrb[0].mxu0 %v491
        %v1280 = vpop.f32.mrb[0].mxu0
        %v1281 = vadd.f32 %v1241, %v1280
        %v1282 = vpop.f32.mrb[0].mxu0
        %v1283 = vpop.f32.mrb[0].mxu0
        %v1284 = vpop.f32.mrb[0].mxu0
        %1285 = vdwg.mxu0
        %1286 = vmatprep.subr.bf16.mxu0 0
        %1287 = vmatpush1.bf16.msra.mxu0 %v994
        %1288 = vmatprep.subr.bf16.mxu0 0
        %1289 = vmatpush1.bf16.msra.mxu0 %v995
        %1290 = vmatprep.subr.bf16.mxu0 0
        %1291 = vmatpush1.bf16.msra.mxu0 %v996
        %1292 = vmatprep.subr.bf16.mxu0 0
        %1293 = vmatpush1.bf16.msra.mxu0 %v997
        %1294 = vmatprep.subr.bf16.mxu0 0
        %1295 = vmatpush1.bf16.msra.mxu0 %v998
        %1296 = vmatprep.subr.bf16.mxu0 0
        %1297 = vmatpush1.bf16.msra.mxu0 %v999
        %1298 = vmatprep.subr.bf16.mxu0 0
        %1299 = vmatpush1.bf16.msra.mxu0 %v1000
        %1300 = vmatprep.subr.bf16.mxu0 0
        %1301 = vmatpush1.bf16.msra.mxu0 %v1001
        %1302 = vmatprep.subr.bf16.mxu0 0
        %1303 = vmatpush1.bf16.msra.mxu0 %v1002
        %1304 = vmatprep.subr.bf16.mxu0 0
        %1305 = vmatpush1.bf16.msra.mxu0 %v1003
        %1306 = vmatprep.subr.bf16.mxu0 0
        %1307 = vmatpush1.bf16.msra.mxu0 %v1004
        %1308 = vmatprep.subr.bf16.mxu0 0
        %1309 = vmatpush1.bf16.msra.mxu0 %v1005
        %1310 = vmatprep.subr.bf16.mxu0 0
        %1311 = vmatpush1.bf16.msra.mxu0 %v1006
        %1312 = vmatprep.subr.bf16.mxu0 0
        %1313 = vmatpush1.bf16.msra.mxu0 %v1007
        %1314 = vmatprep.subr.bf16.mxu0 0
        %1315 = vmatpush1.bf16.msra.mxu0 %v1008
        %1316 = vmatprep.subr.bf16.mxu0 0
        %1317 = vmatpush1.bf16.msra.mxu0 %v1009
        %1318 = vmatprep.mubr.bf16.mxu0 %v494
        %1319 = vmatmul.mubr.bf16.gmra.mrb[0].mxu0 %v493
        %v1320 = vpop.f32.mrb[0].mxu0
        %v1321 = vadd.f32 %v1281, %v1320
        %v1322 = vpop.f32.mrb[0].mxu0
        %v1323 = vpop.f32.mrb[0].mxu0
        %v1324 = vpop.f32.mrb[0].mxu0
        %1325 = vdwg.mxu0
        %1326 = vmatprep.subr.bf16.mxu0 0
        %1327 = vmatpush1.bf16.msra.mxu0 %v1010
        %1328 = vmatprep.subr.bf16.mxu0 0
        %1329 = vmatpush1.bf16.msra.mxu0 %v1011
        %1330 = vmatprep.subr.bf16.mxu0 0
        %1331 = vmatpush1.bf16.msra.mxu0 %v1012
        %1332 = vmatprep.subr.bf16.mxu0 0
        %1333 = vmatpush1.bf16.msra.mxu0 %v1013
        %1334 = vmatprep.subr.bf16.mxu0 0
        %1335 = vmatpush1.bf16.msra.mxu0 %v1014
        %1336 = vmatprep.subr.bf16.mxu0 0
        %1337 = vmatpush1.bf16.msra.mxu0 %v1015
        %1338 = vmatprep.subr.bf16.mxu0 0
        %1339 = vmatpush1.bf16.msra.mxu0 %v1016
        %1340 = vmatprep.subr.bf16.mxu0 0
        %1341 = vmatpush1.bf16.msra.mxu0 %v1017
        %1342 = vmatprep.subr.bf16.mxu0 0
        %1343 = vmatpush1.bf16.msra.mxu0 %v1018
        %1344 = vmatprep.subr.bf16.mxu0 0
        %1345 = vmatpush1.bf16.msra.mxu0 %v1019
        %1346 = vmatprep.subr.bf16.mxu0 0
        %1347 = vmatpush1.bf16.msra.mxu0 %v1020
        %1348 = vmatprep.subr.bf16.mxu0 0
        %1349 = vmatpush1.bf16.msra.mxu0 %v1021
        %1350 = vmatprep.subr.bf16.mxu0 0
        %1351 = vmatpush1.bf16.msra.mxu0 %v1022
        %1352 = vmatprep.subr.bf16.mxu0 0
        %1353 = vmatpush1.bf16.msra.mxu0 %v1023
        %1354 = vmatprep.subr.bf16.mxu0 0
        %1355 = vmatpush1.bf16.msra.mxu0 %v1024
        %1356 = vmatprep.subr.bf16.mxu0 0
        %1357 = vmatpush1.bf16.msra.mxu0 %v1025
        %1358 = vmatprep.mubr.bf16.mxu0 %v496
        %1359 = vmatmul.mubr.bf16.gmra.mrb[0].mxu0 %v495
        %v1360 = vpop.f32.mrb[0].mxu0
        %v1361 = vadd.f32 %v1321, %v1360
        %v1362 = vpop.f32.mrb[0].mxu0
        %v1363 = vpop.f32.mrb[0].mxu0
        %v1364 = vpop.f32.mrb[0].mxu0
        %1365 = vdwg.mxu0
        %1366 = vmatprep.subr.bf16.mxu0 0
        %1367 = vmatpush1.bf16.msra.mxu0 %v1026
        %1368 = vmatprep.subr.bf16.mxu0 0
        %1369 = vmatpush1.bf16.msra.mxu0 %v1027
        %1370 = vmatprep.subr.bf16.mxu0 0
        %1371 = vmatpush1.bf16.msra.mxu0 %v1028
        %1372 = vmatprep.subr.bf16.mxu0 0
        %1373 = vmatpush1.bf16.msra.mxu0 %v1029
        %1374 = vmatprep.subr.bf16.mxu0 0
        %1375 = vmatpush1.bf16.msra.mxu0 %v1030
        %1376 = vmatprep.subr.bf16.mxu0 0
        %1377 = vmatpush1.bf16.msra.mxu0 %v1031
        %1378 = vmatprep.subr.bf16.mxu0 0
        %1379 = vmatpush1.bf16.msra.mxu0 %v1032
        %1380 = vmatprep.subr.bf16.mxu0 0
        %1381 = vmatpush1.bf16.msra.mxu0 %v1033
        %1382 = vmatprep.subr.bf16.mxu0 0
        %1383 = vmatpush1.bf16.msra.mxu0 %v1034
        %1384 = vmatprep.subr.bf16.mxu0 0
        %1385 = vmatpush1.bf16.msra.mxu0 %v1035
        %1386 = vmatprep.subr.bf16.mxu0 0
        %1387 = vmatpush1.bf16.msra.mxu0 %v1036
        %1388 = vmatprep.subr.bf16.mxu0 0
        %1389 = vmatpush1.bf16.msra.mxu0 %v1037
        %1390 = vmatprep.subr.bf16.mxu0 0
        %1391 = vmatpush1.bf16.msra.mxu0 %v1038
        %1392 = vmatprep.subr.bf16.mxu0 0
        %1393 = vmatpush1.bf16.msra.mxu0 %v1039
        %1394 = vmatprep.subr.bf16.mxu0 0
        %1395 = vmatpush1.bf16.msra.mxu0 %v1040
        %1396 = vmatprep.subr.bf16.mxu0 0
        %1397 = vmatpush1.bf16.msra.mxu0 %v1041
        %1398 = vmatprep.mubr.bf16.mxu0 %v498
        %1399 = vmatmul.mubr.bf16.gmra.mrb[0].mxu0 %v497
        %v1400 = vpop.f32.mrb[0].mxu0
        %v1401 = vadd.f32 %v1361, %v1400
        %v1402 = vpop.f32.mrb[0].mxu0
        %v1403 = vpop.f32.mrb[0].mxu0
        %v1404 = vpop.f32.mrb[0].mxu0
        %1405 = vdwg.mxu0
        %1406 = vmatprep.subr.bf16.mxu0 0
        %1407 = vmatpush1.bf16.msra.mxu0 %v1042
        %1408 = vmatprep.subr.bf16.mxu0 0
        %1409 = vmatpush1.bf16.msra.mxu0 %v1043
        %1410 = vmatprep.subr.bf16.mxu0 0
        %1411 = vmatpush1.bf16.msra.mxu0 %v1044
        %1412 = vmatprep.subr.bf16.mxu0 0
        %1413 = vmatpush1.bf16.msra.mxu0 %v1045
        %1414 = vmatprep.subr.bf16.mxu0 0
        %1415 = vmatpush1.bf16.msra.mxu0 %v1046
        %1416 = vmatprep.subr.bf16.mxu0 0
        %1417 = vmatpush1.bf16.msra.mxu0 %v1047
        %1418 = vmatprep.subr.bf16.mxu0 0
        %1419 = vmatpush1.bf16.msra.mxu0 %v1048
        %1420 = vmatprep.subr.bf16.mxu0 0
        %1421 = vmatpush1.bf16.msra.mxu0 %v1049
        %1422 = vmatprep.subr.bf16.mxu0 0
        %1423 = vmatpush1.bf16.msra.mxu0 %v1050
        %1424 = vmatprep.subr.bf16.mxu0 0
        %1425 = vmatpush1.bf16.msra.mxu0 %v1051
        %1426 = vmatprep.subr.bf16.mxu0 0
        %1427 = vmatpush1.bf16.msra.mxu0 %v1052
        %1428 = vmatprep.subr.bf16.mxu0 0
        %1429 = vmatpush1.bf16.msra.mxu0 %v1053
        %1430 = vmatprep.subr.bf16.mxu0 0
        %1431 = vmatpush1.bf16.msra.mxu0 0
        %1432 = vmatprep.subr.bf16.mxu0 0
        %1433 = vmatpush1.bf16.msra.mxu0 0
        %1434 = vmatprep.subr.bf16.mxu0 0
        %1435 = vmatpush1.bf16.msra.mxu0 0
        %1436 = vmatprep.subr.bf16.mxu0 0
        %1437 = vmatpush1.bf16.msra.mxu0 0
        %1438 = vmatprep.mubr.bf16.mxu0 %v1164
        %1439 = vmatmul.mubr.bf16.gmra.mrb[0].mxu0 %v499
        %v1440 = vpop.f32.mrb[0].mxu0
        %v1441 = vadd.f32 %v1401, %v1440
        %v1442 = vpop.f32.mrb[0].mxu0
        %v1443 = vpop.f32.mrb[0].mxu0
        %v1444 = vpop.f32.mrb[0].mxu0
        %1445 = vdwg.mxu0
        %v1446 = vld [vmem:[%s2] sm:$0x1]
        %v1448 = vlaneseq
        %v1449 = vshrl.u32 %v1448, 7
        %v1450 = vsub.s32 0, %v1449
        %v1451 = vrot.slane %v1446, %v1450
        %v1453 = vmul.f32 %v1441, %v1451
        %v1454 = vld [vmem:[%s3] sm:$0x1]
        %v1456 = vlaneseq
        %v1457 = vshrl.u32 %v1456, 7
        %v1458 = vsub.s32 0, %v1457
        %v1459 = vrot.slane %v1454, %v1458
        %v1461 = vadd.f32 %v1453, %v1459
        %v1462 = vmax.f32 %v1461, 0.0
        %1463 = vst.msk [vmem:[%s230] sm:$0xff] %vm1162, %v1462
        %s1464 = sand.u32 %s142, 1
        %s1465 = scalar_lea.sflag [#allocation3], %s1464
        %s1466 = sand.u32 %s142, 1
        %s1467 = smul.addr %s1466, 8
        %s1468 = scalar_lea.vmem [#allocation2], %s1467
        // Predicated region
        $region41: #{videonet_forward.9} parent=39 // pred_check
          %p1469 = pneg %p152
        $region42: #{videonet_forward.9} parent=39 // pred_check_branch
          %1471 = sbr.rel (%p1469) target = $region44
        $region43: #{videonet_forward.9} parent=39 // pred_region
          %s1473 = ssub.s32 128, 128
          %1474 = vsyncadd %s1465, %s1473
          %s1475 = smul.addr %s19, 128
          %s1476 = scalar_lea.hbm %s5, %s1475
          %s1478 = sshll.u32 %s1468, 4
          %s1479 = int_to_ptr.vmem [resolvable:$true] %s1478
          %1481 = dma.vmem_to_hbm [thread:$0]  %s1479, 128, %s1476, %s1465
        $region44: #{videonet_forward.9} parent=39 // pred_fallthru
          _
      $region40: #{videonet_forward.9} parent=5 // pred_fallthru
        _
      %p1482 = scmp.le.s32.totalorder 2, %s14
      // Predicated region
      $region45: #{videonet_forward.9} parent=5 // pred_check
        %p1483 = pneg %p1482
      $region46: #{videonet_forward.9} parent=5 // pred_check_branch
        %1485 = sbr.rel (%p1483) target = $region48
      $region47: #{videonet_forward.9} parent=5 // pred_region
        %s1486 = ssub.s32 %s14, 2
        // Predicated region
        $region49: #{videonet_forward.9} parent=47 // pred_check
          %p1487 = pneg %p158
        $region50: #{videonet_forward.9} parent=47 // pred_check_branch
          %1489 = sbr.rel (%p1487) target = $region52
        $region51: #{videonet_forward.9} parent=47 // pred_region
          %s1490 = sand.u32 %s143, 1
          %s1491 = scalar_lea.sflag [#allocation3], %s1490
          %s1492 = sand.u32 %s143, 1
          %s1493 = smul.addr %s1492, 8
          %s1494 = scalar_lea.vmem [#allocation2], %s1493
          %1495 = dma.done %s1491, 128
        $region52: #{videonet_forward.9} parent=47 // pred_fallthru
          _
      $region48: #{videonet_forward.9} parent=5 // pred_fallthru
        _
    $region6: #{videonet_forward.9} parent=1 // loop_footer
      %s18 = sadd.s32 1, %s14
    $region7: #{videonet_forward.9} parent=1 // loop_footer_branch
      %13 = sbr.rel target = $region3
    $region8: #{videonet_forward.9} parent=1 // loop_exit
      _
    %1496 = vsyncpa [#allocation3], 1
    %s1497 = scalar_lea.sflag [#allocation3], 1
    %1498 = vsyncpa %s1497, 1

</llo_original>
